<compile_context>
chip_gen: v5e
topology: v5e:2x2
jax: 0.10.0
libtpu: 0.0.40
codegen_flags: <defaults>
</compile_context>

<pallas_src>
import math
import functools

import jax
import jax.numpy as jnp
from jax import lax
from jax.experimental import pallas as pl
from jax.experimental.pallas import tpu as pltpu

DP = 128          # padded lane width for every feature dimension
NEG = -1e30       # "-inf" used to exclude padded seed rows from the softmax


# ----------------------------- small helpers -----------------------------

def _vmem_specs(n):
    return [pl.BlockSpec(memory_space=pltpu.MemorySpace.VMEM) for _ in range(n)]


def _vmem_out():
    return pl.BlockSpec(memory_space=pltpu.MemorySpace.VMEM)


def _conv_vmem_limit(n):
    # Dense-path working set: two NxN bf16 operators + a handful of [N, 256] f32
    # activations + <1 MiB of packed bf16 weights.  Clamp to [32 MiB, 100 MiB];
    # v6e/v5e have 128 MiB physical so the high end is safe there, on v7x (64 MiB)
    # large graphs should switch to the row-tiled SpMM path (TODO above) instead.
    need = 2 * 2 * n * n + 8 * n * (2 * DP) * 4 + (1 << 20)
    return int(min(max(32 << 20, 2 * need), 100 << 20))


# ============================ kernel 1: convolution stack ============================

def _conv_stack_kernel(agg_ref, ahat_ref, x_ref, *refs, num_layers):
    """Fused: num_layers x (GIN agg -> Lin -> ReLU -> Lin -> BN -> ReLU)
    -> conv tail Linear -> GMT.lin1 -> packed GCNConv K||V for GMPool_G.
    Node features stay resident in VMEM; only the packed [N, 2*DP] K||V leaves."""
    n_in = num_layers * 6 + 6
    p = refs[:n_in]
    kv_ref = refs[n_in]

    f32, bf16 = jnp.float32, jnp.bfloat16
    agg = agg_ref[...]                       # bf16 [N, N]   ((1+eps)I + A^T, eps=0)
    h = x_ref[...]                           # f32  [N, DP]
    i = 0
    for _ in range(num_layers):
        w1, b1, w2, b2, gamma, beta = [p[i + j][...] for j in range(6)]
        i += 6
        hs = jnp.dot(agg, h.astype(bf16), preferred_element_type=f32)
        z = jnp.maximum(jnp.dot(hs.astype(bf16), w1, preferred_element_type=f32) + b1, 0.0)
        z = jnp.dot(z.astype(bf16), w2, preferred_element_type=f32) + b2
        # BatchNorm1d (training mode, biased var, eps=1e-5), stats in f32.
        # Padded feature columns have zero mean/var and zero gamma/beta -> stay 0.
        mean = jnp.mean(z, axis=0, keepdims=True)
        d = z - mean
        var = jnp.mean(d * d, axis=0, keepdims=True)
        h = jnp.maximum(gamma * (d * lax.rsqrt(var + 1e-5)) + beta, 0.0)

    wout, bout, wl1, bl1, wkv, bkv = [p[i + j][...] for j in range(6)]
    h = jnp.dot(h.astype(bf16), wout, preferred_element_type=f32) + bout   # conv tail
    h = jnp.dot(h.astype(bf16), wl1, preferred_element_type=f32) + bl1     # GMT.lin1

    # GMPool_G K||V: GCNConv == D^-1/2 (A+I) D^-1/2 (h W) + b, with W = wk||wv packed
    # into a 256-wide matmul (fills the 2x256 MXU on v6e/v7x).
    ahat = ahat_ref[...]                     # bf16 [N, N]
    hkv = jnp.dot(h.astype(bf16), wkv, preferred_element_type=f32)         # [N, 2*DP]
    kv_ref[...] = jnp.dot(ahat, hkv.astype(bf16), preferred_element_type=f32) + bkv


def conv_stack(agg, ahat, x_pad, conv_layers, conv_out, lin1, kv_g):
    args = [agg, ahat, x_pad]
    for lp in conv_layers:
        args += [lp["w1"], lp["b1"], lp["w2"], lp["b2"], lp["gamma"], lp["beta"]]
    args += [conv_out[0], conv_out[1], lin1[0], lin1[1], kv_g[0], kv_g[1]]
    N = x_pad.shape[0]
    return pl.pallas_call(
        functools.partial(_conv_stack_kernel, num_layers=len(conv_layers)),
        out_shape=jax.ShapeDtypeStruct((N, 2 * DP), jnp.float32),
        in_specs=_vmem_specs(len(args)),
        out_specs=_vmem_out(),
        compiler_params=pltpu.CompilerParams(vmem_limit_bytes=_conv_vmem_limit(N)),
    )(*args)


# ============================ kernel 2: fused GMT readout ============================

def _readout_kernel(kv_ref, qg_ref, qi_ref,
                    pg_ow, pg_ob, sa_qkvw, sa_qkvb, sa_ow, sa_ob,
                    pi_kvw, pi_kvb, pi_ow, pi_ob, l2w, l2b, lbw, lbb,
                    pred_ref, *, dim, num_heads, num_seeds, scale):
    """One grid step == one graph.  GMPool_G -> SelfAtt -> GMPool_I -> lin2 -> label."""
    f32, bf16 = jnp.float32, jnp.bfloat16
    dh = dim // num_heads

    kv = kv_ref[0]                               # [Nk_pad, 2*DP]; padded rows are 0
    k1 = kv[:, :DP]                              # GCNConv K (real cols [:dim])
    v1 = kv[:, DP:]                              # GCNConv V

    sg = qg_ref.shape[0]                         # 80 (75 real seeds, sublane-aligned)
    si = qi_ref.shape[0]                         # 8  (1 real seed)
    g_valid = lax.broadcasted_iota(jnp.int32, (sg, 1), 0) < num_seeds
    i_valid = lax.broadcasted_iota(jnp.int32, (si, 1), 0) < 1
    col = lax.broadcasted_iota(jnp.int32, (1, DP), 1)

    def mab(q_full, k_full, v_full, q_valid):
        # PyG MAB core.  Softmax is over the QUERY/SEED axis (torch dim=1 quirk) and
        # the score is scaled by 1/sqrt(dim_V).  Padded KEY rows are exactly zero, so
        # their per-column softmax multiplies a zero V row -> no contribution (this is
        # numerically identical to torch's -1e9 additive key mask).  Padded QUERY rows
        # are excluded from the softmax denominator via q_valid.  The per-head A @ V is
        # written straight into the head's column range of a lane-dense [Sq, DP] slab,
        # fusing the head re-merge and the residual-on-Q into the epilogue.
        out = q_full
        for h in range(num_heads):
            lo, hi = h * dh, (h + 1) * dh
            s = lax.dot_general(q_full[:, lo:hi], k_full[:, lo:hi],
                                (((1,), (1,)), ((), ())),
                                preferred_element_type=f32) * scale          # [Sq, Sk]
            s = jnp.where(q_valid, s, NEG)
            s = s - jnp.max(s, axis=0, keepdims=True)
            e = jnp.exp(s)
            a = e / jnp.sum(e, axis=0, keepdims=True)                        # softmax/seeds
            vh = jnp.where((col >= lo) & (col < hi), v_full, 0.0)            # head-h V cols
            out = out + jnp.dot(a, vh, preferred_element_type=f32)           # [Sq, DP]
        return out

    def linear(x_full, w_ref, b_ref):
        return jnp.dot(x_full.astype(bf16), w_ref[...],
                       preferred_element_type=f32) + b_ref[...]

    def fc_o_res(x_full, w_ref, b_ref, q_valid):
        y = x_full + jnp.maximum(linear(x_full, w_ref, b_ref), 0.0)
        return jnp.where(q_valid, y, 0.0)        # keep padded seed rows exactly zero

    # ---- Pool 1: GMPool_G (75 seeds; K/V = GCNConv node features, fc_q(S) precomputed)
    bx = fc_o_res(mab(qg_ref[...], k1, v1, g_valid), pg_ow, pg_ob, g_valid)   # [sg, DP]

    # ---- Pool 2: SelfAtt (SAB over the 75 pooled rows; packed fc_q||fc_k||fc_v) ----
    qkv = jnp.where(g_valid, linear(bx, sa_qkvw, sa_qkvb), 0.0)               # [sg, 3*DP]
    bx = fc_o_res(mab(qkv[:, :DP], qkv[:, DP:2 * DP], qkv[:, 2 * DP:], g_valid),
                  sa_ow, sa_ob, g_valid)

    # ---- Pool 3: GMPool_I (1 seed; packed fc_k||fc_v; fc_q(seed) precomputed) ----
    kv3 = jnp.where(g_valid, linear(bx, pi_kvw, pi_kvb), 0.0)                 # [sg, 2*DP]
    pooled = fc_o_res(mab(qi_ref[...], kv3[:, :DP], kv3[:, DP:], i_valid),
                      pi_ow, pi_ob, i_valid)                                  # [si, DP]

    # ---- GMT.lin2 -> label head (row 0 is the real graph embedding) ----
    pred_ref[0] = linear(linear(pooled, l2w, l2b), lbw, lbb)


def readout(kv_dense, params, *, dim, num_heads, num_seeds, scale):
    B, nk_pad, _ = kv_dense.shape
    qg, qi = params["q_seed_g"], params["q_seed_i"]
    weights = [params["pg_fc_o"], params["sa_qkv"], params["sa_fc_o"],
               params["pi_kv"], params["pi_fc_o"], params["lin2"], params["label"]]
    args = [kv_dense, qg, qi]
    for w, b in weights:
        args += [w, b]

    def const_spec(a):
        # shared across graphs: constant block index -> Pallas skips the re-copy
        return pl.BlockSpec(a.shape, lambda b, nd=a.ndim: (0,) * nd)

    in_specs = [pl.BlockSpec((1, nk_pad, 2 * DP), lambda b: (b, 0, 0))]
    in_specs += [const_spec(a) for a in args[1:]]

    return pl.pallas_call(
        functools.partial(_readout_kernel, dim=dim, num_heads=num_heads,
                          num_seeds=num_seeds, scale=scale),
        out_shape=jax.ShapeDtypeStruct((B, 8, DP), jnp.float32),
        grid=(B,),
        in_specs=in_specs,
        out_specs=pl.BlockSpec((1, 8, DP), lambda b: (b, 0, 0)),
        compiler_params=pltpu.CompilerParams(dimension_semantics=("parallel",)),
    )(*args)


# ----------------------------- parameters -----------------------------

def init_gin_enc(key, num_layers, dim, hdim, num_labels, num_heads=4,
                 gmt_num_nodes=300, gmt_pool_ratio=0.25):
    assert dim % num_heads == 0 and dim <= DP and num_labels <= DP
    keys = iter(jax.random.split(key, 64))

    def lin(fi, fo):
        kw, kb = jax.random.split(next(keys))
        bound = 1.0 / math.sqrt(fi)
        w = jax.random.uniform(kw, (fi, fo), jnp.float32, -bound, bound)
        b = jax.random.uniform(kb, (fo,), jnp.float32, -bound, bound)
        return w, b

    def wpad(w):
        fi, fo = w.shape
        return jnp.zeros((DP, DP), jnp.float32).at[:fi, :fo].set(w)

    def bpad(b):
        return jnp.zeros((1, DP), jnp.float32).at[0, :b.shape[0]].set(b)

    def packed(ws, bs):          # -> ([DP, k*DP] bf16 weight, [1, k*DP] f32 bias)
        return (jnp.concatenate([wpad(w) for w in ws], axis=1).astype(jnp.bfloat16),
                jnp.concatenate([bpad(b) for b in bs], axis=1))

    def single(w, b):
        return wpad(w).astype(jnp.bfloat16), bpad(b)

    conv = []
    cur_dim, cur_hdim = dim, hdim
    for i in range(num_layers):
        w1, b1 = lin(cur_dim, cur_hdim)
        w2, b2 = lin(cur_hdim, cur_hdim)
        conv.append(dict(w1=wpad(w1).astype(jnp.bfloat16), b1=bpad(b1),
                         w2=wpad(w2).astype(jnp.bfloat16), b2=bpad(b2),
                         gamma=bpad(jnp.ones((cur_hdim,), jnp.float32)),
                         beta=bpad(jnp.zeros((cur_hdim,), jnp.float32))))
        cur_dim = cur_hdim
        if i < 2:
            cur_hdim *= 2

    conv_out = single(*lin(cur_hdim, dim))
    lin1 = single(*lin(dim, dim))

    num_seeds_g = math.ceil(gmt_num_nodes * gmt_pool_ratio)       # 75
    s_pad = -(-num_seeds_g // 8) * 8                              # 80 (sublane-aligned)

    def seeds(n):
        return jax.random.normal(next(keys), (n, dim), jnp.float32) * math.sqrt(2.0 / (n + dim))

    # ---- GMPool_G: fc_q(S) precomputed at init (param-only, f32); GCN K||V packed ----
    s_g = seeds(num_seeds_g)
    wq_g, bq_g = lin(dim, dim)
    q_seed_g = jnp.zeros((s_pad, DP), jnp.float32).at[:num_seeds_g, :dim].set(
        s_g @ wq_g + bq_g[None, :])
    wk_g, bk_g = lin(dim, dim)
    wv_g, bv_g = lin(dim, dim)
    kv_g = packed([wk_g, wv_g], [bk_g, bv_g])
    pg_fc_o = single(*lin(dim, dim))

    # ---- SelfAtt: fc_q || fc_k || fc_v packed ----
    sa_ws, sa_bs = zip(*[lin(dim, dim) for _ in range(3)])
    sa_qkv = packed(list(sa_ws), list(sa_bs))
    sa_fc_o = single(*lin(dim, dim))

    # ---- GMPool_I: 1 seed, fc_q precomputed; fc_k || fc_v packed ----
    s_i = seeds(1)
    wq_i, bq_i = lin(dim, dim)
    q_seed_i = jnp.zeros((8, DP), jnp.float32).at[:1, :dim].set(s_i @ wq_i + bq_i[None, :])
    pi_ws, pi_bs = zip(*[lin(dim, dim) for _ in range(2)])
    pi_kv = packed(list(pi_ws), list(pi_bs))
    pi_fc_o = single(*lin(dim, dim))

    params = dict(conv=conv, conv_out=conv_out, lin1=lin1,
                  kv_g=kv_g, q_seed_g=q_seed_g, q_seed_i=q_seed_i,
                  pg_fc_o=pg_fc_o, sa_qkv=sa_qkv, sa_fc_o=sa_fc_o,
                  pi_kv=pi_kv, pi_fc_o=pi_fc_o,
                  lin2=single(*lin(dim, dim)), label=single(*lin(dim, num_labels)))
    cfg = dict(num_seeds_g=num_seeds_g)
    return params, cfg


# ----------------------------- forward -----------------------------

def gin_enc_forward(params, x, edge_index, edge_weight, batch, *,
                    num_graphs, max_nodes, dim, num_heads, num_labels, num_seeds):
    del edge_weight                            # accepted but unused, as in the torch forward
    N = x.shape[0]
    B = num_graphs
    scale = 1.0 / math.sqrt(dim)               # PyG MAB scales by sqrt(dim_V)
    src, dst = edge_index[0], edge_index[1]

    # ---- dense message-passing operators (XLA glue scatter; bf16 MXU operands) ----
    eye = jnp.eye(N, dtype=jnp.float32)
    A_in = jnp.zeros((N, N), jnp.float32).at[dst, src].add(1.0)   # A_in[i,j] = #edges j->i
    gin_agg = (A_in + eye).astype(jnp.bfloat16)                   # (1+eps)I + A^T, eps=0
    atil = A_in + eye
    dis = lax.rsqrt(jnp.sum(atil, axis=1))
    ahat = (dis[:, None] * atil * dis[None, :]).astype(jnp.bfloat16)

    x_pad = jnp.zeros((N, DP), jnp.float32).at[:, :dim].set(x)

    # ---- kernel 1: conv stack + conv_out + GMT.lin1 + packed GCN K||V (1 launch) ----
    kv_nodes = conv_stack(gin_agg, ahat, x_pad, params["conv"],
                          params["conv_out"], params["lin1"], params["kv_g"])  # [N, 2*DP]

    # ---- to_dense_batch (XLA scatter glue; static max_nodes, no host sync).
    # Padded rows stay EXACTLY zero -- the readout kernel's implicit key masking
    # depends on it (see _readout_kernel docstring).
    counts = jnp.zeros((B,), jnp.int32).at[batch].add(1)
    starts = jnp.concatenate([jnp.zeros((1,), jnp.int32),
                              jnp.cumsum(counts)[:-1].astype(jnp.int32)])
    pos = jnp.arange(N, dtype=jnp.int32) - starts[batch]
    nk_pad = max(128, -(-max_nodes // 128) * 128)
    kv_dense = jnp.zeros((B, nk_pad, 2 * DP), jnp.float32).at[batch, pos].set(kv_nodes)
    # TODO(synk): replace this scatter with a PrefetchScalarGridSpec row gather inside
    #             the readout kernel (removes the [B, Nk, 256] HBM materialization).

    # ---- kernel 2: whole GMT readout + lin2 + label head, gridded over graphs ----
    pred_pad = readout(kv_dense, params, dim=dim, num_heads=num_heads,
                       num_seeds=num_seeds, scale=scale)                       # [B, 8, DP]
    return pred_pad[:, 0, :num_labels]


# ----------------------------- demo -----------------------------

if __name__ == "__main__":
    pDim, pHDim, pNumLayers, pNumLabels = 32, 16, 3, 8
    num_heads = 4

    # batch of 2 graphs with 10 + 6 nodes
    graph_sizes = [10, 6]
    N = sum(graph_sizes)
    batch = jnp.array(sum([[g] * c for g, c in enumerate(graph_sizes)], []), jnp.int32)

    # bidirectional ring edges within each graph
    src_list, dst_list = [], []
    off = 0
    for c in graph_sizes:
        for i in range(c):
            j = (i + 1) % c
            src_list += [off + i, off + j]
            dst_list += [off + j, off + i]
        off += c
    edge_index = jnp.array([src_list, dst_list], jnp.int32)
    edge_weight = jnp.ones((edge_index.shape[1],), jnp.float32)   # accepted but unused

    key = jax.random.PRNGKey(0)
    kx, kp = jax.random.split(key)
    x = jax.random.normal(kx, (N, pDim), jnp.float32)

    params, cfg = init_gin_enc(kp, pNumLayers, pDim, pHDim, pNumLabels, num_heads=num_heads)

    fwd = jax.jit(functools.partial(
        gin_enc_forward,
        num_graphs=len(graph_sizes),
        max_nodes=max(graph_sizes),
        dim=pDim, num_heads=num_heads, num_labels=pNumLabels,
        num_seeds=cfg["num_seeds_g"]))

    pred = fwd(params, x, edge_index, edge_weight, batch)
    pred = jax.block_until_ready(pred)
    assert pred.shape == (len(graph_sizes), pNumLabels)
    assert bool(jnp.all(jnp.isfinite(pred)))
    print("KERNEL_OK")
</pallas_src>

<mosaic_0001>
module attributes {stable_mosaic.version = 11 : i64} {
  func.func @_conv_stack_kernel(%arg0: memref<16x16xbf16, #tpu.memory_space<vmem>>, %arg1: memref<16x16xbf16, #tpu.memory_space<vmem>>, %arg2: memref<16x128xf32, #tpu.memory_space<vmem>>, %arg3: memref<128x128xbf16, #tpu.memory_space<vmem>>, %arg4: memref<1x128xf32, #tpu.memory_space<vmem>>, %arg5: memref<128x128xbf16, #tpu.memory_space<vmem>>, %arg6: memref<1x128xf32, #tpu.memory_space<vmem>>, %arg7: memref<1x128xf32, #tpu.memory_space<vmem>>, %arg8: memref<1x128xf32, #tpu.memory_space<vmem>>, %arg9: memref<128x128xbf16, #tpu.memory_space<vmem>>, %arg10: memref<1x128xf32, #tpu.memory_space<vmem>>, %arg11: memref<128x128xbf16, #tpu.memory_space<vmem>>, %arg12: memref<1x128xf32, #tpu.memory_space<vmem>>, %arg13: memref<1x128xf32, #tpu.memory_space<vmem>>, %arg14: memref<1x128xf32, #tpu.memory_space<vmem>>, %arg15: memref<128x128xbf16, #tpu.memory_space<vmem>>, %arg16: memref<1x128xf32, #tpu.memory_space<vmem>>, %arg17: memref<128x128xbf16, #tpu.memory_space<vmem>>, %arg18: memref<1x128xf32, #tpu.memory_space<vmem>>, %arg19: memref<1x128xf32, #tpu.memory_space<vmem>>, %arg20: memref<1x128xf32, #tpu.memory_space<vmem>>, %arg21: memref<128x128xbf16, #tpu.memory_space<vmem>>, %arg22: memref<1x128xf32, #tpu.memory_space<vmem>>, %arg23: memref<128x128xbf16, #tpu.memory_space<vmem>>, %arg24: memref<1x128xf32, #tpu.memory_space<vmem>>, %arg25: memref<128x256xbf16, #tpu.memory_space<vmem>>, %arg26: memref<1x256xf32, #tpu.memory_space<vmem>>, %arg27: memref<16x256xf32, #tpu.memory_space<vmem>>) attributes {dimension_semantics = [], scalar_prefetch = 0 : i64, scratch_operands = 0 : i64, tpu.core_type = #tpu.core_type<tc>} {
    %c0 = arith.constant 0 : index
    %c0_0 = arith.constant 0 : index
    %0 = vector.load %arg0[%c0, %c0_0] : memref<16x16xbf16, #tpu.memory_space<vmem>>, vector<16x16xbf16>
    %c0_1 = arith.constant 0 : index
    %c0_2 = arith.constant 0 : index
    %1 = vector.load %arg2[%c0_1, %c0_2] : memref<16x128xf32, #tpu.memory_space<vmem>>, vector<16x128xf32>
    %c0_3 = arith.constant 0 : index
    %c0_4 = arith.constant 0 : index
    %2 = vector.load %arg3[%c0_3, %c0_4] : memref<128x128xbf16, #tpu.memory_space<vmem>>, vector<128x128xbf16>
    %c0_5 = arith.constant 0 : index
    %c0_6 = arith.constant 0 : index
    %3 = vector.load %arg4[%c0_5, %c0_6] : memref<1x128xf32, #tpu.memory_space<vmem>>, vector<1x128xf32>
    %c0_7 = arith.constant 0 : index
    %c0_8 = arith.constant 0 : index
    %4 = vector.load %arg5[%c0_7, %c0_8] : memref<128x128xbf16, #tpu.memory_space<vmem>>, vector<128x128xbf16>
    %c0_9 = arith.constant 0 : index
    %c0_10 = arith.constant 0 : index
    %5 = vector.load %arg6[%c0_9, %c0_10] : memref<1x128xf32, #tpu.memory_space<vmem>>, vector<1x128xf32>
    %c0_11 = arith.constant 0 : index
    %c0_12 = arith.constant 0 : index
    %6 = vector.load %arg7[%c0_11, %c0_12] : memref<1x128xf32, #tpu.memory_space<vmem>>, vector<1x128xf32>
    %c0_13 = arith.constant 0 : index
    %c0_14 = arith.constant 0 : index
    %7 = vector.load %arg8[%c0_13, %c0_14] : memref<1x128xf32, #tpu.memory_space<vmem>>, vector<1x128xf32>
    %8 = arith.truncf %1 : vector<16x128xf32> to vector<16x128xbf16>
    %cst = arith.constant dense<0.000000e+00> : vector<16x128xf32>
    %9 = tpu.matmul %0, %8, %cst {dimension_numbers = #tpu.dot_dimension_numbers<[1], [0], [0], [1], [0, 0, 1, 1], [], []>} : vector<16x16xbf16>, vector<16x128xbf16>, vector<16x128xf32> -> vector<16x128xf32>
    %10 = arith.truncf %9 : vector<16x128xf32> to vector<16x128xbf16>
    %cst_15 = arith.constant dense<0.000000e+00> : vector<16x128xf32>
    %11 = tpu.matmul %10, %2, %cst_15 {dimension_numbers = #tpu.dot_dimension_numbers<[1], [0], [0], [1], [0, 0, 1, 1], [], []>} : vector<16x128xbf16>, vector<128x128xbf16>, vector<16x128xf32> -> vector<16x128xf32>
    %12 = vector.broadcast %3 : vector<1x128xf32> to vector<16x128xf32>
    %13 = arith.addf %11, %12 : vector<16x128xf32>
    %cst_16 = arith.constant 0.000000e+00 : f32
    %14 = vector.broadcast %cst_16 : f32 to vector<16x128xf32>
    %15 = arith.maximumf %13, %14 : vector<16x128xf32>
    %16 = arith.truncf %15 : vector<16x128xf32> to vector<16x128xbf16>
    %cst_17 = arith.constant dense<0.000000e+00> : vector<16x128xf32>
    %17 = tpu.matmul %16, %4, %cst_17 {dimension_numbers = #tpu.dot_dimension_numbers<[1], [0], [0], [1], [0, 0, 1, 1], [], []>} : vector<16x128xbf16>, vector<128x128xbf16>, vector<16x128xf32> -> vector<16x128xf32>
    %18 = vector.broadcast %5 : vector<1x128xf32> to vector<16x128xf32>
    %19 = arith.addf %17, %18 : vector<16x128xf32>
    %cst_18 = arith.constant dense<0.000000e+00> : vector<128xf32>
    %20 = vector.multi_reduction <add>, %19, %cst_18 [0] : vector<16x128xf32> to vector<128xf32>
    %21 = vector.shape_cast %20 : vector<128xf32> to vector<1x128xf32>
    %cst_19 = arith.constant 1.600000e+01 : f32
    %22 = vector.broadcast %cst_19 : f32 to vector<1x128xf32>
    %23 = arith.divf %21, %22 : vector<1x128xf32>
    %24 = vector.broadcast %23 : vector<1x128xf32> to vector<16x128xf32>
    %25 = arith.subf %19, %24 : vector<16x128xf32>
    %26 = arith.mulf %25, %25 : vector<16x128xf32>
    %cst_20 = arith.constant dense<0.000000e+00> : vector<128xf32>
    %27 = vector.multi_reduction <add>, %26, %cst_20 [0] : vector<16x128xf32> to vector<128xf32>
    %28 = vector.shape_cast %27 : vector<128xf32> to vector<1x128xf32>
    %cst_21 = arith.constant 1.600000e+01 : f32
    %29 = vector.broadcast %cst_21 : f32 to vector<1x128xf32>
    %30 = arith.divf %28, %29 : vector<1x128xf32>
    %cst_22 = arith.constant 9.99999974E-6 : f32
    %31 = vector.broadcast %cst_22 : f32 to vector<1x128xf32>
    %32 = arith.addf %30, %31 : vector<1x128xf32>
    %33 = math.rsqrt %32 : vector<1x128xf32>
    %34 = vector.broadcast %33 : vector<1x128xf32> to vector<16x128xf32>
    %35 = arith.mulf %25, %34 : vector<16x128xf32>
    %36 = vector.broadcast %6 : vector<1x128xf32> to vector<16x128xf32>
    %37 = arith.mulf %36, %35 : vector<16x128xf32>
    %38 = vector.broadcast %7 : vector<1x128xf32> to vector<16x128xf32>
    %39 = arith.addf %37, %38 : vector<16x128xf32>
    %cst_23 = arith.constant 0.000000e+00 : f32
    %40 = vector.broadcast %cst_23 : f32 to vector<16x128xf32>
    %41 = arith.maximumf %39, %40 : vector<16x128xf32>
    %c0_24 = arith.constant 0 : index
    %c0_25 = arith.constant 0 : index
    %42 = vector.load %arg9[%c0_24, %c0_25] : memref<128x128xbf16, #tpu.memory_space<vmem>>, vector<128x128xbf16>
    %c0_26 = arith.constant 0 : index
    %c0_27 = arith.constant 0 : index
    %43 = vector.load %arg10[%c0_26, %c0_27] : memref<1x128xf32, #tpu.memory_space<vmem>>, vector<1x128xf32>
    %c0_28 = arith.constant 0 : index
    %c0_29 = arith.constant 0 : index
    %44 = vector.load %arg11[%c0_28, %c0_29] : memref<128x128xbf16, #tpu.memory_space<vmem>>, vector<128x128xbf16>
    %c0_30 = arith.constant 0 : index
    %c0_31 = arith.constant 0 : index
    %45 = vector.load %arg12[%c0_30, %c0_31] : memref<1x128xf32, #tpu.memory_space<vmem>>, vector<1x128xf32>
    %c0_32 = arith.constant 0 : index
    %c0_33 = arith.constant 0 : index
    %46 = vector.load %arg13[%c0_32, %c0_33] : memref<1x128xf32, #tpu.memory_space<vmem>>, vector<1x128xf32>
    %c0_34 = arith.constant 0 : index
    %c0_35 = arith.constant 0 : index
    %47 = vector.load %arg14[%c0_34, %c0_35] : memref<1x128xf32, #tpu.memory_space<vmem>>, vector<1x128xf32>
    %48 = arith.truncf %41 : vector<16x128xf32> to vector<16x128xbf16>
    %cst_36 = arith.constant dense<0.000000e+00> : vector<16x128xf32>
    %49 = tpu.matmul %0, %48, %cst_36 {dimension_numbers = #tpu.dot_dimension_numbers<[1], [0], [0], [1], [0, 0, 1, 1], [], []>} : vector<16x16xbf16>, vector<16x128xbf16>, vector<16x128xf32> -> vector<16x128xf32>
    %50 = arith.truncf %49 : vector<16x128xf32> to vector<16x128xbf16>
    %cst_37 = arith.constant dense<0.000000e+00> : vector<16x128xf32>
    %51 = tpu.matmul %50, %42, %cst_37 {dimension_numbers = #tpu.dot_dimension_numbers<[1], [0], [0], [1], [0, 0, 1, 1], [], []>} : vector<16x128xbf16>, vector<128x128xbf16>, vector<16x128xf32> -> vector<16x128xf32>
    %52 = vector.broadcast %43 : vector<1x128xf32> to vector<16x128xf32>
    %53 = arith.addf %51, %52 : vector<16x128xf32>
    %cst_38 = arith.constant 0.000000e+00 : f32
    %54 = vector.broadcast %cst_38 : f32 to vector<16x128xf32>
    %55 = arith.maximumf %53, %54 : vector<16x128xf32>
    %56 = arith.truncf %55 : vector<16x128xf32> to vector<16x128xbf16>
    %cst_39 = arith.constant dense<0.000000e+00> : vector<16x128xf32>
    %57 = tpu.matmul %56, %44, %cst_39 {dimension_numbers = #tpu.dot_dimension_numbers<[1], [0], [0], [1], [0, 0, 1, 1], [], []>} : vector<16x128xbf16>, vector<128x128xbf16>, vector<16x128xf32> -> vector<16x128xf32>
    %58 = vector.broadcast %45 : vector<1x128xf32> to vector<16x128xf32>
    %59 = arith.addf %57, %58 : vector<16x128xf32>
    %cst_40 = arith.constant dense<0.000000e+00> : vector<128xf32>
    %60 = vector.multi_reduction <add>, %59, %cst_40 [0] : vector<16x128xf32> to vector<128xf32>
    %61 = vector.shape_cast %60 : vector<128xf32> to vector<1x128xf32>
    %cst_41 = arith.constant 1.600000e+01 : f32
    %62 = vector.broadcast %cst_41 : f32 to vector<1x128xf32>
    %63 = arith.divf %61, %62 : vector<1x128xf32>
    %64 = vector.broadcast %63 : vector<1x128xf32> to vector<16x128xf32>
    %65 = arith.subf %59, %64 : vector<16x128xf32>
    %66 = arith.mulf %65, %65 : vector<16x128xf32>
    %cst_42 = arith.constant dense<0.000000e+00> : vector<128xf32>
    %67 = vector.multi_reduction <add>, %66, %cst_42 [0] : vector<16x128xf32> to vector<128xf32>
    %68 = vector.shape_cast %67 : vector<128xf32> to vector<1x128xf32>
    %cst_43 = arith.constant 1.600000e+01 : f32
    %69 = vector.broadcast %cst_43 : f32 to vector<1x128xf32>
    %70 = arith.divf %68, %69 : vector<1x128xf32>
    %cst_44 = arith.constant 9.99999974E-6 : f32
    %71 = vector.broadcast %cst_44 : f32 to vector<1x128xf32>
    %72 = arith.addf %70, %71 : vector<1x128xf32>
    %73 = math.rsqrt %72 : vector<1x128xf32>
    %74 = vector.broadcast %73 : vector<1x128xf32> to vector<16x128xf32>
    %75 = arith.mulf %65, %74 : vector<16x128xf32>
    %76 = vector.broadcast %46 : vector<1x128xf32> to vector<16x128xf32>
    %77 = arith.mulf %76, %75 : vector<16x128xf32>
    %78 = vector.broadcast %47 : vector<1x128xf32> to vector<16x128xf32>
    %79 = arith.addf %77, %78 : vector<16x128xf32>
    %cst_45 = arith.constant 0.000000e+00 : f32
    %80 = vector.broadcast %cst_45 : f32 to vector<16x128xf32>
    %81 = arith.maximumf %79, %80 : vector<16x128xf32>
    %c0_46 = arith.constant 0 : index
    %c0_47 = arith.constant 0 : index
    %82 = vector.load %arg15[%c0_46, %c0_47] : memref<128x128xbf16, #tpu.memory_space<vmem>>, vector<128x128xbf16>
    %c0_48 = arith.constant 0 : index
    %c0_49 = arith.constant 0 : index
    %83 = vector.load %arg16[%c0_48, %c0_49] : memref<1x128xf32, #tpu.memory_space<vmem>>, vector<1x128xf32>
    %c0_50 = arith.constant 0 : index
    %c0_51 = arith.constant 0 : index
    %84 = vector.load %arg17[%c0_50, %c0_51] : memref<128x128xbf16, #tpu.memory_space<vmem>>, vector<128x128xbf16>
    %c0_52 = arith.constant 0 : index
    %c0_53 = arith.constant 0 : index
    %85 = vector.load %arg18[%c0_52, %c0_53] : memref<1x128xf32, #tpu.memory_space<vmem>>, vector<1x128xf32>
    %c0_54 = arith.constant 0 : index
    %c0_55 = arith.constant 0 : index
    %86 = vector.load %arg19[%c0_54, %c0_55] : memref<1x128xf32, #tpu.memory_space<vmem>>, vector<1x128xf32>
    %c0_56 = arith.constant 0 : index
    %c0_57 = arith.constant 0 : index
    %87 = vector.load %arg20[%c0_56, %c0_57] : memref<1x128xf32, #tpu.memory_space<vmem>>, vector<1x128xf32>
    %88 = arith.truncf %81 : vector<16x128xf32> to vector<16x128xbf16>
    %cst_58 = arith.constant dense<0.000000e+00> : vector<16x128xf32>
    %89 = tpu.matmul %0, %88, %cst_58 {dimension_numbers = #tpu.dot_dimension_numbers<[1], [0], [0], [1], [0, 0, 1, 1], [], []>} : vector<16x16xbf16>, vector<16x128xbf16>, vector<16x128xf32> -> vector<16x128xf32>
    %90 = arith.truncf %89 : vector<16x128xf32> to vector<16x128xbf16>
    %cst_59 = arith.constant dense<0.000000e+00> : vector<16x128xf32>
    %91 = tpu.matmul %90, %82, %cst_59 {dimension_numbers = #tpu.dot_dimension_numbers<[1], [0], [0], [1], [0, 0, 1, 1], [], []>} : vector<16x128xbf16>, vector<128x128xbf16>, vector<16x128xf32> -> vector<16x128xf32>
    %92 = vector.broadcast %83 : vector<1x128xf32> to vector<16x128xf32>
    %93 = arith.addf %91, %92 : vector<16x128xf32>
    %cst_60 = arith.constant 0.000000e+00 : f32
    %94 = vector.broadcast %cst_60 : f32 to vector<16x128xf32>
    %95 = arith.maximumf %93, %94 : vector<16x128xf32>
    %96 = arith.truncf %95 : vector<16x128xf32> to vector<16x128xbf16>
    %cst_61 = arith.constant dense<0.000000e+00> : vector<16x128xf32>
    %97 = tpu.matmul %96, %84, %cst_61 {dimension_numbers = #tpu.dot_dimension_numbers<[1], [0], [0], [1], [0, 0, 1, 1], [], []>} : vector<16x128xbf16>, vector<128x128xbf16>, vector<16x128xf32> -> vector<16x128xf32>
    %98 = vector.broadcast %85 : vector<1x128xf32> to vector<16x128xf32>
    %99 = arith.addf %97, %98 : vector<16x128xf32>
    %cst_62 = arith.constant dense<0.000000e+00> : vector<128xf32>
    %100 = vector.multi_reduction <add>, %99, %cst_62 [0] : vector<16x128xf32> to vector<128xf32>
    %101 = vector.shape_cast %100 : vector<128xf32> to vector<1x128xf32>
    %cst_63 = arith.constant 1.600000e+01 : f32
    %102 = vector.broadcast %cst_63 : f32 to vector<1x128xf32>
    %103 = arith.divf %101, %102 : vector<1x128xf32>
    %104 = vector.broadcast %103 : vector<1x128xf32> to vector<16x128xf32>
    %105 = arith.subf %99, %104 : vector<16x128xf32>
    %106 = arith.mulf %105, %105 : vector<16x128xf32>
    %cst_64 = arith.constant dense<0.000000e+00> : vector<128xf32>
    %107 = vector.multi_reduction <add>, %106, %cst_64 [0] : vector<16x128xf32> to vector<128xf32>
    %108 = vector.shape_cast %107 : vector<128xf32> to vector<1x128xf32>
    %cst_65 = arith.constant 1.600000e+01 : f32
    %109 = vector.broadcast %cst_65 : f32 to vector<1x128xf32>
    %110 = arith.divf %108, %109 : vector<1x128xf32>
    %cst_66 = arith.constant 9.99999974E-6 : f32
    %111 = vector.broadcast %cst_66 : f32 to vector<1x128xf32>
    %112 = arith.addf %110, %111 : vector<1x128xf32>
    %113 = math.rsqrt %112 : vector<1x128xf32>
    %114 = vector.broadcast %113 : vector<1x128xf32> to vector<16x128xf32>
    %115 = arith.mulf %105, %114 : vector<16x128xf32>
    %116 = vector.broadcast %86 : vector<1x128xf32> to vector<16x128xf32>
    %117 = arith.mulf %116, %115 : vector<16x128xf32>
    %118 = vector.broadcast %87 : vector<1x128xf32> to vector<16x128xf32>
    %119 = arith.addf %117, %118 : vector<16x128xf32>
    %cst_67 = arith.constant 0.000000e+00 : f32
    %120 = vector.broadcast %cst_67 : f32 to vector<16x128xf32>
    %121 = arith.maximumf %119, %120 : vector<16x128xf32>
    %c0_68 = arith.constant 0 : index
    %c0_69 = arith.constant 0 : index
    %122 = vector.load %arg21[%c0_68, %c0_69] : memref<128x128xbf16, #tpu.memory_space<vmem>>, vector<128x128xbf16>
    %c0_70 = arith.constant 0 : index
    %c0_71 = arith.constant 0 : index
    %123 = vector.load %arg22[%c0_70, %c0_71] : memref<1x128xf32, #tpu.memory_space<vmem>>, vector<1x128xf32>
    %c0_72 = arith.constant 0 : index
    %c0_73 = arith.constant 0 : index
    %124 = vector.load %arg23[%c0_72, %c0_73] : memref<128x128xbf16, #tpu.memory_space<vmem>>, vector<128x128xbf16>
    %c0_74 = arith.constant 0 : index
    %c0_75 = arith.constant 0 : index
    %125 = vector.load %arg24[%c0_74, %c0_75] : memref<1x128xf32, #tpu.memory_space<vmem>>, vector<1x128xf32>
    %c0_76 = arith.constant 0 : index
    %c0_77 = arith.constant 0 : index
    %126 = vector.load %arg25[%c0_76, %c0_77] : memref<128x256xbf16, #tpu.memory_space<vmem>>, vector<128x256xbf16>
    %c0_78 = arith.constant 0 : index
    %c0_79 = arith.constant 0 : index
    %127 = vector.load %arg26[%c0_78, %c0_79] : memref<1x256xf32, #tpu.memory_space<vmem>>, vector<1x256xf32>
    %128 = arith.truncf %121 : vector<16x128xf32> to vector<16x128xbf16>
    %cst_80 = arith.constant dense<0.000000e+00> : vector<16x128xf32>
    %129 = tpu.matmul %128, %122, %cst_80 {dimension_numbers = #tpu.dot_dimension_numbers<[1], [0], [0], [1], [0, 0, 1, 1], [], []>} : vector<16x128xbf16>, vector<128x128xbf16>, vector<16x128xf32> -> vector<16x128xf32>
    %130 = vector.broadcast %123 : vector<1x128xf32> to vector<16x128xf32>
    %131 = arith.addf %129, %130 : vector<16x128xf32>
    %132 = arith.truncf %131 : vector<16x128xf32> to vector<16x128xbf16>
    %cst_81 = arith.constant dense<0.000000e+00> : vector<16x128xf32>
    %133 = tpu.matmul %132, %124, %cst_81 {dimension_numbers = #tpu.dot_dimension_numbers<[1], [0], [0], [1], [0, 0, 1, 1], [], []>} : vector<16x128xbf16>, vector<128x128xbf16>, vector<16x128xf32> -> vector<16x128xf32>
    %134 = vector.broadcast %125 : vector<1x128xf32> to vector<16x128xf32>
    %135 = arith.addf %133, %134 : vector<16x128xf32>
    %c0_82 = arith.constant 0 : index
    %c0_83 = arith.constant 0 : index
    %136 = vector.load %arg1[%c0_82, %c0_83] : memref<16x16xbf16, #tpu.memory_space<vmem>>, vector<16x16xbf16>
    %137 = arith.truncf %135 : vector<16x128xf32> to vector<16x128xbf16>
    %cst_84 = arith.constant dense<0.000000e+00> : vector<16x256xf32>
    %138 = tpu.matmul %137, %126, %cst_84 {dimension_numbers = #tpu.dot_dimension_numbers<[1], [0], [0], [1], [0, 0, 1, 1], [], []>} : vector<16x128xbf16>, vector<128x256xbf16>, vector<16x256xf32> -> vector<16x256xf32>
    %139 = arith.truncf %138 : vector<16x256xf32> to vector<16x256xbf16>
    %cst_85 = arith.constant dense<0.000000e+00> : vector<16x256xf32>
    %140 = tpu.matmul %136, %139, %cst_85 {dimension_numbers = #tpu.dot_dimension_numbers<[1], [0], [0], [1], [0, 0, 1, 1], [], []>} : vector<16x16xbf16>, vector<16x256xbf16>, vector<16x256xf32> -> vector<16x256xf32>
    %141 = vector.broadcast %127 : vector<1x256xf32> to vector<16x256xf32>
    %142 = arith.addf %140, %141 : vector<16x256xf32>
    %c0_86 = arith.constant 0 : index
    %c0_87 = arith.constant 0 : index
    %143 = vector.load %arg27[%c0_86, %c0_87] : memref<16x256xf32, #tpu.memory_space<vmem>>, vector<16x256xf32>
    tpu.vector_store %arg27[%c0_86, %c0_87], %142 {strides = array<i32>} : memref<16x256xf32, #tpu.memory_space<vmem>>, vector<16x256xf32>,
    return
  }
}

module attributes {stable_mosaic.version = 11 : i64} {
  func.func @_readout_kernel(%arg0: i32, %arg1: memref<1x128x256xf32, #tpu.memory_space<vmem>>, %arg2: memref<80x128xf32, #tpu.memory_space<vmem>>, %arg3: memref<8x128xf32, #tpu.memory_space<vmem>>, %arg4: memref<128x128xbf16, #tpu.memory_space<vmem>>, %arg5: memref<1x128xf32, #tpu.memory_space<vmem>>, %arg6: memref<128x384xbf16, #tpu.memory_space<vmem>>, %arg7: memref<1x384xf32, #tpu.memory_space<vmem>>, %arg8: memref<128x128xbf16, #tpu.memory_space<vmem>>, %arg9: memref<1x128xf32, #tpu.memory_space<vmem>>, %arg10: memref<128x256xbf16, #tpu.memory_space<vmem>>, %arg11: memref<1x256xf32, #tpu.memory_space<vmem>>, %arg12: memref<128x128xbf16, #tpu.memory_space<vmem>>, %arg13: memref<1x128xf32, #tpu.memory_space<vmem>>, %arg14: memref<128x128xbf16, #tpu.memory_space<vmem>>, %arg15: memref<1x128xf32, #tpu.memory_space<vmem>>, %arg16: memref<128x128xbf16, #tpu.memory_space<vmem>>, %arg17: memref<1x128xf32, #tpu.memory_space<vmem>>, %arg18: memref<1x8x128xf32, #tpu.memory_space<vmem>>) attributes {dimension_semantics = [#tpu.dimension_semantics<parallel>], iteration_bounds = array<i64: 2>, scalar_prefetch = 0 : i64, scratch_operands = 0 : i64, tpu.core_type = #tpu.core_type<tc>, window_params = [{transform_indices = @transform_0, window_bounds = array<i64: 1, 128, 256>}, {pipeline_mode = #tpu.pipeline_mode<synchronous>, transform_indices = @transform_1, window_bounds = array<i64: 80, 128>}, {pipeline_mode = #tpu.pipeline_mode<synchronous>, transform_indices = @transform_2, window_bounds = array<i64: 8, 128>}, {pipeline_mode = #tpu.pipeline_mode<synchronous>, transform_indices = @transform_3, window_bounds = array<i64: 128, 128>}, {pipeline_mode = #tpu.pipeline_mode<synchronous>, transform_indices = @transform_4, window_bounds = array<i64: 1, 128>}, {pipeline_mode = #tpu.pipeline_mode<synchronous>, transform_indices = @transform_5, window_bounds = array<i64: 128, 384>}, {pipeline_mode = #tpu.pipeline_mode<synchronous>, transform_indices = @transform_6, window_bounds = array<i64: 1, 384>}, {pipeline_mode = #tpu.pipeline_mode<synchronous>, transform_indices = @transform_7, window_bounds = array<i64: 128, 128>}, {pipeline_mode = #tpu.pipeline_mode<synchronous>, transform_indices = @transform_8, window_bounds = array<i64: 1, 128>}, {pipeline_mode = #tpu.pipeline_mode<synchronous>, transform_indices = @transform_9, window_bounds = array<i64: 128, 256>}, {pipeline_mode = #tpu.pipeline_mode<synchronous>, transform_indices = @transform_10, window_bounds = array<i64: 1, 256>}, {pipeline_mode = #tpu.pipeline_mode<synchronous>, transform_indices = @transform_11, window_bounds = array<i64: 128, 128>}, {pipeline_mode = #tpu.pipeline_mode<synchronous>, transform_indices = @transform_12, window_bounds = array<i64: 1, 128>}, {pipeline_mode = #tpu.pipeline_mode<synchronous>, transform_indices = @transform_13, window_bounds = array<i64: 128, 128>}, {pipeline_mode = #tpu.pipeline_mode<synchronous>, transform_indices = @transform_14, window_bounds = array<i64: 1, 128>}, {pipeline_mode = #tpu.pipeline_mode<synchronous>, transform_indices = @transform_15, window_bounds = array<i64: 128, 128>}, {pipeline_mode = #tpu.pipeline_mode<synchronous>, transform_indices = @transform_16, window_bounds = array<i64: 1, 128>}, {transform_indices = @transform_17, window_bounds = array<i64: 1, 8, 128>}]} {
    %c0 = arith.constant 0 : index
    %c0_0 = arith.constant 0 : index
    %c0_1 = arith.constant 0 : index
    %0 = vector.load %arg1[%c0, %c0_0, %c0_1] : memref<1x128x256xf32, #tpu.memory_space<vmem>>, vector<1x128x256xf32>
    %1 = vector.shape_cast %0 : vector<1x128x256xf32> to vector<128x256xf32>
    %2 = vector.extract_strided_slice %1 {offsets = [0, 0], sizes = [128, 128], strides = [1, 1]} : vector<128x256xf32> to vector<128x128xf32>
    %3 = vector.extract_strided_slice %1 {offsets = [0, 128], sizes = [128, 128], strides = [1, 1]} : vector<128x256xf32> to vector<128x128xf32>
    %4 = tpu.iota {dimensions = array<i32: 0>} : vector<80x1xi32>
    %c75_i32 = arith.constant 75 : i32
    %5 = vector.broadcast %c75_i32 : i32 to vector<80x1xi32>
    %6 = arith.cmpi slt, %4, %5 : vector<80x1xi32>
    %7 = tpu.iota {dimensions = array<i32: 0>} : vector<8x1xi32>
    %c1_i32 = arith.constant 1 : i32
    %8 = vector.broadcast %c1_i32 : i32 to vector<8x1xi32>
    %9 = arith.cmpi slt, %7, %8 : vector<8x1xi32>
    %10 = tpu.iota {dimensions = array<i32: 1>} : vector<1x128xi32>
    %c0_2 = arith.constant 0 : index
    %c0_3 = arith.constant 0 : index
    %11 = vector.load %arg2[%c0_2, %c0_3] : memref<80x128xf32, #tpu.memory_space<vmem>>, vector<80x128xf32>
    %12 = vector.extract_strided_slice %11 {offsets = [0, 0], sizes = [80, 8], strides = [1, 1]} : vector<80x128xf32> to vector<80x8xf32>
    %13 = vector.extract_strided_slice %2 {offsets = [0, 0], sizes = [128, 8], strides = [1, 1]} : vector<128x128xf32> to vector<128x8xf32>
    %cst = arith.constant dense<0.000000e+00> : vector<80x128xf32>
    %14 = tpu.matmul %12, %13, %cst {dimension_numbers = #tpu.dot_dimension_numbers<[1], [1], [0], [0], [0, 0, 1, 0], [], []>} : vector<80x8xf32>, vector<128x8xf32>, vector<80x128xf32> -> vector<80x128xf32>
    %cst_4 = arith.constant 0.176776692 : f32
    %15 = vector.broadcast %cst_4 : f32 to vector<80x128xf32>
    %16 = arith.mulf %14, %15 : vector<80x128xf32>
    %cst_5 = arith.constant -1.000000e+30 : f32
    %17 = vector.shape_cast %6 : vector<80x1xi1> to vector<80x1xi1>
    %18 = vector.broadcast %17 : vector<80x1xi1> to vector<80x128xi1>
    %19 = vector.broadcast %cst_5 : f32 to vector<80x128xf32>
    %20 = arith.select %18, %16, %19 : vector<80x128xi1>, vector<80x128xf32>
    %cst_6 = arith.constant dense<0xFF800000> : vector<128xf32>
    %21 = vector.multi_reduction <maximumf>, %20, %cst_6 [0] : vector<80x128xf32> to vector<128xf32>
    %22 = vector.shape_cast %21 : vector<128xf32> to vector<1x128xf32>
    %23 = vector.broadcast %22 : vector<1x128xf32> to vector<80x128xf32>
    %24 = arith.subf %20, %23 : vector<80x128xf32>
    %25 = math.exp %24 : vector<80x128xf32>
    %cst_7 = arith.constant dense<0.000000e+00> : vector<128xf32>
    %26 = vector.multi_reduction <add>, %25, %cst_7 [0] : vector<80x128xf32> to vector<128xf32>
    %27 = vector.shape_cast %26 : vector<128xf32> to vector<1x128xf32>
    %28 = vector.broadcast %27 : vector<1x128xf32> to vector<80x128xf32>
    %29 = arith.divf %25, %28 : vector<80x128xf32>
    %c0_i32 = arith.constant 0 : i32
    %30 = vector.broadcast %c0_i32 : i32 to vector<1x128xi32>
    %31 = arith.cmpi sge, %10, %30 : vector<1x128xi32>
    %c8_i32 = arith.constant 8 : i32
    %32 = vector.broadcast %c8_i32 : i32 to vector<1x128xi32>
    %33 = arith.cmpi slt, %10, %32 : vector<1x128xi32>
    %34 = arith.andi %31, %33 : vector<1x128xi1>
    %cst_8 = arith.constant 0.000000e+00 : f32
    %35 = vector.shape_cast %34 : vector<1x128xi1> to vector<1x128xi1>
    %36 = vector.broadcast %35 : vector<1x128xi1> to vector<128x128xi1>
    %37 = vector.broadcast %cst_8 : f32 to vector<128x128xf32>
    %38 = arith.select %36, %3, %37 : vector<128x128xi1>, vector<128x128xf32>
    %cst_9 = arith.constant dense<0.000000e+00> : vector<80x128xf32>
    %39 = tpu.matmul %29, %38, %cst_9 {dimension_numbers = #tpu.dot_dimension_numbers<[1], [0], [0], [1], [0, 0, 1, 1], [], []>} : vector<80x128xf32>, vector<128x128xf32>, vector<80x128xf32> -> vector<80x128xf32>
    %40 = arith.addf %11, %39 : vector<80x128xf32>
    %41 = vector.extract_strided_slice %11 {offsets = [0, 8], sizes = [80, 8], strides = [1, 1]} : vector<80x128xf32> to vector<80x8xf32>
    %42 = vector.extract_strided_slice %2 {offsets = [0, 8], sizes = [128, 8], strides = [1, 1]} : vector<128x128xf32> to vector<128x8xf32>
    %cst_10 = arith.constant dense<0.000000e+00> : vector<80x128xf32>
    %43 = tpu.matmul %41, %42, %cst_10 {dimension_numbers = #tpu.dot_dimension_numbers<[1], [1], [0], [0], [0, 0, 1, 0], [], []>} : vector<80x8xf32>, vector<128x8xf32>, vector<80x128xf32> -> vector<80x128xf32>
    %cst_11 = arith.constant 0.176776692 : f32
    %44 = vector.broadcast %cst_11 : f32 to vector<80x128xf32>
    %45 = arith.mulf %43, %44 : vector<80x128xf32>
    %cst_12 = arith.constant -1.000000e+30 : f32
    %46 = vector.shape_cast %6 : vector<80x1xi1> to vector<80x1xi1>
    %47 = vector.broadcast %46 : vector<80x1xi1> to vector<80x128xi1>
    %48 = vector.broadcast %cst_12 : f32 to vector<80x128xf32>
    %49 = arith.select %47, %45, %48 : vector<80x128xi1>, vector<80x128xf32>
    %cst_13 = arith.constant dense<0xFF800000> : vector<128xf32>
    %50 = vector.multi_reduction <maximumf>, %49, %cst_13 [0] : vector<80x128xf32> to vector<128xf32>
    %51 = vector.shape_cast %50 : vector<128xf32> to vector<1x128xf32>
    %52 = vector.broadcast %51 : vector<1x128xf32> to vector<80x128xf32>
    %53 = arith.subf %49, %52 : vector<80x128xf32>
    %54 = math.exp %53 : vector<80x128xf32>
    %cst_14 = arith.constant dense<0.000000e+00> : vector<128xf32>
    %55 = vector.multi_reduction <add>, %54, %cst_14 [0] : vector<80x128xf32> to vector<128xf32>
    %56 = vector.shape_cast %55 : vector<128xf32> to vector<1x128xf32>
    %57 = vector.broadcast %56 : vector<1x128xf32> to vector<80x128xf32>
    %58 = arith.divf %54, %57 : vector<80x128xf32>
    %c8_i32_15 = arith.constant 8 : i32
    %59 = vector.broadcast %c8_i32_15 : i32 to vector<1x128xi32>
    %60 = arith.cmpi sge, %10, %59 : vector<1x128xi32>
    %c16_i32 = arith.constant 16 : i32
    %61 = vector.broadcast %c16_i32 : i32 to vector<1x128xi32>
    %62 = arith.cmpi slt, %10, %61 : vector<1x128xi32>
    %63 = arith.andi %60, %62 : vector<1x128xi1>
    %cst_16 = arith.constant 0.000000e+00 : f32
    %64 = vector.shape_cast %63 : vector<1x128xi1> to vector<1x128xi1>
    %65 = vector.broadcast %64 : vector<1x128xi1> to vector<128x128xi1>
    %66 = vector.broadcast %cst_16 : f32 to vector<128x128xf32>
    %67 = arith.select %65, %3, %66 : vector<128x128xi1>, vector<128x128xf32>
    %cst_17 = arith.constant dense<0.000000e+00> : vector<80x128xf32>
    %68 = tpu.matmul %58, %67, %cst_17 {dimension_numbers = #tpu.dot_dimension_numbers<[1], [0], [0], [1], [0, 0, 1, 1], [], []>} : vector<80x128xf32>, vector<128x128xf32>, vector<80x128xf32> -> vector<80x128xf32>
    %69 = arith.addf %40, %68 : vector<80x128xf32>
    %70 = vector.extract_strided_slice %11 {offsets = [0, 16], sizes = [80, 8], strides = [1, 1]} : vector<80x128xf32> to vector<80x8xf32>
    %71 = vector.extract_strided_slice %2 {offsets = [0, 16], sizes = [128, 8], strides = [1, 1]} : vector<128x128xf32> to vector<128x8xf32>
    %cst_18 = arith.constant dense<0.000000e+00> : vector<80x128xf32>
    %72 = tpu.matmul %70, %71, %cst_18 {dimension_numbers = #tpu.dot_dimension_numbers<[1], [1], [0], [0], [0, 0, 1, 0], [], []>} : vector<80x8xf32>, vector<128x8xf32>, vector<80x128xf32> -> vector<80x128xf32>
    %cst_19 = arith.constant 0.176776692 : f32
    %73 = vector.broadcast %cst_19 : f32 to vector<80x128xf32>
    %74 = arith.mulf %72, %73 : vector<80x128xf32>
    %cst_20 = arith.constant -1.000000e+30 : f32
    %75 = vector.shape_cast %6 : vector<80x1xi1> to vector<80x1xi1>
    %76 = vector.broadcast %75 : vector<80x1xi1> to vector<80x128xi1>
    %77 = vector.broadcast %cst_20 : f32 to vector<80x128xf32>
    %78 = arith.select %76, %74, %77 : vector<80x128xi1>, vector<80x128xf32>
    %cst_21 = arith.constant dense<0xFF800000> : vector<128xf32>
    %79 = vector.multi_reduction <maximumf>, %78, %cst_21 [0] : vector<80x128xf32> to vector<128xf32>
    %80 = vector.shape_cast %79 : vector<128xf32> to vector<1x128xf32>
    %81 = vector.broadcast %80 : vector<1x128xf32> to vector<80x128xf32>
    %82 = arith.subf %78, %81 : vector<80x128xf32>
    %83 = math.exp %82 : vector<80x128xf32>
    %cst_22 = arith.constant dense<0.000000e+00> : vector<128xf32>
    %84 = vector.multi_reduction <add>, %83, %cst_22 [0] : vector<80x128xf32> to vector<128xf32>
    %85 = vector.shape_cast %84 : vector<128xf32> to vector<1x128xf32>
    %86 = vector.broadcast %85 : vector<1x128xf32> to vector<80x128xf32>
    %87 = arith.divf %83, %86 : vector<80x128xf32>
    %c16_i32_23 = arith.constant 16 : i32
    %88 = vector.broadcast %c16_i32_23 : i32 to vector<1x128xi32>
    %89 = arith.cmpi sge, %10, %88 : vector<1x128xi32>
    %c24_i32 = arith.constant 24 : i32
    %90 = vector.broadcast %c24_i32 : i32 to vector<1x128xi32>
    %91 = arith.cmpi slt, %10, %90 : vector<1x128xi32>
    %92 = arith.andi %89, %91 : vector<1x128xi1>
    %cst_24 = arith.constant 0.000000e+00 : f32
    %93 = vector.shape_cast %92 : vector<1x128xi1> to vector<1x128xi1>
    %94 = vector.broadcast %93 : vector<1x128xi1> to vector<128x128xi1>
    %95 = vector.broadcast %cst_24 : f32 to vector<128x128xf32>
    %96 = arith.select %94, %3, %95 : vector<128x128xi1>, vector<128x128xf32>
    %cst_25 = arith.constant dense<0.000000e+00> : vector<80x128xf32>
    %97 = tpu.matmul %87, %96, %cst_25 {dimension_numbers = #tpu.dot_dimension_numbers<[1], [0], [0], [1], [0, 0, 1, 1], [], []>} : vector<80x128xf32>, vector<128x128xf32>, vector<80x128xf32> -> vector<80x128xf32>
    %98 = arith.addf %69, %97 : vector<80x128xf32>
    %99 = vector.extract_strided_slice %11 {offsets = [0, 24], sizes = [80, 8], strides = [1, 1]} : vector<80x128xf32> to vector<80x8xf32>
    %100 = vector.extract_strided_slice %2 {offsets = [0, 24], sizes = [128, 8], strides = [1, 1]} : vector<128x128xf32> to vector<128x8xf32>
    %cst_26 = arith.constant dense<0.000000e+00> : vector<80x128xf32>
    %101 = tpu.matmul %99, %100, %cst_26 {dimension_numbers = #tpu.dot_dimension_numbers<[1], [1], [0], [0], [0, 0, 1, 0], [], []>} : vector<80x8xf32>, vector<128x8xf32>, vector<80x128xf32> -> vector<80x128xf32>
    %cst_27 = arith.constant 0.176776692 : f32
    %102 = vector.broadcast %cst_27 : f32 to vector<80x128xf32>
    %103 = arith.mulf %101, %102 : vector<80x128xf32>
    %cst_28 = arith.constant -1.000000e+30 : f32
    %104 = vector.shape_cast %6 : vector<80x1xi1> to vector<80x1xi1>
    %105 = vector.broadcast %104 : vector<80x1xi1> to vector<80x128xi1>
    %106 = vector.broadcast %cst_28 : f32 to vector<80x128xf32>
    %107 = arith.select %105, %103, %106 : vector<80x128xi1>, vector<80x128xf32>
    %cst_29 = arith.constant dense<0xFF800000> : vector<128xf32>
    %108 = vector.multi_reduction <maximumf>, %107, %cst_29 [0] : vector<80x128xf32> to vector<128xf32>
    %109 = vector.shape_cast %108 : vector<128xf32> to vector<1x128xf32>
    %110 = vector.broadcast %109 : vector<1x128xf32> to vector<80x128xf32>
    %111 = arith.subf %107, %110 : vector<80x128xf32>
    %112 = math.exp %111 : vector<80x128xf32>
    %cst_30 = arith.constant dense<0.000000e+00> : vector<128xf32>
    %113 = vector.multi_reduction <add>, %112, %cst_30 [0] : vector<80x128xf32> to vector<128xf32>
    %114 = vector.shape_cast %113 : vector<128xf32> to vector<1x128xf32>
    %115 = vector.broadcast %114 : vector<1x128xf32> to vector<80x128xf32>
    %116 = arith.divf %112, %115 : vector<80x128xf32>
    %c24_i32_31 = arith.constant 24 : i32
    %117 = vector.broadcast %c24_i32_31 : i32 to vector<1x128xi32>
    %118 = arith.cmpi sge, %10, %117 : vector<1x128xi32>
    %c32_i32 = arith.constant 32 : i32
    %119 = vector.broadcast %c32_i32 : i32 to vector<1x128xi32>
    %120 = arith.cmpi slt, %10, %119 : vector<1x128xi32>
    %121 = arith.andi %118, %120 : vector<1x128xi1>
    %cst_32 = arith.constant 0.000000e+00 : f32
    %122 = vector.shape_cast %121 : vector<1x128xi1> to vector<1x128xi1>
    %123 = vector.broadcast %122 : vector<1x128xi1> to vector<128x128xi1>
    %124 = vector.broadcast %cst_32 : f32 to vector<128x128xf32>
    %125 = arith.select %123, %3, %124 : vector<128x128xi1>, vector<128x128xf32>
    %cst_33 = arith.constant dense<0.000000e+00> : vector<80x128xf32>
    %126 = tpu.matmul %116, %125, %cst_33 {dimension_numbers = #tpu.dot_dimension_numbers<[1], [0], [0], [1], [0, 0, 1, 1], [], []>} : vector<80x128xf32>, vector<128x128xf32>, vector<80x128xf32> -> vector<80x128xf32>
    %127 = arith.addf %98, %126 : vector<80x128xf32>
    %128 = arith.truncf %127 : vector<80x128xf32> to vector<80x128xbf16>
    %c0_34 = arith.constant 0 : index
    %c0_35 = arith.constant 0 : index
    %129 = vector.load %arg4[%c0_34, %c0_35] : memref<128x128xbf16, #tpu.memory_space<vmem>>, vector<128x128xbf16>
    %cst_36 = arith.constant dense<0.000000e+00> : vector<80x128xf32>
    %130 = tpu.matmul %128, %129, %cst_36 {dimension_numbers = #tpu.dot_dimension_numbers<[1], [0], [0], [1], [0, 0, 1, 1], [], []>} : vector<80x128xbf16>, vector<128x128xbf16>, vector<80x128xf32> -> vector<80x128xf32>
    %c0_37 = arith.constant 0 : index
    %c0_38 = arith.constant 0 : index
    %131 = vector.load %arg5[%c0_37, %c0_38] : memref<1x128xf32, #tpu.memory_space<vmem>>, vector<1x128xf32>
    %132 = vector.broadcast %131 : vector<1x128xf32> to vector<80x128xf32>
    %133 = arith.addf %130, %132 : vector<80x128xf32>
    %cst_39 = arith.constant 0.000000e+00 : f32
    %134 = vector.broadcast %cst_39 : f32 to vector<80x128xf32>
    %135 = arith.maximumf %133, %134 : vector<80x128xf32>
    %136 = arith.addf %127, %135 : vector<80x128xf32>
    %cst_40 = arith.constant 0.000000e+00 : f32
    %137 = vector.shape_cast %6 : vector<80x1xi1> to vector<80x1xi1>
    %138 = vector.broadcast %137 : vector<80x1xi1> to vector<80x128xi1>
    %139 = vector.broadcast %cst_40 : f32 to vector<80x128xf32>
    %140 = arith.select %138, %136, %139 : vector<80x128xi1>, vector<80x128xf32>
    %141 = arith.truncf %140 : vector<80x128xf32> to vector<80x128xbf16>
    %c0_41 = arith.constant 0 : index
    %c0_42 = arith.constant 0 : index
    %142 = vector.load %arg6[%c0_41, %c0_42] : memref<128x384xbf16, #tpu.memory_space<vmem>>, vector<128x384xbf16>
    %cst_43 = arith.constant dense<0.000000e+00> : vector<80x384xf32>
    %143 = tpu.matmul %141, %142, %cst_43 {dimension_numbers = #tpu.dot_dimension_numbers<[1], [0], [0], [1], [0, 0, 1, 1], [], []>} : vector<80x128xbf16>, vector<128x384xbf16>, vector<80x384xf32> -> vector<80x384xf32>
    %c0_44 = arith.constant 0 : index
    %c0_45 = arith.constant 0 : index
    %144 = vector.load %arg7[%c0_44, %c0_45] : memref<1x384xf32, #tpu.memory_space<vmem>>, vector<1x384xf32>
    %145 = vector.broadcast %144 : vector<1x384xf32> to vector<80x384xf32>
    %146 = arith.addf %143, %145 : vector<80x384xf32>
    %cst_46 = arith.constant 0.000000e+00 : f32
    %147 = vector.shape_cast %6 : vector<80x1xi1> to vector<80x1xi1>
    %148 = vector.broadcast %147 : vector<80x1xi1> to vector<80x384xi1>
    %149 = vector.broadcast %cst_46 : f32 to vector<80x384xf32>
    %150 = arith.select %148, %146, %149 : vector<80x384xi1>, vector<80x384xf32>
    %151 = vector.extract_strided_slice %150 {offsets = [0, 0], sizes = [80, 128], strides = [1, 1]} : vector<80x384xf32> to vector<80x128xf32>
    %152 = vector.extract_strided_slice %150 {offsets = [0, 128], sizes = [80, 128], strides = [1, 1]} : vector<80x384xf32> to vector<80x128xf32>
    %153 = vector.extract_strided_slice %150 {offsets = [0, 256], sizes = [80, 128], strides = [1, 1]} : vector<80x384xf32> to vector<80x128xf32>
    %154 = vector.extract_strided_slice %151 {offsets = [0, 0], sizes = [80, 8], strides = [1, 1]} : vector<80x128xf32> to vector<80x8xf32>
    %155 = vector.extract_strided_slice %152 {offsets = [0, 0], sizes = [80, 8], strides = [1, 1]} : vector<80x128xf32> to vector<80x8xf32>
    %cst_47 = arith.constant dense<0.000000e+00> : vector<80x80xf32>
    %156 = tpu.matmul %154, %155, %cst_47 {dimension_numbers = #tpu.dot_dimension_numbers<[1], [1], [0], [0], [0, 0, 1, 0], [], []>} : vector<80x8xf32>, vector<80x8xf32>, vector<80x80xf32> -> vector<80x80xf32>
    %cst_48 = arith.constant 0.176776692 : f32
    %157 = vector.broadcast %cst_48 : f32 to vector<80x80xf32>
    %158 = arith.mulf %156, %157 : vector<80x80xf32>
    %cst_49 = arith.constant -1.000000e+30 : f32
    %159 = vector.shape_cast %6 : vector<80x1xi1> to vector<80x1xi1>
    %160 = vector.broadcast %159 : vector<80x1xi1> to vector<80x80xi1>
    %161 = vector.broadcast %cst_49 : f32 to vector<80x80xf32>
    %162 = arith.select %160, %158, %161 : vector<80x80xi1>, vector<80x80xf32>
    %cst_50 = arith.constant dense<0xFF800000> : vector<80xf32>
    %163 = vector.multi_reduction <maximumf>, %162, %cst_50 [0] : vector<80x80xf32> to vector<80xf32>
    %164 = vector.shape_cast %163 : vector<80xf32> to vector<1x80xf32>
    %165 = vector.broadcast %164 : vector<1x80xf32> to vector<80x80xf32>
    %166 = arith.subf %162, %165 : vector<80x80xf32>
    %167 = math.exp %166 : vector<80x80xf32>
    %cst_51 = arith.constant dense<0.000000e+00> : vector<80xf32>
    %168 = vector.multi_reduction <add>, %167, %cst_51 [0] : vector<80x80xf32> to vector<80xf32>
    %169 = vector.shape_cast %168 : vector<80xf32> to vector<1x80xf32>
    %170 = vector.broadcast %169 : vector<1x80xf32> to vector<80x80xf32>
    %171 = arith.divf %167, %170 : vector<80x80xf32>
    %c0_i32_52 = arith.constant 0 : i32
    %172 = vector.broadcast %c0_i32_52 : i32 to vector<1x128xi32>
    %173 = arith.cmpi sge, %10, %172 : vector<1x128xi32>
    %c8_i32_53 = arith.constant 8 : i32
    %174 = vector.broadcast %c8_i32_53 : i32 to vector<1x128xi32>
    %175 = arith.cmpi slt, %10, %174 : vector<1x128xi32>
    %176 = arith.andi %173, %175 : vector<1x128xi1>
    %cst_54 = arith.constant 0.000000e+00 : f32
    %177 = vector.shape_cast %176 : vector<1x128xi1> to vector<1x128xi1>
    %178 = vector.broadcast %177 : vector<1x128xi1> to vector<80x128xi1>
    %179 = vector.broadcast %cst_54 : f32 to vector<80x128xf32>
    %180 = arith.select %178, %153, %179 : vector<80x128xi1>, vector<80x128xf32>
    %cst_55 = arith.constant dense<0.000000e+00> : vector<80x128xf32>
    %181 = tpu.matmul %171, %180, %cst_55 {dimension_numbers = #tpu.dot_dimension_numbers<[1], [0], [0], [1], [0, 0, 1, 1], [], []>} : vector<80x80xf32>, vector<80x128xf32>, vector<80x128xf32> -> vector<80x128xf32>
    %182 = arith.addf %151, %181 : vector<80x128xf32>
    %183 = vector.extract_strided_slice %151 {offsets = [0, 8], sizes = [80, 8], strides = [1, 1]} : vector<80x128xf32> to vector<80x8xf32>
    %184 = vector.extract_strided_slice %152 {offsets = [0, 8], sizes = [80, 8], strides = [1, 1]} : vector<80x128xf32> to vector<80x8xf32>
    %cst_56 = arith.constant dense<0.000000e+00> : vector<80x80xf32>
    %185 = tpu.matmul %183, %184, %cst_56 {dimension_numbers = #tpu.dot_dimension_numbers<[1], [1], [0], [0], [0, 0, 1, 0], [], []>} : vector<80x8xf32>, vector<80x8xf32>, vector<80x80xf32> -> vector<80x80xf32>
    %cst_57 = arith.constant 0.176776692 : f32
    %186 = vector.broadcast %cst_57 : f32 to vector<80x80xf32>
    %187 = arith.mulf %185, %186 : vector<80x80xf32>
    %cst_58 = arith.constant -1.000000e+30 : f32
    %188 = vector.shape_cast %6 : vector<80x1xi1> to vector<80x1xi1>
    %189 = vector.broadcast %188 : vector<80x1xi1> to vector<80x80xi1>
    %190 = vector.broadcast %cst_58 : f32 to vector<80x80xf32>
    %191 = arith.select %189, %187, %190 : vector<80x80xi1>, vector<80x80xf32>
    %cst_59 = arith.constant dense<0xFF800000> : vector<80xf32>
    %192 = vector.multi_reduction <maximumf>, %191, %cst_59 [0] : vector<80x80xf32> to vector<80xf32>
    %193 = vector.shape_cast %192 : vector<80xf32> to vector<1x80xf32>
    %194 = vector.broadcast %193 : vector<1x80xf32> to vector<80x80xf32>
    %195 = arith.subf %191, %194 : vector<80x80xf32>
    %196 = math.exp %195 : vector<80x80xf32>
    %cst_60 = arith.constant dense<0.000000e+00> : vector<80xf32>
    %197 = vector.multi_reduction <add>, %196, %cst_60 [0] : vector<80x80xf32> to vector<80xf32>
    %198 = vector.shape_cast %197 : vector<80xf32> to vector<1x80xf32>
    %199 = vector.broadcast %198 : vector<1x80xf32> to vector<80x80xf32>
    %200 = arith.divf %196, %199 : vector<80x80xf32>
    %c8_i32_61 = arith.constant 8 : i32
    %201 = vector.broadcast %c8_i32_61 : i32 to vector<1x128xi32>
    %202 = arith.cmpi sge, %10, %201 : vector<1x128xi32>
    %c16_i32_62 = arith.constant 16 : i32
    %203 = vector.broadcast %c16_i32_62 : i32 to vector<1x128xi32>
    %204 = arith.cmpi slt, %10, %203 : vector<1x128xi32>
    %205 = arith.andi %202, %204 : vector<1x128xi1>
    %cst_63 = arith.constant 0.000000e+00 : f32
    %206 = vector.shape_cast %205 : vector<1x128xi1> to vector<1x128xi1>
    %207 = vector.broadcast %206 : vector<1x128xi1> to vector<80x128xi1>
    %208 = vector.broadcast %cst_63 : f32 to vector<80x128xf32>
    %209 = arith.select %207, %153, %208 : vector<80x128xi1>, vector<80x128xf32>
    %cst_64 = arith.constant dense<0.000000e+00> : vector<80x128xf32>
    %210 = tpu.matmul %200, %209, %cst_64 {dimension_numbers = #tpu.dot_dimension_numbers<[1], [0], [0], [1], [0, 0, 1, 1], [], []>} : vector<80x80xf32>, vector<80x128xf32>, vector<80x128xf32> -> vector<80x128xf32>
    %211 = arith.addf %182, %210 : vector<80x128xf32>
    %212 = vector.extract_strided_slice %151 {offsets = [0, 16], sizes = [80, 8], strides = [1, 1]} : vector<80x128xf32> to vector<80x8xf32>
    %213 = vector.extract_strided_slice %152 {offsets = [0, 16], sizes = [80, 8], strides = [1, 1]} : vector<80x128xf32> to vector<80x8xf32>
    %cst_65 = arith.constant dense<0.000000e+00> : vector<80x80xf32>
    %214 = tpu.matmul %212, %213, %cst_65 {dimension_numbers = #tpu.dot_dimension_numbers<[1], [1], [0], [0], [0, 0, 1, 0], [], []>} : vector<80x8xf32>, vector<80x8xf32>, vector<80x80xf32> -> vector<80x80xf32>
    %cst_66 = arith.constant 0.176776692 : f32
    %215 = vector.broadcast %cst_66 : f32 to vector<80x80xf32>
    %216 = arith.mulf %214, %215 : vector<80x80xf32>
    %cst_67 = arith.constant -1.000000e+30 : f32
    %217 = vector.shape_cast %6 : vector<80x1xi1> to vector<80x1xi1>
    %218 = vector.broadcast %217 : vector<80x1xi1> to vector<80x80xi1>
    %219 = vector.broadcast %cst_67 : f32 to vector<80x80xf32>
    %220 = arith.select %218, %216, %219 : vector<80x80xi1>, vector<80x80xf32>
    %cst_68 = arith.constant dense<0xFF800000> : vector<80xf32>
    %221 = vector.multi_reduction <maximumf>, %220, %cst_68 [0] : vector<80x80xf32> to vector<80xf32>
    %222 = vector.shape_cast %221 : vector<80xf32> to vector<1x80xf32>
    %223 = vector.broadcast %222 : vector<1x80xf32> to vector<80x80xf32>
    %224 = arith.subf %220, %223 : vector<80x80xf32>
    %225 = math.exp %224 : vector<80x80xf32>
    %cst_69 = arith.constant dense<0.000000e+00> : vector<80xf32>
    %226 = vector.multi_reduction <add>, %225, %cst_69 [0] : vector<80x80xf32> to vector<80xf32>
    %227 = vector.shape_cast %226 : vector<80xf32> to vector<1x80xf32>
    %228 = vector.broadcast %227 : vector<1x80xf32> to vector<80x80xf32>
    %229 = arith.divf %225, %228 : vector<80x80xf32>
    %c16_i32_70 = arith.constant 16 : i32
    %230 = vector.broadcast %c16_i32_70 : i32 to vector<1x128xi32>
    %231 = arith.cmpi sge, %10, %230 : vector<1x128xi32>
    %c24_i32_71 = arith.constant 24 : i32
    %232 = vector.broadcast %c24_i32_71 : i32 to vector<1x128xi32>
    %233 = arith.cmpi slt, %10, %232 : vector<1x128xi32>
    %234 = arith.andi %231, %233 : vector<1x128xi1>
    %cst_72 = arith.constant 0.000000e+00 : f32
    %235 = vector.shape_cast %234 : vector<1x128xi1> to vector<1x128xi1>
    %236 = vector.broadcast %235 : vector<1x128xi1> to vector<80x128xi1>
    %237 = vector.broadcast %cst_72 : f32 to vector<80x128xf32>
    %238 = arith.select %236, %153, %237 : vector<80x128xi1>, vector<80x128xf32>
    %cst_73 = arith.constant dense<0.000000e+00> : vector<80x128xf32>
    %239 = tpu.matmul %229, %238, %cst_73 {dimension_numbers = #tpu.dot_dimension_numbers<[1], [0], [0], [1], [0, 0, 1, 1], [], []>} : vector<80x80xf32>, vector<80x128xf32>, vector<80x128xf32> -> vector<80x128xf32>
    %240 = arith.addf %211, %239 : vector<80x128xf32>
    %241 = vector.extract_strided_slice %151 {offsets = [0, 24], sizes = [80, 8], strides = [1, 1]} : vector<80x128xf32> to vector<80x8xf32>
    %242 = vector.extract_strided_slice %152 {offsets = [0, 24], sizes = [80, 8], strides = [1, 1]} : vector<80x128xf32> to vector<80x8xf32>
    %cst_74 = arith.constant dense<0.000000e+00> : vector<80x80xf32>
    %243 = tpu.matmul %241, %242, %cst_74 {dimension_numbers = #tpu.dot_dimension_numbers<[1], [1], [0], [0], [0, 0, 1, 0], [], []>} : vector<80x8xf32>, vector<80x8xf32>, vector<80x80xf32> -> vector<80x80xf32>
    %cst_75 = arith.constant 0.176776692 : f32
    %244 = vector.broadcast %cst_75 : f32 to vector<80x80xf32>
    %245 = arith.mulf %243, %244 : vector<80x80xf32>
    %cst_76 = arith.constant -1.000000e+30 : f32
    %246 = vector.shape_cast %6 : vector<80x1xi1> to vector<80x1xi1>
    %247 = vector.broadcast %246 : vector<80x1xi1> to vector<80x80xi1>
    %248 = vector.broadcast %cst_76 : f32 to vector<80x80xf32>
    %249 = arith.select %247, %245, %248 : vector<80x80xi1>, vector<80x80xf32>
    %cst_77 = arith.constant dense<0xFF800000> : vector<80xf32>
    %250 = vector.multi_reduction <maximumf>, %249, %cst_77 [0] : vector<80x80xf32> to vector<80xf32>
    %251 = vector.shape_cast %250 : vector<80xf32> to vector<1x80xf32>
    %252 = vector.broadcast %251 : vector<1x80xf32> to vector<80x80xf32>
    %253 = arith.subf %249, %252 : vector<80x80xf32>
    %254 = math.exp %253 : vector<80x80xf32>
    %cst_78 = arith.constant dense<0.000000e+00> : vector<80xf32>
    %255 = vector.multi_reduction <add>, %254, %cst_78 [0] : vector<80x80xf32> to vector<80xf32>
    %256 = vector.shape_cast %255 : vector<80xf32> to vector<1x80xf32>
    %257 = vector.broadcast %256 : vector<1x80xf32> to vector<80x80xf32>
    %258 = arith.divf %254, %257 : vector<80x80xf32>
    %c24_i32_79 = arith.constant 24 : i32
    %259 = vector.broadcast %c24_i32_79 : i32 to vector<1x128xi32>
    %260 = arith.cmpi sge, %10, %259 : vector<1x128xi32>
    %c32_i32_80 = arith.constant 32 : i32
    %261 = vector.broadcast %c32_i32_80 : i32 to vector<1x128xi32>
    %262 = arith.cmpi slt, %10, %261 : vector<1x128xi32>
    %263 = arith.andi %260, %262 : vector<1x128xi1>
    %cst_81 = arith.constant 0.000000e+00 : f32
    %264 = vector.shape_cast %263 : vector<1x128xi1> to vector<1x128xi1>
    %265 = vector.broadcast %264 : vector<1x128xi1> to vector<80x128xi1>
    %266 = vector.broadcast %cst_81 : f32 to vector<80x128xf32>
    %267 = arith.select %265, %153, %266 : vector<80x128xi1>, vector<80x128xf32>
    %cst_82 = arith.constant dense<0.000000e+00> : vector<80x128xf32>
    %268 = tpu.matmul %258, %267, %cst_82 {dimension_numbers = #tpu.dot_dimension_numbers<[1], [0], [0], [1], [0, 0, 1, 1], [], []>} : vector<80x80xf32>, vector<80x128xf32>, vector<80x128xf32> -> vector<80x128xf32>
    %269 = arith.addf %240, %268 : vector<80x128xf32>
    %270 = arith.truncf %269 : vector<80x128xf32> to vector<80x128xbf16>
    %c0_83 = arith.constant 0 : index
    %c0_84 = arith.constant 0 : index
    %271 = vector.load %arg8[%c0_83, %c0_84] : memref<128x128xbf16, #tpu.memory_space<vmem>>, vector<128x128xbf16>
    %cst_85 = arith.constant dense<0.000000e+00> : vector<80x128xf32>
    %272 = tpu.matmul %270, %271, %cst_85 {dimension_numbers = #tpu.dot_dimension_numbers<[1], [0], [0], [1], [0, 0, 1, 1], [], []>} : vector<80x128xbf16>, vector<128x128xbf16>, vector<80x128xf32> -> vector<80x128xf32>
    %c0_86 = arith.constant 0 : index
    %c0_87 = arith.constant 0 : index
    %273 = vector.load %arg9[%c0_86, %c0_87] : memref<1x128xf32, #tpu.memory_space<vmem>>, vector<1x128xf32>
    %274 = vector.broadcast %273 : vector<1x128xf32> to vector<80x128xf32>
    %275 = arith.addf %272, %274 : vector<80x128xf32>
    %cst_88 = arith.constant 0.000000e+00 : f32
    %276 = vector.broadcast %cst_88 : f32 to vector<80x128xf32>
    %277 = arith.maximumf %275, %276 : vector<80x128xf32>
    %278 = arith.addf %269, %277 : vector<80x128xf32>
    %cst_89 = arith.constant 0.000000e+00 : f32
    %279 = vector.shape_cast %6 : vector<80x1xi1> to vector<80x1xi1>
    %280 = vector.broadcast %279 : vector<80x1xi1> to vector<80x128xi1>
    %281 = vector.broadcast %cst_89 : f32 to vector<80x128xf32>
    %282 = arith.select %280, %278, %281 : vector<80x128xi1>, vector<80x128xf32>
    %283 = arith.truncf %282 : vector<80x128xf32> to vector<80x128xbf16>
    %c0_90 = arith.constant 0 : index
    %c0_91 = arith.constant 0 : index
    %284 = vector.load %arg10[%c0_90, %c0_91] : memref<128x256xbf16, #tpu.memory_space<vmem>>, vector<128x256xbf16>
    %cst_92 = arith.constant dense<0.000000e+00> : vector<80x256xf32>
    %285 = tpu.matmul %283, %284, %cst_92 {dimension_numbers = #tpu.dot_dimension_numbers<[1], [0], [0], [1], [0, 0, 1, 1], [], []>} : vector<80x128xbf16>, vector<128x256xbf16>, vector<80x256xf32> -> vector<80x256xf32>
    %c0_93 = arith.constant 0 : index
    %c0_94 = arith.constant 0 : index
    %286 = vector.load %arg11[%c0_93, %c0_94] : memref<1x256xf32, #tpu.memory_space<vmem>>, vector<1x256xf32>
    %287 = vector.broadcast %286 : vector<1x256xf32> to vector<80x256xf32>
    %288 = arith.addf %285, %287 : vector<80x256xf32>
    %cst_95 = arith.constant 0.000000e+00 : f32
    %289 = vector.shape_cast %6 : vector<80x1xi1> to vector<80x1xi1>
    %290 = vector.broadcast %289 : vector<80x1xi1> to vector<80x256xi1>
    %291 = vector.broadcast %cst_95 : f32 to vector<80x256xf32>
    %292 = arith.select %290, %288, %291 : vector<80x256xi1>, vector<80x256xf32>
    %c0_96 = arith.constant 0 : index
    %c0_97 = arith.constant 0 : index
    %293 = vector.load %arg3[%c0_96, %c0_97] : memref<8x128xf32, #tpu.memory_space<vmem>>, vector<8x128xf32>
    %294 = vector.extract_strided_slice %292 {offsets = [0, 0], sizes = [80, 128], strides = [1, 1]} : vector<80x256xf32> to vector<80x128xf32>
    %295 = vector.extract_strided_slice %292 {offsets = [0, 128], sizes = [80, 128], strides = [1, 1]} : vector<80x256xf32> to vector<80x128xf32>
    %296 = vector.extract_strided_slice %293 {offsets = [0, 0], sizes = [8, 8], strides = [1, 1]} : vector<8x128xf32> to vector<8x8xf32>
    %297 = vector.extract_strided_slice %294 {offsets = [0, 0], sizes = [80, 8], strides = [1, 1]} : vector<80x128xf32> to vector<80x8xf32>
    %cst_98 = arith.constant dense<0.000000e+00> : vector<8x80xf32>
    %298 = tpu.matmul %296, %297, %cst_98 {dimension_numbers = #tpu.dot_dimension_numbers<[1], [1], [0], [0], [0, 0, 1, 0], [], []>} : vector<8x8xf32>, vector<80x8xf32>, vector<8x80xf32> -> vector<8x80xf32>
    %cst_99 = arith.constant 0.176776692 : f32
    %299 = vector.broadcast %cst_99 : f32 to vector<8x80xf32>
    %300 = arith.mulf %298, %299 : vector<8x80xf32>
    %cst_100 = arith.constant -1.000000e+30 : f32
    %301 = vector.shape_cast %9 : vector<8x1xi1> to vector<8x1xi1>
    %302 = vector.broadcast %301 : vector<8x1xi1> to vector<8x80xi1>
    %303 = vector.broadcast %cst_100 : f32 to vector<8x80xf32>
    %304 = arith.select %302, %300, %303 : vector<8x80xi1>, vector<8x80xf32>
    %cst_101 = arith.constant dense<0xFF800000> : vector<80xf32>
    %305 = vector.multi_reduction <maximumf>, %304, %cst_101 [0] : vector<8x80xf32> to vector<80xf32>
    %306 = vector.shape_cast %305 : vector<80xf32> to vector<1x80xf32>
    %307 = vector.broadcast %306 : vector<1x80xf32> to vector<8x80xf32>
    %308 = arith.subf %304, %307 : vector<8x80xf32>
    %309 = math.exp %308 : vector<8x80xf32>
    %cst_102 = arith.constant dense<0.000000e+00> : vector<80xf32>
    %310 = vector.multi_reduction <add>, %309, %cst_102 [0] : vector<8x80xf32> to vector<80xf32>
    %311 = vector.shape_cast %310 : vector<80xf32> to vector<1x80xf32>
    %312 = vector.broadcast %311 : vector<1x80xf32> to vector<8x80xf32>
    %313 = arith.divf %309, %312 : vector<8x80xf32>
    %c0_i32_103 = arith.constant 0 : i32
    %314 = vector.broadcast %c0_i32_103 : i32 to vector<1x128xi32>
    %315 = arith.cmpi sge, %10, %314 : vector<1x128xi32>
    %c8_i32_104 = arith.constant 8 : i32
    %316 = vector.broadcast %c8_i32_104 : i32 to vector<1x128xi32>
    %317 = arith.cmpi slt, %10, %316 : vector<1x128xi32>
    %318 = arith.andi %315, %317 : vector<1x128xi1>
    %cst_105 = arith.constant 0.000000e+00 : f32
    %319 = vector.shape_cast %318 : vector<1x128xi1> to vector<1x128xi1>
    %320 = vector.broadcast %319 : vector<1x128xi1> to vector<80x128xi1>
    %321 = vector.broadcast %cst_105 : f32 to vector<80x128xf32>
    %322 = arith.select %320, %295, %321 : vector<80x128xi1>, vector<80x128xf32>
    %cst_106 = arith.constant dense<0.000000e+00> : vector<8x128xf32>
    %323 = tpu.matmul %313, %322, %cst_106 {dimension_numbers = #tpu.dot_dimension_numbers<[1], [0], [0], [1], [0, 0, 1, 1], [], []>} : vector<8x80xf32>, vector<80x128xf32>, vector<8x128xf32> -> vector<8x128xf32>
    %324 = arith.addf %293, %323 : vector<8x128xf32>
    %325 = vector.extract_strided_slice %293 {offsets = [0, 8], sizes = [8, 8], strides = [1, 1]} : vector<8x128xf32> to vector<8x8xf32>
    %326 = vector.extract_strided_slice %294 {offsets = [0, 8], sizes = [80, 8], strides = [1, 1]} : vector<80x128xf32> to vector<80x8xf32>
    %cst_107 = arith.constant dense<0.000000e+00> : vector<8x80xf32>
    %327 = tpu.matmul %325, %326, %cst_107 {dimension_numbers = #tpu.dot_dimension_numbers<[1], [1], [0], [0], [0, 0, 1, 0], [], []>} : vector<8x8xf32>, vector<80x8xf32>, vector<8x80xf32> -> vector<8x80xf32>
    %cst_108 = arith.constant 0.176776692 : f32
    %328 = vector.broadcast %cst_108 : f32 to vector<8x80xf32>
    %329 = arith.mulf %327, %328 : vector<8x80xf32>
    %cst_109 = arith.constant -1.000000e+30 : f32
    %330 = vector.shape_cast %9 : vector<8x1xi1> to vector<8x1xi1>
    %331 = vector.broadcast %330 : vector<8x1xi1> to vector<8x80xi1>
    %332 = vector.broadcast %cst_109 : f32 to vector<8x80xf32>
    %333 = arith.select %331, %329, %332 : vector<8x80xi1>, vector<8x80xf32>
    %cst_110 = arith.constant dense<0xFF800000> : vector<80xf32>
    %334 = vector.multi_reduction <maximumf>, %333, %cst_110 [0] : vector<8x80xf32> to vector<80xf32>
    %335 = vector.shape_cast %334 : vector<80xf32> to vector<1x80xf32>
    %336 = vector.broadcast %335 : vector<1x80xf32> to vector<8x80xf32>
    %337 = arith.subf %333, %336 : vector<8x80xf32>
    %338 = math.exp %337 : vector<8x80xf32>
    %cst_111 = arith.constant dense<0.000000e+00> : vector<80xf32>
    %339 = vector.multi_reduction <add>, %338, %cst_111 [0] : vector<8x80xf32> to vector<80xf32>
    %340 = vector.shape_cast %339 : vector<80xf32> to vector<1x80xf32>
    %341 = vector.broadcast %340 : vector<1x80xf32> to vector<8x80xf32>
    %342 = arith.divf %338, %341 : vector<8x80xf32>
    %c8_i32_112 = arith.constant 8 : i32
    %343 = vector.broadcast %c8_i32_112 : i32 to vector<1x128xi32>
    %344 = arith.cmpi sge, %10, %343 : vector<1x128xi32>
    %c16_i32_113 = arith.constant 16 : i32
    %345 = vector.broadcast %c16_i32_113 : i32 to vector<1x128xi32>
    %346 = arith.cmpi slt, %10, %345 : vector<1x128xi32>
    %347 = arith.andi %344, %346 : vector<1x128xi1>
    %cst_114 = arith.constant 0.000000e+00 : f32
    %348 = vector.shape_cast %347 : vector<1x128xi1> to vector<1x128xi1>
    %349 = vector.broadcast %348 : vector<1x128xi1> to vector<80x128xi1>
    %350 = vector.broadcast %cst_114 : f32 to vector<80x128xf32>
    %351 = arith.select %349, %295, %350 : vector<80x128xi1>, vector<80x128xf32>
    %cst_115 = arith.constant dense<0.000000e+00> : vector<8x128xf32>
    %352 = tpu.matmul %342, %351, %cst_115 {dimension_numbers = #tpu.dot_dimension_numbers<[1], [0], [0], [1], [0, 0, 1, 1], [], []>} : vector<8x80xf32>, vector<80x128xf32>, vector<8x128xf32> -> vector<8x128xf32>
    %353 = arith.addf %324, %352 : vector<8x128xf32>
    %354 = vector.extract_strided_slice %293 {offsets = [0, 16], sizes = [8, 8], strides = [1, 1]} : vector<8x128xf32> to vector<8x8xf32>
    %355 = vector.extract_strided_slice %294 {offsets = [0, 16], sizes = [80, 8], strides = [1, 1]} : vector<80x128xf32> to vector<80x8xf32>
    %cst_116 = arith.constant dense<0.000000e+00> : vector<8x80xf32>
    %356 = tpu.matmul %354, %355, %cst_116 {dimension_numbers = #tpu.dot_dimension_numbers<[1], [1], [0], [0], [0, 0, 1, 0], [], []>} : vector<8x8xf32>, vector<80x8xf32>, vector<8x80xf32> -> vector<8x80xf32>
    %cst_117 = arith.constant 0.176776692 : f32
    %357 = vector.broadcast %cst_117 : f32 to vector<8x80xf32>
    %358 = arith.mulf %356, %357 : vector<8x80xf32>
    %cst_118 = arith.constant -1.000000e+30 : f32
    %359 = vector.shape_cast %9 : vector<8x1xi1> to vector<8x1xi1>
    %360 = vector.broadcast %359 : vector<8x1xi1> to vector<8x80xi1>
    %361 = vector.broadcast %cst_118 : f32 to vector<8x80xf32>
    %362 = arith.select %360, %358, %361 : vector<8x80xi1>, vector<8x80xf32>
    %cst_119 = arith.constant dense<0xFF800000> : vector<80xf32>
    %363 = vector.multi_reduction <maximumf>, %362, %cst_119 [0] : vector<8x80xf32> to vector<80xf32>
    %364 = vector.shape_cast %363 : vector<80xf32> to vector<1x80xf32>
    %365 = vector.broadcast %364 : vector<1x80xf32> to vector<8x80xf32>
    %366 = arith.subf %362, %365 : vector<8x80xf32>
    %367 = math.exp %366 : vector<8x80xf32>
    %cst_120 = arith.constant dense<0.000000e+00> : vector<80xf32>
    %368 = vector.multi_reduction <add>, %367, %cst_120 [0] : vector<8x80xf32> to vector<80xf32>
    %369 = vector.shape_cast %368 : vector<80xf32> to vector<1x80xf32>
    %370 = vector.broadcast %369 : vector<1x80xf32> to vector<8x80xf32>
    %371 = arith.divf %367, %370 : vector<8x80xf32>
    %c16_i32_121 = arith.constant 16 : i32
    %372 = vector.broadcast %c16_i32_121 : i32 to vector<1x128xi32>
    %373 = arith.cmpi sge, %10, %372 : vector<1x128xi32>
    %c24_i32_122 = arith.constant 24 : i32
    %374 = vector.broadcast %c24_i32_122 : i32 to vector<1x128xi32>
    %375 = arith.cmpi slt, %10, %374 : vector<1x128xi32>
    %376 = arith.andi %373, %375 : vector<1x128xi1>
    %cst_123 = arith.constant 0.000000e+00 : f32
    %377 = vector.shape_cast %376 : vector<1x128xi1> to vector<1x128xi1>
    %378 = vector.broadcast %377 : vector<1x128xi1> to vector<80x128xi1>
    %379 = vector.broadcast %cst_123 : f32 to vector<80x128xf32>
    %380 = arith.select %378, %295, %379 : vector<80x128xi1>, vector<80x128xf32>
    %cst_124 = arith.constant dense<0.000000e+00> : vector<8x128xf32>
    %381 = tpu.matmul %371, %380, %cst_124 {dimension_numbers = #tpu.dot_dimension_numbers<[1], [0], [0], [1], [0, 0, 1, 1], [], []>} : vector<8x80xf32>, vector<80x128xf32>, vector<8x128xf32> -> vector<8x128xf32>
    %382 = arith.addf %353, %381 : vector<8x128xf32>
    %383 = vector.extract_strided_slice %293 {offsets = [0, 24], sizes = [8, 8], strides = [1, 1]} : vector<8x128xf32> to vector<8x8xf32>
    %384 = vector.extract_strided_slice %294 {offsets = [0, 24], sizes = [80, 8], strides = [1, 1]} : vector<80x128xf32> to vector<80x8xf32>
    %cst_125 = arith.constant dense<0.000000e+00> : vector<8x80xf32>
    %385 = tpu.matmul %383, %384, %cst_125 {dimension_numbers = #tpu.dot_dimension_numbers<[1], [1], [0], [0], [0, 0, 1, 0], [], []>} : vector<8x8xf32>, vector<80x8xf32>, vector<8x80xf32> -> vector<8x80xf32>
    %cst_126 = arith.constant 0.176776692 : f32
    %386 = vector.broadcast %cst_126 : f32 to vector<8x80xf32>
    %387 = arith.mulf %385, %386 : vector<8x80xf32>
    %cst_127 = arith.constant -1.000000e+30 : f32
    %388 = vector.shape_cast %9 : vector<8x1xi1> to vector<8x1xi1>
    %389 = vector.broadcast %388 : vector<8x1xi1> to vector<8x80xi1>
    %390 = vector.broadcast %cst_127 : f32 to vector<8x80xf32>
    %391 = arith.select %389, %387, %390 : vector<8x80xi1>, vector<8x80xf32>
    %cst_128 = arith.constant dense<0xFF800000> : vector<80xf32>
    %392 = vector.multi_reduction <maximumf>, %391, %cst_128 [0] : vector<8x80xf32> to vector<80xf32>
    %393 = vector.shape_cast %392 : vector<80xf32> to vector<1x80xf32>
    %394 = vector.broadcast %393 : vector<1x80xf32> to vector<8x80xf32>
    %395 = arith.subf %391, %394 : vector<8x80xf32>
    %396 = math.exp %395 : vector<8x80xf32>
    %cst_129 = arith.constant dense<0.000000e+00> : vector<80xf32>
    %397 = vector.multi_reduction <add>, %396, %cst_129 [0] : vector<8x80xf32> to vector<80xf32>
    %398 = vector.shape_cast %397 : vector<80xf32> to vector<1x80xf32>
    %399 = vector.broadcast %398 : vector<1x80xf32> to vector<8x80xf32>
    %400 = arith.divf %396, %399 : vector<8x80xf32>
    %c24_i32_130 = arith.constant 24 : i32
    %401 = vector.broadcast %c24_i32_130 : i32 to vector<1x128xi32>
    %402 = arith.cmpi sge, %10, %401 : vector<1x128xi32>
    %c32_i32_131 = arith.constant 32 : i32
    %403 = vector.broadcast %c32_i32_131 : i32 to vector<1x128xi32>
    %404 = arith.cmpi slt, %10, %403 : vector<1x128xi32>
    %405 = arith.andi %402, %404 : vector<1x128xi1>
    %cst_132 = arith.constant 0.000000e+00 : f32
    %406 = vector.shape_cast %405 : vector<1x128xi1> to vector<1x128xi1>
    %407 = vector.broadcast %406 : vector<1x128xi1> to vector<80x128xi1>
    %408 = vector.broadcast %cst_132 : f32 to vector<80x128xf32>
    %409 = arith.select %407, %295, %408 : vector<80x128xi1>, vector<80x128xf32>
    %cst_133 = arith.constant dense<0.000000e+00> : vector<8x128xf32>
    %410 = tpu.matmul %400, %409, %cst_133 {dimension_numbers = #tpu.dot_dimension_numbers<[1], [0], [0], [1], [0, 0, 1, 1], [], []>} : vector<8x80xf32>, vector<80x128xf32>, vector<8x128xf32> -> vector<8x128xf32>
    %411 = arith.addf %382, %410 : vector<8x128xf32>
    %412 = arith.truncf %411 : vector<8x128xf32> to vector<8x128xbf16>
    %c0_134 = arith.constant 0 : index
    %c0_135 = arith.constant 0 : index
    %413 = vector.load %arg12[%c0_134, %c0_135] : memref<128x128xbf16, #tpu.memory_space<vmem>>, vector<128x128xbf16>
    %cst_136 = arith.constant dense<0.000000e+00> : vector<8x128xf32>
    %414 = tpu.matmul %412, %413, %cst_136 {dimension_numbers = #tpu.dot_dimension_numbers<[1], [0], [0], [1], [0, 0, 1, 1], [], []>} : vector<8x128xbf16>, vector<128x128xbf16>, vector<8x128xf32> -> vector<8x128xf32>
    %c0_137 = arith.constant 0 : index
    %c0_138 = arith.constant 0 : index
    %415 = vector.load %arg13[%c0_137, %c0_138] : memref<1x128xf32, #tpu.memory_space<vmem>>, vector<1x128xf32>
    %416 = vector.broadcast %415 : vector<1x128xf32> to vector<8x128xf32>
    %417 = arith.addf %414, %416 : vector<8x128xf32>
    %cst_139 = arith.constant 0.000000e+00 : f32
    %418 = vector.broadcast %cst_139 : f32 to vector<8x128xf32>
    %419 = arith.maximumf %417, %418 : vector<8x128xf32>
    %420 = arith.addf %411, %419 : vector<8x128xf32>
    %cst_140 = arith.constant 0.000000e+00 : f32
    %421 = vector.shape_cast %9 : vector<8x1xi1> to vector<8x1xi1>
    %422 = vector.broadcast %421 : vector<8x1xi1> to vector<8x128xi1>
    %423 = vector.broadcast %cst_140 : f32 to vector<8x128xf32>
    %424 = arith.select %422, %420, %423 : vector<8x128xi1>, vector<8x128xf32>
    %425 = arith.truncf %424 : vector<8x128xf32> to vector<8x128xbf16>
    %c0_141 = arith.constant 0 : index
    %c0_142 = arith.constant 0 : index
    %426 = vector.load %arg14[%c0_141, %c0_142] : memref<128x128xbf16, #tpu.memory_space<vmem>>, vector<128x128xbf16>
    %cst_143 = arith.constant dense<0.000000e+00> : vector<8x128xf32>
    %427 = tpu.matmul %425, %426, %cst_143 {dimension_numbers = #tpu.dot_dimension_numbers<[1], [0], [0], [1], [0, 0, 1, 1], [], []>} : vector<8x128xbf16>, vector<128x128xbf16>, vector<8x128xf32> -> vector<8x128xf32>
    %c0_144 = arith.constant 0 : index
    %c0_145 = arith.constant 0 : index
    %428 = vector.load %arg15[%c0_144, %c0_145] : memref<1x128xf32, #tpu.memory_space<vmem>>, vector<1x128xf32>
    %429 = vector.broadcast %428 : vector<1x128xf32> to vector<8x128xf32>
    %430 = arith.addf %427, %429 : vector<8x128xf32>
    %431 = arith.truncf %430 : vector<8x128xf32> to vector<8x128xbf16>
    %c0_146 = arith.constant 0 : index
    %c0_147 = arith.constant 0 : index
    %432 = vector.load %arg16[%c0_146, %c0_147] : memref<128x128xbf16, #tpu.memory_space<vmem>>, vector<128x128xbf16>
    %cst_148 = arith.constant dense<0.000000e+00> : vector<8x128xf32>
    %433 = tpu.matmul %431, %432, %cst_148 {dimension_numbers = #tpu.dot_dimension_numbers<[1], [0], [0], [1], [0, 0, 1, 1], [], []>} : vector<8x128xbf16>, vector<128x128xbf16>, vector<8x128xf32> -> vector<8x128xf32>
    %c0_149 = arith.constant 0 : index
    %c0_150 = arith.constant 0 : index
    %434 = vector.load %arg17[%c0_149, %c0_150] : memref<1x128xf32, #tpu.memory_space<vmem>>, vector<1x128xf32>
    %435 = vector.broadcast %434 : vector<1x128xf32> to vector<8x128xf32>
    %436 = arith.addf %433, %435 : vector<8x128xf32>
    %c0_151 = arith.constant 0 : index
    %c0_152 = arith.constant 0 : index
    %c0_153 = arith.constant 0 : index
    %437 = vector.load %arg18[%c0_151, %c0_152, %c0_153] : memref<1x8x128xf32, #tpu.memory_space<vmem>>, vector<1x8x128xf32>
    %438 = vector.shape_cast %437 : vector<1x8x128xf32> to vector<8x128xf32>
    %439 = vector.shape_cast %436 : vector<8x128xf32> to vector<1x8x128xf32>
    tpu.vector_store %arg18[%c0_151, %c0_152, %c0_153], %439 {strides = array<i32>} : memref<1x8x128xf32, #tpu.memory_space<vmem>>, vector<1x8x128xf32>,
    return
  }
  func.func @transform_0(%arg0: i32) -> (i32, i32, i32) {
    %c0_i32 = arith.constant 0 : i32
    %c0_i32_0 = arith.constant 0 : i32
    %c0_i32_1 = arith.constant 0 : i32
    return %arg0, %c0_i32, %c0_i32_0 : i32, i32, i32
  }
  func.func @transform_1(%arg0: i32) -> (i32, i32) {
    %c0_i32 = arith.constant 0 : i32
    %c0_i32_0 = arith.constant 0 : i32
    %c0_i32_1 = arith.constant 0 : i32
    return %c0_i32, %c0_i32_0 : i32, i32
  }
  func.func @transform_2(%arg0: i32) -> (i32, i32) {
    %c0_i32 = arith.constant 0 : i32
    %c0_i32_0 = arith.constant 0 : i32
    %c0_i32_1 = arith.constant 0 : i32
    return %c0_i32, %c0_i32_0 : i32, i32
  }
  func.func @transform_3(%arg0: i32) -> (i32, i32) {
    %c0_i32 = arith.constant 0 : i32
    %c0_i32_0 = arith.constant 0 : i32
    %c0_i32_1 = arith.constant 0 : i32
    return %c0_i32, %c0_i32_0 : i32, i32
  }
  func.func @transform_4(%arg0: i32) -> (i32, i32) {
    %c0_i32 = arith.constant 0 : i32
    %c0_i32_0 = arith.constant 0 : i32
    %c0_i32_1 = arith.constant 0 : i32
    return %c0_i32, %c0_i32_0 : i32, i32
  }
  func.func @transform_5(%arg0: i32) -> (i32, i32) {
    %c0_i32 = arith.constant 0 : i32
    %c0_i32_0 = arith.constant 0 : i32
    %c0_i32_1 = arith.constant 0 : i32
    return %c0_i32, %c0_i32_0 : i32, i32
  }
  func.func @transform_6(%arg0: i32) -> (i32, i32) {
    %c0_i32 = arith.constant 0 : i32
    %c0_i32_0 = arith.constant 0 : i32
    %c0_i32_1 = arith.constant 0 : i32
    return %c0_i32, %c0_i32_0 : i32, i32
  }
  func.func @transform_7(%arg0: i32) -> (i32, i32) {
    %c0_i32 = arith.constant 0 : i32
    %c0_i32_0 = arith.constant 0 : i32
    %c0_i32_1 = arith.constant 0 : i32
    return %c0_i32, %c0_i32_0 : i32, i32
  }
  func.func @transform_8(%arg0: i32) -> (i32, i32) {
    %c0_i32 = arith.constant 0 : i32
    %c0_i32_0 = arith.constant 0 : i32
    %c0_i32_1 = arith.constant 0 : i32
    return %c0_i32, %c0_i32_0 : i32, i32
  }
  func.func @transform_9(%arg0: i32) -> (i32, i32) {
    %c0_i32 = arith.constant 0 : i32
    %c0_i32_0 = arith.constant 0 : i32
    %c0_i32_1 = arith.constant 0 : i32
    return %c0_i32, %c0_i32_0 : i32, i32
  }
  func.func @transform_10(%arg0: i32) -> (i32, i32) {
    %c0_i32 = arith.constant 0 : i32
    %c0_i32_0 = arith.constant 0 : i32
    %c0_i32_1 = arith.constant 0 : i32
    return %c0_i32, %c0_i32_0 : i32, i32
  }
  func.func @transform_11(%arg0: i32) -> (i32, i32) {
    %c0_i32 = arith.constant 0 : i32
    %c0_i32_0 = arith.constant 0 : i32
    %c0_i32_1 = arith.constant 0 : i32
    return %c0_i32, %c0_i32_0 : i32, i32
  }
  func.func @transform_12(%arg0: i32) -> (i32, i32) {
    %c0_i32 = arith.constant 0 : i32
    %c0_i32_0 = arith.constant 0 : i32
    %c0_i32_1 = arith.constant 0 : i32
    return %c0_i32, %c0_i32_0 : i32, i32
  }
  func.func @transform_13(%arg0: i32) -> (i32, i32) {
    %c0_i32 = arith.constant 0 : i32
    %c0_i32_0 = arith.constant 0 : i32
    %c0_i32_1 = arith.constant 0 : i32
    return %c0_i32, %c0_i32_0 : i32, i32
  }
  func.func @transform_14(%arg0: i32) -> (i32, i32) {
    %c0_i32 = arith.constant 0 : i32
    %c0_i32_0 = arith.constant 0 : i32
    %c0_i32_1 = arith.constant 0 : i32
    return %c0_i32, %c0_i32_0 : i32, i32
  }
  func.func @transform_15(%arg0: i32) -> (i32, i32) {
    %c0_i32 = arith.constant 0 : i32
    %c0_i32_0 = arith.constant 0 : i32
    %c0_i32_1 = arith.constant 0 : i32
    return %c0_i32, %c0_i32_0 : i32, i32
  }
  func.func @transform_16(%arg0: i32) -> (i32, i32) {
    %c0_i32 = arith.constant 0 : i32
    %c0_i32_0 = arith.constant 0 : i32
    %c0_i32_1 = arith.constant 0 : i32
    return %c0_i32, %c0_i32_0 : i32, i32
  }
  func.func @transform_17(%arg0: i32) -> (i32, i32, i32) {
    %c0_i32 = arith.constant 0 : i32
    %c0_i32_0 = arith.constant 0 : i32
    %c0_i32_1 = arith.constant 0 : i32
    return %arg0, %c0_i32, %c0_i32_0 : i32, i32, i32
  }
}

</mosaic_0001>

<llo_original>
// kernel: gin_enc_forward.2
$region0: #{gin_enc_forward.2}
  #allocation0 [shape = 'u32[]', space=smem, size = 0x4, offset = 0x4, fixed_abs, tag = 'smem constant byte address 0x4 - core index']
  #allocation1 [shape = 'u32[72,128]{1,0:T(1,128)}', space=vmem, size = 0x9000, scoped, tag = 'internal scratch']
  %s0 = inlined_call_operand.vmem [shape: bf16[16,16], index: 0, kind: input, shape index: {}]
  %s1 = inlined_call_operand.vmem [shape: bf16[16,16], index: 1, kind: input, shape index: {}]
  %s2 = inlined_call_operand.vmem [shape: f32[16,128], index: 2, kind: input, shape index: {}]
  %s3 = inlined_call_operand.vmem [shape: bf16[128,128], index: 3, kind: input, shape index: {}]
  %s4 = inlined_call_operand.vmem [shape: f32[1,128], index: 4, kind: input, shape index: {}]
  %s5 = inlined_call_operand.vmem [shape: bf16[128,128], index: 5, kind: input, shape index: {}]
  %s6 = inlined_call_operand.vmem [shape: f32[1,128], index: 6, kind: input, shape index: {}]
  %s7 = inlined_call_operand.vmem [shape: f32[1,128], index: 7, kind: input, shape index: {}]
  %s8 = inlined_call_operand.vmem [shape: f32[1,128], index: 8, kind: input, shape index: {}]
  %s9 = inlined_call_operand.vmem [shape: bf16[128,128], index: 9, kind: input, shape index: {}]
  %s10 = inlined_call_operand.vmem [shape: f32[1,128], index: 10, kind: input, shape index: {}]
  %s11 = inlined_call_operand.vmem [shape: bf16[128,128], index: 11, kind: input, shape index: {}]
  %s12 = inlined_call_operand.vmem [shape: f32[1,128], index: 12, kind: input, shape index: {}]
  %s13 = inlined_call_operand.vmem [shape: f32[1,128], index: 13, kind: input, shape index: {}]
  %s14 = inlined_call_operand.vmem [shape: f32[1,128], index: 14, kind: input, shape index: {}]
  %s15 = inlined_call_operand.vmem [shape: bf16[128,128], index: 15, kind: input, shape index: {}]
  %s16 = inlined_call_operand.vmem [shape: f32[1,128], index: 16, kind: input, shape index: {}]
  %s17 = inlined_call_operand.vmem [shape: bf16[128,128], index: 17, kind: input, shape index: {}]
  %s18 = inlined_call_operand.vmem [shape: f32[1,128], index: 18, kind: input, shape index: {}]
  %s19 = inlined_call_operand.vmem [shape: f32[1,128], index: 19, kind: input, shape index: {}]
  %s20 = inlined_call_operand.vmem [shape: f32[1,128], index: 20, kind: input, shape index: {}]
  %s21 = inlined_call_operand.vmem [shape: bf16[128,128], index: 21, kind: input, shape index: {}]
  %s22 = inlined_call_operand.vmem [shape: f32[1,128], index: 22, kind: input, shape index: {}]
  %s23 = inlined_call_operand.vmem [shape: bf16[128,128], index: 23, kind: input, shape index: {}]
  %s24 = inlined_call_operand.vmem [shape: f32[1,128], index: 24, kind: input, shape index: {}]
  %s25 = inlined_call_operand.vmem [shape: bf16[128,256], index: 25, kind: input, shape index: {}]
  %s26 = inlined_call_operand.vmem [shape: f32[1,256], index: 26, kind: input, shape index: {}]
  %s27 = inlined_call_operand.vmem [shape: f32[16,256], index: 27, kind: output, shape index: {}]
  %s28 = sld [smem:[#allocation0]]
  $region118: #{gin_enc_forward.2} parent=0
    _
  %s30 = ssub.s32 1, %s28
  %s31 = scalar_select 0, %s30, %s28
  // Predicated region
  $region2: #{gin_enc_forward.2} parent=0 // pred_check
    _
  $region3: #{gin_enc_forward.2} parent=0 // pred_check_branch
    %33 = sbr.rel (0) target = $region5
  $region4: #{gin_enc_forward.2} parent=0 // pred_region
    _
  $region5: #{gin_enc_forward.2} parent=0 // pred_fallthru
    _
  // Predicated region
  $region6: #{gin_enc_forward.2} parent=0 // pred_check
    _
  $region7: #{gin_enc_forward.2} parent=0 // pred_check_branch
    %35 = sbr.rel (0) target = $region9
  $region8: #{gin_enc_forward.2} parent=0 // pred_region
    _
  $region9: #{gin_enc_forward.2} parent=0 // pred_fallthru
    _
  // Predicated region
  $region10: #{gin_enc_forward.2} parent=0 // pred_check
    _
  $region11: #{gin_enc_forward.2} parent=0 // pred_check_branch
    %37 = sbr.rel (0) target = $region13
  $region12: #{gin_enc_forward.2} parent=0 // pred_region
    _
  $region13: #{gin_enc_forward.2} parent=0 // pred_fallthru
    _
  // Predicated region
  $region14: #{gin_enc_forward.2} parent=0 // pred_check
    _
  $region15: #{gin_enc_forward.2} parent=0 // pred_check_branch
    %39 = sbr.rel (0) target = $region17
  $region16: #{gin_enc_forward.2} parent=0 // pred_region
    _
  $region17: #{gin_enc_forward.2} parent=0 // pred_fallthru
    _
  // Predicated region
  $region18: #{gin_enc_forward.2} parent=0 // pred_check
    _
  $region19: #{gin_enc_forward.2} parent=0 // pred_check_branch
    %41 = sbr.rel (0) target = $region21
  $region20: #{gin_enc_forward.2} parent=0 // pred_region
    _
  $region21: #{gin_enc_forward.2} parent=0 // pred_fallthru
    _
  // Predicated region
  $region22: #{gin_enc_forward.2} parent=0 // pred_check
    _
  $region23: #{gin_enc_forward.2} parent=0 // pred_check_branch
    %43 = sbr.rel (0) target = $region25
  $region24: #{gin_enc_forward.2} parent=0 // pred_region
    _
  $region25: #{gin_enc_forward.2} parent=0 // pred_fallthru
    _
  // Predicated region
  $region26: #{gin_enc_forward.2} parent=0 // pred_check
    _
  $region27: #{gin_enc_forward.2} parent=0 // pred_check_branch
    %45 = sbr.rel (0) target = $region29
  $region28: #{gin_enc_forward.2} parent=0 // pred_region
    _
  $region29: #{gin_enc_forward.2} parent=0 // pred_fallthru
    _
  // Predicated region
  $region30: #{gin_enc_forward.2} parent=0 // pred_check
    _
  $region31: #{gin_enc_forward.2} parent=0 // pred_check_branch
    %47 = sbr.rel (0) target = $region33
  $region32: #{gin_enc_forward.2} parent=0 // pred_region
    _
  $region33: #{gin_enc_forward.2} parent=0 // pred_fallthru
    _
  // Predicated region
  $region34: #{gin_enc_forward.2} parent=0 // pred_check
    _
  $region35: #{gin_enc_forward.2} parent=0 // pred_check_branch
    %49 = sbr.rel (0) target = $region37
  $region36: #{gin_enc_forward.2} parent=0 // pred_region
    _
  $region37: #{gin_enc_forward.2} parent=0 // pred_fallthru
    _
  // Predicated region
  $region38: #{gin_enc_forward.2} parent=0 // pred_check
    _
  $region39: #{gin_enc_forward.2} parent=0 // pred_check_branch
    %51 = sbr.rel (0) target = $region41
  $region40: #{gin_enc_forward.2} parent=0 // pred_region
    _
  $region41: #{gin_enc_forward.2} parent=0 // pred_fallthru
    _
  // Predicated region
  $region42: #{gin_enc_forward.2} parent=0 // pred_check
    _
  $region43: #{gin_enc_forward.2} parent=0 // pred_check_branch
    %53 = sbr.rel (0) target = $region45
  $region44: #{gin_enc_forward.2} parent=0 // pred_region
    _
  $region45: #{gin_enc_forward.2} parent=0 // pred_fallthru
    _
  // Predicated region
  $region46: #{gin_enc_forward.2} parent=0 // pred_check
    _
  $region47: #{gin_enc_forward.2} parent=0 // pred_check_branch
    %55 = sbr.rel (0) target = $region49
  $region48: #{gin_enc_forward.2} parent=0 // pred_region
    _
  $region49: #{gin_enc_forward.2} parent=0 // pred_fallthru
    _
  // Predicated region
  $region50: #{gin_enc_forward.2} parent=0 // pred_check
    _
  $region51: #{gin_enc_forward.2} parent=0 // pred_check_branch
    %57 = sbr.rel (0) target = $region53
  $region52: #{gin_enc_forward.2} parent=0 // pred_region
    _
  $region53: #{gin_enc_forward.2} parent=0 // pred_fallthru
    _
  // Predicated region
  $region54: #{gin_enc_forward.2} parent=0 // pred_check
    _
  $region55: #{gin_enc_forward.2} parent=0 // pred_check_branch
    %59 = sbr.rel (0) target = $region57
  $region56: #{gin_enc_forward.2} parent=0 // pred_region
    _
  $region57: #{gin_enc_forward.2} parent=0 // pred_fallthru
    _
  // Predicated region
  $region58: #{gin_enc_forward.2} parent=0 // pred_check
    _
  $region59: #{gin_enc_forward.2} parent=0 // pred_check_branch
    %61 = sbr.rel (0) target = $region61
  $region60: #{gin_enc_forward.2} parent=0 // pred_region
    _
  $region61: #{gin_enc_forward.2} parent=0 // pred_fallthru
    _
  // Predicated region
  $region62: #{gin_enc_forward.2} parent=0 // pred_check
    _
  $region63: #{gin_enc_forward.2} parent=0 // pred_check_branch
    %63 = sbr.rel (0) target = $region65
  $region64: #{gin_enc_forward.2} parent=0 // pred_region
    _
  $region65: #{gin_enc_forward.2} parent=0 // pred_fallthru
    _
  // Predicated region
  $region66: #{gin_enc_forward.2} parent=0 // pred_check
    _
  $region67: #{gin_enc_forward.2} parent=0 // pred_check_branch
    %65 = sbr.rel (0) target = $region69
  $region68: #{gin_enc_forward.2} parent=0 // pred_region
    _
  $region69: #{gin_enc_forward.2} parent=0 // pred_fallthru
    _
  // Predicated region
  $region70: #{gin_enc_forward.2} parent=0 // pred_check
    _
  $region71: #{gin_enc_forward.2} parent=0 // pred_check_branch
    %67 = sbr.rel (0) target = $region73
  $region72: #{gin_enc_forward.2} parent=0 // pred_region
    _
  $region73: #{gin_enc_forward.2} parent=0 // pred_fallthru
    _
  // Predicated region
  $region74: #{gin_enc_forward.2} parent=0 // pred_check
    _
  $region75: #{gin_enc_forward.2} parent=0 // pred_check_branch
    %69 = sbr.rel (0) target = $region77
  $region76: #{gin_enc_forward.2} parent=0 // pred_region
    _
  $region77: #{gin_enc_forward.2} parent=0 // pred_fallthru
    _
  // Predicated region
  $region78: #{gin_enc_forward.2} parent=0 // pred_check
    _
  $region79: #{gin_enc_forward.2} parent=0 // pred_check_branch
    %71 = sbr.rel (0) target = $region81
  $region80: #{gin_enc_forward.2} parent=0 // pred_region
    _
  $region81: #{gin_enc_forward.2} parent=0 // pred_fallthru
    _
  // Predicated region
  $region82: #{gin_enc_forward.2} parent=0 // pred_check
    _
  $region83: #{gin_enc_forward.2} parent=0 // pred_check_branch
    %73 = sbr.rel (0) target = $region85
  $region84: #{gin_enc_forward.2} parent=0 // pred_region
    _
  $region85: #{gin_enc_forward.2} parent=0 // pred_fallthru
    _
  // Predicated region
  $region86: #{gin_enc_forward.2} parent=0 // pred_check
    _
  $region87: #{gin_enc_forward.2} parent=0 // pred_check_branch
    %75 = sbr.rel (0) target = $region89
  $region88: #{gin_enc_forward.2} parent=0 // pred_region
    _
  $region89: #{gin_enc_forward.2} parent=0 // pred_fallthru
    _
  // Predicated region
  $region90: #{gin_enc_forward.2} parent=0 // pred_check
    _
  $region91: #{gin_enc_forward.2} parent=0 // pred_check_branch
    %77 = sbr.rel (0) target = $region93
  $region92: #{gin_enc_forward.2} parent=0 // pred_region
    _
  $region93: #{gin_enc_forward.2} parent=0 // pred_fallthru
    _
  // Predicated region
  $region94: #{gin_enc_forward.2} parent=0 // pred_check
    _
  $region95: #{gin_enc_forward.2} parent=0 // pred_check_branch
    %79 = sbr.rel (0) target = $region97
  $region96: #{gin_enc_forward.2} parent=0 // pred_region
    _
  $region97: #{gin_enc_forward.2} parent=0 // pred_fallthru
    _
  // Predicated region
  $region98: #{gin_enc_forward.2} parent=0 // pred_check
    _
  $region99: #{gin_enc_forward.2} parent=0 // pred_check_branch
    %81 = sbr.rel (0) target = $region101
  $region100: #{gin_enc_forward.2} parent=0 // pred_region
    _
  $region101: #{gin_enc_forward.2} parent=0 // pred_fallthru
    _
  // Predicated region
  $region102: #{gin_enc_forward.2} parent=0 // pred_check
    _
  $region103: #{gin_enc_forward.2} parent=0 // pred_check_branch
    %83 = sbr.rel (0) target = $region105
  $region104: #{gin_enc_forward.2} parent=0 // pred_region
    _
  $region105: #{gin_enc_forward.2} parent=0 // pred_fallthru
    _
  // Predicated region
  $region106: #{gin_enc_forward.2} parent=0 // pred_check
    _
  $region107: #{gin_enc_forward.2} parent=0 // pred_check_branch
    %85 = sbr.rel (0) target = $region109
  $region108: #{gin_enc_forward.2} parent=0 // pred_region
    _
  $region109: #{gin_enc_forward.2} parent=0 // pred_fallthru
    _
  %v87 = vld [vmem:[%s0] sm:$0xf]
  %v88 = vld [vmem:[%s0 + $0x4] sm:$0xf]
  %v89 = vld [vmem:[%s2] sm:$0xff]
  %v90 = vld [vmem:[%s2 + $0x8] sm:$0xff]
  %v91 = vld [vmem:[%s3] sm:$0xf]
  %v92 = vld [vmem:[%s3 + $0x4] sm:$0xf]
  %v93 = vld [vmem:[%s3 + $0x8] sm:$0xf]
  %v94 = vld [vmem:[%s3 + $0xc] sm:$0xf]
  %v95 = vld [vmem:[%s3 + $0x10] sm:$0xf]
  %v96 = vld [vmem:[%s3 + $0x14] sm:$0xf]
  %v97 = vld [vmem:[%s3 + $0x18] sm:$0xf]
  %v98 = vld [vmem:[%s3 + $0x1c] sm:$0xf]
  %v99 = vld [vmem:[%s3 + $0x20] sm:$0xf]
  %v100 = vld [vmem:[%s3 + $0x24] sm:$0xf]
  %v101 = vld [vmem:[%s3 + $0x28] sm:$0xf]
  %v102 = vld [vmem:[%s3 + $0x2c] sm:$0xf]
  %v103 = vld [vmem:[%s3 + $0x30] sm:$0xf]
  %v104 = vld [vmem:[%s3 + $0x34] sm:$0xf]
  %v105 = vld [vmem:[%s3 + $0x38] sm:$0xf]
  %v106 = vld [vmem:[%s3 + $0x3c] sm:$0xf]
  %v107 = vld [vmem:[%s4] sm:$0x1]
  %v108 = vld [vmem:[%s5] sm:$0xf]
  %v109 = vld [vmem:[%s5 + $0x4] sm:$0xf]
  %v110 = vld [vmem:[%s5 + $0x8] sm:$0xf]
  %v111 = vld [vmem:[%s5 + $0xc] sm:$0xf]
  %v112 = vld [vmem:[%s5 + $0x10] sm:$0xf]
  %v113 = vld [vmem:[%s5 + $0x14] sm:$0xf]
  %v114 = vld [vmem:[%s5 + $0x18] sm:$0xf]
  %v115 = vld [vmem:[%s5 + $0x1c] sm:$0xf]
  %v116 = vld [vmem:[%s5 + $0x20] sm:$0xf]
  %v117 = vld [vmem:[%s5 + $0x24] sm:$0xf]
  %v118 = vld [vmem:[%s5 + $0x28] sm:$0xf]
  %v119 = vld [vmem:[%s5 + $0x2c] sm:$0xf]
  %v120 = vld [vmem:[%s5 + $0x30] sm:$0xf]
  %v121 = vld [vmem:[%s5 + $0x34] sm:$0xf]
  %v122 = vld [vmem:[%s5 + $0x38] sm:$0xf]
  %v123 = vld [vmem:[%s5 + $0x3c] sm:$0xf]
  %v124 = vld [vmem:[%s6] sm:$0x1]
  %v125 = vld [vmem:[%s7] sm:$0x1]
  %v126 = vld [vmem:[%s8] sm:$0x1]
  %v127 = vpack.c.bf16 %v90, %v89
  %v130 = vunpack.c.l.b16 %v87
  %v131 = vunpack.c.l.b16 %v88
  %v132 = vpack.c.b16 %v131, %v130
  %vm133 = vcmask 130048
  %v135 = vsel %vm133, %v132, 0
  %137 = vmatpush.bf16.msra.mxu0 0
  %138 = vmatpush.bf16.msra.mxu0 0
  %139 = vmatpush.bf16.msra.mxu0 0
  %140 = vmatpush.bf16.msra.mxu0 0
  %141 = vmatpush.bf16.msra.mxu0 0
  %142 = vmatpush.bf16.msra.mxu0 0
  %143 = vmatpush.bf16.msra.mxu0 0
  %144 = vmatpush.bf16.msra.mxu0 %v127
  %145 = vmatmul.bf16.gmra.mxu0 %v135
  %v146 = vpop.f32.mrf.mxu0
  %v147 = vadd.f32 0.0, %v146
  %v148 = vpop.f32.mrf.mxu0
  %v149 = vadd.f32 0.0, %v148
  %150 = vdwg.mxu0
  %v151 = vpack.c.bf16 %v149, %v147
  %v153 = vperm.slane %v107, 0
  %v171 = vunpack.c.l.b16 %v91
  %v172 = vunpack.c.l.b16 %v92
  %v173 = vunpack.c.l.b16 %v93
  %v174 = vunpack.c.l.b16 %v94
  %v175 = vunpack.c.l.b16 %v95
  %v176 = vunpack.c.l.b16 %v96
  %v177 = vunpack.c.l.b16 %v97
  %v178 = vunpack.c.l.b16 %v98
  %v179 = vunpack.c.l.b16 %v99
  %v180 = vunpack.c.l.b16 %v100
  %v181 = vunpack.c.l.b16 %v101
  %v182 = vunpack.c.l.b16 %v102
  %v183 = vunpack.c.l.b16 %v103
  %v184 = vunpack.c.l.b16 %v104
  %v185 = vunpack.c.l.b16 %v105
  %v186 = vunpack.c.l.b16 %v106
  %v187 = vpack.c.b16 %v172, %v171
  %v188 = vpack.c.b16 %v174, %v173
  %v189 = vpack.c.b16 %v176, %v175
  %v190 = vpack.c.b16 %v178, %v177
  %v191 = vpack.c.b16 %v180, %v179
  %v192 = vpack.c.b16 %v182, %v181
  %v193 = vpack.c.b16 %v184, %v183
  %v194 = vpack.c.b16 %v186, %v185
  %203 = vmatpush.bf16.msra.mxu0 %v194
  %204 = vmatpush.bf16.msra.mxu0 %v193
  %205 = vmatpush.bf16.msra.mxu0 %v192
  %206 = vmatpush.bf16.msra.mxu0 %v191
  %207 = vmatpush.bf16.msra.mxu0 %v190
  %208 = vmatpush.bf16.msra.mxu0 %v189
  %209 = vmatpush.bf16.msra.mxu0 %v188
  %210 = vmatpush.bf16.msra.mxu0 %v187
  %211 = vmatmul.bf16.gmra.mxu0 %v151
  %v212 = vpop.f32.mrf.mxu0
  %v213 = vadd.f32 %v153, %v212
  %v214 = vpop.f32.mrf.mxu0
  %v215 = vadd.f32 %v153, %v214
  %216 = vdwg.mxu0
  %v217 = vmax.f32 %v213, 0.0
  %v218 = vmax.f32 %v215, 0.0
  %v219 = vpack.c.bf16 %v218, %v217
  %v221 = vperm.slane %v124, 0
  %v239 = vunpack.c.l.b16 %v108
  %v240 = vunpack.c.l.b16 %v109
  %v241 = vunpack.c.l.b16 %v110
  %v242 = vunpack.c.l.b16 %v111
  %v243 = vunpack.c.l.b16 %v112
  %v244 = vunpack.c.l.b16 %v113
  %v245 = vunpack.c.l.b16 %v114
  %v246 = vunpack.c.l.b16 %v115
  %v247 = vunpack.c.l.b16 %v116
  %v248 = vunpack.c.l.b16 %v117
  %v249 = vunpack.c.l.b16 %v118
  %v250 = vunpack.c.l.b16 %v119
  %v251 = vunpack.c.l.b16 %v120
  %v252 = vunpack.c.l.b16 %v121
  %v253 = vunpack.c.l.b16 %v122
  %v254 = vunpack.c.l.b16 %v123
  %v255 = vpack.c.b16 %v240, %v239
  %v256 = vpack.c.b16 %v242, %v241
  %v257 = vpack.c.b16 %v244, %v243
  %v258 = vpack.c.b16 %v246, %v245
  %v259 = vpack.c.b16 %v248, %v247
  %v260 = vpack.c.b16 %v250, %v249
  %v261 = vpack.c.b16 %v252, %v251
  %v262 = vpack.c.b16 %v254, %v253
  %271 = vmatpush.bf16.msra.mxu0 %v262
  %272 = vmatpush.bf16.msra.mxu0 %v261
  %273 = vmatpush.bf16.msra.mxu0 %v260
  %274 = vmatpush.bf16.msra.mxu0 %v259
  %275 = vmatpush.bf16.msra.mxu0 %v258
  %276 = vmatpush.bf16.msra.mxu0 %v257
  %277 = vmatpush.bf16.msra.mxu0 %v256
  %278 = vmatpush.bf16.msra.mxu0 %v255
  %279 = vmatmul.bf16.gmra.mxu0 %v219
  %v280 = vpop.f32.mrf.mxu0
  %v281 = vadd.f32 %v221, %v280
  %v282 = vpop.f32.mrf.mxu0
  %v283 = vadd.f32 %v221, %v282
  %284 = vdwg.mxu0
  %v285 = vadd.f32 %v281, %v283
  %v286 = vrot.slane %v285, 4
  %v287 = vadd.f32 %v285, %v286
  %v288 = vrot.slane %v287, 2
  %v289 = vadd.f32 %v287, %v288
  %v290 = vrot.slane %v289, 1
  %v291 = vadd.f32 %v289, %v290
  %v292 = vrcp.pop 16.0
  %v293 = vmul.f32 16.0, %v292
  %v294 = vsub.f32 1.0, %v293
  %v295 = vmul.f32 %v292, %v294
  %v296 = vadd.f32 %v292, %v295
  %vm297 = vweird.f32 %v292
  %v298 = vsel %vm297, %v292, %v296
  %v299 = vmul.f32 %v291, %v298
  %v300 = vsub.f32 %v281, %v299
  %v301 = vsub.f32 %v283, %v299
  %v302 = vmul.f32 %v300, %v300
  %v303 = vmul.f32 %v301, %v301
  %v304 = vadd.f32 %v302, %v303
  %v305 = vrot.slane %v304, 4
  %v306 = vadd.f32 %v304, %v305
  %v307 = vrot.slane %v306, 2
  %v308 = vadd.f32 %v306, %v307
  %v309 = vrot.slane %v308, 1
  %v310 = vadd.f32 %v308, %v309
  %v311 = vmul.f32 %v310, %v298
  %v312 = vadd.f32 %v311, 1e-05
  %v313 = vrsqrt.pop %v312
  %v314 = vmul.f32 %v313, %v312
  %v315 = vmul.f32 %v314, %v313
  %v316 = vmul.f32 0.5, %v315
  %v317 = vsub.f32 1.5, %v316
  %v318 = vmul.f32 %v313, %v317
  %vm319 = vweird.f32 %v312
  %vm320 = vweird.f32 %v313
  %vm321 = vmor %vm319, %vm320
  %v322 = vsel %vm321, %v313, %v318
  %v323 = vmul.f32 %v300, %v322
  %v324 = vmul.f32 %v301, %v322
  %v326 = vperm.slane %v125, 0
  %v328 = vmul.f32 %v326, %v323
  %v329 = vmul.f32 %v326, %v324
  %v331 = vperm.slane %v126, 0
  %v333 = vadd.f32 %v328, %v331
  %v334 = vadd.f32 %v329, %v331
  %v335 = vmax.f32 %v333, 0.0
  %v336 = vmax.f32 %v334, 0.0
  %v337 = vld [vmem:[%s9] sm:$0xf]
  %v338 = vld [vmem:[%s9 + $0x4] sm:$0xf]
  %v339 = vld [vmem:[%s9 + $0x8] sm:$0xf]
  %v340 = vld [vmem:[%s9 + $0xc] sm:$0xf]
  %v341 = vld [vmem:[%s9 + $0x10] sm:$0xf]
  %v342 = vld [vmem:[%s9 + $0x14] sm:$0xf]
  %v343 = vld [vmem:[%s9 + $0x18] sm:$0xf]
  %v344 = vld [vmem:[%s9 + $0x1c] sm:$0xf]
  %v345 = vld [vmem:[%s9 + $0x20] sm:$0xf]
  %v346 = vld [vmem:[%s9 + $0x24] sm:$0xf]
  %v347 = vld [vmem:[%s9 + $0x28] sm:$0xf]
  %v348 = vld [vmem:[%s9 + $0x2c] sm:$0xf]
  %v349 = vld [vmem:[%s9 + $0x30] sm:$0xf]
  %v350 = vld [vmem:[%s9 + $0x34] sm:$0xf]
  %v351 = vld [vmem:[%s9 + $0x38] sm:$0xf]
  %v352 = vld [vmem:[%s9 + $0x3c] sm:$0xf]
  %v353 = vld [vmem:[%s10] sm:$0x1]
  %v354 = vld [vmem:[%s11] sm:$0xf]
  %v355 = vld [vmem:[%s11 + $0x4] sm:$0xf]
  %v356 = vld [vmem:[%s11 + $0x8] sm:$0xf]
  %v357 = vld [vmem:[%s11 + $0xc] sm:$0xf]
  %v358 = vld [vmem:[%s11 + $0x10] sm:$0xf]
  %v359 = vld [vmem:[%s11 + $0x14] sm:$0xf]
  %v360 = vld [vmem:[%s11 + $0x18] sm:$0xf]
  %v361 = vld [vmem:[%s11 + $0x1c] sm:$0xf]
  %v362 = vld [vmem:[%s11 + $0x20] sm:$0xf]
  %v363 = vld [vmem:[%s11 + $0x24] sm:$0xf]
  %v364 = vld [vmem:[%s11 + $0x28] sm:$0xf]
  %v365 = vld [vmem:[%s11 + $0x2c] sm:$0xf]
  %v366 = vld [vmem:[%s11 + $0x30] sm:$0xf]
  %v367 = vld [vmem:[%s11 + $0x34] sm:$0xf]
  %v368 = vld [vmem:[%s11 + $0x38] sm:$0xf]
  %v369 = vld [vmem:[%s11 + $0x3c] sm:$0xf]
  %v370 = vld [vmem:[%s12] sm:$0x1]
  %v371 = vld [vmem:[%s13] sm:$0x1]
  %v372 = vld [vmem:[%s14] sm:$0x1]
  %v373 = vpack.c.bf16 %v336, %v335
  %374 = vmatpush.bf16.msra.mxu0 0
  %375 = vmatpush.bf16.msra.mxu0 0
  %376 = vmatpush.bf16.msra.mxu0 0
  %377 = vmatpush.bf16.msra.mxu0 0
  %378 = vmatpush.bf16.msra.mxu0 0
  %379 = vmatpush.bf16.msra.mxu0 0
  %380 = vmatpush.bf16.msra.mxu0 0
  %381 = vmatpush.bf16.msra.mxu0 %v373
  %382 = vmatmul.bf16.gmra.mxu0 %v135
  %v383 = vpop.f32.mrf.mxu0
  %v384 = vadd.f32 0.0, %v383
  %v385 = vpop.f32.mrf.mxu0
  %v386 = vadd.f32 0.0, %v385
  %387 = vdwg.mxu0
  %v388 = vpack.c.bf16 %v386, %v384
  %v390 = vperm.slane %v353, 0
  %v408 = vunpack.c.l.b16 %v337
  %v409 = vunpack.c.l.b16 %v338
  %v410 = vunpack.c.l.b16 %v339
  %v411 = vunpack.c.l.b16 %v340
  %v412 = vunpack.c.l.b16 %v341
  %v413 = vunpack.c.l.b16 %v342
  %v414 = vunpack.c.l.b16 %v343
  %v415 = vunpack.c.l.b16 %v344
  %v416 = vunpack.c.l.b16 %v345
  %v417 = vunpack.c.l.b16 %v346
  %v418 = vunpack.c.l.b16 %v347
  %v419 = vunpack.c.l.b16 %v348
  %v420 = vunpack.c.l.b16 %v349
  %v421 = vunpack.c.l.b16 %v350
  %v422 = vunpack.c.l.b16 %v351
  %v423 = vunpack.c.l.b16 %v352
  %v424 = vpack.c.b16 %v409, %v408
  %v425 = vpack.c.b16 %v411, %v410
  %v426 = vpack.c.b16 %v413, %v412
  %v427 = vpack.c.b16 %v415, %v414
  %v428 = vpack.c.b16 %v417, %v416
  %v429 = vpack.c.b16 %v419, %v418
  %v430 = vpack.c.b16 %v421, %v420
  %v431 = vpack.c.b16 %v423, %v422
  %440 = vmatpush.bf16.msra.mxu0 %v431
  %441 = vmatpush.bf16.msra.mxu0 %v430
  %442 = vmatpush.bf16.msra.mxu0 %v429
  %443 = vmatpush.bf16.msra.mxu0 %v428
  %444 = vmatpush.bf16.msra.mxu0 %v427
  %445 = vmatpush.bf16.msra.mxu0 %v426
  %446 = vmatpush.bf16.msra.mxu0 %v425
  %447 = vmatpush.bf16.msra.mxu0 %v424
  %448 = vmatmul.bf16.gmra.mxu0 %v388
  %v449 = vpop.f32.mrf.mxu0
  %v450 = vadd.f32 %v390, %v449
  %v451 = vpop.f32.mrf.mxu0
  %v452 = vadd.f32 %v390, %v451
  %453 = vdwg.mxu0
  %v454 = vmax.f32 %v450, 0.0
  %v455 = vmax.f32 %v452, 0.0
  %v456 = vpack.c.bf16 %v455, %v454
  %v458 = vperm.slane %v370, 0
  %v476 = vunpack.c.l.b16 %v354
  %v477 = vunpack.c.l.b16 %v355
  %v478 = vunpack.c.l.b16 %v356
  %v479 = vunpack.c.l.b16 %v357
  %v480 = vunpack.c.l.b16 %v358
  %v481 = vunpack.c.l.b16 %v359
  %v482 = vunpack.c.l.b16 %v360
  %v483 = vunpack.c.l.b16 %v361
  %v484 = vunpack.c.l.b16 %v362
  %v485 = vunpack.c.l.b16 %v363
  %v486 = vunpack.c.l.b16 %v364
  %v487 = vunpack.c.l.b16 %v365
  %v488 = vunpack.c.l.b16 %v366
  %v489 = vunpack.c.l.b16 %v367
  %v490 = vunpack.c.l.b16 %v368
  %v491 = vunpack.c.l.b16 %v369
  %v492 = vpack.c.b16 %v477, %v476
  %v493 = vpack.c.b16 %v479, %v478
  %v494 = vpack.c.b16 %v481, %v480
  %v495 = vpack.c.b16 %v483, %v482
  %v496 = vpack.c.b16 %v485, %v484
  %v497 = vpack.c.b16 %v487, %v486
  %v498 = vpack.c.b16 %v489, %v488
  %v499 = vpack.c.b16 %v491, %v490
  %508 = vmatpush.bf16.msra.mxu0 %v499
  %509 = vmatpush.bf16.msra.mxu0 %v498
  %510 = vmatpush.bf16.msra.mxu0 %v497
  %511 = vmatpush.bf16.msra.mxu0 %v496
  %512 = vmatpush.bf16.msra.mxu0 %v495
  %513 = vmatpush.bf16.msra.mxu0 %v494
  %514 = vmatpush.bf16.msra.mxu0 %v493
  %515 = vmatpush.bf16.msra.mxu0 %v492
  %516 = vmatmul.bf16.gmra.mxu0 %v456
  %v517 = vpop.f32.mrf.mxu0
  %v518 = vadd.f32 %v458, %v517
  %v519 = vpop.f32.mrf.mxu0
  %v520 = vadd.f32 %v458, %v519
  %521 = vdwg.mxu0
  %v522 = vadd.f32 %v518, %v520
  %v523 = vrot.slane %v522, 4
  %v524 = vadd.f32 %v522, %v523
  %v525 = vrot.slane %v524, 2
  %v526 = vadd.f32 %v524, %v525
  %v527 = vrot.slane %v526, 1
  %v528 = vadd.f32 %v526, %v527
  %v529 = vmul.f32 %v528, %v298
  %v530 = vsub.f32 %v518, %v529
  %v531 = vsub.f32 %v520, %v529
  %v532 = vmul.f32 %v530, %v530
  %v533 = vmul.f32 %v531, %v531
  %v534 = vadd.f32 %v532, %v533
  %v535 = vrot.slane %v534, 4
  %v536 = vadd.f32 %v534, %v535
  %v537 = vrot.slane %v536, 2
  %v538 = vadd.f32 %v536, %v537
  %v539 = vrot.slane %v538, 1
  %v540 = vadd.f32 %v538, %v539
  %v541 = vmul.f32 %v540, %v298
  %v542 = vadd.f32 %v541, 1e-05
  %v543 = vrsqrt.pop %v542
  %v544 = vmul.f32 %v543, %v542
  %v545 = vmul.f32 %v544, %v543
  %v546 = vmul.f32 0.5, %v545
  %v547 = vsub.f32 1.5, %v546
  %v548 = vmul.f32 %v543, %v547
  %vm549 = vweird.f32 %v542
  %vm550 = vweird.f32 %v543
  %vm551 = vmor %vm549, %vm550
  %v552 = vsel %vm551, %v543, %v548
  %v553 = vmul.f32 %v530, %v552
  %v554 = vmul.f32 %v531, %v552
  %v556 = vperm.slane %v371, 0
  %v558 = vmul.f32 %v556, %v553
  %v559 = vmul.f32 %v556, %v554
  %v561 = vperm.slane %v372, 0
  %v563 = vadd.f32 %v558, %v561
  %v564 = vadd.f32 %v559, %v561
  %v565 = vmax.f32 %v563, 0.0
  %v566 = vmax.f32 %v564, 0.0
  %v567 = vld [vmem:[%s15] sm:$0xf]
  %v568 = vld [vmem:[%s15 + $0x4] sm:$0xf]
  %v569 = vld [vmem:[%s15 + $0x8] sm:$0xf]
  %v570 = vld [vmem:[%s15 + $0xc] sm:$0xf]
  %v571 = vld [vmem:[%s15 + $0x10] sm:$0xf]
  %v572 = vld [vmem:[%s15 + $0x14] sm:$0xf]
  %v573 = vld [vmem:[%s15 + $0x18] sm:$0xf]
  %v574 = vld [vmem:[%s15 + $0x1c] sm:$0xf]
  %v575 = vld [vmem:[%s15 + $0x20] sm:$0xf]
  %v576 = vld [vmem:[%s15 + $0x24] sm:$0xf]
  %v577 = vld [vmem:[%s15 + $0x28] sm:$0xf]
  %v578 = vld [vmem:[%s15 + $0x2c] sm:$0xf]
  %v579 = vld [vmem:[%s15 + $0x30] sm:$0xf]
  %v580 = vld [vmem:[%s15 + $0x34] sm:$0xf]
  %v581 = vld [vmem:[%s15 + $0x38] sm:$0xf]
  %v582 = vld [vmem:[%s15 + $0x3c] sm:$0xf]
  %v583 = vld [vmem:[%s16] sm:$0x1]
  %v584 = vld [vmem:[%s17] sm:$0xf]
  %v585 = vld [vmem:[%s17 + $0x4] sm:$0xf]
  %v586 = vld [vmem:[%s17 + $0x8] sm:$0xf]
  %v587 = vld [vmem:[%s17 + $0xc] sm:$0xf]
  %v588 = vld [vmem:[%s17 + $0x10] sm:$0xf]
  %v589 = vld [vmem:[%s17 + $0x14] sm:$0xf]
  %v590 = vld [vmem:[%s17 + $0x18] sm:$0xf]
  %v591 = vld [vmem:[%s17 + $0x1c] sm:$0xf]
  %v592 = vld [vmem:[%s17 + $0x20] sm:$0xf]
  %v593 = vld [vmem:[%s17 + $0x24] sm:$0xf]
  %v594 = vld [vmem:[%s17 + $0x28] sm:$0xf]
  %v595 = vld [vmem:[%s17 + $0x2c] sm:$0xf]
  %v596 = vld [vmem:[%s17 + $0x30] sm:$0xf]
  %v597 = vld [vmem:[%s17 + $0x34] sm:$0xf]
  %v598 = vld [vmem:[%s17 + $0x38] sm:$0xf]
  %v599 = vld [vmem:[%s17 + $0x3c] sm:$0xf]
  %v600 = vld [vmem:[%s18] sm:$0x1]
  %v601 = vld [vmem:[%s19] sm:$0x1]
  %v602 = vld [vmem:[%s20] sm:$0x1]
  %v603 = vpack.c.bf16 %v566, %v565
  %604 = vmatpush.bf16.msra.mxu0 0
  %605 = vmatpush.bf16.msra.mxu0 0
  %606 = vmatpush.bf16.msra.mxu0 0
  %607 = vmatpush.bf16.msra.mxu0 0
  %608 = vmatpush.bf16.msra.mxu0 0
  %609 = vmatpush.bf16.msra.mxu0 0
  %610 = vmatpush.bf16.msra.mxu0 0
  %611 = vmatpush.bf16.msra.mxu0 %v603
  %612 = vmatmul.bf16.gmra.mxu0 %v135
  %v613 = vpop.f32.mrf.mxu0
  %v614 = vadd.f32 0.0, %v613
  %v615 = vpop.f32.mrf.mxu0
  %v616 = vadd.f32 0.0, %v615
  %617 = vdwg.mxu0
  %v618 = vpack.c.bf16 %v616, %v614
  %v620 = vperm.slane %v583, 0
  %v638 = vunpack.c.l.b16 %v567
  %v639 = vunpack.c.l.b16 %v568
  %v640 = vunpack.c.l.b16 %v569
  %v641 = vunpack.c.l.b16 %v570
  %v642 = vunpack.c.l.b16 %v571
  %v643 = vunpack.c.l.b16 %v572
  %v644 = vunpack.c.l.b16 %v573
  %v645 = vunpack.c.l.b16 %v574
  %v646 = vunpack.c.l.b16 %v575
  %v647 = vunpack.c.l.b16 %v576
  %v648 = vunpack.c.l.b16 %v577
  %v649 = vunpack.c.l.b16 %v578
  %v650 = vunpack.c.l.b16 %v579
  %v651 = vunpack.c.l.b16 %v580
  %v652 = vunpack.c.l.b16 %v581
  %v653 = vunpack.c.l.b16 %v582
  %v654 = vpack.c.b16 %v639, %v638
  %v655 = vpack.c.b16 %v641, %v640
  %v656 = vpack.c.b16 %v643, %v642
  %v657 = vpack.c.b16 %v645, %v644
  %v658 = vpack.c.b16 %v647, %v646
  %v659 = vpack.c.b16 %v649, %v648
  %v660 = vpack.c.b16 %v651, %v650
  %v661 = vpack.c.b16 %v653, %v652
  %670 = vmatpush.bf16.msra.mxu0 %v661
  %671 = vmatpush.bf16.msra.mxu0 %v660
  %672 = vmatpush.bf16.msra.mxu0 %v659
  %673 = vmatpush.bf16.msra.mxu0 %v658
  %674 = vmatpush.bf16.msra.mxu0 %v657
  %675 = vmatpush.bf16.msra.mxu0 %v656
  %676 = vmatpush.bf16.msra.mxu0 %v655
  %677 = vmatpush.bf16.msra.mxu0 %v654
  %678 = vmatmul.bf16.gmra.mxu0 %v618
  %v679 = vpop.f32.mrf.mxu0
  %v680 = vadd.f32 %v620, %v679
  %v681 = vpop.f32.mrf.mxu0
  %v682 = vadd.f32 %v620, %v681
  %683 = vdwg.mxu0
  %v684 = vmax.f32 %v680, 0.0
  %v685 = vmax.f32 %v682, 0.0
  %v686 = vpack.c.bf16 %v685, %v684
  %v688 = vperm.slane %v600, 0
  %v706 = vunpack.c.l.b16 %v584
  %v707 = vunpack.c.l.b16 %v585
  %v708 = vunpack.c.l.b16 %v586
  %v709 = vunpack.c.l.b16 %v587
  %v710 = vunpack.c.l.b16 %v588
  %v711 = vunpack.c.l.b16 %v589
  %v712 = vunpack.c.l.b16 %v590
  %v713 = vunpack.c.l.b16 %v591
  %v714 = vunpack.c.l.b16 %v592
  %v715 = vunpack.c.l.b16 %v593
  %v716 = vunpack.c.l.b16 %v594
  %v717 = vunpack.c.l.b16 %v595
  %v718 = vunpack.c.l.b16 %v596
  %v719 = vunpack.c.l.b16 %v597
  %v720 = vunpack.c.l.b16 %v598
  %v721 = vunpack.c.l.b16 %v599
  %v722 = vpack.c.b16 %v707, %v706
  %v723 = vpack.c.b16 %v709, %v708
  %v724 = vpack.c.b16 %v711, %v710
  %v725 = vpack.c.b16 %v713, %v712
  %v726 = vpack.c.b16 %v715, %v714
  %v727 = vpack.c.b16 %v717, %v716
  %v728 = vpack.c.b16 %v719, %v718
  %v729 = vpack.c.b16 %v721, %v720
  %738 = vmatpush.bf16.msra.mxu0 %v729
  %739 = vmatpush.bf16.msra.mxu0 %v728
  %740 = vmatpush.bf16.msra.mxu0 %v727
  %741 = vmatpush.bf16.msra.mxu0 %v726
  %742 = vmatpush.bf16.msra.mxu0 %v725
  %743 = vmatpush.bf16.msra.mxu0 %v724
  %744 = vmatpush.bf16.msra.mxu0 %v723
  %745 = vmatpush.bf16.msra.mxu0 %v722
  %746 = vmatmul.bf16.gmra.mxu0 %v686
  %v747 = vpop.f32.mrf.mxu0
  %v748 = vadd.f32 %v688, %v747
  %v749 = vpop.f32.mrf.mxu0
  %v750 = vadd.f32 %v688, %v749
  %751 = vdwg.mxu0
  %v752 = vadd.f32 %v748, %v750
  %v753 = vrot.slane %v752, 4
  %v754 = vadd.f32 %v752, %v753
  %v755 = vrot.slane %v754, 2
  %v756 = vadd.f32 %v754, %v755
  %v757 = vrot.slane %v756, 1
  %v758 = vadd.f32 %v756, %v757
  %v759 = vmul.f32 %v758, %v298
  %v760 = vsub.f32 %v748, %v759
  %v761 = vsub.f32 %v750, %v759
  %v762 = vmul.f32 %v760, %v760
  %v763 = vmul.f32 %v761, %v761
  %v764 = vadd.f32 %v762, %v763
  %v765 = vrot.slane %v764, 4
  %v766 = vadd.f32 %v764, %v765
  %v767 = vrot.slane %v766, 2
  %v768 = vadd.f32 %v766, %v767
  %v769 = vrot.slane %v768, 1
  %v770 = vadd.f32 %v768, %v769
  %v771 = vmul.f32 %v770, %v298
  %v772 = vadd.f32 %v771, 1e-05
  %v773 = vrsqrt.pop %v772
  %v774 = vmul.f32 %v773, %v772
  %v775 = vmul.f32 %v774, %v773
  %v776 = vmul.f32 0.5, %v775
  %v777 = vsub.f32 1.5, %v776
  %v778 = vmul.f32 %v773, %v777
  %vm779 = vweird.f32 %v772
  %vm780 = vweird.f32 %v773
  %vm781 = vmor %vm779, %vm780
  %v782 = vsel %vm781, %v773, %v778
  %v783 = vmul.f32 %v760, %v782
  %v784 = vmul.f32 %v761, %v782
  %v786 = vperm.slane %v601, 0
  %v788 = vmul.f32 %v786, %v783
  %v789 = vmul.f32 %v786, %v784
  %v791 = vperm.slane %v602, 0
  %v793 = vadd.f32 %v788, %v791
  %v794 = vadd.f32 %v789, %v791
  %v795 = vmax.f32 %v793, 0.0
  %v796 = vmax.f32 %v794, 0.0
  %v797 = vld [vmem:[%s21] sm:$0xf]
  %v798 = vld [vmem:[%s21 + $0x4] sm:$0xf]
  %v799 = vld [vmem:[%s21 + $0x8] sm:$0xf]
  %v800 = vld [vmem:[%s21 + $0xc] sm:$0xf]
  %v801 = vld [vmem:[%s21 + $0x10] sm:$0xf]
  %v802 = vld [vmem:[%s21 + $0x14] sm:$0xf]
  %v803 = vld [vmem:[%s21 + $0x18] sm:$0xf]
  %v804 = vld [vmem:[%s21 + $0x1c] sm:$0xf]
  %v805 = vld [vmem:[%s21 + $0x20] sm:$0xf]
  %v806 = vld [vmem:[%s21 + $0x24] sm:$0xf]
  %v807 = vld [vmem:[%s21 + $0x28] sm:$0xf]
  %v808 = vld [vmem:[%s21 + $0x2c] sm:$0xf]
  %v809 = vld [vmem:[%s21 + $0x30] sm:$0xf]
  %v810 = vld [vmem:[%s21 + $0x34] sm:$0xf]
  %v811 = vld [vmem:[%s21 + $0x38] sm:$0xf]
  %v812 = vld [vmem:[%s21 + $0x3c] sm:$0xf]
  %v813 = vld [vmem:[%s22] sm:$0x1]
  %v814 = vld [vmem:[%s23] sm:$0xf]
  %v815 = vld [vmem:[%s23 + $0x4] sm:$0xf]
  %v816 = vld [vmem:[%s23 + $0x8] sm:$0xf]
  %v817 = vld [vmem:[%s23 + $0xc] sm:$0xf]
  %v818 = vld [vmem:[%s23 + $0x10] sm:$0xf]
  %v819 = vld [vmem:[%s23 + $0x14] sm:$0xf]
  %v820 = vld [vmem:[%s23 + $0x18] sm:$0xf]
  %v821 = vld [vmem:[%s23 + $0x1c] sm:$0xf]
  %v822 = vld [vmem:[%s23 + $0x20] sm:$0xf]
  %v823 = vld [vmem:[%s23 + $0x24] sm:$0xf]
  %v824 = vld [vmem:[%s23 + $0x28] sm:$0xf]
  %v825 = vld [vmem:[%s23 + $0x2c] sm:$0xf]
  %v826 = vld [vmem:[%s23 + $0x30] sm:$0xf]
  %v827 = vld [vmem:[%s23 + $0x34] sm:$0xf]
  %v828 = vld [vmem:[%s23 + $0x38] sm:$0xf]
  %v829 = vld [vmem:[%s23 + $0x3c] sm:$0xf]
  %v830 = vld [vmem:[%s24] sm:$0x1]
  %v831 = vld [vmem:[%s25] sm:$0xff]
  %v832 = vld [vmem:[%s25 + $0x8] sm:$0xff]
  %v833 = vld [vmem:[%s25 + $0x10] sm:$0xff]
  %v834 = vld [vmem:[%s25 + $0x18] sm:$0xff]
  %v835 = vld [vmem:[%s25 + $0x20] sm:$0xff]
  %v836 = vld [vmem:[%s25 + $0x28] sm:$0xff]
  %v837 = vld [vmem:[%s25 + $0x30] sm:$0xff]
  %v838 = vld [vmem:[%s25 + $0x38] sm:$0xff]
  %v839 = vld [vmem:[%s25 + $0x40] sm:$0xff]
  %v840 = vld [vmem:[%s25 + $0x48] sm:$0xff]
  %v841 = vld [vmem:[%s25 + $0x50] sm:$0xff]
  %v842 = vld [vmem:[%s25 + $0x58] sm:$0xff]
  %v843 = vld [vmem:[%s25 + $0x60] sm:$0xff]
  %v844 = vld [vmem:[%s25 + $0x68] sm:$0xff]
  %v845 = vld [vmem:[%s25 + $0x70] sm:$0xff]
  %v846 = vld [vmem:[%s25 + $0x78] sm:$0xff]
  %v847 = vld [vmem:[%s26] sm:$0x3]
  %v848 = vpack.c.bf16 %v796, %v795
  %v850 = vperm.slane %v813, 0
  %v868 = vunpack.c.l.b16 %v797
  %v869 = vunpack.c.l.b16 %v798
  %v870 = vunpack.c.l.b16 %v799
  %v871 = vunpack.c.l.b16 %v800
  %v872 = vunpack.c.l.b16 %v801
  %v873 = vunpack.c.l.b16 %v802
  %v874 = vunpack.c.l.b16 %v803
  %v875 = vunpack.c.l.b16 %v804
  %v876 = vunpack.c.l.b16 %v805
  %v877 = vunpack.c.l.b16 %v806
  %v878 = vunpack.c.l.b16 %v807
  %v879 = vunpack.c.l.b16 %v808
  %v880 = vunpack.c.l.b16 %v809
  %v881 = vunpack.c.l.b16 %v810
  %v882 = vunpack.c.l.b16 %v811
  %v883 = vunpack.c.l.b16 %v812
  %v884 = vpack.c.b16 %v869, %v868
  %v885 = vpack.c.b16 %v871, %v870
  %v886 = vpack.c.b16 %v873, %v872
  %v887 = vpack.c.b16 %v875, %v874
  %v888 = vpack.c.b16 %v877, %v876
  %v889 = vpack.c.b16 %v879, %v878
  %v890 = vpack.c.b16 %v881, %v880
  %v891 = vpack.c.b16 %v883, %v882
  %900 = vmatpush.bf16.msra.mxu0 %v891
  %901 = vmatpush.bf16.msra.mxu0 %v890
  %902 = vmatpush.bf16.msra.mxu0 %v889
  %903 = vmatpush.bf16.msra.mxu0 %v888
  %904 = vmatpush.bf16.msra.mxu0 %v887
  %905 = vmatpush.bf16.msra.mxu0 %v886
  %906 = vmatpush.bf16.msra.mxu0 %v885
  %907 = vmatpush.bf16.msra.mxu0 %v884
  %908 = vmatmul.bf16.gmra.mxu0 %v848
  %v909 = vpop.f32.mrf.mxu0
  %v910 = vadd.f32 %v850, %v909
  %v911 = vpop.f32.mrf.mxu0
  %v912 = vadd.f32 %v850, %v911
  %913 = vdwg.mxu0
  %v914 = vpack.c.bf16 %v912, %v910
  %v916 = vperm.slane %v830, 0
  %v934 = vunpack.c.l.b16 %v814
  %v935 = vunpack.c.l.b16 %v815
  %v936 = vunpack.c.l.b16 %v816
  %v937 = vunpack.c.l.b16 %v817
  %v938 = vunpack.c.l.b16 %v818
  %v939 = vunpack.c.l.b16 %v819
  %v940 = vunpack.c.l.b16 %v820
  %v941 = vunpack.c.l.b16 %v821
  %v942 = vunpack.c.l.b16 %v822
  %v943 = vunpack.c.l.b16 %v823
  %v944 = vunpack.c.l.b16 %v824
  %v945 = vunpack.c.l.b16 %v825
  %v946 = vunpack.c.l.b16 %v826
  %v947 = vunpack.c.l.b16 %v827
  %v948 = vunpack.c.l.b16 %v828
  %v949 = vunpack.c.l.b16 %v829
  %v950 = vpack.c.b16 %v935, %v934
  %v951 = vpack.c.b16 %v937, %v936
  %v952 = vpack.c.b16 %v939, %v938
  %v953 = vpack.c.b16 %v941, %v940
  %v954 = vpack.c.b16 %v943, %v942
  %v955 = vpack.c.b16 %v945, %v944
  %v956 = vpack.c.b16 %v947, %v946
  %v957 = vpack.c.b16 %v949, %v948
  %966 = vmatpush.bf16.msra.mxu0 %v957
  %967 = vmatpush.bf16.msra.mxu0 %v956
  %968 = vmatpush.bf16.msra.mxu0 %v955
  %969 = vmatpush.bf16.msra.mxu0 %v954
  %970 = vmatpush.bf16.msra.mxu0 %v953
  %971 = vmatpush.bf16.msra.mxu0 %v952
  %972 = vmatpush.bf16.msra.mxu0 %v951
  %973 = vmatpush.bf16.msra.mxu0 %v950
  %974 = vmatmul.bf16.gmra.mxu0 %v914
  %v975 = vpop.f32.mrf.mxu0
  %v976 = vadd.f32 %v916, %v975
  %v977 = vpop.f32.mrf.mxu0
  %v978 = vadd.f32 %v916, %v977
  %979 = vdwg.mxu0
  %v980 = vld [vmem:[%s1] sm:$0xf]
  %v981 = vld [vmem:[%s1 + $0x4] sm:$0xf]
  %v982 = vpack.c.bf16 %v978, %v976
  %v999 = vunpack.c.l.b16 %v831
  %v1000 = vunpack.c.h.b16 %v831
  %v1001 = vunpack.c.l.b16 %v832
  %v1002 = vunpack.c.h.b16 %v832
  %v1003 = vunpack.c.l.b16 %v833
  %v1004 = vunpack.c.h.b16 %v833
  %v1005 = vunpack.c.l.b16 %v834
  %v1006 = vunpack.c.h.b16 %v834
  %v1007 = vunpack.c.l.b16 %v835
  %v1008 = vunpack.c.h.b16 %v835
  %v1009 = vunpack.c.l.b16 %v836
  %v1010 = vunpack.c.h.b16 %v836
  %v1011 = vunpack.c.l.b16 %v837
  %v1012 = vunpack.c.h.b16 %v837
  %v1013 = vunpack.c.l.b16 %v838
  %v1014 = vunpack.c.h.b16 %v838
  %v1015 = vunpack.c.l.b16 %v839
  %v1016 = vunpack.c.h.b16 %v839
  %v1017 = vunpack.c.l.b16 %v840
  %v1018 = vunpack.c.h.b16 %v840
  %v1019 = vunpack.c.l.b16 %v841
  %v1020 = vunpack.c.h.b16 %v841
  %v1021 = vunpack.c.l.b16 %v842
  %v1022 = vunpack.c.h.b16 %v842
  %v1023 = vunpack.c.l.b16 %v843
  %v1024 = vunpack.c.h.b16 %v843
  %v1025 = vunpack.c.l.b16 %v844
  %v1026 = vunpack.c.h.b16 %v844
  %v1027 = vunpack.c.l.b16 %v845
  %v1028 = vunpack.c.h.b16 %v845
  %v1029 = vunpack.c.l.b16 %v846
  %v1030 = vunpack.c.h.b16 %v846
  %v1031 = vpack.c.b16 %v1001, %v999
  %v1032 = vpack.c.b16 %v1002, %v1000
  %v1033 = vpack.c.b16 %v1005, %v1003
  %v1034 = vpack.c.b16 %v1006, %v1004
  %v1035 = vpack.c.b16 %v1009, %v1007
  %v1036 = vpack.c.b16 %v1010, %v1008
  %v1037 = vpack.c.b16 %v1013, %v1011
  %v1038 = vpack.c.b16 %v1014, %v1012
  %v1039 = vpack.c.b16 %v1017, %v1015
  %v1040 = vpack.c.b16 %v1018, %v1016
  %v1041 = vpack.c.b16 %v1021, %v1019
  %v1042 = vpack.c.b16 %v1022, %v1020
  %v1043 = vpack.c.b16 %v1025, %v1023
  %v1044 = vpack.c.b16 %v1026, %v1024
  %v1045 = vpack.c.b16 %v1029, %v1027
  %v1046 = vpack.c.b16 %v1030, %v1028
  %1063 = vmatpush.bf16.msra.mxu0 %v1045
  %1064 = vmatpush.bf16.msra.mxu0 %v1043
  %1065 = vmatpush.bf16.msra.mxu0 %v1041
  %1066 = vmatpush.bf16.msra.mxu0 %v1039
  %1067 = vmatpush.bf16.msra.mxu0 %v1037
  %1068 = vmatpush.bf16.msra.mxu0 %v1035
  %1069 = vmatpush.bf16.msra.mxu0 %v1033
  %1070 = vmatpush.bf16.msra.mxu0 %v1031
  %1071 = vmatmul.bf16.gmra.mxu0 %v982
  %v1072 = vpop.f32.mrf.mxu0
  %v1073 = vadd.f32 0.0, %v1072
  %v1074 = vpop.f32.mrf.mxu0
  %v1075 = vadd.f32 0.0, %v1074
  %1076 = vdwg.mxu0
  %1077 = vmatpush.bf16.msra.mxu0 %v1046
  %1078 = vmatpush.bf16.msra.mxu0 %v1044
  %1079 = vmatpush.bf16.msra.mxu0 %v1042
  %1080 = vmatpush.bf16.msra.mxu0 %v1040
  %1081 = vmatpush.bf16.msra.mxu0 %v1038
  %1082 = vmatpush.bf16.msra.mxu0 %v1036
  %1083 = vmatpush.bf16.msra.mxu0 %v1034
  %1084 = vmatpush.bf16.msra.mxu0 %v1032
  %1085 = vmatmul.bf16.gmra.mxu0 %v982
  %v1086 = vpop.f32.mrf.mxu0
  %v1087 = vadd.f32 0.0, %v1086
  %v1088 = vpop.f32.mrf.mxu0
  %v1089 = vadd.f32 0.0, %v1088
  %1090 = vdwg.mxu0
  %v1091 = vpack.c.bf16 %v1075, %v1073
  %v1092 = vpack.c.bf16 %v1089, %v1087
  %v1094 = vperm.slane %v847, 0
  %v1095 = vperm.slane %v847, 1
  %v1100 = vunpack.c.l.b16 %v980
  %v1101 = vunpack.c.l.b16 %v981
  %v1102 = vpack.c.b16 %v1101, %v1100
  %v1104 = vsel %vm133, %v1102, 0
  %1106 = vmatpush.bf16.msra.mxu0 0
  %1107 = vmatpush.bf16.msra.mxu0 0
  %1108 = vmatpush.bf16.msra.mxu0 0
  %1109 = vmatpush.bf16.msra.mxu0 0
  %1110 = vmatpush.bf16.msra.mxu0 0
  %1111 = vmatpush.bf16.msra.mxu0 0
  %1112 = vmatpush.bf16.msra.mxu0 0
  %1113 = vmatpush.bf16.msra.mxu0 %v1091
  %1114 = vmatmul.bf16.gmra.mxu0 %v1104
  %v1115 = vpop.f32.mrf.mxu0
  %v1116 = vadd.f32 %v1094, %v1115
  %v1117 = vpop.f32.mrf.mxu0
  %v1118 = vadd.f32 %v1094, %v1117
  %1119 = vdwg.mxu0
  %1120 = vmatpush.bf16.msra.mxu0 0
  %1121 = vmatpush.bf16.msra.mxu0 0
  %1122 = vmatpush.bf16.msra.mxu0 0
  %1123 = vmatpush.bf16.msra.mxu0 0
  %1124 = vmatpush.bf16.msra.mxu0 0
  %1125 = vmatpush.bf16.msra.mxu0 0
  %1126 = vmatpush.bf16.msra.mxu0 0
  %1127 = vmatpush.bf16.msra.mxu0 %v1092
  %1128 = vmatmul.bf16.gmra.mxu0 %v1104
  %v1129 = vpop.f32.mrf.mxu0
  %v1130 = vadd.f32 %v1095, %v1129
  %v1131 = vpop.f32.mrf.mxu0
  %v1132 = vadd.f32 %v1095, %v1131
  %1133 = vdwg.mxu0
  %1134 = vst [vmem:[%s27] sm:$0xff] %v1116
  %1135 = vst [vmem:[%s27 + $0x8] sm:$0xff] %v1130
  %1136 = vst [vmem:[%s27 + $0x10] sm:$0xff] %v1118
  %1137 = vst [vmem:[%s27 + $0x18] sm:$0xff] %v1132
  // Predicated region
  $region110: #{gin_enc_forward.2} parent=0 // pred_check
    _
  $region111: #{gin_enc_forward.2} parent=0 // pred_check_branch
    %1139 = sbr.rel (0) target = $region113
  $region112: #{gin_enc_forward.2} parent=0 // pred_region
    _
  $region113: #{gin_enc_forward.2} parent=0 // pred_fallthru
    _
  // Predicated region
  $region114: #{gin_enc_forward.2} parent=0 // pred_check
    _
  $region115: #{gin_enc_forward.2} parent=0 // pred_check_branch
    %1141 = sbr.rel (0) target = $region117
  $region116: #{gin_enc_forward.2} parent=0 // pred_region
    _
  $region117: #{gin_enc_forward.2} parent=0 // pred_fallthru
    _

// kernel: gin_enc_forward.3
$region0: #{gin_enc_forward.3}
  #allocation0 [shape = 'u32[]', space=smem, size = 0x4, offset = 0x4, fixed_abs, tag = 'smem constant byte address 0x4 - core index']
  #allocation1 [shape = 'u32[72,128]{1,0:T(1,128)}', space=vmem, size = 0x9000, scoped, tag = 'internal scratch']
  %s0 = inlined_call_operand.vmem [shape: f32[2,128,256], index: 0, kind: input, shape index: {}]
  %s1 = inlined_call_operand.vmem [shape: f32[80,128], index: 1, kind: input, shape index: {}]
  %s2 = inlined_call_operand.vmem [shape: f32[8,128], index: 2, kind: input, shape index: {}]
  %s3 = inlined_call_operand.vmem [shape: bf16[128,128], index: 3, kind: input, shape index: {}]
  %s4 = inlined_call_operand.vmem [shape: f32[1,128], index: 4, kind: input, shape index: {}]
  %s5 = inlined_call_operand.vmem [shape: bf16[128,384], index: 5, kind: input, shape index: {}]
  %s6 = inlined_call_operand.vmem [shape: f32[1,384], index: 6, kind: input, shape index: {}]
  %s7 = inlined_call_operand.vmem [shape: bf16[128,128], index: 7, kind: input, shape index: {}]
  %s8 = inlined_call_operand.vmem [shape: f32[1,128], index: 8, kind: input, shape index: {}]
  %s9 = inlined_call_operand.vmem [shape: bf16[128,256], index: 9, kind: input, shape index: {}]
  %s10 = inlined_call_operand.vmem [shape: f32[1,256], index: 10, kind: input, shape index: {}]
  %s11 = inlined_call_operand.vmem [shape: bf16[128,128], index: 11, kind: input, shape index: {}]
  %s12 = inlined_call_operand.vmem [shape: f32[1,128], index: 12, kind: input, shape index: {}]
  %s13 = inlined_call_operand.vmem [shape: bf16[128,128], index: 13, kind: input, shape index: {}]
  %s14 = inlined_call_operand.vmem [shape: f32[1,128], index: 14, kind: input, shape index: {}]
  %s15 = inlined_call_operand.vmem [shape: bf16[128,128], index: 15, kind: input, shape index: {}]
  %s16 = inlined_call_operand.vmem [shape: f32[1,128], index: 16, kind: input, shape index: {}]
  %s17 = inlined_call_operand.vmem [shape: f32[2,8,128], index: 17, kind: output, shape index: {}]
  %s18 = sld [smem:[#allocation0]]
  $region101: #{gin_enc_forward.3} parent=0
    _
  %s20 = ssub.s32 1, %s18
  %s21 = scalar_select 0, %s20, %s18
  loop: start=0, step=1, limit=4
  $region2: #{gin_enc_forward.3} parent=0 // loop_pre_header
    _
  $region3: #{gin_enc_forward.3} parent=0 // loop_header
    %s23 = sphi 0, %s27
    %p24 = scmp.ge.s32.totalorder %s23, 4
    %s33 = sphi 0, %s35
    %s36 = sphi 0, %s33
    %s37 = sphi 0, %s36
    %s53 = sphi 0, %s37
    %s57 = sphi 0, %s57
    %s59 = sphi 0, %s57
    %s60 = sphi 0, %s59
    %s74 = sphi 0, %s60
    %s78 = sphi 0, %s78
    %s80 = sphi 0, %s78
    %s81 = sphi 0, %s80
    %s95 = sphi 0, %s81
    %s99 = sphi 0, %s99
    %s101 = sphi 0, %s99
    %s102 = sphi 0, %s101
    %s116 = sphi 0, %s102
    %s120 = sphi 0, %s120
    %s122 = sphi 0, %s120
    %s123 = sphi 0, %s122
    %s137 = sphi 0, %s123
    %s141 = sphi 0, %s141
    %s143 = sphi 0, %s141
    %s144 = sphi 0, %s143
    %s158 = sphi 0, %s144
    %s162 = sphi 0, %s162
    %s164 = sphi 0, %s162
    %s165 = sphi 0, %s164
    %s179 = sphi 0, %s165
    %s183 = sphi 0, %s183
    %s185 = sphi 0, %s183
    %s186 = sphi 0, %s185
    %s200 = sphi 0, %s186
    %s204 = sphi 0, %s204
    %s206 = sphi 0, %s204
    %s207 = sphi 0, %s206
    %s221 = sphi 0, %s207
    %s225 = sphi 0, %s225
    %s227 = sphi 0, %s225
    %s228 = sphi 0, %s227
    %s242 = sphi 0, %s228
    %s246 = sphi 0, %s246
    %s248 = sphi 0, %s246
    %s249 = sphi 0, %s248
    %s263 = sphi 0, %s249
    %s267 = sphi 0, %s267
    %s269 = sphi 0, %s267
    %s270 = sphi 0, %s269
    %s284 = sphi 0, %s270
    %s288 = sphi 0, %s288
    %s290 = sphi 0, %s288
    %s291 = sphi 0, %s290
    %s305 = sphi 0, %s291
    %s309 = sphi 0, %s309
    %s311 = sphi 0, %s309
    %s312 = sphi 0, %s311
    %s326 = sphi 0, %s312
    %s330 = sphi 0, %s330
    %s332 = sphi 0, %s330
    %s333 = sphi 0, %s332
    %s347 = sphi 0, %s333
    %s351 = sphi 0, %s351
    %s353 = sphi 0, %s351
    %s354 = sphi 0, %s353
    %s368 = sphi 0, %s354
    %s372 = sphi 0, %s372
    %s374 = sphi 0, %s372
    %s375 = sphi 0, %s374
    %s389 = sphi 0, %s375
    %s395 = sphi 0, %s397
    %s398 = sphi 0, %s395
    %s399 = sphi 0, %s398
    %s415 = sphi 0, %s399
  $region4: #{gin_enc_forward.3} parent=0 // loop_header_branch
    %26 = sbr.rel (%p24) target = $region8
  $region5: #{gin_enc_forward.3} parent=0 // loop_body
    %s28 = ssub.s32 %s23, 1
    %s29 = ssub.s32 %s23, 2
    %s30 = sadd.s32 %s23, 1
    %s31 = ssub.s32 %s23, %s30
    %p32 = scmp.eq.s32.totalorder %s31, 0
    %s34 = sadd.s32 %s33, 1
    %s35 = scalar_select %p32, %s33, %s34
    %p38 = pneg %p32
    %p39 = scmp.eq.s32.totalorder %s23, 1
    %p40 = por %p38, %p39
    %p41 = scmp.ne.s32.totalorder %s33, %s36
    %p42 = scmp.eq.s32.totalorder %s23, 0
    %p43 = por %p41, %p42
    %p44 = scmp.ne.s32.totalorder %s33, %s36
    %p45 = scmp.eq.s32.totalorder %s28, 1
    %p46 = por %p44, %p45
    %p47 = scmp.ne.s32.totalorder %s36, %s37
    %p48 = scmp.eq.s32.totalorder %s28, 0
    %p49 = por %p47, %p48
    %p50 = scmp.ne.s32.totalorder %s36, %s37
    %p51 = scmp.eq.s32.totalorder %s29, 1
    %p52 = por %p50, %p51
    %p54 = scmp.ne.s32.totalorder %s37, %s53
    %p55 = scmp.eq.s32.totalorder %s29, 0
    %p56 = por %p54, %p55
    %s58 = sadd.s32 %s57, 1
    %p61 = scmp.eq.s32.totalorder %s23, 1
    %p62 = scmp.ne.s32.totalorder %s57, %s59
    %p63 = scmp.eq.s32.totalorder %s23, 0
    %p64 = por %p62, %p63
    %p65 = scmp.ne.s32.totalorder %s57, %s59
    %p66 = scmp.eq.s32.totalorder %s28, 1
    %p67 = por %p65, %p66
    %p68 = scmp.ne.s32.totalorder %s59, %s60
    %p69 = scmp.eq.s32.totalorder %s28, 0
    %p70 = por %p68, %p69
    %p71 = scmp.ne.s32.totalorder %s59, %s60
    %p72 = scmp.eq.s32.totalorder %s29, 1
    %p73 = por %p71, %p72
    %p75 = scmp.ne.s32.totalorder %s60, %s74
    %p76 = scmp.eq.s32.totalorder %s29, 0
    %p77 = por %p75, %p76
    %s79 = sadd.s32 %s78, 1
    %p82 = scmp.eq.s32.totalorder %s23, 1
    %p83 = scmp.ne.s32.totalorder %s78, %s80
    %p84 = scmp.eq.s32.totalorder %s23, 0
    %p85 = por %p83, %p84
    %p86 = scmp.ne.s32.totalorder %s78, %s80
    %p87 = scmp.eq.s32.totalorder %s28, 1
    %p88 = por %p86, %p87
    %p89 = scmp.ne.s32.totalorder %s80, %s81
    %p90 = scmp.eq.s32.totalorder %s28, 0
    %p91 = por %p89, %p90
    %p92 = scmp.ne.s32.totalorder %s80, %s81
    %p93 = scmp.eq.s32.totalorder %s29, 1
    %p94 = por %p92, %p93
    %p96 = scmp.ne.s32.totalorder %s81, %s95
    %p97 = scmp.eq.s32.totalorder %s29, 0
    %p98 = por %p96, %p97
    %s100 = sadd.s32 %s99, 1
    %p103 = scmp.eq.s32.totalorder %s23, 1
    %p104 = scmp.ne.s32.totalorder %s99, %s101
    %p105 = scmp.eq.s32.totalorder %s23, 0
    %p106 = por %p104, %p105
    %p107 = scmp.ne.s32.totalorder %s99, %s101
    %p108 = scmp.eq.s32.totalorder %s28, 1
    %p109 = por %p107, %p108
    %p110 = scmp.ne.s32.totalorder %s101, %s102
    %p111 = scmp.eq.s32.totalorder %s28, 0
    %p112 = por %p110, %p111
    %p113 = scmp.ne.s32.totalorder %s101, %s102
    %p114 = scmp.eq.s32.totalorder %s29, 1
    %p115 = por %p113, %p114
    %p117 = scmp.ne.s32.totalorder %s102, %s116
    %p118 = scmp.eq.s32.totalorder %s29, 0
    %p119 = por %p117, %p118
    %s121 = sadd.s32 %s120, 1
    %p124 = scmp.eq.s32.totalorder %s23, 1
    %p125 = scmp.ne.s32.totalorder %s120, %s122
    %p126 = scmp.eq.s32.totalorder %s23, 0
    %p127 = por %p125, %p126
    %p128 = scmp.ne.s32.totalorder %s120, %s122
    %p129 = scmp.eq.s32.totalorder %s28, 1
    %p130 = por %p128, %p129
    %p131 = scmp.ne.s32.totalorder %s122, %s123
    %p132 = scmp.eq.s32.totalorder %s28, 0
    %p133 = por %p131, %p132
    %p134 = scmp.ne.s32.totalorder %s122, %s123
    %p135 = scmp.eq.s32.totalorder %s29, 1
    %p136 = por %p134, %p135
    %p138 = scmp.ne.s32.totalorder %s123, %s137
    %p139 = scmp.eq.s32.totalorder %s29, 0
    %p140 = por %p138, %p139
    %s142 = sadd.s32 %s141, 1
    %p145 = scmp.eq.s32.totalorder %s23, 1
    %p146 = scmp.ne.s32.totalorder %s141, %s143
    %p147 = scmp.eq.s32.totalorder %s23, 0
    %p148 = por %p146, %p147
    %p149 = scmp.ne.s32.totalorder %s141, %s143
    %p150 = scmp.eq.s32.totalorder %s28, 1
    %p151 = por %p149, %p150
    %p152 = scmp.ne.s32.totalorder %s143, %s144
    %p153 = scmp.eq.s32.totalorder %s28, 0
    %p154 = por %p152, %p153
    %p155 = scmp.ne.s32.totalorder %s143, %s144
    %p156 = scmp.eq.s32.totalorder %s29, 1
    %p157 = por %p155, %p156
    %p159 = scmp.ne.s32.totalorder %s144, %s158
    %p160 = scmp.eq.s32.totalorder %s29, 0
    %p161 = por %p159, %p160
    %s163 = sadd.s32 %s162, 1
    %p166 = scmp.eq.s32.totalorder %s23, 1
    %p167 = scmp.ne.s32.totalorder %s162, %s164
    %p168 = scmp.eq.s32.totalorder %s23, 0
    %p169 = por %p167, %p168
    %p170 = scmp.ne.s32.totalorder %s162, %s164
    %p171 = scmp.eq.s32.totalorder %s28, 1
    %p172 = por %p170, %p171
    %p173 = scmp.ne.s32.totalorder %s164, %s165
    %p174 = scmp.eq.s32.totalorder %s28, 0
    %p175 = por %p173, %p174
    %p176 = scmp.ne.s32.totalorder %s164, %s165
    %p177 = scmp.eq.s32.totalorder %s29, 1
    %p178 = por %p176, %p177
    %p180 = scmp.ne.s32.totalorder %s165, %s179
    %p181 = scmp.eq.s32.totalorder %s29, 0
    %p182 = por %p180, %p181
    %s184 = sadd.s32 %s183, 1
    %p187 = scmp.eq.s32.totalorder %s23, 1
    %p188 = scmp.ne.s32.totalorder %s183, %s185
    %p189 = scmp.eq.s32.totalorder %s23, 0
    %p190 = por %p188, %p189
    %p191 = scmp.ne.s32.totalorder %s183, %s185
    %p192 = scmp.eq.s32.totalorder %s28, 1
    %p193 = por %p191, %p192
    %p194 = scmp.ne.s32.totalorder %s185, %s186
    %p195 = scmp.eq.s32.totalorder %s28, 0
    %p196 = por %p194, %p195
    %p197 = scmp.ne.s32.totalorder %s185, %s186
    %p198 = scmp.eq.s32.totalorder %s29, 1
    %p199 = por %p197, %p198
    %p201 = scmp.ne.s32.totalorder %s186, %s200
    %p202 = scmp.eq.s32.totalorder %s29, 0
    %p203 = por %p201, %p202
    %s205 = sadd.s32 %s204, 1
    %p208 = scmp.eq.s32.totalorder %s23, 1
    %p209 = scmp.ne.s32.totalorder %s204, %s206
    %p210 = scmp.eq.s32.totalorder %s23, 0
    %p211 = por %p209, %p210
    %p212 = scmp.ne.s32.totalorder %s204, %s206
    %p213 = scmp.eq.s32.totalorder %s28, 1
    %p214 = por %p212, %p213
    %p215 = scmp.ne.s32.totalorder %s206, %s207
    %p216 = scmp.eq.s32.totalorder %s28, 0
    %p217 = por %p215, %p216
    %p218 = scmp.ne.s32.totalorder %s206, %s207
    %p219 = scmp.eq.s32.totalorder %s29, 1
    %p220 = por %p218, %p219
    %p222 = scmp.ne.s32.totalorder %s207, %s221
    %p223 = scmp.eq.s32.totalorder %s29, 0
    %p224 = por %p222, %p223
    %s226 = sadd.s32 %s225, 1
    %p229 = scmp.eq.s32.totalorder %s23, 1
    %p230 = scmp.ne.s32.totalorder %s225, %s227
    %p231 = scmp.eq.s32.totalorder %s23, 0
    %p232 = por %p230, %p231
    %p233 = scmp.ne.s32.totalorder %s225, %s227
    %p234 = scmp.eq.s32.totalorder %s28, 1
    %p235 = por %p233, %p234
    %p236 = scmp.ne.s32.totalorder %s227, %s228
    %p237 = scmp.eq.s32.totalorder %s28, 0
    %p238 = por %p236, %p237
    %p239 = scmp.ne.s32.totalorder %s227, %s228
    %p240 = scmp.eq.s32.totalorder %s29, 1
    %p241 = por %p239, %p240
    %p243 = scmp.ne.s32.totalorder %s228, %s242
    %p244 = scmp.eq.s32.totalorder %s29, 0
    %p245 = por %p243, %p244
    %s247 = sadd.s32 %s246, 1
    %p250 = scmp.eq.s32.totalorder %s23, 1
    %p251 = scmp.ne.s32.totalorder %s246, %s248
    %p252 = scmp.eq.s32.totalorder %s23, 0
    %p253 = por %p251, %p252
    %p254 = scmp.ne.s32.totalorder %s246, %s248
    %p255 = scmp.eq.s32.totalorder %s28, 1
    %p256 = por %p254, %p255
    %p257 = scmp.ne.s32.totalorder %s248, %s249
    %p258 = scmp.eq.s32.totalorder %s28, 0
    %p259 = por %p257, %p258
    %p260 = scmp.ne.s32.totalorder %s248, %s249
    %p261 = scmp.eq.s32.totalorder %s29, 1
    %p262 = por %p260, %p261
    %p264 = scmp.ne.s32.totalorder %s249, %s263
    %p265 = scmp.eq.s32.totalorder %s29, 0
    %p266 = por %p264, %p265
    %s268 = sadd.s32 %s267, 1
    %p271 = scmp.eq.s32.totalorder %s23, 1
    %p272 = scmp.ne.s32.totalorder %s267, %s269
    %p273 = scmp.eq.s32.totalorder %s23, 0
    %p274 = por %p272, %p273
    %p275 = scmp.ne.s32.totalorder %s267, %s269
    %p276 = scmp.eq.s32.totalorder %s28, 1
    %p277 = por %p275, %p276
    %p278 = scmp.ne.s32.totalorder %s269, %s270
    %p279 = scmp.eq.s32.totalorder %s28, 0
    %p280 = por %p278, %p279
    %p281 = scmp.ne.s32.totalorder %s269, %s270
    %p282 = scmp.eq.s32.totalorder %s29, 1
    %p283 = por %p281, %p282
    %p285 = scmp.ne.s32.totalorder %s270, %s284
    %p286 = scmp.eq.s32.totalorder %s29, 0
    %p287 = por %p285, %p286
    %s289 = sadd.s32 %s288, 1
    %p292 = scmp.eq.s32.totalorder %s23, 1
    %p293 = scmp.ne.s32.totalorder %s288, %s290
    %p294 = scmp.eq.s32.totalorder %s23, 0
    %p295 = por %p293, %p294
    %p296 = scmp.ne.s32.totalorder %s288, %s290
    %p297 = scmp.eq.s32.totalorder %s28, 1
    %p298 = por %p296, %p297
    %p299 = scmp.ne.s32.totalorder %s290, %s291
    %p300 = scmp.eq.s32.totalorder %s28, 0
    %p301 = por %p299, %p300
    %p302 = scmp.ne.s32.totalorder %s290, %s291
    %p303 = scmp.eq.s32.totalorder %s29, 1
    %p304 = por %p302, %p303
    %p306 = scmp.ne.s32.totalorder %s291, %s305
    %p307 = scmp.eq.s32.totalorder %s29, 0
    %p308 = por %p306, %p307
    %s310 = sadd.s32 %s309, 1
    %p313 = scmp.eq.s32.totalorder %s23, 1
    %p314 = scmp.ne.s32.totalorder %s309, %s311
    %p315 = scmp.eq.s32.totalorder %s23, 0
    %p316 = por %p314, %p315
    %p317 = scmp.ne.s32.totalorder %s309, %s311
    %p318 = scmp.eq.s32.totalorder %s28, 1
    %p319 = por %p317, %p318
    %p320 = scmp.ne.s32.totalorder %s311, %s312
    %p321 = scmp.eq.s32.totalorder %s28, 0
    %p322 = por %p320, %p321
    %p323 = scmp.ne.s32.totalorder %s311, %s312
    %p324 = scmp.eq.s32.totalorder %s29, 1
    %p325 = por %p323, %p324
    %p327 = scmp.ne.s32.totalorder %s312, %s326
    %p328 = scmp.eq.s32.totalorder %s29, 0
    %p329 = por %p327, %p328
    %s331 = sadd.s32 %s330, 1
    %p334 = scmp.eq.s32.totalorder %s23, 1
    %p335 = scmp.ne.s32.totalorder %s330, %s332
    %p336 = scmp.eq.s32.totalorder %s23, 0
    %p337 = por %p335, %p336
    %p338 = scmp.ne.s32.totalorder %s330, %s332
    %p339 = scmp.eq.s32.totalorder %s28, 1
    %p340 = por %p338, %p339
    %p341 = scmp.ne.s32.totalorder %s332, %s333
    %p342 = scmp.eq.s32.totalorder %s28, 0
    %p343 = por %p341, %p342
    %p344 = scmp.ne.s32.totalorder %s332, %s333
    %p345 = scmp.eq.s32.totalorder %s29, 1
    %p346 = por %p344, %p345
    %p348 = scmp.ne.s32.totalorder %s333, %s347
    %p349 = scmp.eq.s32.totalorder %s29, 0
    %p350 = por %p348, %p349
    %s352 = sadd.s32 %s351, 1
    %p355 = scmp.eq.s32.totalorder %s23, 1
    %p356 = scmp.ne.s32.totalorder %s351, %s353
    %p357 = scmp.eq.s32.totalorder %s23, 0
    %p358 = por %p356, %p357
    %p359 = scmp.ne.s32.totalorder %s351, %s353
    %p360 = scmp.eq.s32.totalorder %s28, 1
    %p361 = por %p359, %p360
    %p362 = scmp.ne.s32.totalorder %s353, %s354
    %p363 = scmp.eq.s32.totalorder %s28, 0
    %p364 = por %p362, %p363
    %p365 = scmp.ne.s32.totalorder %s353, %s354
    %p366 = scmp.eq.s32.totalorder %s29, 1
    %p367 = por %p365, %p366
    %p369 = scmp.ne.s32.totalorder %s354, %s368
    %p370 = scmp.eq.s32.totalorder %s29, 0
    %p371 = por %p369, %p370
    %s373 = sadd.s32 %s372, 1
    %p376 = scmp.eq.s32.totalorder %s23, 1
    %p377 = scmp.ne.s32.totalorder %s372, %s374
    %p378 = scmp.eq.s32.totalorder %s23, 0
    %p379 = por %p377, %p378
    %p380 = scmp.ne.s32.totalorder %s372, %s374
    %p381 = scmp.eq.s32.totalorder %s28, 1
    %p382 = por %p380, %p381
    %p383 = scmp.ne.s32.totalorder %s374, %s375
    %p384 = scmp.eq.s32.totalorder %s28, 0
    %p385 = por %p383, %p384
    %p386 = scmp.ne.s32.totalorder %s374, %s375
    %p387 = scmp.eq.s32.totalorder %s29, 1
    %p388 = por %p386, %p387
    %p390 = scmp.ne.s32.totalorder %s375, %s389
    %p391 = scmp.eq.s32.totalorder %s29, 0
    %p392 = por %p390, %p391
    %s393 = ssub.s32 %s23, %s30
    %p394 = scmp.eq.s32.totalorder %s393, 0
    %s396 = sadd.s32 %s395, 1
    %s397 = scalar_select %p394, %s395, %s396
    %p400 = pneg %p394
    %p401 = scmp.eq.s32.totalorder %s23, 1
    %p402 = por %p400, %p401
    %p403 = scmp.ne.s32.totalorder %s395, %s398
    %p404 = scmp.eq.s32.totalorder %s23, 0
    %p405 = por %p403, %p404
    %p406 = scmp.ne.s32.totalorder %s395, %s398
    %p407 = scmp.eq.s32.totalorder %s28, 1
    %p408 = por %p406, %p407
    %p409 = scmp.ne.s32.totalorder %s398, %s399
    %p410 = scmp.eq.s32.totalorder %s28, 0
    %p411 = por %p409, %p410
    %p412 = scmp.ne.s32.totalorder %s398, %s399
    %p413 = scmp.eq.s32.totalorder %s29, 1
    %p414 = por %p412, %p413
    %p416 = scmp.ne.s32.totalorder %s399, %s415
    %p417 = scmp.eq.s32.totalorder %s29, 0
    %p418 = por %p416, %p417
    %p419 = scmp.le.s32.totalorder 1, %s23
    %p420 = scmp.lt.s32.totalorder %s23, 3
    %p421 = pnand %p419, %p420
    %p422 = pneg %p421
    // Predicated region
    $region9: #{gin_enc_forward.3} parent=5 // pred_check
      _
    $region10: #{gin_enc_forward.3} parent=5 // pred_check_branch
      %424 = sbr.rel (%p421) target = $region12
    $region11: #{gin_enc_forward.3} parent=5 // pred_region
      %s425 = ssub.s32 %s23, 1
      // Predicated region
      $region13: #{gin_enc_forward.3} parent=11 // pred_check
        %p426 = pneg %p70
      $region14: #{gin_enc_forward.3} parent=11 // pred_check_branch
        %428 = sbr.rel (%p426) target = $region16
      $region15: #{gin_enc_forward.3} parent=11 // pred_region
        _
      $region16: #{gin_enc_forward.3} parent=11 // pred_fallthru
        _
      // Predicated region
      $region17: #{gin_enc_forward.3} parent=11 // pred_check
        %p429 = pneg %p91
      $region18: #{gin_enc_forward.3} parent=11 // pred_check_branch
        %431 = sbr.rel (%p429) target = $region20
      $region19: #{gin_enc_forward.3} parent=11 // pred_region
        _
      $region20: #{gin_enc_forward.3} parent=11 // pred_fallthru
        _
      // Predicated region
      $region21: #{gin_enc_forward.3} parent=11 // pred_check
        %p432 = pneg %p112
      $region22: #{gin_enc_forward.3} parent=11 // pred_check_branch
        %434 = sbr.rel (%p432) target = $region24
      $region23: #{gin_enc_forward.3} parent=11 // pred_region
        _
      $region24: #{gin_enc_forward.3} parent=11 // pred_fallthru
        _
      // Predicated region
      $region25: #{gin_enc_forward.3} parent=11 // pred_check
        %p435 = pneg %p133
      $region26: #{gin_enc_forward.3} parent=11 // pred_check_branch
        %437 = sbr.rel (%p435) target = $region28
      $region27: #{gin_enc_forward.3} parent=11 // pred_region
        _
      $region28: #{gin_enc_forward.3} parent=11 // pred_fallthru
        _
      // Predicated region
      $region29: #{gin_enc_forward.3} parent=11 // pred_check
        %p438 = pneg %p154
      $region30: #{gin_enc_forward.3} parent=11 // pred_check_branch
        %440 = sbr.rel (%p438) target = $region32
      $region31: #{gin_enc_forward.3} parent=11 // pred_region
        _
      $region32: #{gin_enc_forward.3} parent=11 // pred_fallthru
        _
      // Predicated region
      $region33: #{gin_enc_forward.3} parent=11 // pred_check
        %p441 = pneg %p175
      $region34: #{gin_enc_forward.3} parent=11 // pred_check_branch
        %443 = sbr.rel (%p441) target = $region36
      $region35: #{gin_enc_forward.3} parent=11 // pred_region
        _
      $region36: #{gin_enc_forward.3} parent=11 // pred_fallthru
        _
      // Predicated region
      $region37: #{gin_enc_forward.3} parent=11 // pred_check
        %p444 = pneg %p196
      $region38: #{gin_enc_forward.3} parent=11 // pred_check_branch
        %446 = sbr.rel (%p444) target = $region40
      $region39: #{gin_enc_forward.3} parent=11 // pred_region
        _
      $region40: #{gin_enc_forward.3} parent=11 // pred_fallthru
        _
      // Predicated region
      $region41: #{gin_enc_forward.3} parent=11 // pred_check
        %p447 = pneg %p217
      $region42: #{gin_enc_forward.3} parent=11 // pred_check_branch
        %449 = sbr.rel (%p447) target = $region44
      $region43: #{gin_enc_forward.3} parent=11 // pred_region
        _
      $region44: #{gin_enc_forward.3} parent=11 // pred_fallthru
        _
      // Predicated region
      $region45: #{gin_enc_forward.3} parent=11 // pred_check
        %p450 = pneg %p238
      $region46: #{gin_enc_forward.3} parent=11 // pred_check_branch
        %452 = sbr.rel (%p450) target = $region48
      $region47: #{gin_enc_forward.3} parent=11 // pred_region
        _
      $region48: #{gin_enc_forward.3} parent=11 // pred_fallthru
        _
      // Predicated region
      $region49: #{gin_enc_forward.3} parent=11 // pred_check
        %p453 = pneg %p259
      $region50: #{gin_enc_forward.3} parent=11 // pred_check_branch
        %455 = sbr.rel (%p453) target = $region52
      $region51: #{gin_enc_forward.3} parent=11 // pred_region
        _
      $region52: #{gin_enc_forward.3} parent=11 // pred_fallthru
        _
      // Predicated region
      $region53: #{gin_enc_forward.3} parent=11 // pred_check
        %p456 = pneg %p280
      $region54: #{gin_enc_forward.3} parent=11 // pred_check_branch
        %458 = sbr.rel (%p456) target = $region56
      $region55: #{gin_enc_forward.3} parent=11 // pred_region
        _
      $region56: #{gin_enc_forward.3} parent=11 // pred_fallthru
        _
      // Predicated region
      $region57: #{gin_enc_forward.3} parent=11 // pred_check
        %p459 = pneg %p301
      $region58: #{gin_enc_forward.3} parent=11 // pred_check_branch
        %461 = sbr.rel (%p459) target = $region60
      $region59: #{gin_enc_forward.3} parent=11 // pred_region
        _
      $region60: #{gin_enc_forward.3} parent=11 // pred_fallthru
        _
      // Predicated region
      $region61: #{gin_enc_forward.3} parent=11 // pred_check
        %p462 = pneg %p322
      $region62: #{gin_enc_forward.3} parent=11 // pred_check_branch
        %464 = sbr.rel (%p462) target = $region64
      $region63: #{gin_enc_forward.3} parent=11 // pred_region
        _
      $region64: #{gin_enc_forward.3} parent=11 // pred_fallthru
        _
      // Predicated region
      $region65: #{gin_enc_forward.3} parent=11 // pred_check
        %p465 = pneg %p343
      $region66: #{gin_enc_forward.3} parent=11 // pred_check_branch
        %467 = sbr.rel (%p465) target = $region68
      $region67: #{gin_enc_forward.3} parent=11 // pred_region
        _
      $region68: #{gin_enc_forward.3} parent=11 // pred_fallthru
        _
      // Predicated region
      $region69: #{gin_enc_forward.3} parent=11 // pred_check
        %p468 = pneg %p364
      $region70: #{gin_enc_forward.3} parent=11 // pred_check_branch
        %470 = sbr.rel (%p468) target = $region72
      $region71: #{gin_enc_forward.3} parent=11 // pred_region
        _
      $region72: #{gin_enc_forward.3} parent=11 // pred_fallthru
        _
      // Predicated region
      $region73: #{gin_enc_forward.3} parent=11 // pred_check
        %p471 = pneg %p385
      $region74: #{gin_enc_forward.3} parent=11 // pred_check_branch
        %473 = sbr.rel (%p471) target = $region76
      $region75: #{gin_enc_forward.3} parent=11 // pred_region
        _
      $region76: #{gin_enc_forward.3} parent=11 // pred_fallthru
        _
    $region12: #{gin_enc_forward.3} parent=5 // pred_fallthru
      _
    %p474 = scmp.lt.s32.totalorder %s23, 2
    // Predicated region
    $region77: #{gin_enc_forward.3} parent=5 // pred_check
      %p475 = pneg %p474
    $region78: #{gin_enc_forward.3} parent=5 // pred_check_branch
      %477 = sbr.rel (%p475) target = $region80
    $region79: #{gin_enc_forward.3} parent=5 // pred_region
      // Predicated region
      $region81: #{gin_enc_forward.3} parent=79 // pred_check
        %p478 = pneg %p43
      $region82: #{gin_enc_forward.3} parent=79 // pred_check_branch
        %480 = sbr.rel (%p478) target = $region84
      $region83: #{gin_enc_forward.3} parent=79 // pred_region
        %p481 = scmp.lt.s32.totalorder %s23, 1
        %s482 = scalar_select %p481, %s23, 1
        %s483 = smul.addr %s482, 32
        %s484 = smul.addr %s483, 8
        %s485 = scalar_lea.vmem %s0, %s484
      $region84: #{gin_enc_forward.3} parent=79 // pred_fallthru
        _
    $region80: #{gin_enc_forward.3} parent=5 // pred_fallthru
      _
    %p486 = scmp.le.s32.totalorder 1, %s23
    %p487 = scmp.lt.s32.totalorder %s23, 3
    %p488 = pnand %p486, %p487
    %p489 = pneg %p488
    // Predicated region
    $region85: #{gin_enc_forward.3} parent=5 // pred_check
      _
    $region86: #{gin_enc_forward.3} parent=5 // pred_check_branch
      %491 = sbr.rel (%p488) target = $region88
    $region87: #{gin_enc_forward.3} parent=5 // pred_region
      %s492 = ssub.s32 %s23, 1
      %p493 = scmp.lt.s32.totalorder %s28, 1
      %s494 = scalar_select %p493, %s28, 1
      %s495 = smul.addr %s494, 32
      %s496 = smul.addr %s495, 8
      %s497 = scalar_lea.vmem %s0, %s496
      %p498 = pneg %p49
      %p499 = pneg %p46
      %p500 = pneg %p70
      %p501 = pneg %p67
      %p502 = pneg %p91
      %p503 = pneg %p88
      %p504 = pneg %p112
      %p505 = pneg %p109
      %p506 = pneg %p133
      %p507 = pneg %p130
      %p508 = pneg %p154
      %p509 = pneg %p151
      %p510 = pneg %p175
      %p511 = pneg %p172
      %p512 = pneg %p196
      %p513 = pneg %p193
      %p514 = pneg %p217
      %p515 = pneg %p214
      %p516 = pneg %p238
      %p517 = pneg %p235
      %p518 = pneg %p259
      %p519 = pneg %p256
      %p520 = pneg %p280
      %p521 = pneg %p277
      %p522 = pneg %p301
      %p523 = pneg %p298
      %p524 = pneg %p322
      %p525 = pneg %p319
      %p526 = pneg %p343
      %p527 = pneg %p340
      %p528 = pneg %p364
      %p529 = pneg %p361
      %p530 = pneg %p385
      %p531 = pneg %p382
      %p532 = pneg %p411
      %p533 = pneg %p408
      %p534 = scmp.lt.s32.totalorder %s28, 1
      %s535 = scalar_select %p534, %s28, 1
      %s536 = smul.addr %s535, 8
      %s537 = scalar_lea.vmem %s17, %s536
      %p538 = scmp.lt.s32.totalorder %s28, 1
      %s539 = scalar_select %p538, %s28, 1
      %s540 = smul.addr %s539, 32
      %s541 = smul.addr %s540, 8
      %s542 = scalar_lea.vmem %s0, %s541
      %p543 = scmp.lt.s32.totalorder %s28, 1
      %s544 = scalar_select %p543, %s28, 1
      %s545 = smul.addr %s544, 8
      %s546 = scalar_lea.vmem %s17, %s545
      %v547 = vld [vmem:[%s542] sm:$0xff]
      %v548 = vld [vmem:[%s542 + $0x8] sm:$0xff]
      %v549 = vld [vmem:[%s542 + $0x10] sm:$0xff]
      %v550 = vld [vmem:[%s542 + $0x18] sm:$0xff]
      %v551 = vld [vmem:[%s542 + $0x20] sm:$0xff]
      %v552 = vld [vmem:[%s542 + $0x28] sm:$0xff]
      %v553 = vld [vmem:[%s542 + $0x30] sm:$0xff]
      %v554 = vld [vmem:[%s542 + $0x38] sm:$0xff]
      %v555 = vld [vmem:[%s542 + $0x40] sm:$0xff]
      %v556 = vld [vmem:[%s542 + $0x48] sm:$0xff]
      %v557 = vld [vmem:[%s542 + $0x50] sm:$0xff]
      %v558 = vld [vmem:[%s542 + $0x58] sm:$0xff]
      %v559 = vld [vmem:[%s542 + $0x60] sm:$0xff]
      %v560 = vld [vmem:[%s542 + $0x68] sm:$0xff]
      %v561 = vld [vmem:[%s542 + $0x70] sm:$0xff]
      %v562 = vld [vmem:[%s542 + $0x78] sm:$0xff]
      %v563 = vld [vmem:[%s542 + $0x80] sm:$0xff]
      %v564 = vld [vmem:[%s542 + $0x88] sm:$0xff]
      %v565 = vld [vmem:[%s542 + $0x90] sm:$0xff]
      %v566 = vld [vmem:[%s542 + $0x98] sm:$0xff]
      %v567 = vld [vmem:[%s542 + $0xa0] sm:$0xff]
      %v568 = vld [vmem:[%s542 + $0xa8] sm:$0xff]
      %v569 = vld [vmem:[%s542 + $0xb0] sm:$0xff]
      %v570 = vld [vmem:[%s542 + $0xb8] sm:$0xff]
      %v571 = vld [vmem:[%s542 + $0xc0] sm:$0xff]
      %v572 = vld [vmem:[%s542 + $0xc8] sm:$0xff]
      %v573 = vld [vmem:[%s542 + $0xd0] sm:$0xff]
      %v574 = vld [vmem:[%s542 + $0xd8] sm:$0xff]
      %v575 = vld [vmem:[%s542 + $0xe0] sm:$0xff]
      %v576 = vld [vmem:[%s542 + $0xe8] sm:$0xff]
      %v577 = vld [vmem:[%s542 + $0xf0] sm:$0xff]
      %v578 = vld [vmem:[%s542 + $0xf8] sm:$0xff]
      %v579 = vlaneseq
      %v580 = vshrl.u32 %v579, 7
      %v581 = vadd.s32 %v580, 8
      %v582 = vadd.s32 %v580, 16
      %v583 = vadd.s32 %v580, 24
      %v584 = vadd.s32 %v580, 32
      %v585 = vadd.s32 %v580, 40
      %v586 = vadd.s32 %v580, 48
      %v587 = vadd.s32 %v580, 56
      %v588 = vadd.s32 %v580, 64
      %v589 = vadd.s32 %v580, 72
      %vm590 = vcmp.lt.s32.totalorder %v580, 75
      %vm591 = vcmp.lt.s32.totalorder %v581, 75
      %vm592 = vcmp.lt.s32.totalorder %v582, 75
      %vm593 = vcmp.lt.s32.totalorder %v583, 75
      %vm594 = vcmp.lt.s32.totalorder %v584, 75
      %vm595 = vcmp.lt.s32.totalorder %v585, 75
      %vm596 = vcmp.lt.s32.totalorder %v586, 75
      %vm597 = vcmp.lt.s32.totalorder %v587, 75
      %vm598 = vcmp.lt.s32.totalorder %v588, 75
      %vm599 = vcmp.lt.s32.totalorder %v589, 75
      %vm600 = vcmp.lt.s32.totalorder %v580, 1
      %v601 = vlaneseq
      %v602 = vand.u32 %v601, 127
      %v603 = vld [vmem:[%s1] sm:$0xff]
      %v604 = vld [vmem:[%s1 + $0x8] sm:$0xff]
      %v605 = vld [vmem:[%s1 + $0x10] sm:$0xff]
      %v606 = vld [vmem:[%s1 + $0x18] sm:$0xff]
      %v607 = vld [vmem:[%s1 + $0x20] sm:$0xff]
      %v608 = vld [vmem:[%s1 + $0x28] sm:$0xff]
      %v609 = vld [vmem:[%s1 + $0x30] sm:$0xff]
      %v610 = vld [vmem:[%s1 + $0x38] sm:$0xff]
      %v611 = vld [vmem:[%s1 + $0x40] sm:$0xff]
      %v612 = vld [vmem:[%s1 + $0x48] sm:$0xff]
      %vm613 = vcmask 64512
      %v615 = vsel %vm613, %v603, 0
      %v618 = vsel %vm613, %v604, 0
      %v621 = vsel %vm613, %v605, 0
      %v624 = vsel %vm613, %v606, 0
      %v627 = vsel %vm613, %v607, 0
      %v630 = vsel %vm613, %v608, 0
      %v633 = vsel %vm613, %v609, 0
      %v636 = vsel %vm613, %v610, 0
      %v639 = vsel %vm613, %v611, 0
      %v642 = vsel %vm613, %v612, 0
      %v645 = vsel %vm613, %v547, 0
      %v648 = vsel %vm613, %v549, 0
      %v651 = vsel %vm613, %v551, 0
      %v654 = vsel %vm613, %v553, 0
      %v657 = vsel %vm613, %v555, 0
      %v660 = vsel %vm613, %v557, 0
      %v663 = vsel %vm613, %v559, 0
      %v666 = vsel %vm613, %v561, 0
      %v669 = vsel %vm613, %v563, 0
      %v672 = vsel %vm613, %v565, 0
      %v675 = vsel %vm613, %v567, 0
      %v678 = vsel %vm613, %v569, 0
      %v681 = vsel %vm613, %v571, 0
      %v684 = vsel %vm613, %v573, 0
      %v687 = vsel %vm613, %v575, 0
      %v690 = vsel %vm613, %v577, 0
      %692 = vmatpush.xpose.msra.mxu0 %v690
      %693 = vmatpush.xpose.msra.mxu0 %v687
      %694 = vmatpush.xpose.msra.mxu0 %v684
      %695 = vmatpush.xpose.msra.mxu0 %v681
      %696 = vmatpush.xpose.msra.mxu0 %v678
      %697 = vmatpush.xpose.msra.mxu0 %v675
      %698 = vmatpush.xpose.msra.mxu0 %v672
      %699 = vmatpush.xpose.msra.mxu0 %v669
      %700 = vmatpush.xpose.msra.mxu0 %v666
      %701 = vmatpush.xpose.msra.mxu0 %v663
      %702 = vmatpush.xpose.msra.mxu0 %v660
      %703 = vmatpush.xpose.msra.mxu0 %v657
      %704 = vmatpush.xpose.msra.mxu0 %v654
      %705 = vmatpush.xpose.msra.mxu0 %v651
      %706 = vmatpush.xpose.msra.mxu0 %v648
      %707 = vmatpush.xpose.msra.mxu0 %v645
      %708 = vmatmul.f32.gmra.mxu0 %v615
      %v709 = vpop.f32.mrf.mxu0
      %v710 = vadd.f32 0.0, %v709
      %711 = vmatmul.f32.gmra.mxu0 %v618
      %v712 = vpop.f32.mrf.mxu0
      %v713 = vadd.f32 0.0, %v712
      %714 = vmatmul.f32.gmra.mxu0 %v621
      %v715 = vpop.f32.mrf.mxu0
      %v716 = vadd.f32 0.0, %v715
      %717 = vmatmul.f32.gmra.mxu0 %v624
      %v718 = vpop.f32.mrf.mxu0
      %v719 = vadd.f32 0.0, %v718
      %720 = vmatmul.f32.gmra.mxu0 %v627
      %v721 = vpop.f32.mrf.mxu0
      %v722 = vadd.f32 0.0, %v721
      %723 = vmatmul.f32.gmra.mxu0 %v630
      %v724 = vpop.f32.mrf.mxu0
      %v725 = vadd.f32 0.0, %v724
      %726 = vmatmul.f32.gmra.mxu0 %v633
      %v727 = vpop.f32.mrf.mxu0
      %v728 = vadd.f32 0.0, %v727
      %729 = vmatmul.f32.gmra.mxu0 %v636
      %v730 = vpop.f32.mrf.mxu0
      %v731 = vadd.f32 0.0, %v730
      %732 = vmatmul.f32.gmra.mxu0 %v639
      %v733 = vpop.f32.mrf.mxu0
      %v734 = vadd.f32 0.0, %v733
      %735 = vmatmul.f32.gmra.mxu0 %v642
      %v736 = vpop.f32.mrf.mxu0
      %v737 = vadd.f32 0.0, %v736
      %738 = vdwg.mxu0
      %v739 = vmul.f32 %v710, 0.17677669
      %v740 = vmul.f32 %v713, 0.17677669
      %v741 = vmul.f32 %v716, 0.17677669
      %v742 = vmul.f32 %v719, 0.17677669
      %v743 = vmul.f32 %v722, 0.17677669
      %v744 = vmul.f32 %v725, 0.17677669
      %v745 = vmul.f32 %v728, 0.17677669
      %v746 = vmul.f32 %v731, 0.17677669
      %v747 = vmul.f32 %v734, 0.17677669
      %v748 = vmul.f32 %v737, 0.17677669
      %v749 = vsel %vm590, 1, 0
      %v750 = vsel %vm591, 1, 0
      %v751 = vsel %vm592, 1, 0
      %v752 = vsel %vm593, 1, 0
      %v753 = vsel %vm594, 1, 0
      %v754 = vsel %vm595, 1, 0
      %v755 = vsel %vm596, 1, 0
      %v756 = vsel %vm597, 1, 0
      %v757 = vsel %vm598, 1, 0
      %v758 = vsel %vm599, 1, 0
      %vm759 = vcmp.eq.s32.totalorder %v749, 1
      %vm760 = vcmp.eq.s32.totalorder %v750, 1
      %vm761 = vcmp.eq.s32.totalorder %v751, 1
      %vm762 = vcmp.eq.s32.totalorder %v752, 1
      %vm763 = vcmp.eq.s32.totalorder %v753, 1
      %vm764 = vcmp.eq.s32.totalorder %v754, 1
      %vm765 = vcmp.eq.s32.totalorder %v755, 1
      %vm766 = vcmp.eq.s32.totalorder %v756, 1
      %vm767 = vcmp.eq.s32.totalorder %v757, 1
      %vm768 = vcmp.eq.s32.totalorder %v758, 1
      %v769 = vsel %vm759, %v739, -1e+30
      %v770 = vsel %vm760, %v740, -1e+30
      %v771 = vsel %vm761, %v741, -1e+30
      %v772 = vsel %vm762, %v742, -1e+30
      %v773 = vsel %vm763, %v743, -1e+30
      %v774 = vsel %vm764, %v744, -1e+30
      %v775 = vsel %vm765, %v745, -1e+30
      %v776 = vsel %vm766, %v746, -1e+30
      %v777 = vsel %vm767, %v747, -1e+30
      %v778 = vsel %vm768, %v748, -1e+30
      %v779 = vmax.f32 %v769, %v773
      %v780 = vmax.f32 %v770, %v774
      %v781 = vmax.f32 %v771, %v775
      %v782 = vmax.f32 %v772, %v776
      %v783 = vmax.f32 %v779, %v777
      %v784 = vmax.f32 %v780, %v778
      %v785 = vmax.f32 %v783, %v784
      %v786 = vmax.f32 %v781, %v782
      %v787 = vmax.f32 %v785, %v786
      %v788 = vrot.slane %v787, 4
      %v789 = vmax.f32 %v787, %v788
      %v790 = vrot.slane %v789, 2
      %v791 = vmax.f32 %v789, %v790
      %v792 = vrot.slane %v791, 1
      %v793 = vmax.f32 %v791, %v792
      %v794 = vsub.f32 %v769, %v793
      %v795 = vsub.f32 %v770, %v793
      %v796 = vsub.f32 %v771, %v793
      %v797 = vsub.f32 %v772, %v793
      %v798 = vsub.f32 %v773, %v793
      %v799 = vsub.f32 %v774, %v793
      %v800 = vsub.f32 %v775, %v793
      %v801 = vsub.f32 %v776, %v793
      %v802 = vsub.f32 %v777, %v793
      %v803 = vsub.f32 %v778, %v793
      %v804 = vmul.f32 %v794, 1.442695
      %v805 = vpow.pop %v804
      %v806 = vmul.f32 %v795, 1.442695
      %v807 = vpow.pop %v806
      %v808 = vmul.f32 %v796, 1.442695
      %v809 = vpow.pop %v808
      %v810 = vmul.f32 %v797, 1.442695
      %v811 = vpow.pop %v810
      %v812 = vmul.f32 %v798, 1.442695
      %v813 = vpow.pop %v812
      %v814 = vmul.f32 %v799, 1.442695
      %v815 = vpow.pop %v814
      %v816 = vmul.f32 %v800, 1.442695
      %v817 = vpow.pop %v816
      %v818 = vmul.f32 %v801, 1.442695
      %v819 = vpow.pop %v818
      %v820 = vmul.f32 %v802, 1.442695
      %v821 = vpow.pop %v820
      %v822 = vmul.f32 %v803, 1.442695
      %v823 = vpow.pop %v822
      %v824 = vadd.f32 %v805, %v807
      %v825 = vadd.f32 %v824, %v809
      %v826 = vadd.f32 %v825, %v811
      %v827 = vadd.f32 %v826, %v813
      %v828 = vadd.f32 %v827, %v815
      %v829 = vadd.f32 %v828, %v817
      %v830 = vadd.f32 %v829, %v819
      %v831 = vadd.f32 %v830, %v821
      %v832 = vadd.f32 %v831, %v823
      %v833 = vrot.slane %v832, 4
      %v834 = vadd.f32 %v832, %v833
      %v835 = vrot.slane %v834, 2
      %v836 = vadd.f32 %v834, %v835
      %v837 = vrot.slane %v836, 1
      %v838 = vadd.f32 %v836, %v837
      %v839 = vrcp.pop %v838
      %v840 = vmul.f32 %v838, %v839
      %v841 = vsub.f32 1.0, %v840
      %v842 = vmul.f32 %v839, %v841
      %v843 = vadd.f32 %v839, %v842
      %vm844 = vweird.f32 %v838
      %vm845 = vweird.f32 %v839
      %vm846 = vmor %vm844, %vm845
      %v847 = vsel %vm846, %v839, %v843
      %v848 = vand.u32 2147483647, %v838
      %vm849 = vcmp.eq.f32.partialorder %v848, 8.507059e+37
      %v850 = vand.u32 %v838, 2147483648
      %v851 = vor.u32 1.1754944e-38, %v850
      %v852 = vsel %vm849, %v851, %v847
      %v853 = vmul.f32 %v805, %v852
      %v854 = vmul.f32 %v807, %v852
      %v855 = vmul.f32 %v809, %v852
      %v856 = vmul.f32 %v811, %v852
      %v857 = vmul.f32 %v813, %v852
      %v858 = vmul.f32 %v815, %v852
      %v859 = vmul.f32 %v817, %v852
      %v860 = vmul.f32 %v819, %v852
      %v861 = vmul.f32 %v821, %v852
      %v862 = vmul.f32 %v823, %v852
      %vm863 = vcmp.ge.s32.totalorder %v602, 0
      %vm864 = vcmp.lt.s32.totalorder %v602, 8
      %vm865 = vmand %vm863, %vm864
      %v866 = vsel %vm865, 1, 0
      %vm867 = vcmp.eq.s32.totalorder %v866, 1
      %v868 = vsel %vm867, %v548, 0.0
      %v869 = vsel %vm867, %v550, 0.0
      %v870 = vsel %vm867, %v552, 0.0
      %v871 = vsel %vm867, %v554, 0.0
      %v872 = vsel %vm867, %v556, 0.0
      %v873 = vsel %vm867, %v558, 0.0
      %v874 = vsel %vm867, %v560, 0.0
      %v875 = vsel %vm867, %v562, 0.0
      %v876 = vsel %vm867, %v564, 0.0
      %v877 = vsel %vm867, %v566, 0.0
      %v878 = vsel %vm867, %v568, 0.0
      %v879 = vsel %vm867, %v570, 0.0
      %v880 = vsel %vm867, %v572, 0.0
      %v881 = vsel %vm867, %v574, 0.0
      %v882 = vsel %vm867, %v576, 0.0
      %v883 = vsel %vm867, %v578, 0.0
      %884 = vmatpush.msra.mxu0 %v883
      %885 = vmatpush.msra.mxu0 %v882
      %886 = vmatpush.msra.mxu0 %v881
      %887 = vmatpush.msra.mxu0 %v880
      %888 = vmatpush.msra.mxu0 %v879
      %889 = vmatpush.msra.mxu0 %v878
      %890 = vmatpush.msra.mxu0 %v877
      %891 = vmatpush.msra.mxu0 %v876
      %892 = vmatpush.msra.mxu0 %v875
      %893 = vmatpush.msra.mxu0 %v874
      %894 = vmatpush.msra.mxu0 %v873
      %895 = vmatpush.msra.mxu0 %v872
      %896 = vmatpush.msra.mxu0 %v871
      %897 = vmatpush.msra.mxu0 %v870
      %898 = vmatpush.msra.mxu0 %v869
      %899 = vmatpush.msra.mxu0 %v868
      %900 = vmatmul.f32.gmra.mxu0 %v853
      %v901 = vpop.f32.mrf.mxu0
      %v902 = vadd.f32 0.0, %v901
      %903 = vmatmul.f32.gmra.mxu0 %v854
      %v904 = vpop.f32.mrf.mxu0
      %v905 = vadd.f32 0.0, %v904
      %906 = vmatmul.f32.gmra.mxu0 %v855
      %v907 = vpop.f32.mrf.mxu0
      %v908 = vadd.f32 0.0, %v907
      %909 = vmatmul.f32.gmra.mxu0 %v856
      %v910 = vpop.f32.mrf.mxu0
      %v911 = vadd.f32 0.0, %v910
      %912 = vmatmul.f32.gmra.mxu0 %v857
      %v913 = vpop.f32.mrf.mxu0
      %v914 = vadd.f32 0.0, %v913
      %915 = vmatmul.f32.gmra.mxu0 %v858
      %v916 = vpop.f32.mrf.mxu0
      %v917 = vadd.f32 0.0, %v916
      %918 = vmatmul.f32.gmra.mxu0 %v859
      %v919 = vpop.f32.mrf.mxu0
      %v920 = vadd.f32 0.0, %v919
      %921 = vmatmul.f32.gmra.mxu0 %v860
      %v922 = vpop.f32.mrf.mxu0
      %v923 = vadd.f32 0.0, %v922
      %924 = vmatmul.f32.gmra.mxu0 %v861
      %v925 = vpop.f32.mrf.mxu0
      %v926 = vadd.f32 0.0, %v925
      %927 = vmatmul.f32.gmra.mxu0 %v862
      %v928 = vpop.f32.mrf.mxu0
      %v929 = vadd.f32 0.0, %v928
      %930 = vdwg.mxu0
      %v931 = vadd.f32 %v603, %v902
      %v932 = vadd.f32 %v604, %v905
      %v933 = vadd.f32 %v605, %v908
      %v934 = vadd.f32 %v606, %v911
      %v935 = vadd.f32 %v607, %v914
      %v936 = vadd.f32 %v608, %v917
      %v937 = vadd.f32 %v609, %v920
      %v938 = vadd.f32 %v610, %v923
      %v939 = vadd.f32 %v611, %v926
      %v940 = vadd.f32 %v612, %v929
      %941 = vrot.lane.b32.xlu0 %v603, 120
      %v942 = vpop.permute.xlu0 %941
      %943 = vrot.lane.b32.xlu0 %v604, 120
      %v944 = vpop.permute.xlu0 %943
      %945 = vrot.lane.b32.xlu0 %v605, 120
      %v946 = vpop.permute.xlu0 %945
      %947 = vrot.lane.b32.xlu0 %v606, 120
      %v948 = vpop.permute.xlu0 %947
      %949 = vrot.lane.b32.xlu0 %v607, 120
      %v950 = vpop.permute.xlu0 %949
      %951 = vrot.lane.b32.xlu0 %v608, 120
      %v952 = vpop.permute.xlu0 %951
      %953 = vrot.lane.b32.xlu0 %v609, 120
      %v954 = vpop.permute.xlu0 %953
      %955 = vrot.lane.b32.xlu0 %v610, 120
      %v956 = vpop.permute.xlu0 %955
      %957 = vrot.lane.b32.xlu0 %v611, 120
      %v958 = vpop.permute.xlu0 %957
      %959 = vrot.lane.b32.xlu0 %v612, 120
      %v960 = vpop.permute.xlu0 %959
      %961 = vrot.lane.b32.xlu0 %v547, 120
      %v962 = vpop.permute.xlu0 %961
      %963 = vrot.lane.b32.xlu0 %v549, 120
      %v964 = vpop.permute.xlu0 %963
      %965 = vrot.lane.b32.xlu0 %v551, 120
      %v966 = vpop.permute.xlu0 %965
      %967 = vrot.lane.b32.xlu0 %v553, 120
      %v968 = vpop.permute.xlu0 %967
      %969 = vrot.lane.b32.xlu0 %v555, 120
      %v970 = vpop.permute.xlu0 %969
      %971 = vrot.lane.b32.xlu0 %v557, 120
      %v972 = vpop.permute.xlu0 %971
      %973 = vrot.lane.b32.xlu0 %v559, 120
      %v974 = vpop.permute.xlu0 %973
      %975 = vrot.lane.b32.xlu0 %v561, 120
      %v976 = vpop.permute.xlu0 %975
      %977 = vrot.lane.b32.xlu0 %v563, 120
      %v978 = vpop.permute.xlu0 %977
      %979 = vrot.lane.b32.xlu0 %v565, 120
      %v980 = vpop.permute.xlu0 %979
      %981 = vrot.lane.b32.xlu0 %v567, 120
      %v982 = vpop.permute.xlu0 %981
      %983 = vrot.lane.b32.xlu0 %v569, 120
      %v984 = vpop.permute.xlu0 %983
      %985 = vrot.lane.b32.xlu0 %v571, 120
      %v986 = vpop.permute.xlu0 %985
      %987 = vrot.lane.b32.xlu0 %v573, 120
      %v988 = vpop.permute.xlu0 %987
      %989 = vrot.lane.b32.xlu0 %v575, 120
      %v990 = vpop.permute.xlu0 %989
      %991 = vrot.lane.b32.xlu0 %v577, 120
      %v992 = vpop.permute.xlu0 %991
      %v993 = vsel %vm613, %v942, 0
      %v995 = vsel %vm613, %v944, 0
      %v997 = vsel %vm613, %v946, 0
      %v999 = vsel %vm613, %v948, 0
      %v1001 = vsel %vm613, %v950, 0
      %v1003 = vsel %vm613, %v952, 0
      %v1005 = vsel %vm613, %v954, 0
      %v1007 = vsel %vm613, %v956, 0
      %v1009 = vsel %vm613, %v958, 0
      %v1011 = vsel %vm613, %v960, 0
      %v1013 = vsel %vm613, %v962, 0
      %v1015 = vsel %vm613, %v964, 0
      %v1017 = vsel %vm613, %v966, 0
      %v1019 = vsel %vm613, %v968, 0
      %v1021 = vsel %vm613, %v970, 0
      %v1023 = vsel %vm613, %v972, 0
      %v1025 = vsel %vm613, %v974, 0
      %v1027 = vsel %vm613, %v976, 0
      %v1029 = vsel %vm613, %v978, 0
      %v1031 = vsel %vm613, %v980, 0
      %v1033 = vsel %vm613, %v982, 0
      %v1035 = vsel %vm613, %v984, 0
      %v1037 = vsel %vm613, %v986, 0
      %v1039 = vsel %vm613, %v988, 0
      %v1041 = vsel %vm613, %v990, 0
      %v1043 = vsel %vm613, %v992, 0
      %1045 = vmatpush.xpose.msra.mxu0 %v1043
      %1046 = vmatpush.xpose.msra.mxu0 %v1041
      %1047 = vmatpush.xpose.msra.mxu0 %v1039
      %1048 = vmatpush.xpose.msra.mxu0 %v1037
      %1049 = vmatpush.xpose.msra.mxu0 %v1035
      %1050 = vmatpush.xpose.msra.mxu0 %v1033
      %1051 = vmatpush.xpose.msra.mxu0 %v1031
      %1052 = vmatpush.xpose.msra.mxu0 %v1029
      %1053 = vmatpush.xpose.msra.mxu0 %v1027
      %1054 = vmatpush.xpose.msra.mxu0 %v1025
      %1055 = vmatpush.xpose.msra.mxu0 %v1023
      %1056 = vmatpush.xpose.msra.mxu0 %v1021
      %1057 = vmatpush.xpose.msra.mxu0 %v1019
      %1058 = vmatpush.xpose.msra.mxu0 %v1017
      %1059 = vmatpush.xpose.msra.mxu0 %v1015
      %1060 = vmatpush.xpose.msra.mxu0 %v1013
      %1061 = vmatmul.f32.gmra.mxu0 %v993
      %v1062 = vpop.f32.mrf.mxu0
      %v1063 = vadd.f32 0.0, %v1062
      %1064 = vmatmul.f32.gmra.mxu0 %v995
      %v1065 = vpop.f32.mrf.mxu0
      %v1066 = vadd.f32 0.0, %v1065
      %1067 = vmatmul.f32.gmra.mxu0 %v997
      %v1068 = vpop.f32.mrf.mxu0
      %v1069 = vadd.f32 0.0, %v1068
      %1070 = vmatmul.f32.gmra.mxu0 %v999
      %v1071 = vpop.f32.mrf.mxu0
      %v1072 = vadd.f32 0.0, %v1071
      %1073 = vmatmul.f32.gmra.mxu0 %v1001
      %v1074 = vpop.f32.mrf.mxu0
      %v1075 = vadd.f32 0.0, %v1074
      %1076 = vmatmul.f32.gmra.mxu0 %v1003
      %v1077 = vpop.f32.mrf.mxu0
      %v1078 = vadd.f32 0.0, %v1077
      %1079 = vmatmul.f32.gmra.mxu0 %v1005
      %v1080 = vpop.f32.mrf.mxu0
      %v1081 = vadd.f32 0.0, %v1080
      %1082 = vmatmul.f32.gmra.mxu0 %v1007
      %v1083 = vpop.f32.mrf.mxu0
      %v1084 = vadd.f32 0.0, %v1083
      %1085 = vmatmul.f32.gmra.mxu0 %v1009
      %v1086 = vpop.f32.mrf.mxu0
      %v1087 = vadd.f32 0.0, %v1086
      %1088 = vmatmul.f32.gmra.mxu0 %v1011
      %v1089 = vpop.f32.mrf.mxu0
      %v1090 = vadd.f32 0.0, %v1089
      %1091 = vdwg.mxu0
      %v1092 = vmul.f32 %v1063, 0.17677669
      %v1093 = vmul.f32 %v1066, 0.17677669
      %v1094 = vmul.f32 %v1069, 0.17677669
      %v1095 = vmul.f32 %v1072, 0.17677669
      %v1096 = vmul.f32 %v1075, 0.17677669
      %v1097 = vmul.f32 %v1078, 0.17677669
      %v1098 = vmul.f32 %v1081, 0.17677669
      %v1099 = vmul.f32 %v1084, 0.17677669
      %v1100 = vmul.f32 %v1087, 0.17677669
      %v1101 = vmul.f32 %v1090, 0.17677669
      %v1102 = vsel %vm759, %v1092, -1e+30
      %v1103 = vsel %vm760, %v1093, -1e+30
      %v1104 = vsel %vm761, %v1094, -1e+30
      %v1105 = vsel %vm762, %v1095, -1e+30
      %v1106 = vsel %vm763, %v1096, -1e+30
      %v1107 = vsel %vm764, %v1097, -1e+30
      %v1108 = vsel %vm765, %v1098, -1e+30
      %v1109 = vsel %vm766, %v1099, -1e+30
      %v1110 = vsel %vm767, %v1100, -1e+30
      %v1111 = vsel %vm768, %v1101, -1e+30
      %v1112 = vmax.f32 %v1102, %v1106
      %v1113 = vmax.f32 %v1103, %v1107
      %v1114 = vmax.f32 %v1104, %v1108
      %v1115 = vmax.f32 %v1105, %v1109
      %v1116 = vmax.f32 %v1112, %v1110
      %v1117 = vmax.f32 %v1113, %v1111
      %v1118 = vmax.f32 %v1116, %v1117
      %v1119 = vmax.f32 %v1114, %v1115
      %v1120 = vmax.f32 %v1118, %v1119
      %v1121 = vrot.slane %v1120, 4
      %v1122 = vmax.f32 %v1120, %v1121
      %v1123 = vrot.slane %v1122, 2
      %v1124 = vmax.f32 %v1122, %v1123
      %v1125 = vrot.slane %v1124, 1
      %v1126 = vmax.f32 %v1124, %v1125
      %v1127 = vsub.f32 %v1102, %v1126
      %v1128 = vsub.f32 %v1103, %v1126
      %v1129 = vsub.f32 %v1104, %v1126
      %v1130 = vsub.f32 %v1105, %v1126
      %v1131 = vsub.f32 %v1106, %v1126
      %v1132 = vsub.f32 %v1107, %v1126
      %v1133 = vsub.f32 %v1108, %v1126
      %v1134 = vsub.f32 %v1109, %v1126
      %v1135 = vsub.f32 %v1110, %v1126
      %v1136 = vsub.f32 %v1111, %v1126
      %v1137 = vmul.f32 %v1127, 1.442695
      %v1138 = vpow.pop %v1137
      %v1139 = vmul.f32 %v1128, 1.442695
      %v1140 = vpow.pop %v1139
      %v1141 = vmul.f32 %v1129, 1.442695
      %v1142 = vpow.pop %v1141
      %v1143 = vmul.f32 %v1130, 1.442695
      %v1144 = vpow.pop %v1143
      %v1145 = vmul.f32 %v1131, 1.442695
      %v1146 = vpow.pop %v1145
      %v1147 = vmul.f32 %v1132, 1.442695
      %v1148 = vpow.pop %v1147
      %v1149 = vmul.f32 %v1133, 1.442695
      %v1150 = vpow.pop %v1149
      %v1151 = vmul.f32 %v1134, 1.442695
      %v1152 = vpow.pop %v1151
      %v1153 = vmul.f32 %v1135, 1.442695
      %v1154 = vpow.pop %v1153
      %v1155 = vmul.f32 %v1136, 1.442695
      %v1156 = vpow.pop %v1155
      %v1157 = vadd.f32 %v1138, %v1140
      %v1158 = vadd.f32 %v1157, %v1142
      %v1159 = vadd.f32 %v1158, %v1144
      %v1160 = vadd.f32 %v1159, %v1146
      %v1161 = vadd.f32 %v1160, %v1148
      %v1162 = vadd.f32 %v1161, %v1150
      %v1163 = vadd.f32 %v1162, %v1152
      %v1164 = vadd.f32 %v1163, %v1154
      %v1165 = vadd.f32 %v1164, %v1156
      %v1166 = vrot.slane %v1165, 4
      %v1167 = vadd.f32 %v1165, %v1166
      %v1168 = vrot.slane %v1167, 2
      %v1169 = vadd.f32 %v1167, %v1168
      %v1170 = vrot.slane %v1169, 1
      %v1171 = vadd.f32 %v1169, %v1170
      %v1172 = vrcp.pop %v1171
      %v1173 = vmul.f32 %v1171, %v1172
      %v1174 = vsub.f32 1.0, %v1173
      %v1175 = vmul.f32 %v1172, %v1174
      %v1176 = vadd.f32 %v1172, %v1175
      %vm1177 = vweird.f32 %v1171
      %vm1178 = vweird.f32 %v1172
      %vm1179 = vmor %vm1177, %vm1178
      %v1180 = vsel %vm1179, %v1172, %v1176
      %v1181 = vand.u32 2147483647, %v1171
      %vm1182 = vcmp.eq.f32.partialorder %v1181, 8.507059e+37
      %v1183 = vand.u32 %v1171, 2147483648
      %v1184 = vor.u32 1.1754944e-38, %v1183
      %v1185 = vsel %vm1182, %v1184, %v1180
      %v1186 = vmul.f32 %v1138, %v1185
      %v1187 = vmul.f32 %v1140, %v1185
      %v1188 = vmul.f32 %v1142, %v1185
      %v1189 = vmul.f32 %v1144, %v1185
      %v1190 = vmul.f32 %v1146, %v1185
      %v1191 = vmul.f32 %v1148, %v1185
      %v1192 = vmul.f32 %v1150, %v1185
      %v1193 = vmul.f32 %v1152, %v1185
      %v1194 = vmul.f32 %v1154, %v1185
      %v1195 = vmul.f32 %v1156, %v1185
      %vm1196 = vcmp.ge.s32.totalorder %v602, 8
      %vm1197 = vcmp.lt.s32.totalorder %v602, 16
      %vm1198 = vmand %vm1196, %vm1197
      %v1199 = vsel %vm1198, 1, 0
      %vm1200 = vcmp.eq.s32.totalorder %v1199, 1
      %v1201 = vsel %vm1200, %v548, 0.0
      %v1202 = vsel %vm1200, %v550, 0.0
      %v1203 = vsel %vm1200, %v552, 0.0
      %v1204 = vsel %vm1200, %v554, 0.0
      %v1205 = vsel %vm1200, %v556, 0.0
      %v1206 = vsel %vm1200, %v558, 0.0
      %v1207 = vsel %vm1200, %v560, 0.0
      %v1208 = vsel %vm1200, %v562, 0.0
      %v1209 = vsel %vm1200, %v564, 0.0
      %v1210 = vsel %vm1200, %v566, 0.0
      %v1211 = vsel %vm1200, %v568, 0.0
      %v1212 = vsel %vm1200, %v570, 0.0
      %v1213 = vsel %vm1200, %v572, 0.0
      %v1214 = vsel %vm1200, %v574, 0.0
      %v1215 = vsel %vm1200, %v576, 0.0
      %v1216 = vsel %vm1200, %v578, 0.0
      %1217 = vmatpush.msra.mxu0 %v1216
      %1218 = vmatpush.msra.mxu0 %v1215
      %1219 = vmatpush.msra.mxu0 %v1214
      %1220 = vmatpush.msra.mxu0 %v1213
      %1221 = vmatpush.msra.mxu0 %v1212
      %1222 = vmatpush.msra.mxu0 %v1211
      %1223 = vmatpush.msra.mxu0 %v1210
      %1224 = vmatpush.msra.mxu0 %v1209
      %1225 = vmatpush.msra.mxu0 %v1208
      %1226 = vmatpush.msra.mxu0 %v1207
      %1227 = vmatpush.msra.mxu0 %v1206
      %1228 = vmatpush.msra.mxu0 %v1205
      %1229 = vmatpush.msra.mxu0 %v1204
      %1230 = vmatpush.msra.mxu0 %v1203
      %1231 = vmatpush.msra.mxu0 %v1202
      %1232 = vmatpush.msra.mxu0 %v1201
      %1233 = vmatmul.f32.gmra.mxu0 %v1186
      %v1234 = vpop.f32.mrf.mxu0
      %v1235 = vadd.f32 0.0, %v1234
      %1236 = vmatmul.f32.gmra.mxu0 %v1187
      %v1237 = vpop.f32.mrf.mxu0
      %v1238 = vadd.f32 0.0, %v1237
      %1239 = vmatmul.f32.gmra.mxu0 %v1188
      %v1240 = vpop.f32.mrf.mxu0
      %v1241 = vadd.f32 0.0, %v1240
      %1242 = vmatmul.f32.gmra.mxu0 %v1189
      %v1243 = vpop.f32.mrf.mxu0
      %v1244 = vadd.f32 0.0, %v1243
      %1245 = vmatmul.f32.gmra.mxu0 %v1190
      %v1246 = vpop.f32.mrf.mxu0
      %v1247 = vadd.f32 0.0, %v1246
      %1248 = vmatmul.f32.gmra.mxu0 %v1191
      %v1249 = vpop.f32.mrf.mxu0
      %v1250 = vadd.f32 0.0, %v1249
      %1251 = vmatmul.f32.gmra.mxu0 %v1192
      %v1252 = vpop.f32.mrf.mxu0
      %v1253 = vadd.f32 0.0, %v1252
      %1254 = vmatmul.f32.gmra.mxu0 %v1193
      %v1255 = vpop.f32.mrf.mxu0
      %v1256 = vadd.f32 0.0, %v1255
      %1257 = vmatmul.f32.gmra.mxu0 %v1194
      %v1258 = vpop.f32.mrf.mxu0
      %v1259 = vadd.f32 0.0, %v1258
      %1260 = vmatmul.f32.gmra.mxu0 %v1195
      %v1261 = vpop.f32.mrf.mxu0
      %v1262 = vadd.f32 0.0, %v1261
      %1263 = vdwg.mxu0
      %v1264 = vadd.f32 %v931, %v1235
      %v1265 = vadd.f32 %v932, %v1238
      %v1266 = vadd.f32 %v933, %v1241
      %v1267 = vadd.f32 %v934, %v1244
      %v1268 = vadd.f32 %v935, %v1247
      %v1269 = vadd.f32 %v936, %v1250
      %v1270 = vadd.f32 %v937, %v1253
      %v1271 = vadd.f32 %v938, %v1256
      %v1272 = vadd.f32 %v939, %v1259
      %v1273 = vadd.f32 %v940, %v1262
      %1274 = vrot.lane.b32.xlu0 %v603, 112
      %v1275 = vpop.permute.xlu0 %1274
      %1276 = vrot.lane.b32.xlu0 %v604, 112
      %v1277 = vpop.permute.xlu0 %1276
      %1278 = vrot.lane.b32.xlu0 %v605, 112
      %v1279 = vpop.permute.xlu0 %1278
      %1280 = vrot.lane.b32.xlu0 %v606, 112
      %v1281 = vpop.permute.xlu0 %1280
      %1282 = vrot.lane.b32.xlu0 %v607, 112
      %v1283 = vpop.permute.xlu0 %1282
      %1284 = vrot.lane.b32.xlu0 %v608, 112
      %v1285 = vpop.permute.xlu0 %1284
      %1286 = vrot.lane.b32.xlu0 %v609, 112
      %v1287 = vpop.permute.xlu0 %1286
      %1288 = vrot.lane.b32.xlu0 %v610, 112
      %v1289 = vpop.permute.xlu0 %1288
      %1290 = vrot.lane.b32.xlu0 %v611, 112
      %v1291 = vpop.permute.xlu0 %1290
      %1292 = vrot.lane.b32.xlu0 %v612, 112
      %v1293 = vpop.permute.xlu0 %1292
      %1294 = vrot.lane.b32.xlu0 %v547, 112
      %v1295 = vpop.permute.xlu0 %1294
      %1296 = vrot.lane.b32.xlu0 %v549, 112
      %v1297 = vpop.permute.xlu0 %1296
      %1298 = vrot.lane.b32.xlu0 %v551, 112
      %v1299 = vpop.permute.xlu0 %1298
      %1300 = vrot.lane.b32.xlu0 %v553, 112
      %v1301 = vpop.permute.xlu0 %1300
      %1302 = vrot.lane.b32.xlu0 %v555, 112
      %v1303 = vpop.permute.xlu0 %1302
      %1304 = vrot.lane.b32.xlu0 %v557, 112
      %v1305 = vpop.permute.xlu0 %1304
      %1306 = vrot.lane.b32.xlu0 %v559, 112
      %v1307 = vpop.permute.xlu0 %1306
      %1308 = vrot.lane.b32.xlu0 %v561, 112
      %v1309 = vpop.permute.xlu0 %1308
      %1310 = vrot.lane.b32.xlu0 %v563, 112
      %v1311 = vpop.permute.xlu0 %1310
      %1312 = vrot.lane.b32.xlu0 %v565, 112
      %v1313 = vpop.permute.xlu0 %1312
      %1314 = vrot.lane.b32.xlu0 %v567, 112
      %v1315 = vpop.permute.xlu0 %1314
      %1316 = vrot.lane.b32.xlu0 %v569, 112
      %v1317 = vpop.permute.xlu0 %1316
      %1318 = vrot.lane.b32.xlu0 %v571, 112
      %v1319 = vpop.permute.xlu0 %1318
      %1320 = vrot.lane.b32.xlu0 %v573, 112
      %v1321 = vpop.permute.xlu0 %1320
      %1322 = vrot.lane.b32.xlu0 %v575, 112
      %v1323 = vpop.permute.xlu0 %1322
      %1324 = vrot.lane.b32.xlu0 %v577, 112
      %v1325 = vpop.permute.xlu0 %1324
      %v1326 = vsel %vm613, %v1275, 0
      %v1328 = vsel %vm613, %v1277, 0
      %v1330 = vsel %vm613, %v1279, 0
      %v1332 = vsel %vm613, %v1281, 0
      %v1334 = vsel %vm613, %v1283, 0
      %v1336 = vsel %vm613, %v1285, 0
      %v1338 = vsel %vm613, %v1287, 0
      %v1340 = vsel %vm613, %v1289, 0
      %v1342 = vsel %vm613, %v1291, 0
      %v1344 = vsel %vm613, %v1293, 0
      %v1346 = vsel %vm613, %v1295, 0
      %v1348 = vsel %vm613, %v1297, 0
      %v1350 = vsel %vm613, %v1299, 0
      %v1352 = vsel %vm613, %v1301, 0
      %v1354 = vsel %vm613, %v1303, 0
      %v1356 = vsel %vm613, %v1305, 0
      %v1358 = vsel %vm613, %v1307, 0
      %v1360 = vsel %vm613, %v1309, 0
      %v1362 = vsel %vm613, %v1311, 0
      %v1364 = vsel %vm613, %v1313, 0
      %v1366 = vsel %vm613, %v1315, 0
      %v1368 = vsel %vm613, %v1317, 0
      %v1370 = vsel %vm613, %v1319, 0
      %v1372 = vsel %vm613, %v1321, 0
      %v1374 = vsel %vm613, %v1323, 0
      %v1376 = vsel %vm613, %v1325, 0
      %1378 = vmatpush.xpose.msra.mxu0 %v1376
      %1379 = vmatpush.xpose.msra.mxu0 %v1374
      %1380 = vmatpush.xpose.msra.mxu0 %v1372
      %1381 = vmatpush.xpose.msra.mxu0 %v1370
      %1382 = vmatpush.xpose.msra.mxu0 %v1368
      %1383 = vmatpush.xpose.msra.mxu0 %v1366
      %1384 = vmatpush.xpose.msra.mxu0 %v1364
      %1385 = vmatpush.xpose.msra.mxu0 %v1362
      %1386 = vmatpush.xpose.msra.mxu0 %v1360
      %1387 = vmatpush.xpose.msra.mxu0 %v1358
      %1388 = vmatpush.xpose.msra.mxu0 %v1356
      %1389 = vmatpush.xpose.msra.mxu0 %v1354
      %1390 = vmatpush.xpose.msra.mxu0 %v1352
      %1391 = vmatpush.xpose.msra.mxu0 %v1350
      %1392 = vmatpush.xpose.msra.mxu0 %v1348
      %1393 = vmatpush.xpose.msra.mxu0 %v1346
      %1394 = vmatmul.f32.gmra.mxu0 %v1326
      %v1395 = vpop.f32.mrf.mxu0
      %v1396 = vadd.f32 0.0, %v1395
      %1397 = vmatmul.f32.gmra.mxu0 %v1328
      %v1398 = vpop.f32.mrf.mxu0
      %v1399 = vadd.f32 0.0, %v1398
      %1400 = vmatmul.f32.gmra.mxu0 %v1330
      %v1401 = vpop.f32.mrf.mxu0
      %v1402 = vadd.f32 0.0, %v1401
      %1403 = vmatmul.f32.gmra.mxu0 %v1332
      %v1404 = vpop.f32.mrf.mxu0
      %v1405 = vadd.f32 0.0, %v1404
      %1406 = vmatmul.f32.gmra.mxu0 %v1334
      %v1407 = vpop.f32.mrf.mxu0
      %v1408 = vadd.f32 0.0, %v1407
      %1409 = vmatmul.f32.gmra.mxu0 %v1336
      %v1410 = vpop.f32.mrf.mxu0
      %v1411 = vadd.f32 0.0, %v1410
      %1412 = vmatmul.f32.gmra.mxu0 %v1338
      %v1413 = vpop.f32.mrf.mxu0
      %v1414 = vadd.f32 0.0, %v1413
      %1415 = vmatmul.f32.gmra.mxu0 %v1340
      %v1416 = vpop.f32.mrf.mxu0
      %v1417 = vadd.f32 0.0, %v1416
      %1418 = vmatmul.f32.gmra.mxu0 %v1342
      %v1419 = vpop.f32.mrf.mxu0
      %v1420 = vadd.f32 0.0, %v1419
      %1421 = vmatmul.f32.gmra.mxu0 %v1344
      %v1422 = vpop.f32.mrf.mxu0
      %v1423 = vadd.f32 0.0, %v1422
      %1424 = vdwg.mxu0
      %v1425 = vmul.f32 %v1396, 0.17677669
      %v1426 = vmul.f32 %v1399, 0.17677669
      %v1427 = vmul.f32 %v1402, 0.17677669
      %v1428 = vmul.f32 %v1405, 0.17677669
      %v1429 = vmul.f32 %v1408, 0.17677669
      %v1430 = vmul.f32 %v1411, 0.17677669
      %v1431 = vmul.f32 %v1414, 0.17677669
      %v1432 = vmul.f32 %v1417, 0.17677669
      %v1433 = vmul.f32 %v1420, 0.17677669
      %v1434 = vmul.f32 %v1423, 0.17677669
      %v1435 = vsel %vm759, %v1425, -1e+30
      %v1436 = vsel %vm760, %v1426, -1e+30
      %v1437 = vsel %vm761, %v1427, -1e+30
      %v1438 = vsel %vm762, %v1428, -1e+30
      %v1439 = vsel %vm763, %v1429, -1e+30
      %v1440 = vsel %vm764, %v1430, -1e+30
      %v1441 = vsel %vm765, %v1431, -1e+30
      %v1442 = vsel %vm766, %v1432, -1e+30
      %v1443 = vsel %vm767, %v1433, -1e+30
      %v1444 = vsel %vm768, %v1434, -1e+30
      %v1445 = vmax.f32 %v1435, %v1439
      %v1446 = vmax.f32 %v1436, %v1440
      %v1447 = vmax.f32 %v1437, %v1441
      %v1448 = vmax.f32 %v1438, %v1442
      %v1449 = vmax.f32 %v1445, %v1443
      %v1450 = vmax.f32 %v1446, %v1444
      %v1451 = vmax.f32 %v1449, %v1450
      %v1452 = vmax.f32 %v1447, %v1448
      %v1453 = vmax.f32 %v1451, %v1452
      %v1454 = vrot.slane %v1453, 4
      %v1455 = vmax.f32 %v1453, %v1454
      %v1456 = vrot.slane %v1455, 2
      %v1457 = vmax.f32 %v1455, %v1456
      %v1458 = vrot.slane %v1457, 1
      %v1459 = vmax.f32 %v1457, %v1458
      %v1460 = vsub.f32 %v1435, %v1459
      %v1461 = vsub.f32 %v1436, %v1459
      %v1462 = vsub.f32 %v1437, %v1459
      %v1463 = vsub.f32 %v1438, %v1459
      %v1464 = vsub.f32 %v1439, %v1459
      %v1465 = vsub.f32 %v1440, %v1459
      %v1466 = vsub.f32 %v1441, %v1459
      %v1467 = vsub.f32 %v1442, %v1459
      %v1468 = vsub.f32 %v1443, %v1459
      %v1469 = vsub.f32 %v1444, %v1459
      %v1470 = vmul.f32 %v1460, 1.442695
      %v1471 = vpow.pop %v1470
      %v1472 = vmul.f32 %v1461, 1.442695
      %v1473 = vpow.pop %v1472
      %v1474 = vmul.f32 %v1462, 1.442695
      %v1475 = vpow.pop %v1474
      %v1476 = vmul.f32 %v1463, 1.442695
      %v1477 = vpow.pop %v1476
      %v1478 = vmul.f32 %v1464, 1.442695
      %v1479 = vpow.pop %v1478
      %v1480 = vmul.f32 %v1465, 1.442695
      %v1481 = vpow.pop %v1480
      %v1482 = vmul.f32 %v1466, 1.442695
      %v1483 = vpow.pop %v1482
      %v1484 = vmul.f32 %v1467, 1.442695
      %v1485 = vpow.pop %v1484
      %v1486 = vmul.f32 %v1468, 1.442695
      %v1487 = vpow.pop %v1486
      %v1488 = vmul.f32 %v1469, 1.442695
      %v1489 = vpow.pop %v1488
      %v1490 = vadd.f32 %v1471, %v1473
      %v1491 = vadd.f32 %v1490, %v1475
      %v1492 = vadd.f32 %v1491, %v1477
      %v1493 = vadd.f32 %v1492, %v1479
      %v1494 = vadd.f32 %v1493, %v1481
      %v1495 = vadd.f32 %v1494, %v1483
      %v1496 = vadd.f32 %v1495, %v1485
      %v1497 = vadd.f32 %v1496, %v1487
      %v1498 = vadd.f32 %v1497, %v1489
      %v1499 = vrot.slane %v1498, 4
      %v1500 = vadd.f32 %v1498, %v1499
      %v1501 = vrot.slane %v1500, 2
      %v1502 = vadd.f32 %v1500, %v1501
      %v1503 = vrot.slane %v1502, 1
      %v1504 = vadd.f32 %v1502, %v1503
      %v1505 = vrcp.pop %v1504
      %v1506 = vmul.f32 %v1504, %v1505
      %v1507 = vsub.f32 1.0, %v1506
      %v1508 = vmul.f32 %v1505, %v1507
      %v1509 = vadd.f32 %v1505, %v1508
      %vm1510 = vweird.f32 %v1504
      %vm1511 = vweird.f32 %v1505
      %vm1512 = vmor %vm1510, %vm1511
      %v1513 = vsel %vm1512, %v1505, %v1509
      %v1514 = vand.u32 2147483647, %v1504
      %vm1515 = vcmp.eq.f32.partialorder %v1514, 8.507059e+37
      %v1516 = vand.u32 %v1504, 2147483648
      %v1517 = vor.u32 1.1754944e-38, %v1516
      %v1518 = vsel %vm1515, %v1517, %v1513
      %v1519 = vmul.f32 %v1471, %v1518
      %v1520 = vmul.f32 %v1473, %v1518
      %v1521 = vmul.f32 %v1475, %v1518
      %v1522 = vmul.f32 %v1477, %v1518
      %v1523 = vmul.f32 %v1479, %v1518
      %v1524 = vmul.f32 %v1481, %v1518
      %v1525 = vmul.f32 %v1483, %v1518
      %v1526 = vmul.f32 %v1485, %v1518
      %v1527 = vmul.f32 %v1487, %v1518
      %v1528 = vmul.f32 %v1489, %v1518
      %vm1529 = vcmp.ge.s32.totalorder %v602, 16
      %vm1530 = vcmp.lt.s32.totalorder %v602, 24
      %vm1531 = vmand %vm1529, %vm1530
      %v1532 = vsel %vm1531, 1, 0
      %vm1533 = vcmp.eq.s32.totalorder %v1532, 1
      %v1534 = vsel %vm1533, %v548, 0.0
      %v1535 = vsel %vm1533, %v550, 0.0
      %v1536 = vsel %vm1533, %v552, 0.0
      %v1537 = vsel %vm1533, %v554, 0.0
      %v1538 = vsel %vm1533, %v556, 0.0
      %v1539 = vsel %vm1533, %v558, 0.0
      %v1540 = vsel %vm1533, %v560, 0.0
      %v1541 = vsel %vm1533, %v562, 0.0
      %v1542 = vsel %vm1533, %v564, 0.0
      %v1543 = vsel %vm1533, %v566, 0.0
      %v1544 = vsel %vm1533, %v568, 0.0
      %v1545 = vsel %vm1533, %v570, 0.0
      %v1546 = vsel %vm1533, %v572, 0.0
      %v1547 = vsel %vm1533, %v574, 0.0
      %v1548 = vsel %vm1533, %v576, 0.0
      %v1549 = vsel %vm1533, %v578, 0.0
      %1550 = vmatpush.msra.mxu0 %v1549
      %1551 = vmatpush.msra.mxu0 %v1548
      %1552 = vmatpush.msra.mxu0 %v1547
      %1553 = vmatpush.msra.mxu0 %v1546
      %1554 = vmatpush.msra.mxu0 %v1545
      %1555 = vmatpush.msra.mxu0 %v1544
      %1556 = vmatpush.msra.mxu0 %v1543
      %1557 = vmatpush.msra.mxu0 %v1542
      %1558 = vmatpush.msra.mxu0 %v1541
      %1559 = vmatpush.msra.mxu0 %v1540
      %1560 = vmatpush.msra.mxu0 %v1539
      %1561 = vmatpush.msra.mxu0 %v1538
      %1562 = vmatpush.msra.mxu0 %v1537
      %1563 = vmatpush.msra.mxu0 %v1536
      %1564 = vmatpush.msra.mxu0 %v1535
      %1565 = vmatpush.msra.mxu0 %v1534
      %1566 = vmatmul.f32.gmra.mxu0 %v1519
      %v1567 = vpop.f32.mrf.mxu0
      %v1568 = vadd.f32 0.0, %v1567
      %1569 = vmatmul.f32.gmra.mxu0 %v1520
      %v1570 = vpop.f32.mrf.mxu0
      %v1571 = vadd.f32 0.0, %v1570
      %1572 = vmatmul.f32.gmra.mxu0 %v1521
      %v1573 = vpop.f32.mrf.mxu0
      %v1574 = vadd.f32 0.0, %v1573
      %1575 = vmatmul.f32.gmra.mxu0 %v1522
      %v1576 = vpop.f32.mrf.mxu0
      %v1577 = vadd.f32 0.0, %v1576
      %1578 = vmatmul.f32.gmra.mxu0 %v1523
      %v1579 = vpop.f32.mrf.mxu0
      %v1580 = vadd.f32 0.0, %v1579
      %1581 = vmatmul.f32.gmra.mxu0 %v1524
      %v1582 = vpop.f32.mrf.mxu0
      %v1583 = vadd.f32 0.0, %v1582
      %1584 = vmatmul.f32.gmra.mxu0 %v1525
      %v1585 = vpop.f32.mrf.mxu0
      %v1586 = vadd.f32 0.0, %v1585
      %1587 = vmatmul.f32.gmra.mxu0 %v1526
      %v1588 = vpop.f32.mrf.mxu0
      %v1589 = vadd.f32 0.0, %v1588
      %1590 = vmatmul.f32.gmra.mxu0 %v1527
      %v1591 = vpop.f32.mrf.mxu0
      %v1592 = vadd.f32 0.0, %v1591
      %1593 = vmatmul.f32.gmra.mxu0 %v1528
      %v1594 = vpop.f32.mrf.mxu0
      %v1595 = vadd.f32 0.0, %v1594
      %1596 = vdwg.mxu0
      %v1597 = vadd.f32 %v1264, %v1568
      %v1598 = vadd.f32 %v1265, %v1571
      %v1599 = vadd.f32 %v1266, %v1574
      %v1600 = vadd.f32 %v1267, %v1577
      %v1601 = vadd.f32 %v1268, %v1580
      %v1602 = vadd.f32 %v1269, %v1583
      %v1603 = vadd.f32 %v1270, %v1586
      %v1604 = vadd.f32 %v1271, %v1589
      %v1605 = vadd.f32 %v1272, %v1592
      %v1606 = vadd.f32 %v1273, %v1595
      %1607 = vrot.lane.b32.xlu0 %v603, 104
      %v1608 = vpop.permute.xlu0 %1607
      %1609 = vrot.lane.b32.xlu0 %v604, 104
      %v1610 = vpop.permute.xlu0 %1609
      %1611 = vrot.lane.b32.xlu0 %v605, 104
      %v1612 = vpop.permute.xlu0 %1611
      %1613 = vrot.lane.b32.xlu0 %v606, 104
      %v1614 = vpop.permute.xlu0 %1613
      %1615 = vrot.lane.b32.xlu0 %v607, 104
      %v1616 = vpop.permute.xlu0 %1615
      %1617 = vrot.lane.b32.xlu0 %v608, 104
      %v1618 = vpop.permute.xlu0 %1617
      %1619 = vrot.lane.b32.xlu0 %v609, 104
      %v1620 = vpop.permute.xlu0 %1619
      %1621 = vrot.lane.b32.xlu0 %v610, 104
      %v1622 = vpop.permute.xlu0 %1621
      %1623 = vrot.lane.b32.xlu0 %v611, 104
      %v1624 = vpop.permute.xlu0 %1623
      %1625 = vrot.lane.b32.xlu0 %v612, 104
      %v1626 = vpop.permute.xlu0 %1625
      %1627 = vrot.lane.b32.xlu0 %v547, 104
      %v1628 = vpop.permute.xlu0 %1627
      %1629 = vrot.lane.b32.xlu0 %v549, 104
      %v1630 = vpop.permute.xlu0 %1629
      %1631 = vrot.lane.b32.xlu0 %v551, 104
      %v1632 = vpop.permute.xlu0 %1631
      %1633 = vrot.lane.b32.xlu0 %v553, 104
      %v1634 = vpop.permute.xlu0 %1633
      %1635 = vrot.lane.b32.xlu0 %v555, 104
      %v1636 = vpop.permute.xlu0 %1635
      %1637 = vrot.lane.b32.xlu0 %v557, 104
      %v1638 = vpop.permute.xlu0 %1637
      %1639 = vrot.lane.b32.xlu0 %v559, 104
      %v1640 = vpop.permute.xlu0 %1639
      %1641 = vrot.lane.b32.xlu0 %v561, 104
      %v1642 = vpop.permute.xlu0 %1641
      %1643 = vrot.lane.b32.xlu0 %v563, 104
      %v1644 = vpop.permute.xlu0 %1643
      %1645 = vrot.lane.b32.xlu0 %v565, 104
      %v1646 = vpop.permute.xlu0 %1645
      %1647 = vrot.lane.b32.xlu0 %v567, 104
      %v1648 = vpop.permute.xlu0 %1647
      %1649 = vrot.lane.b32.xlu0 %v569, 104
      %v1650 = vpop.permute.xlu0 %1649
      %1651 = vrot.lane.b32.xlu0 %v571, 104
      %v1652 = vpop.permute.xlu0 %1651
      %1653 = vrot.lane.b32.xlu0 %v573, 104
      %v1654 = vpop.permute.xlu0 %1653
      %1655 = vrot.lane.b32.xlu0 %v575, 104
      %v1656 = vpop.permute.xlu0 %1655
      %1657 = vrot.lane.b32.xlu0 %v577, 104
      %v1658 = vpop.permute.xlu0 %1657
      %v1659 = vsel %vm613, %v1608, 0
      %v1661 = vsel %vm613, %v1610, 0
      %v1663 = vsel %vm613, %v1612, 0
      %v1665 = vsel %vm613, %v1614, 0
      %v1667 = vsel %vm613, %v1616, 0
      %v1669 = vsel %vm613, %v1618, 0
      %v1671 = vsel %vm613, %v1620, 0
      %v1673 = vsel %vm613, %v1622, 0
      %v1675 = vsel %vm613, %v1624, 0
      %v1677 = vsel %vm613, %v1626, 0
      %v1679 = vsel %vm613, %v1628, 0
      %v1681 = vsel %vm613, %v1630, 0
      %v1683 = vsel %vm613, %v1632, 0
      %v1685 = vsel %vm613, %v1634, 0
      %v1687 = vsel %vm613, %v1636, 0
      %v1689 = vsel %vm613, %v1638, 0
      %v1691 = vsel %vm613, %v1640, 0
      %v1693 = vsel %vm613, %v1642, 0
      %v1695 = vsel %vm613, %v1644, 0
      %v1697 = vsel %vm613, %v1646, 0
      %v1699 = vsel %vm613, %v1648, 0
      %v1701 = vsel %vm613, %v1650, 0
      %v1703 = vsel %vm613, %v1652, 0
      %v1705 = vsel %vm613, %v1654, 0
      %v1707 = vsel %vm613, %v1656, 0
      %v1709 = vsel %vm613, %v1658, 0
      %1711 = vmatpush.xpose.msra.mxu0 %v1709
      %1712 = vmatpush.xpose.msra.mxu0 %v1707
      %1713 = vmatpush.xpose.msra.mxu0 %v1705
      %1714 = vmatpush.xpose.msra.mxu0 %v1703
      %1715 = vmatpush.xpose.msra.mxu0 %v1701
      %1716 = vmatpush.xpose.msra.mxu0 %v1699
      %1717 = vmatpush.xpose.msra.mxu0 %v1697
      %1718 = vmatpush.xpose.msra.mxu0 %v1695
      %1719 = vmatpush.xpose.msra.mxu0 %v1693
      %1720 = vmatpush.xpose.msra.mxu0 %v1691
      %1721 = vmatpush.xpose.msra.mxu0 %v1689
      %1722 = vmatpush.xpose.msra.mxu0 %v1687
      %1723 = vmatpush.xpose.msra.mxu0 %v1685
      %1724 = vmatpush.xpose.msra.mxu0 %v1683
      %1725 = vmatpush.xpose.msra.mxu0 %v1681
      %1726 = vmatpush.xpose.msra.mxu0 %v1679
      %1727 = vmatmul.f32.gmra.mxu0 %v1659
      %v1728 = vpop.f32.mrf.mxu0
      %v1729 = vadd.f32 0.0, %v1728
      %1730 = vmatmul.f32.gmra.mxu0 %v1661
      %v1731 = vpop.f32.mrf.mxu0
      %v1732 = vadd.f32 0.0, %v1731
      %1733 = vmatmul.f32.gmra.mxu0 %v1663
      %v1734 = vpop.f32.mrf.mxu0
      %v1735 = vadd.f32 0.0, %v1734
      %1736 = vmatmul.f32.gmra.mxu0 %v1665
      %v1737 = vpop.f32.mrf.mxu0
      %v1738 = vadd.f32 0.0, %v1737
      %1739 = vmatmul.f32.gmra.mxu0 %v1667
      %v1740 = vpop.f32.mrf.mxu0
      %v1741 = vadd.f32 0.0, %v1740
      %1742 = vmatmul.f32.gmra.mxu0 %v1669
      %v1743 = vpop.f32.mrf.mxu0
      %v1744 = vadd.f32 0.0, %v1743
      %1745 = vmatmul.f32.gmra.mxu0 %v1671
      %v1746 = vpop.f32.mrf.mxu0
      %v1747 = vadd.f32 0.0, %v1746
      %1748 = vmatmul.f32.gmra.mxu0 %v1673
      %v1749 = vpop.f32.mrf.mxu0
      %v1750 = vadd.f32 0.0, %v1749
      %1751 = vmatmul.f32.gmra.mxu0 %v1675
      %v1752 = vpop.f32.mrf.mxu0
      %v1753 = vadd.f32 0.0, %v1752
      %1754 = vmatmul.f32.gmra.mxu0 %v1677
      %v1755 = vpop.f32.mrf.mxu0
      %v1756 = vadd.f32 0.0, %v1755
      %1757 = vdwg.mxu0
      %v1758 = vmul.f32 %v1729, 0.17677669
      %v1759 = vmul.f32 %v1732, 0.17677669
      %v1760 = vmul.f32 %v1735, 0.17677669
      %v1761 = vmul.f32 %v1738, 0.17677669
      %v1762 = vmul.f32 %v1741, 0.17677669
      %v1763 = vmul.f32 %v1744, 0.17677669
      %v1764 = vmul.f32 %v1747, 0.17677669
      %v1765 = vmul.f32 %v1750, 0.17677669
      %v1766 = vmul.f32 %v1753, 0.17677669
      %v1767 = vmul.f32 %v1756, 0.17677669
      %v1768 = vsel %vm759, %v1758, -1e+30
      %v1769 = vsel %vm760, %v1759, -1e+30
      %v1770 = vsel %vm761, %v1760, -1e+30
      %v1771 = vsel %vm762, %v1761, -1e+30
      %v1772 = vsel %vm763, %v1762, -1e+30
      %v1773 = vsel %vm764, %v1763, -1e+30
      %v1774 = vsel %vm765, %v1764, -1e+30
      %v1775 = vsel %vm766, %v1765, -1e+30
      %v1776 = vsel %vm767, %v1766, -1e+30
      %v1777 = vsel %vm768, %v1767, -1e+30
      %v1778 = vmax.f32 %v1768, %v1772
      %v1779 = vmax.f32 %v1769, %v1773
      %v1780 = vmax.f32 %v1770, %v1774
      %v1781 = vmax.f32 %v1771, %v1775
      %v1782 = vmax.f32 %v1778, %v1776
      %v1783 = vmax.f32 %v1779, %v1777
      %v1784 = vmax.f32 %v1782, %v1783
      %v1785 = vmax.f32 %v1780, %v1781
      %v1786 = vmax.f32 %v1784, %v1785
      %v1787 = vrot.slane %v1786, 4
      %v1788 = vmax.f32 %v1786, %v1787
      %v1789 = vrot.slane %v1788, 2
      %v1790 = vmax.f32 %v1788, %v1789
      %v1791 = vrot.slane %v1790, 1
      %v1792 = vmax.f32 %v1790, %v1791
      %v1793 = vsub.f32 %v1768, %v1792
      %v1794 = vsub.f32 %v1769, %v1792
      %v1795 = vsub.f32 %v1770, %v1792
      %v1796 = vsub.f32 %v1771, %v1792
      %v1797 = vsub.f32 %v1772, %v1792
      %v1798 = vsub.f32 %v1773, %v1792
      %v1799 = vsub.f32 %v1774, %v1792
      %v1800 = vsub.f32 %v1775, %v1792
      %v1801 = vsub.f32 %v1776, %v1792
      %v1802 = vsub.f32 %v1777, %v1792
      %v1803 = vmul.f32 %v1793, 1.442695
      %v1804 = vpow.pop %v1803
      %v1805 = vmul.f32 %v1794, 1.442695
      %v1806 = vpow.pop %v1805
      %v1807 = vmul.f32 %v1795, 1.442695
      %v1808 = vpow.pop %v1807
      %v1809 = vmul.f32 %v1796, 1.442695
      %v1810 = vpow.pop %v1809
      %v1811 = vmul.f32 %v1797, 1.442695
      %v1812 = vpow.pop %v1811
      %v1813 = vmul.f32 %v1798, 1.442695
      %v1814 = vpow.pop %v1813
      %v1815 = vmul.f32 %v1799, 1.442695
      %v1816 = vpow.pop %v1815
      %v1817 = vmul.f32 %v1800, 1.442695
      %v1818 = vpow.pop %v1817
      %v1819 = vmul.f32 %v1801, 1.442695
      %v1820 = vpow.pop %v1819
      %v1821 = vmul.f32 %v1802, 1.442695
      %v1822 = vpow.pop %v1821
      %v1823 = vadd.f32 %v1804, %v1806
      %v1824 = vadd.f32 %v1823, %v1808
      %v1825 = vadd.f32 %v1824, %v1810
      %v1826 = vadd.f32 %v1825, %v1812
      %v1827 = vadd.f32 %v1826, %v1814
      %v1828 = vadd.f32 %v1827, %v1816
      %v1829 = vadd.f32 %v1828, %v1818
      %v1830 = vadd.f32 %v1829, %v1820
      %v1831 = vadd.f32 %v1830, %v1822
      %v1832 = vrot.slane %v1831, 4
      %v1833 = vadd.f32 %v1831, %v1832
      %v1834 = vrot.slane %v1833, 2
      %v1835 = vadd.f32 %v1833, %v1834
      %v1836 = vrot.slane %v1835, 1
      %v1837 = vadd.f32 %v1835, %v1836
      %v1838 = vrcp.pop %v1837
      %v1839 = vmul.f32 %v1837, %v1838
      %v1840 = vsub.f32 1.0, %v1839
      %v1841 = vmul.f32 %v1838, %v1840
      %v1842 = vadd.f32 %v1838, %v1841
      %vm1843 = vweird.f32 %v1837
      %vm1844 = vweird.f32 %v1838
      %vm1845 = vmor %vm1843, %vm1844
      %v1846 = vsel %vm1845, %v1838, %v1842
      %v1847 = vand.u32 2147483647, %v1837
      %vm1848 = vcmp.eq.f32.partialorder %v1847, 8.507059e+37
      %v1849 = vand.u32 %v1837, 2147483648
      %v1850 = vor.u32 1.1754944e-38, %v1849
      %v1851 = vsel %vm1848, %v1850, %v1846
      %v1852 = vmul.f32 %v1804, %v1851
      %v1853 = vmul.f32 %v1806, %v1851
      %v1854 = vmul.f32 %v1808, %v1851
      %v1855 = vmul.f32 %v1810, %v1851
      %v1856 = vmul.f32 %v1812, %v1851
      %v1857 = vmul.f32 %v1814, %v1851
      %v1858 = vmul.f32 %v1816, %v1851
      %v1859 = vmul.f32 %v1818, %v1851
      %v1860 = vmul.f32 %v1820, %v1851
      %v1861 = vmul.f32 %v1822, %v1851
      %vm1862 = vcmp.ge.s32.totalorder %v602, 24
      %vm1863 = vcmp.lt.s32.totalorder %v602, 32
      %vm1864 = vmand %vm1862, %vm1863
      %v1865 = vsel %vm1864, 1, 0
      %vm1866 = vcmp.eq.s32.totalorder %v1865, 1
      %v1867 = vsel %vm1866, %v548, 0.0
      %v1868 = vsel %vm1866, %v550, 0.0
      %v1869 = vsel %vm1866, %v552, 0.0
      %v1870 = vsel %vm1866, %v554, 0.0
      %v1871 = vsel %vm1866, %v556, 0.0
      %v1872 = vsel %vm1866, %v558, 0.0
      %v1873 = vsel %vm1866, %v560, 0.0
      %v1874 = vsel %vm1866, %v562, 0.0
      %v1875 = vsel %vm1866, %v564, 0.0
      %v1876 = vsel %vm1866, %v566, 0.0
      %v1877 = vsel %vm1866, %v568, 0.0
      %v1878 = vsel %vm1866, %v570, 0.0
      %v1879 = vsel %vm1866, %v572, 0.0
      %v1880 = vsel %vm1866, %v574, 0.0
      %v1881 = vsel %vm1866, %v576, 0.0
      %v1882 = vsel %vm1866, %v578, 0.0
      %1883 = vmatpush.msra.mxu0 %v1882
      %1884 = vmatpush.msra.mxu0 %v1881
      %1885 = vmatpush.msra.mxu0 %v1880
      %1886 = vmatpush.msra.mxu0 %v1879
      %1887 = vmatpush.msra.mxu0 %v1878
      %1888 = vmatpush.msra.mxu0 %v1877
      %1889 = vmatpush.msra.mxu0 %v1876
      %1890 = vmatpush.msra.mxu0 %v1875
      %1891 = vmatpush.msra.mxu0 %v1874
      %1892 = vmatpush.msra.mxu0 %v1873
      %1893 = vmatpush.msra.mxu0 %v1872
      %1894 = vmatpush.msra.mxu0 %v1871
      %1895 = vmatpush.msra.mxu0 %v1870
      %1896 = vmatpush.msra.mxu0 %v1869
      %1897 = vmatpush.msra.mxu0 %v1868
      %1898 = vmatpush.msra.mxu0 %v1867
      %1899 = vmatmul.f32.gmra.mxu0 %v1852
      %v1900 = vpop.f32.mrf.mxu0
      %v1901 = vadd.f32 0.0, %v1900
      %1902 = vmatmul.f32.gmra.mxu0 %v1853
      %v1903 = vpop.f32.mrf.mxu0
      %v1904 = vadd.f32 0.0, %v1903
      %1905 = vmatmul.f32.gmra.mxu0 %v1854
      %v1906 = vpop.f32.mrf.mxu0
      %v1907 = vadd.f32 0.0, %v1906
      %1908 = vmatmul.f32.gmra.mxu0 %v1855
      %v1909 = vpop.f32.mrf.mxu0
      %v1910 = vadd.f32 0.0, %v1909
      %1911 = vmatmul.f32.gmra.mxu0 %v1856
      %v1912 = vpop.f32.mrf.mxu0
      %v1913 = vadd.f32 0.0, %v1912
      %1914 = vmatmul.f32.gmra.mxu0 %v1857
      %v1915 = vpop.f32.mrf.mxu0
      %v1916 = vadd.f32 0.0, %v1915
      %1917 = vmatmul.f32.gmra.mxu0 %v1858
      %v1918 = vpop.f32.mrf.mxu0
      %v1919 = vadd.f32 0.0, %v1918
      %1920 = vmatmul.f32.gmra.mxu0 %v1859
      %v1921 = vpop.f32.mrf.mxu0
      %v1922 = vadd.f32 0.0, %v1921
      %1923 = vmatmul.f32.gmra.mxu0 %v1860
      %v1924 = vpop.f32.mrf.mxu0
      %v1925 = vadd.f32 0.0, %v1924
      %1926 = vmatmul.f32.gmra.mxu0 %v1861
      %v1927 = vpop.f32.mrf.mxu0
      %v1928 = vadd.f32 0.0, %v1927
      %1929 = vdwg.mxu0
      %v1930 = vadd.f32 %v1597, %v1901
      %v1931 = vadd.f32 %v1598, %v1904
      %v1932 = vadd.f32 %v1599, %v1907
      %v1933 = vadd.f32 %v1600, %v1910
      %v1934 = vadd.f32 %v1601, %v1913
      %v1935 = vadd.f32 %v1602, %v1916
      %v1936 = vadd.f32 %v1603, %v1919
      %v1937 = vadd.f32 %v1604, %v1922
      %v1938 = vadd.f32 %v1605, %v1925
      %v1939 = vadd.f32 %v1606, %v1928
      %v1940 = vpack.c.bf16 %v1931, %v1930
      %v1941 = vpack.c.bf16 %v1933, %v1932
      %v1942 = vpack.c.bf16 %v1935, %v1934
      %v1943 = vpack.c.bf16 %v1937, %v1936
      %v1944 = vpack.c.bf16 %v1939, %v1938
      %v1945 = vld [vmem:[%s3] sm:$0xf]
      %v1946 = vld [vmem:[%s3 + $0x4] sm:$0xf]
      %v1947 = vld [vmem:[%s3 + $0x8] sm:$0xf]
      %v1948 = vld [vmem:[%s3 + $0xc] sm:$0xf]
      %v1949 = vld [vmem:[%s3 + $0x10] sm:$0xf]
      %v1950 = vld [vmem:[%s3 + $0x14] sm:$0xf]
      %v1951 = vld [vmem:[%s3 + $0x18] sm:$0xf]
      %v1952 = vld [vmem:[%s3 + $0x1c] sm:$0xf]
      %v1953 = vld [vmem:[%s3 + $0x20] sm:$0xf]
      %v1954 = vld [vmem:[%s3 + $0x24] sm:$0xf]
      %v1955 = vld [vmem:[%s3 + $0x28] sm:$0xf]
      %v1956 = vld [vmem:[%s3 + $0x2c] sm:$0xf]
      %v1957 = vld [vmem:[%s3 + $0x30] sm:$0xf]
      %v1958 = vld [vmem:[%s3 + $0x34] sm:$0xf]
      %v1959 = vld [vmem:[%s3 + $0x38] sm:$0xf]
      %v1960 = vld [vmem:[%s3 + $0x3c] sm:$0xf]
      %v1961 = vld [vmem:[%s4] sm:$0x1]
      %v1963 = vperm.slane %v1961, 0
      %v1981 = vunpack.c.l.b16 %v1945
      %v1982 = vunpack.c.l.b16 %v1946
      %v1983 = vunpack.c.l.b16 %v1947
      %v1984 = vunpack.c.l.b16 %v1948
      %v1985 = vunpack.c.l.b16 %v1949
      %v1986 = vunpack.c.l.b16 %v1950
      %v1987 = vunpack.c.l.b16 %v1951
      %v1988 = vunpack.c.l.b16 %v1952
      %v1989 = vunpack.c.l.b16 %v1953
      %v1990 = vunpack.c.l.b16 %v1954
      %v1991 = vunpack.c.l.b16 %v1955
      %v1992 = vunpack.c.l.b16 %v1956
      %v1993 = vunpack.c.l.b16 %v1957
      %v1994 = vunpack.c.l.b16 %v1958
      %v1995 = vunpack.c.l.b16 %v1959
      %v1996 = vunpack.c.l.b16 %v1960
      %v1997 = vpack.c.b16 %v1982, %v1981
      %v1998 = vpack.c.b16 %v1984, %v1983
      %v1999 = vpack.c.b16 %v1986, %v1985
      %v2000 = vpack.c.b16 %v1988, %v1987
      %v2001 = vpack.c.b16 %v1990, %v1989
      %v2002 = vpack.c.b16 %v1992, %v1991
      %v2003 = vpack.c.b16 %v1994, %v1993
      %v2004 = vpack.c.b16 %v1996, %v1995
      %2013 = vmatpush.bf16.msra.mxu0 %v2004
      %2014 = vmatpush.bf16.msra.mxu0 %v2003
      %2015 = vmatpush.bf16.msra.mxu0 %v2002
      %2016 = vmatpush.bf16.msra.mxu0 %v2001
      %2017 = vmatpush.bf16.msra.mxu0 %v2000
      %2018 = vmatpush.bf16.msra.mxu0 %v1999
      %2019 = vmatpush.bf16.msra.mxu0 %v1998
      %2020 = vmatpush.bf16.msra.mxu0 %v1997
      %2021 = vmatmul.bf16.gmra.mxu0 %v1940
      %v2022 = vpop.f32.mrf.mxu0
      %v2023 = vadd.f32 %v1963, %v2022
      %v2024 = vpop.f32.mrf.mxu0
      %v2025 = vadd.f32 %v1963, %v2024
      %2026 = vmatmul.bf16.gmra.mxu0 %v1941
      %v2027 = vpop.f32.mrf.mxu0
      %v2028 = vadd.f32 %v1963, %v2027
      %v2029 = vpop.f32.mrf.mxu0
      %v2030 = vadd.f32 %v1963, %v2029
      %2031 = vmatmul.bf16.gmra.mxu0 %v1942
      %v2032 = vpop.f32.mrf.mxu0
      %v2033 = vadd.f32 %v1963, %v2032
      %v2034 = vpop.f32.mrf.mxu0
      %v2035 = vadd.f32 %v1963, %v2034
      %2036 = vmatmul.bf16.gmra.mxu0 %v1943
      %v2037 = vpop.f32.mrf.mxu0
      %v2038 = vadd.f32 %v1963, %v2037
      %v2039 = vpop.f32.mrf.mxu0
      %v2040 = vadd.f32 %v1963, %v2039
      %2041 = vmatmul.bf16.gmra.mxu0 %v1944
      %v2042 = vpop.f32.mrf.mxu0
      %v2043 = vadd.f32 %v1963, %v2042
      %v2044 = vpop.f32.mrf.mxu0
      %v2045 = vadd.f32 %v1963, %v2044
      %2046 = vdwg.mxu0
      %v2047 = vmax.f32 %v2023, 0.0
      %v2048 = vmax.f32 %v2025, 0.0
      %v2049 = vmax.f32 %v2028, 0.0
      %v2050 = vmax.f32 %v2030, 0.0
      %v2051 = vmax.f32 %v2033, 0.0
      %v2052 = vmax.f32 %v2035, 0.0
      %v2053 = vmax.f32 %v2038, 0.0
      %v2054 = vmax.f32 %v2040, 0.0
      %v2055 = vmax.f32 %v2043, 0.0
      %v2056 = vmax.f32 %v2045, 0.0
      %v2057 = vadd.f32 %v1930, %v2047
      %v2058 = vadd.f32 %v1931, %v2048
      %v2059 = vadd.f32 %v1932, %v2049
      %v2060 = vadd.f32 %v1933, %v2050
      %v2061 = vadd.f32 %v1934, %v2051
      %v2062 = vadd.f32 %v1935, %v2052
      %v2063 = vadd.f32 %v1936, %v2053
      %v2064 = vadd.f32 %v1937, %v2054
      %v2065 = vadd.f32 %v1938, %v2055
      %v2066 = vadd.f32 %v1939, %v2056
      %v2067 = vsel %vm759, %v2057, 0.0
      %v2068 = vsel %vm760, %v2058, 0.0
      %v2069 = vsel %vm761, %v2059, 0.0
      %v2070 = vsel %vm762, %v2060, 0.0
      %v2071 = vsel %vm763, %v2061, 0.0
      %v2072 = vsel %vm764, %v2062, 0.0
      %v2073 = vsel %vm765, %v2063, 0.0
      %v2074 = vsel %vm766, %v2064, 0.0
      %v2075 = vsel %vm767, %v2065, 0.0
      %v2076 = vsel %vm768, %v2066, 0.0
      %v2077 = vpack.c.bf16 %v2068, %v2067
      %v2078 = vpack.c.bf16 %v2070, %v2069
      %v2079 = vpack.c.bf16 %v2072, %v2071
      %v2080 = vpack.c.bf16 %v2074, %v2073
      %v2081 = vpack.c.bf16 %v2076, %v2075
      %v2082 = vld [vmem:[%s5] sm:$0xff]
      %v2083 = vld [vmem:[%s5 + $0x8] sm:$0xf]
      %v2084 = vld [vmem:[%s5 + $0xc] sm:$0xff]
      %v2085 = vld [vmem:[%s5 + $0x14] sm:$0xf]
      %v2086 = vld [vmem:[%s5 + $0x18] sm:$0xff]
      %v2087 = vld [vmem:[%s5 + $0x20] sm:$0xf]
      %v2088 = vld [vmem:[%s5 + $0x24] sm:$0xff]
      %v2089 = vld [vmem:[%s5 + $0x2c] sm:$0xf]
      %v2090 = vld [vmem:[%s5 + $0x30] sm:$0xff]
      %v2091 = vld [vmem:[%s5 + $0x38] sm:$0xf]
      %v2092 = vld [vmem:[%s5 + $0x3c] sm:$0xff]
      %v2093 = vld [vmem:[%s5 + $0x44] sm:$0xf]
      %v2094 = vld [vmem:[%s5 + $0x48] sm:$0xff]
      %v2095 = vld [vmem:[%s5 + $0x50] sm:$0xf]
      %v2096 = vld [vmem:[%s5 + $0x54] sm:$0xff]
      %v2097 = vld [vmem:[%s5 + $0x5c] sm:$0xf]
      %v2098 = vld [vmem:[%s5 + $0x60] sm:$0xff]
      %v2099 = vld [vmem:[%s5 + $0x68] sm:$0xf]
      %v2100 = vld [vmem:[%s5 + $0x6c] sm:$0xff]
      %v2101 = vld [vmem:[%s5 + $0x74] sm:$0xf]
      %v2102 = vld [vmem:[%s5 + $0x78] sm:$0xff]
      %v2103 = vld [vmem:[%s5 + $0x80] sm:$0xf]
      %v2104 = vld [vmem:[%s5 + $0x84] sm:$0xff]
      %v2105 = vld [vmem:[%s5 + $0x8c] sm:$0xf]
      %v2106 = vld [vmem:[%s5 + $0x90] sm:$0xff]
      %v2107 = vld [vmem:[%s5 + $0x98] sm:$0xf]
      %v2108 = vld [vmem:[%s5 + $0x9c] sm:$0xff]
      %v2109 = vld [vmem:[%s5 + $0xa4] sm:$0xf]
      %v2110 = vld [vmem:[%s5 + $0xa8] sm:$0xff]
      %v2111 = vld [vmem:[%s5 + $0xb0] sm:$0xf]
      %v2112 = vld [vmem:[%s5 + $0xb4] sm:$0xff]
      %v2113 = vld [vmem:[%s5 + $0xbc] sm:$0xf]
      %v2114 = vld [vmem:[%s6] sm:$0x7]
      %v2116 = vperm.slane %v2114, 0
      %v2117 = vperm.slane %v2114, 1
      %v2118 = vperm.slane %v2114, 2
      %v2154 = vunpack.c.l.b16 %v2082
      %v2155 = vunpack.c.h.b16 %v2082
      %v2156 = vunpack.c.l.b16 %v2083
      %v2157 = vunpack.c.l.b16 %v2084
      %v2158 = vunpack.c.h.b16 %v2084
      %v2159 = vunpack.c.l.b16 %v2085
      %v2160 = vunpack.c.l.b16 %v2086
      %v2161 = vunpack.c.h.b16 %v2086
      %v2162 = vunpack.c.l.b16 %v2087
      %v2163 = vunpack.c.l.b16 %v2088
      %v2164 = vunpack.c.h.b16 %v2088
      %v2165 = vunpack.c.l.b16 %v2089
      %v2166 = vunpack.c.l.b16 %v2090
      %v2167 = vunpack.c.h.b16 %v2090
      %v2168 = vunpack.c.l.b16 %v2091
      %v2169 = vunpack.c.l.b16 %v2092
      %v2170 = vunpack.c.h.b16 %v2092
      %v2171 = vunpack.c.l.b16 %v2093
      %v2172 = vunpack.c.l.b16 %v2094
      %v2173 = vunpack.c.h.b16 %v2094
      %v2174 = vunpack.c.l.b16 %v2095
      %v2175 = vunpack.c.l.b16 %v2096
      %v2176 = vunpack.c.h.b16 %v2096
      %v2177 = vunpack.c.l.b16 %v2097
      %v2178 = vunpack.c.l.b16 %v2098
      %v2179 = vunpack.c.h.b16 %v2098
      %v2180 = vunpack.c.l.b16 %v2099
      %v2181 = vunpack.c.l.b16 %v2100
      %v2182 = vunpack.c.h.b16 %v2100
      %v2183 = vunpack.c.l.b16 %v2101
      %v2184 = vunpack.c.l.b16 %v2102
      %v2185 = vunpack.c.h.b16 %v2102
      %v2186 = vunpack.c.l.b16 %v2103
      %v2187 = vunpack.c.l.b16 %v2104
      %v2188 = vunpack.c.h.b16 %v2104
      %v2189 = vunpack.c.l.b16 %v2105
      %v2190 = vunpack.c.l.b16 %v2106
      %v2191 = vunpack.c.h.b16 %v2106
      %v2192 = vunpack.c.l.b16 %v2107
      %v2193 = vunpack.c.l.b16 %v2108
      %v2194 = vunpack.c.h.b16 %v2108
      %v2195 = vunpack.c.l.b16 %v2109
      %v2196 = vunpack.c.l.b16 %v2110
      %v2197 = vunpack.c.h.b16 %v2110
      %v2198 = vunpack.c.l.b16 %v2111
      %v2199 = vunpack.c.l.b16 %v2112
      %v2200 = vunpack.c.h.b16 %v2112
      %v2201 = vunpack.c.l.b16 %v2113
      %v2202 = vpack.c.b16 %v2157, %v2154
      %v2203 = vpack.c.b16 %v2158, %v2155
      %v2204 = vpack.c.b16 %v2159, %v2156
      %v2205 = vpack.c.b16 %v2163, %v2160
      %v2206 = vpack.c.b16 %v2164, %v2161
      %v2207 = vpack.c.b16 %v2165, %v2162
      %v2208 = vpack.c.b16 %v2169, %v2166
      %v2209 = vpack.c.b16 %v2170, %v2167
      %v2210 = vpack.c.b16 %v2171, %v2168
      %v2211 = vpack.c.b16 %v2175, %v2172
      %v2212 = vpack.c.b16 %v2176, %v2173
      %v2213 = vpack.c.b16 %v2177, %v2174
      %v2214 = vpack.c.b16 %v2181, %v2178
      %v2215 = vpack.c.b16 %v2182, %v2179
      %v2216 = vpack.c.b16 %v2183, %v2180
      %v2217 = vpack.c.b16 %v2187, %v2184
      %v2218 = vpack.c.b16 %v2188, %v2185
      %v2219 = vpack.c.b16 %v2189, %v2186
      %v2220 = vpack.c.b16 %v2193, %v2190
      %v2221 = vpack.c.b16 %v2194, %v2191
      %v2222 = vpack.c.b16 %v2195, %v2192
      %v2223 = vpack.c.b16 %v2199, %v2196
      %v2224 = vpack.c.b16 %v2200, %v2197
      %v2225 = vpack.c.b16 %v2201, %v2198
      %2250 = vmatpush.bf16.msra.mxu0 %v2223
      %2251 = vmatpush.bf16.msra.mxu0 %v2220
      %2252 = vmatpush.bf16.msra.mxu0 %v2217
      %2253 = vmatpush.bf16.msra.mxu0 %v2214
      %2254 = vmatpush.bf16.msra.mxu0 %v2211
      %2255 = vmatpush.bf16.msra.mxu0 %v2208
      %2256 = vmatpush.bf16.msra.mxu0 %v2205
      %2257 = vmatpush.bf16.msra.mxu0 %v2202
      %2258 = vmatmul.bf16.gmra.mxu0 %v2077
      %v2259 = vpop.f32.mrf.mxu0
      %v2260 = vadd.f32 %v2116, %v2259
      %v2261 = vpop.f32.mrf.mxu0
      %v2262 = vadd.f32 %v2116, %v2261
      %2263 = vmatmul.bf16.gmra.mxu0 %v2078
      %v2264 = vpop.f32.mrf.mxu0
      %v2265 = vadd.f32 %v2116, %v2264
      %v2266 = vpop.f32.mrf.mxu0
      %v2267 = vadd.f32 %v2116, %v2266
      %2268 = vmatmul.bf16.gmra.mxu0 %v2079
      %v2269 = vpop.f32.mrf.mxu0
      %v2270 = vadd.f32 %v2116, %v2269
      %v2271 = vpop.f32.mrf.mxu0
      %v2272 = vadd.f32 %v2116, %v2271
      %2273 = vmatmul.bf16.gmra.mxu0 %v2080
      %v2274 = vpop.f32.mrf.mxu0
      %v2275 = vadd.f32 %v2116, %v2274
      %v2276 = vpop.f32.mrf.mxu0
      %v2277 = vadd.f32 %v2116, %v2276
      %2278 = vmatmul.bf16.gmra.mxu0 %v2081
      %v2279 = vpop.f32.mrf.mxu0
      %v2280 = vadd.f32 %v2116, %v2279
      %v2281 = vpop.f32.mrf.mxu0
      %v2282 = vadd.f32 %v2116, %v2281
      %2283 = vdwg.mxu0
      %2284 = vmatpush.bf16.msra.mxu0 %v2224
      %2285 = vmatpush.bf16.msra.mxu0 %v2221
      %2286 = vmatpush.bf16.msra.mxu0 %v2218
      %2287 = vmatpush.bf16.msra.mxu0 %v2215
      %2288 = vmatpush.bf16.msra.mxu0 %v2212
      %2289 = vmatpush.bf16.msra.mxu0 %v2209
      %2290 = vmatpush.bf16.msra.mxu0 %v2206
      %2291 = vmatpush.bf16.msra.mxu0 %v2203
      %2292 = vmatmul.bf16.gmra.mxu0 %v2077
      %v2293 = vpop.f32.mrf.mxu0
      %v2294 = vadd.f32 %v2117, %v2293
      %v2295 = vpop.f32.mrf.mxu0
      %v2296 = vadd.f32 %v2117, %v2295
      %2297 = vmatmul.bf16.gmra.mxu0 %v2078
      %v2298 = vpop.f32.mrf.mxu0
      %v2299 = vadd.f32 %v2117, %v2298
      %v2300 = vpop.f32.mrf.mxu0
      %v2301 = vadd.f32 %v2117, %v2300
      %2302 = vmatmul.bf16.gmra.mxu0 %v2079
      %v2303 = vpop.f32.mrf.mxu0
      %v2304 = vadd.f32 %v2117, %v2303
      %v2305 = vpop.f32.mrf.mxu0
      %v2306 = vadd.f32 %v2117, %v2305
      %2307 = vmatmul.bf16.gmra.mxu0 %v2080
      %v2308 = vpop.f32.mrf.mxu0
      %v2309 = vadd.f32 %v2117, %v2308
      %v2310 = vpop.f32.mrf.mxu0
      %v2311 = vadd.f32 %v2117, %v2310
      %2312 = vmatmul.bf16.gmra.mxu0 %v2081
      %v2313 = vpop.f32.mrf.mxu0
      %v2314 = vadd.f32 %v2117, %v2313
      %v2315 = vpop.f32.mrf.mxu0
      %v2316 = vadd.f32 %v2117, %v2315
      %2317 = vdwg.mxu0
      %2318 = vmatpush.bf16.msra.mxu0 %v2225
      %2319 = vmatpush.bf16.msra.mxu0 %v2222
      %2320 = vmatpush.bf16.msra.mxu0 %v2219
      %2321 = vmatpush.bf16.msra.mxu0 %v2216
      %2322 = vmatpush.bf16.msra.mxu0 %v2213
      %2323 = vmatpush.bf16.msra.mxu0 %v2210
      %2324 = vmatpush.bf16.msra.mxu0 %v2207
      %2325 = vmatpush.bf16.msra.mxu0 %v2204
      %2326 = vmatmul.bf16.gmra.mxu0 %v2077
      %v2327 = vpop.f32.mrf.mxu0
      %v2328 = vadd.f32 %v2118, %v2327
      %v2329 = vpop.f32.mrf.mxu0
      %v2330 = vadd.f32 %v2118, %v2329
      %2331 = vmatmul.bf16.gmra.mxu0 %v2078
      %v2332 = vpop.f32.mrf.mxu0
      %v2333 = vadd.f32 %v2118, %v2332
      %v2334 = vpop.f32.mrf.mxu0
      %v2335 = vadd.f32 %v2118, %v2334
      %2336 = vmatmul.bf16.gmra.mxu0 %v2079
      %v2337 = vpop.f32.mrf.mxu0
      %v2338 = vadd.f32 %v2118, %v2337
      %v2339 = vpop.f32.mrf.mxu0
      %v2340 = vadd.f32 %v2118, %v2339
      %2341 = vmatmul.bf16.gmra.mxu0 %v2080
      %v2342 = vpop.f32.mrf.mxu0
      %v2343 = vadd.f32 %v2118, %v2342
      %v2344 = vpop.f32.mrf.mxu0
      %v2345 = vadd.f32 %v2118, %v2344
      %2346 = vmatmul.bf16.gmra.mxu0 %v2081
      %v2347 = vpop.f32.mrf.mxu0
      %v2348 = vadd.f32 %v2118, %v2347
      %v2349 = vpop.f32.mrf.mxu0
      %v2350 = vadd.f32 %v2118, %v2349
      %2351 = vdwg.mxu0
      %v2352 = vsel %vm759, %v2260, 0.0
      %v2353 = vsel %vm759, %v2294, 0.0
      %v2354 = vsel %vm759, %v2328, 0.0
      %v2355 = vsel %vm760, %v2262, 0.0
      %v2356 = vsel %vm760, %v2296, 0.0
      %v2357 = vsel %vm760, %v2330, 0.0
      %v2358 = vsel %vm761, %v2265, 0.0
      %v2359 = vsel %vm761, %v2299, 0.0
      %v2360 = vsel %vm761, %v2333, 0.0
      %v2361 = vsel %vm762, %v2267, 0.0
      %v2362 = vsel %vm762, %v2301, 0.0
      %v2363 = vsel %vm762, %v2335, 0.0
      %v2364 = vsel %vm763, %v2270, 0.0
      %v2365 = vsel %vm763, %v2304, 0.0
      %v2366 = vsel %vm763, %v2338, 0.0
      %v2367 = vsel %vm764, %v2272, 0.0
      %v2368 = vsel %vm764, %v2306, 0.0
      %v2369 = vsel %vm764, %v2340, 0.0
      %v2370 = vsel %vm765, %v2275, 0.0
      %v2371 = vsel %vm765, %v2309, 0.0
      %v2372 = vsel %vm765, %v2343, 0.0
      %v2373 = vsel %vm766, %v2277, 0.0
      %v2374 = vsel %vm766, %v2311, 0.0
      %v2375 = vsel %vm766, %v2345, 0.0
      %v2376 = vsel %vm767, %v2280, 0.0
      %v2377 = vsel %vm767, %v2314, 0.0
      %v2378 = vsel %vm767, %v2348, 0.0
      %v2379 = vsel %vm768, %v2282, 0.0
      %v2380 = vsel %vm768, %v2316, 0.0
      %v2381 = vsel %vm768, %v2350, 0.0
      %v2383 = vsel %vm613, %v2352, 0
      %v2386 = vsel %vm613, %v2355, 0
      %v2389 = vsel %vm613, %v2358, 0
      %v2392 = vsel %vm613, %v2361, 0
      %v2395 = vsel %vm613, %v2364, 0
      %v2398 = vsel %vm613, %v2367, 0
      %v2401 = vsel %vm613, %v2370, 0
      %v2404 = vsel %vm613, %v2373, 0
      %v2407 = vsel %vm613, %v2376, 0
      %v2410 = vsel %vm613, %v2379, 0
      %v2413 = vsel %vm613, %v2353, 0
      %v2416 = vsel %vm613, %v2356, 0
      %v2419 = vsel %vm613, %v2359, 0
      %v2422 = vsel %vm613, %v2362, 0
      %v2425 = vsel %vm613, %v2365, 0
      %v2428 = vsel %vm613, %v2368, 0
      %v2431 = vsel %vm613, %v2371, 0
      %v2434 = vsel %vm613, %v2374, 0
      %v2437 = vsel %vm613, %v2377, 0
      %v2440 = vsel %vm613, %v2380, 0
      %2442 = vmatpush.xpose.msra.mxu0 0.0
      %2443 = vmatpush.xpose.msra.mxu0 0.0
      %2444 = vmatpush.xpose.msra.mxu0 0.0
      %2445 = vmatpush.xpose.msra.mxu0 0.0
      %2446 = vmatpush.xpose.msra.mxu0 0.0
      %2447 = vmatpush.xpose.msra.mxu0 0.0
      %2448 = vmatpush.xpose.msra.mxu0 %v2440
      %2449 = vmatpush.xpose.msra.mxu0 %v2437
      %2450 = vmatpush.xpose.msra.mxu0 %v2434
      %2451 = vmatpush.xpose.msra.mxu0 %v2431
      %2452 = vmatpush.xpose.msra.mxu0 %v2428
      %2453 = vmatpush.xpose.msra.mxu0 %v2425
      %2454 = vmatpush.xpose.msra.mxu0 %v2422
      %2455 = vmatpush.xpose.msra.mxu0 %v2419
      %2456 = vmatpush.xpose.msra.mxu0 %v2416
      %2457 = vmatpush.xpose.msra.mxu0 %v2413
      %2458 = vmatmul.f32.gmra.mxu0 %v2383
      %v2459 = vpop.f32.mrf.mxu0
      %v2460 = vadd.f32 0.0, %v2459
      %2461 = vmatmul.f32.gmra.mxu0 %v2386
      %v2462 = vpop.f32.mrf.mxu0
      %v2463 = vadd.f32 0.0, %v2462
      %2464 = vmatmul.f32.gmra.mxu0 %v2389
      %v2465 = vpop.f32.mrf.mxu0
      %v2466 = vadd.f32 0.0, %v2465
      %2467 = vmatmul.f32.gmra.mxu0 %v2392
      %v2468 = vpop.f32.mrf.mxu0
      %v2469 = vadd.f32 0.0, %v2468
      %2470 = vmatmul.f32.gmra.mxu0 %v2395
      %v2471 = vpop.f32.mrf.mxu0
      %v2472 = vadd.f32 0.0, %v2471
      %2473 = vmatmul.f32.gmra.mxu0 %v2398
      %v2474 = vpop.f32.mrf.mxu0
      %v2475 = vadd.f32 0.0, %v2474
      %2476 = vmatmul.f32.gmra.mxu0 %v2401
      %v2477 = vpop.f32.mrf.mxu0
      %v2478 = vadd.f32 0.0, %v2477
      %2479 = vmatmul.f32.gmra.mxu0 %v2404
      %v2480 = vpop.f32.mrf.mxu0
      %v2481 = vadd.f32 0.0, %v2480
      %2482 = vmatmul.f32.gmra.mxu0 %v2407
      %v2483 = vpop.f32.mrf.mxu0
      %v2484 = vadd.f32 0.0, %v2483
      %2485 = vmatmul.f32.gmra.mxu0 %v2410
      %v2486 = vpop.f32.mrf.mxu0
      %v2487 = vadd.f32 0.0, %v2486
      %2488 = vdwg.mxu0
      %v2489 = vmul.f32 %v2460, 0.17677669
      %v2490 = vmul.f32 %v2463, 0.17677669
      %v2491 = vmul.f32 %v2466, 0.17677669
      %v2492 = vmul.f32 %v2469, 0.17677669
      %v2493 = vmul.f32 %v2472, 0.17677669
      %v2494 = vmul.f32 %v2475, 0.17677669
      %v2495 = vmul.f32 %v2478, 0.17677669
      %v2496 = vmul.f32 %v2481, 0.17677669
      %v2497 = vmul.f32 %v2484, 0.17677669
      %v2498 = vmul.f32 %v2487, 0.17677669
      %v2499 = vsel %vm759, %v2489, -1e+30
      %v2500 = vsel %vm760, %v2490, -1e+30
      %v2501 = vsel %vm761, %v2491, -1e+30
      %v2502 = vsel %vm762, %v2492, -1e+30
      %v2503 = vsel %vm763, %v2493, -1e+30
      %v2504 = vsel %vm764, %v2494, -1e+30
      %v2505 = vsel %vm765, %v2495, -1e+30
      %v2506 = vsel %vm766, %v2496, -1e+30
      %v2507 = vsel %vm767, %v2497, -1e+30
      %v2508 = vsel %vm768, %v2498, -1e+30
      %vm2509 = vcmask 654336
      %v2510 = vsel %vm2509, %v2499, -inf
      %v2511 = vsel %vm2509, %v2500, -inf
      %v2512 = vsel %vm2509, %v2501, -inf
      %v2513 = vsel %vm2509, %v2502, -inf
      %v2514 = vsel %vm2509, %v2503, -inf
      %v2515 = vmax.f32 %v2510, %v2514
      %v2516 = vsel %vm2509, %v2504, -inf
      %v2517 = vmax.f32 %v2511, %v2516
      %v2518 = vsel %vm2509, %v2505, -inf
      %v2519 = vmax.f32 %v2512, %v2518
      %v2520 = vsel %vm2509, %v2506, -inf
      %v2521 = vmax.f32 %v2513, %v2520
      %v2522 = vsel %vm2509, %v2507, -inf
      %v2523 = vmax.f32 %v2515, %v2522
      %v2524 = vsel %vm2509, %v2508, -inf
      %v2525 = vmax.f32 %v2517, %v2524
      %v2526 = vmax.f32 %v2523, %v2525
      %v2527 = vmax.f32 %v2519, %v2521
      %v2528 = vmax.f32 %v2526, %v2527
      %v2529 = vrot.slane %v2528, 4
      %v2530 = vmax.f32 %v2528, %v2529
      %v2531 = vrot.slane %v2530, 2
      %v2532 = vmax.f32 %v2530, %v2531
      %v2533 = vrot.slane %v2532, 1
      %v2534 = vmax.f32 %v2532, %v2533
      %v2535 = vsub.f32 %v2499, %v2534
      %v2536 = vsub.f32 %v2500, %v2534
      %v2537 = vsub.f32 %v2501, %v2534
      %v2538 = vsub.f32 %v2502, %v2534
      %v2539 = vsub.f32 %v2503, %v2534
      %v2540 = vsub.f32 %v2504, %v2534
      %v2541 = vsub.f32 %v2505, %v2534
      %v2542 = vsub.f32 %v2506, %v2534
      %v2543 = vsub.f32 %v2507, %v2534
      %v2544 = vsub.f32 %v2508, %v2534
      %v2545 = vmul.f32 %v2535, 1.442695
      %v2546 = vpow.pop %v2545
      %v2547 = vmul.f32 %v2536, 1.442695
      %v2548 = vpow.pop %v2547
      %v2549 = vmul.f32 %v2537, 1.442695
      %v2550 = vpow.pop %v2549
      %v2551 = vmul.f32 %v2538, 1.442695
      %v2552 = vpow.pop %v2551
      %v2553 = vmul.f32 %v2539, 1.442695
      %v2554 = vpow.pop %v2553
      %v2555 = vmul.f32 %v2540, 1.442695
      %v2556 = vpow.pop %v2555
      %v2557 = vmul.f32 %v2541, 1.442695
      %v2558 = vpow.pop %v2557
      %v2559 = vmul.f32 %v2542, 1.442695
      %v2560 = vpow.pop %v2559
      %v2561 = vmul.f32 %v2543, 1.442695
      %v2562 = vpow.pop %v2561
      %v2563 = vmul.f32 %v2544, 1.442695
      %v2564 = vpow.pop %v2563
      %v2565 = vsel %vm2509, %v2546, 0.0
      %v2566 = vsel %vm2509, %v2548, 0.0
      %v2567 = vadd.f32 %v2565, %v2566
      %v2568 = vsel %vm2509, %v2550, 0.0
      %v2569 = vadd.f32 %v2567, %v2568
      %v2570 = vsel %vm2509, %v2552, 0.0
      %v2571 = vadd.f32 %v2569, %v2570
      %v2572 = vsel %vm2509, %v2554, 0.0
      %v2573 = vadd.f32 %v2571, %v2572
      %v2574 = vsel %vm2509, %v2556, 0.0
      %v2575 = vadd.f32 %v2573, %v2574
      %v2576 = vsel %vm2509, %v2558, 0.0
      %v2577 = vadd.f32 %v2575, %v2576
      %v2578 = vsel %vm2509, %v2560, 0.0
      %v2579 = vadd.f32 %v2577, %v2578
      %v2580 = vsel %vm2509, %v2562, 0.0
      %v2581 = vadd.f32 %v2579, %v2580
      %v2582 = vsel %vm2509, %v2564, 0.0
      %v2583 = vadd.f32 %v2581, %v2582
      %v2584 = vrot.slane %v2583, 4
      %v2585 = vadd.f32 %v2583, %v2584
      %v2586 = vrot.slane %v2585, 2
      %v2587 = vadd.f32 %v2585, %v2586
      %v2588 = vrot.slane %v2587, 1
      %v2589 = vadd.f32 %v2587, %v2588
      %v2590 = vrcp.pop %v2589
      %v2591 = vmul.f32 %v2589, %v2590
      %v2592 = vsub.f32 1.0, %v2591
      %v2593 = vmul.f32 %v2590, %v2592
      %v2594 = vadd.f32 %v2590, %v2593
      %vm2595 = vweird.f32 %v2589
      %vm2596 = vweird.f32 %v2590
      %vm2597 = vmor %vm2595, %vm2596
      %v2598 = vsel %vm2597, %v2590, %v2594
      %v2599 = vand.u32 2147483647, %v2589
      %vm2600 = vcmp.eq.f32.partialorder %v2599, 8.507059e+37
      %v2601 = vand.u32 %v2589, 2147483648
      %v2602 = vor.u32 1.1754944e-38, %v2601
      %v2603 = vsel %vm2600, %v2602, %v2598
      %v2604 = vmul.f32 %v2546, %v2603
      %v2605 = vmul.f32 %v2548, %v2603
      %v2606 = vmul.f32 %v2550, %v2603
      %v2607 = vmul.f32 %v2552, %v2603
      %v2608 = vmul.f32 %v2554, %v2603
      %v2609 = vmul.f32 %v2556, %v2603
      %v2610 = vmul.f32 %v2558, %v2603
      %v2611 = vmul.f32 %v2560, %v2603
      %v2612 = vmul.f32 %v2562, %v2603
      %v2613 = vmul.f32 %v2564, %v2603
      %v2614 = vsel %vm867, %v2354, 0.0
      %v2615 = vsel %vm867, %v2357, 0.0
      %v2616 = vsel %vm867, %v2360, 0.0
      %v2617 = vsel %vm867, %v2363, 0.0
      %v2618 = vsel %vm867, %v2366, 0.0
      %v2619 = vsel %vm867, %v2369, 0.0
      %v2620 = vsel %vm867, %v2372, 0.0
      %v2621 = vsel %vm867, %v2375, 0.0
      %v2622 = vsel %vm867, %v2378, 0.0
      %v2623 = vsel %vm867, %v2381, 0.0
      %v2625 = vsel %vm2509, %v2604, 0
      %v2628 = vsel %vm2509, %v2605, 0
      %v2631 = vsel %vm2509, %v2606, 0
      %v2634 = vsel %vm2509, %v2607, 0
      %v2637 = vsel %vm2509, %v2608, 0
      %v2640 = vsel %vm2509, %v2609, 0
      %v2643 = vsel %vm2509, %v2610, 0
      %v2646 = vsel %vm2509, %v2611, 0
      %v2649 = vsel %vm2509, %v2612, 0
      %v2652 = vsel %vm2509, %v2613, 0
      %2654 = vmatpush.msra.mxu0 0.0
      %2655 = vmatpush.msra.mxu0 0.0
      %2656 = vmatpush.msra.mxu0 0.0
      %2657 = vmatpush.msra.mxu0 0.0
      %2658 = vmatpush.msra.mxu0 0.0
      %2659 = vmatpush.msra.mxu0 0.0
      %2660 = vmatpush.msra.mxu0 %v2623
      %2661 = vmatpush.msra.mxu0 %v2622
      %2662 = vmatpush.msra.mxu0 %v2621
      %2663 = vmatpush.msra.mxu0 %v2620
      %2664 = vmatpush.msra.mxu0 %v2619
      %2665 = vmatpush.msra.mxu0 %v2618
      %2666 = vmatpush.msra.mxu0 %v2617
      %2667 = vmatpush.msra.mxu0 %v2616
      %2668 = vmatpush.msra.mxu0 %v2615
      %2669 = vmatpush.msra.mxu0 %v2614
      %2670 = vmatmul.f32.gmra.mxu0 %v2625
      %v2671 = vpop.f32.mrf.mxu0
      %v2672 = vadd.f32 0.0, %v2671
      %2673 = vmatmul.f32.gmra.mxu0 %v2628
      %v2674 = vpop.f32.mrf.mxu0
      %v2675 = vadd.f32 0.0, %v2674
      %2676 = vmatmul.f32.gmra.mxu0 %v2631
      %v2677 = vpop.f32.mrf.mxu0
      %v2678 = vadd.f32 0.0, %v2677
      %2679 = vmatmul.f32.gmra.mxu0 %v2634
      %v2680 = vpop.f32.mrf.mxu0
      %v2681 = vadd.f32 0.0, %v2680
      %2682 = vmatmul.f32.gmra.mxu0 %v2637
      %v2683 = vpop.f32.mrf.mxu0
      %v2684 = vadd.f32 0.0, %v2683
      %2685 = vmatmul.f32.gmra.mxu0 %v2640
      %v2686 = vpop.f32.mrf.mxu0
      %v2687 = vadd.f32 0.0, %v2686
      %2688 = vmatmul.f32.gmra.mxu0 %v2643
      %v2689 = vpop.f32.mrf.mxu0
      %v2690 = vadd.f32 0.0, %v2689
      %2691 = vmatmul.f32.gmra.mxu0 %v2646
      %v2692 = vpop.f32.mrf.mxu0
      %v2693 = vadd.f32 0.0, %v2692
      %2694 = vmatmul.f32.gmra.mxu0 %v2649
      %v2695 = vpop.f32.mrf.mxu0
      %v2696 = vadd.f32 0.0, %v2695
      %2697 = vmatmul.f32.gmra.mxu0 %v2652
      %v2698 = vpop.f32.mrf.mxu0
      %v2699 = vadd.f32 0.0, %v2698
      %2700 = vdwg.mxu0
      %v2701 = vadd.f32 %v2352, %v2672
      %v2702 = vadd.f32 %v2355, %v2675
      %v2703 = vadd.f32 %v2358, %v2678
      %v2704 = vadd.f32 %v2361, %v2681
      %v2705 = vadd.f32 %v2364, %v2684
      %v2706 = vadd.f32 %v2367, %v2687
      %v2707 = vadd.f32 %v2370, %v2690
      %v2708 = vadd.f32 %v2373, %v2693
      %v2709 = vadd.f32 %v2376, %v2696
      %v2710 = vadd.f32 %v2379, %v2699
      %2711 = vrot.lane.b32.xlu0 %v2352, 120
      %v2712 = vpop.permute.xlu0 %2711
      %2713 = vrot.lane.b32.xlu0 %v2355, 120
      %v2714 = vpop.permute.xlu0 %2713
      %2715 = vrot.lane.b32.xlu0 %v2358, 120
      %v2716 = vpop.permute.xlu0 %2715
      %2717 = vrot.lane.b32.xlu0 %v2361, 120
      %v2718 = vpop.permute.xlu0 %2717
      %2719 = vrot.lane.b32.xlu0 %v2364, 120
      %v2720 = vpop.permute.xlu0 %2719
      %2721 = vrot.lane.b32.xlu0 %v2367, 120
      %v2722 = vpop.permute.xlu0 %2721
      %2723 = vrot.lane.b32.xlu0 %v2370, 120
      %v2724 = vpop.permute.xlu0 %2723
      %2725 = vrot.lane.b32.xlu0 %v2373, 120
      %v2726 = vpop.permute.xlu0 %2725
      %2727 = vrot.lane.b32.xlu0 %v2376, 120
      %v2728 = vpop.permute.xlu0 %2727
      %2729 = vrot.lane.b32.xlu0 %v2379, 120
      %v2730 = vpop.permute.xlu0 %2729
      %2731 = vrot.lane.b32.xlu0 %v2353, 120
      %v2732 = vpop.permute.xlu0 %2731
      %2733 = vrot.lane.b32.xlu0 %v2356, 120
      %v2734 = vpop.permute.xlu0 %2733
      %2735 = vrot.lane.b32.xlu0 %v2359, 120
      %v2736 = vpop.permute.xlu0 %2735
      %2737 = vrot.lane.b32.xlu0 %v2362, 120
      %v2738 = vpop.permute.xlu0 %2737
      %2739 = vrot.lane.b32.xlu0 %v2365, 120
      %v2740 = vpop.permute.xlu0 %2739
      %2741 = vrot.lane.b32.xlu0 %v2368, 120
      %v2742 = vpop.permute.xlu0 %2741
      %2743 = vrot.lane.b32.xlu0 %v2371, 120
      %v2744 = vpop.permute.xlu0 %2743
      %2745 = vrot.lane.b32.xlu0 %v2374, 120
      %v2746 = vpop.permute.xlu0 %2745
      %2747 = vrot.lane.b32.xlu0 %v2377, 120
      %v2748 = vpop.permute.xlu0 %2747
      %2749 = vrot.lane.b32.xlu0 %v2380, 120
      %v2750 = vpop.permute.xlu0 %2749
      %v2751 = vsel %vm613, %v2712, 0
      %v2753 = vsel %vm613, %v2714, 0
      %v2755 = vsel %vm613, %v2716, 0
      %v2757 = vsel %vm613, %v2718, 0
      %v2759 = vsel %vm613, %v2720, 0
      %v2761 = vsel %vm613, %v2722, 0
      %v2763 = vsel %vm613, %v2724, 0
      %v2765 = vsel %vm613, %v2726, 0
      %v2767 = vsel %vm613, %v2728, 0
      %v2769 = vsel %vm613, %v2730, 0
      %v2771 = vsel %vm613, %v2732, 0
      %v2773 = vsel %vm613, %v2734, 0
      %v2775 = vsel %vm613, %v2736, 0
      %v2777 = vsel %vm613, %v2738, 0
      %v2779 = vsel %vm613, %v2740, 0
      %v2781 = vsel %vm613, %v2742, 0
      %v2783 = vsel %vm613, %v2744, 0
      %v2785 = vsel %vm613, %v2746, 0
      %v2787 = vsel %vm613, %v2748, 0
      %v2789 = vsel %vm613, %v2750, 0
      %2791 = vmatpush.xpose.msra.mxu0 0.0
      %2792 = vmatpush.xpose.msra.mxu0 0.0
      %2793 = vmatpush.xpose.msra.mxu0 0.0
      %2794 = vmatpush.xpose.msra.mxu0 0.0
      %2795 = vmatpush.xpose.msra.mxu0 0.0
      %2796 = vmatpush.xpose.msra.mxu0 0.0
      %2797 = vmatpush.xpose.msra.mxu0 %v2789
      %2798 = vmatpush.xpose.msra.mxu0 %v2787
      %2799 = vmatpush.xpose.msra.mxu0 %v2785
      %2800 = vmatpush.xpose.msra.mxu0 %v2783
      %2801 = vmatpush.xpose.msra.mxu0 %v2781
      %2802 = vmatpush.xpose.msra.mxu0 %v2779
      %2803 = vmatpush.xpose.msra.mxu0 %v2777
      %2804 = vmatpush.xpose.msra.mxu0 %v2775
      %2805 = vmatpush.xpose.msra.mxu0 %v2773
      %2806 = vmatpush.xpose.msra.mxu0 %v2771
      %2807 = vmatmul.f32.gmra.mxu0 %v2751
      %v2808 = vpop.f32.mrf.mxu0
      %v2809 = vadd.f32 0.0, %v2808
      %2810 = vmatmul.f32.gmra.mxu0 %v2753
      %v2811 = vpop.f32.mrf.mxu0
      %v2812 = vadd.f32 0.0, %v2811
      %2813 = vmatmul.f32.gmra.mxu0 %v2755
      %v2814 = vpop.f32.mrf.mxu0
      %v2815 = vadd.f32 0.0, %v2814
      %2816 = vmatmul.f32.gmra.mxu0 %v2757
      %v2817 = vpop.f32.mrf.mxu0
      %v2818 = vadd.f32 0.0, %v2817
      %2819 = vmatmul.f32.gmra.mxu0 %v2759
      %v2820 = vpop.f32.mrf.mxu0
      %v2821 = vadd.f32 0.0, %v2820
      %2822 = vmatmul.f32.gmra.mxu0 %v2761
      %v2823 = vpop.f32.mrf.mxu0
      %v2824 = vadd.f32 0.0, %v2823
      %2825 = vmatmul.f32.gmra.mxu0 %v2763
      %v2826 = vpop.f32.mrf.mxu0
      %v2827 = vadd.f32 0.0, %v2826
      %2828 = vmatmul.f32.gmra.mxu0 %v2765
      %v2829 = vpop.f32.mrf.mxu0
      %v2830 = vadd.f32 0.0, %v2829
      %2831 = vmatmul.f32.gmra.mxu0 %v2767
      %v2832 = vpop.f32.mrf.mxu0
      %v2833 = vadd.f32 0.0, %v2832
      %2834 = vmatmul.f32.gmra.mxu0 %v2769
      %v2835 = vpop.f32.mrf.mxu0
      %v2836 = vadd.f32 0.0, %v2835
      %2837 = vdwg.mxu0
      %v2838 = vmul.f32 %v2809, 0.17677669
      %v2839 = vmul.f32 %v2812, 0.17677669
      %v2840 = vmul.f32 %v2815, 0.17677669
      %v2841 = vmul.f32 %v2818, 0.17677669
      %v2842 = vmul.f32 %v2821, 0.17677669
      %v2843 = vmul.f32 %v2824, 0.17677669
      %v2844 = vmul.f32 %v2827, 0.17677669
      %v2845 = vmul.f32 %v2830, 0.17677669
      %v2846 = vmul.f32 %v2833, 0.17677669
      %v2847 = vmul.f32 %v2836, 0.17677669
      %v2848 = vsel %vm759, %v2838, -1e+30
      %v2849 = vsel %vm760, %v2839, -1e+30
      %v2850 = vsel %vm761, %v2840, -1e+30
      %v2851 = vsel %vm762, %v2841, -1e+30
      %v2852 = vsel %vm763, %v2842, -1e+30
      %v2853 = vsel %vm764, %v2843, -1e+30
      %v2854 = vsel %vm765, %v2844, -1e+30
      %v2855 = vsel %vm766, %v2845, -1e+30
      %v2856 = vsel %vm767, %v2846, -1e+30
      %v2857 = vsel %vm768, %v2847, -1e+30
      %v2858 = vsel %vm2509, %v2848, -inf
      %v2859 = vsel %vm2509, %v2849, -inf
      %v2860 = vsel %vm2509, %v2850, -inf
      %v2861 = vsel %vm2509, %v2851, -inf
      %v2862 = vsel %vm2509, %v2852, -inf
      %v2863 = vmax.f32 %v2858, %v2862
      %v2864 = vsel %vm2509, %v2853, -inf
      %v2865 = vmax.f32 %v2859, %v2864
      %v2866 = vsel %vm2509, %v2854, -inf
      %v2867 = vmax.f32 %v2860, %v2866
      %v2868 = vsel %vm2509, %v2855, -inf
      %v2869 = vmax.f32 %v2861, %v2868
      %v2870 = vsel %vm2509, %v2856, -inf
      %v2871 = vmax.f32 %v2863, %v2870
      %v2872 = vsel %vm2509, %v2857, -inf
      %v2873 = vmax.f32 %v2865, %v2872
      %v2874 = vmax.f32 %v2871, %v2873
      %v2875 = vmax.f32 %v2867, %v2869
      %v2876 = vmax.f32 %v2874, %v2875
      %v2877 = vrot.slane %v2876, 4
      %v2878 = vmax.f32 %v2876, %v2877
      %v2879 = vrot.slane %v2878, 2
      %v2880 = vmax.f32 %v2878, %v2879
      %v2881 = vrot.slane %v2880, 1
      %v2882 = vmax.f32 %v2880, %v2881
      %v2883 = vsub.f32 %v2848, %v2882
      %v2884 = vsub.f32 %v2849, %v2882
      %v2885 = vsub.f32 %v2850, %v2882
      %v2886 = vsub.f32 %v2851, %v2882
      %v2887 = vsub.f32 %v2852, %v2882
      %v2888 = vsub.f32 %v2853, %v2882
      %v2889 = vsub.f32 %v2854, %v2882
      %v2890 = vsub.f32 %v2855, %v2882
      %v2891 = vsub.f32 %v2856, %v2882
      %v2892 = vsub.f32 %v2857, %v2882
      %v2893 = vmul.f32 %v2883, 1.442695
      %v2894 = vpow.pop %v2893
      %v2895 = vmul.f32 %v2884, 1.442695
      %v2896 = vpow.pop %v2895
      %v2897 = vmul.f32 %v2885, 1.442695
      %v2898 = vpow.pop %v2897
      %v2899 = vmul.f32 %v2886, 1.442695
      %v2900 = vpow.pop %v2899
      %v2901 = vmul.f32 %v2887, 1.442695
      %v2902 = vpow.pop %v2901
      %v2903 = vmul.f32 %v2888, 1.442695
      %v2904 = vpow.pop %v2903
      %v2905 = vmul.f32 %v2889, 1.442695
      %v2906 = vpow.pop %v2905
      %v2907 = vmul.f32 %v2890, 1.442695
      %v2908 = vpow.pop %v2907
      %v2909 = vmul.f32 %v2891, 1.442695
      %v2910 = vpow.pop %v2909
      %v2911 = vmul.f32 %v2892, 1.442695
      %v2912 = vpow.pop %v2911
      %v2913 = vsel %vm2509, %v2894, 0.0
      %v2914 = vsel %vm2509, %v2896, 0.0
      %v2915 = vadd.f32 %v2913, %v2914
      %v2916 = vsel %vm2509, %v2898, 0.0
      %v2917 = vadd.f32 %v2915, %v2916
      %v2918 = vsel %vm2509, %v2900, 0.0
      %v2919 = vadd.f32 %v2917, %v2918
      %v2920 = vsel %vm2509, %v2902, 0.0
      %v2921 = vadd.f32 %v2919, %v2920
      %v2922 = vsel %vm2509, %v2904, 0.0
      %v2923 = vadd.f32 %v2921, %v2922
      %v2924 = vsel %vm2509, %v2906, 0.0
      %v2925 = vadd.f32 %v2923, %v2924
      %v2926 = vsel %vm2509, %v2908, 0.0
      %v2927 = vadd.f32 %v2925, %v2926
      %v2928 = vsel %vm2509, %v2910, 0.0
      %v2929 = vadd.f32 %v2927, %v2928
      %v2930 = vsel %vm2509, %v2912, 0.0
      %v2931 = vadd.f32 %v2929, %v2930
      %v2932 = vrot.slane %v2931, 4
      %v2933 = vadd.f32 %v2931, %v2932
      %v2934 = vrot.slane %v2933, 2
      %v2935 = vadd.f32 %v2933, %v2934
      %v2936 = vrot.slane %v2935, 1
      %v2937 = vadd.f32 %v2935, %v2936
      %v2938 = vrcp.pop %v2937
      %v2939 = vmul.f32 %v2937, %v2938
      %v2940 = vsub.f32 1.0, %v2939
      %v2941 = vmul.f32 %v2938, %v2940
      %v2942 = vadd.f32 %v2938, %v2941
      %vm2943 = vweird.f32 %v2937
      %vm2944 = vweird.f32 %v2938
      %vm2945 = vmor %vm2943, %vm2944
      %v2946 = vsel %vm2945, %v2938, %v2942
      %v2947 = vand.u32 2147483647, %v2937
      %vm2948 = vcmp.eq.f32.partialorder %v2947, 8.507059e+37
      %v2949 = vand.u32 %v2937, 2147483648
      %v2950 = vor.u32 1.1754944e-38, %v2949
      %v2951 = vsel %vm2948, %v2950, %v2946
      %v2952 = vmul.f32 %v2894, %v2951
      %v2953 = vmul.f32 %v2896, %v2951
      %v2954 = vmul.f32 %v2898, %v2951
      %v2955 = vmul.f32 %v2900, %v2951
      %v2956 = vmul.f32 %v2902, %v2951
      %v2957 = vmul.f32 %v2904, %v2951
      %v2958 = vmul.f32 %v2906, %v2951
      %v2959 = vmul.f32 %v2908, %v2951
      %v2960 = vmul.f32 %v2910, %v2951
      %v2961 = vmul.f32 %v2912, %v2951
      %v2962 = vsel %vm1200, %v2354, 0.0
      %v2963 = vsel %vm1200, %v2357, 0.0
      %v2964 = vsel %vm1200, %v2360, 0.0
      %v2965 = vsel %vm1200, %v2363, 0.0
      %v2966 = vsel %vm1200, %v2366, 0.0
      %v2967 = vsel %vm1200, %v2369, 0.0
      %v2968 = vsel %vm1200, %v2372, 0.0
      %v2969 = vsel %vm1200, %v2375, 0.0
      %v2970 = vsel %vm1200, %v2378, 0.0
      %v2971 = vsel %vm1200, %v2381, 0.0
      %v2973 = vsel %vm2509, %v2952, 0
      %v2976 = vsel %vm2509, %v2953, 0
      %v2979 = vsel %vm2509, %v2954, 0
      %v2982 = vsel %vm2509, %v2955, 0
      %v2985 = vsel %vm2509, %v2956, 0
      %v2988 = vsel %vm2509, %v2957, 0
      %v2991 = vsel %vm2509, %v2958, 0
      %v2994 = vsel %vm2509, %v2959, 0
      %v2997 = vsel %vm2509, %v2960, 0
      %v3000 = vsel %vm2509, %v2961, 0
      %3002 = vmatpush.msra.mxu0 0.0
      %3003 = vmatpush.msra.mxu0 0.0
      %3004 = vmatpush.msra.mxu0 0.0
      %3005 = vmatpush.msra.mxu0 0.0
      %3006 = vmatpush.msra.mxu0 0.0
      %3007 = vmatpush.msra.mxu0 0.0
      %3008 = vmatpush.msra.mxu0 %v2971
      %3009 = vmatpush.msra.mxu0 %v2970
      %3010 = vmatpush.msra.mxu0 %v2969
      %3011 = vmatpush.msra.mxu0 %v2968
      %3012 = vmatpush.msra.mxu0 %v2967
      %3013 = vmatpush.msra.mxu0 %v2966
      %3014 = vmatpush.msra.mxu0 %v2965
      %3015 = vmatpush.msra.mxu0 %v2964
      %3016 = vmatpush.msra.mxu0 %v2963
      %3017 = vmatpush.msra.mxu0 %v2962
      %3018 = vmatmul.f32.gmra.mxu0 %v2973
      %v3019 = vpop.f32.mrf.mxu0
      %v3020 = vadd.f32 0.0, %v3019
      %3021 = vmatmul.f32.gmra.mxu0 %v2976
      %v3022 = vpop.f32.mrf.mxu0
      %v3023 = vadd.f32 0.0, %v3022
      %3024 = vmatmul.f32.gmra.mxu0 %v2979
      %v3025 = vpop.f32.mrf.mxu0
      %v3026 = vadd.f32 0.0, %v3025
      %3027 = vmatmul.f32.gmra.mxu0 %v2982
      %v3028 = vpop.f32.mrf.mxu0
      %v3029 = vadd.f32 0.0, %v3028
      %3030 = vmatmul.f32.gmra.mxu0 %v2985
      %v3031 = vpop.f32.mrf.mxu0
      %v3032 = vadd.f32 0.0, %v3031
      %3033 = vmatmul.f32.gmra.mxu0 %v2988
      %v3034 = vpop.f32.mrf.mxu0
      %v3035 = vadd.f32 0.0, %v3034
      %3036 = vmatmul.f32.gmra.mxu0 %v2991
      %v3037 = vpop.f32.mrf.mxu0
      %v3038 = vadd.f32 0.0, %v3037
      %3039 = vmatmul.f32.gmra.mxu0 %v2994
      %v3040 = vpop.f32.mrf.mxu0
      %v3041 = vadd.f32 0.0, %v3040
      %3042 = vmatmul.f32.gmra.mxu0 %v2997
      %v3043 = vpop.f32.mrf.mxu0
      %v3044 = vadd.f32 0.0, %v3043
      %3045 = vmatmul.f32.gmra.mxu0 %v3000
      %v3046 = vpop.f32.mrf.mxu0
      %v3047 = vadd.f32 0.0, %v3046
      %3048 = vdwg.mxu0
      %v3049 = vadd.f32 %v2701, %v3020
      %v3050 = vadd.f32 %v2702, %v3023
      %v3051 = vadd.f32 %v2703, %v3026
      %v3052 = vadd.f32 %v2704, %v3029
      %v3053 = vadd.f32 %v2705, %v3032
      %v3054 = vadd.f32 %v2706, %v3035
      %v3055 = vadd.f32 %v2707, %v3038
      %v3056 = vadd.f32 %v2708, %v3041
      %v3057 = vadd.f32 %v2709, %v3044
      %v3058 = vadd.f32 %v2710, %v3047
      %3059 = vrot.lane.b32.xlu0 %v2352, 112
      %v3060 = vpop.permute.xlu0 %3059
      %3061 = vrot.lane.b32.xlu0 %v2355, 112
      %v3062 = vpop.permute.xlu0 %3061
      %3063 = vrot.lane.b32.xlu0 %v2358, 112
      %v3064 = vpop.permute.xlu0 %3063
      %3065 = vrot.lane.b32.xlu0 %v2361, 112
      %v3066 = vpop.permute.xlu0 %3065
      %3067 = vrot.lane.b32.xlu0 %v2364, 112
      %v3068 = vpop.permute.xlu0 %3067
      %3069 = vrot.lane.b32.xlu0 %v2367, 112
      %v3070 = vpop.permute.xlu0 %3069
      %3071 = vrot.lane.b32.xlu0 %v2370, 112
      %v3072 = vpop.permute.xlu0 %3071
      %3073 = vrot.lane.b32.xlu0 %v2373, 112
      %v3074 = vpop.permute.xlu0 %3073
      %3075 = vrot.lane.b32.xlu0 %v2376, 112
      %v3076 = vpop.permute.xlu0 %3075
      %3077 = vrot.lane.b32.xlu0 %v2379, 112
      %v3078 = vpop.permute.xlu0 %3077
      %3079 = vrot.lane.b32.xlu0 %v2353, 112
      %v3080 = vpop.permute.xlu0 %3079
      %3081 = vrot.lane.b32.xlu0 %v2356, 112
      %v3082 = vpop.permute.xlu0 %3081
      %3083 = vrot.lane.b32.xlu0 %v2359, 112
      %v3084 = vpop.permute.xlu0 %3083
      %3085 = vrot.lane.b32.xlu0 %v2362, 112
      %v3086 = vpop.permute.xlu0 %3085
      %3087 = vrot.lane.b32.xlu0 %v2365, 112
      %v3088 = vpop.permute.xlu0 %3087
      %3089 = vrot.lane.b32.xlu0 %v2368, 112
      %v3090 = vpop.permute.xlu0 %3089
      %3091 = vrot.lane.b32.xlu0 %v2371, 112
      %v3092 = vpop.permute.xlu0 %3091
      %3093 = vrot.lane.b32.xlu0 %v2374, 112
      %v3094 = vpop.permute.xlu0 %3093
      %3095 = vrot.lane.b32.xlu0 %v2377, 112
      %v3096 = vpop.permute.xlu0 %3095
      %3097 = vrot.lane.b32.xlu0 %v2380, 112
      %v3098 = vpop.permute.xlu0 %3097
      %v3099 = vsel %vm613, %v3060, 0
      %v3101 = vsel %vm613, %v3062, 0
      %v3103 = vsel %vm613, %v3064, 0
      %v3105 = vsel %vm613, %v3066, 0
      %v3107 = vsel %vm613, %v3068, 0
      %v3109 = vsel %vm613, %v3070, 0
      %v3111 = vsel %vm613, %v3072, 0
      %v3113 = vsel %vm613, %v3074, 0
      %v3115 = vsel %vm613, %v3076, 0
      %v3117 = vsel %vm613, %v3078, 0
      %v3119 = vsel %vm613, %v3080, 0
      %v3121 = vsel %vm613, %v3082, 0
      %v3123 = vsel %vm613, %v3084, 0
      %v3125 = vsel %vm613, %v3086, 0
      %v3127 = vsel %vm613, %v3088, 0
      %v3129 = vsel %vm613, %v3090, 0
      %v3131 = vsel %vm613, %v3092, 0
      %v3133 = vsel %vm613, %v3094, 0
      %v3135 = vsel %vm613, %v3096, 0
      %v3137 = vsel %vm613, %v3098, 0
      %3139 = vmatpush.xpose.msra.mxu0 0.0
      %3140 = vmatpush.xpose.msra.mxu0 0.0
      %3141 = vmatpush.xpose.msra.mxu0 0.0
      %3142 = vmatpush.xpose.msra.mxu0 0.0
      %3143 = vmatpush.xpose.msra.mxu0 0.0
      %3144 = vmatpush.xpose.msra.mxu0 0.0
      %3145 = vmatpush.xpose.msra.mxu0 %v3137
      %3146 = vmatpush.xpose.msra.mxu0 %v3135
      %3147 = vmatpush.xpose.msra.mxu0 %v3133
      %3148 = vmatpush.xpose.msra.mxu0 %v3131
      %3149 = vmatpush.xpose.msra.mxu0 %v3129
      %3150 = vmatpush.xpose.msra.mxu0 %v3127
      %3151 = vmatpush.xpose.msra.mxu0 %v3125
      %3152 = vmatpush.xpose.msra.mxu0 %v3123
      %3153 = vmatpush.xpose.msra.mxu0 %v3121
      %3154 = vmatpush.xpose.msra.mxu0 %v3119
      %3155 = vmatmul.f32.gmra.mxu0 %v3099
      %v3156 = vpop.f32.mrf.mxu0
      %v3157 = vadd.f32 0.0, %v3156
      %3158 = vmatmul.f32.gmra.mxu0 %v3101
      %v3159 = vpop.f32.mrf.mxu0
      %v3160 = vadd.f32 0.0, %v3159
      %3161 = vmatmul.f32.gmra.mxu0 %v3103
      %v3162 = vpop.f32.mrf.mxu0
      %v3163 = vadd.f32 0.0, %v3162
      %3164 = vmatmul.f32.gmra.mxu0 %v3105
      %v3165 = vpop.f32.mrf.mxu0
      %v3166 = vadd.f32 0.0, %v3165
      %3167 = vmatmul.f32.gmra.mxu0 %v3107
      %v3168 = vpop.f32.mrf.mxu0
      %v3169 = vadd.f32 0.0, %v3168
      %3170 = vmatmul.f32.gmra.mxu0 %v3109
      %v3171 = vpop.f32.mrf.mxu0
      %v3172 = vadd.f32 0.0, %v3171
      %3173 = vmatmul.f32.gmra.mxu0 %v3111
      %v3174 = vpop.f32.mrf.mxu0
      %v3175 = vadd.f32 0.0, %v3174
      %3176 = vmatmul.f32.gmra.mxu0 %v3113
      %v3177 = vpop.f32.mrf.mxu0
      %v3178 = vadd.f32 0.0, %v3177
      %3179 = vmatmul.f32.gmra.mxu0 %v3115
      %v3180 = vpop.f32.mrf.mxu0
      %v3181 = vadd.f32 0.0, %v3180
      %3182 = vmatmul.f32.gmra.mxu0 %v3117
      %v3183 = vpop.f32.mrf.mxu0
      %v3184 = vadd.f32 0.0, %v3183
      %3185 = vdwg.mxu0
      %v3186 = vmul.f32 %v3157, 0.17677669
      %v3187 = vmul.f32 %v3160, 0.17677669
      %v3188 = vmul.f32 %v3163, 0.17677669
      %v3189 = vmul.f32 %v3166, 0.17677669
      %v3190 = vmul.f32 %v3169, 0.17677669
      %v3191 = vmul.f32 %v3172, 0.17677669
      %v3192 = vmul.f32 %v3175, 0.17677669
      %v3193 = vmul.f32 %v3178, 0.17677669
      %v3194 = vmul.f32 %v3181, 0.17677669
      %v3195 = vmul.f32 %v3184, 0.17677669
      %v3196 = vsel %vm759, %v3186, -1e+30
      %v3197 = vsel %vm760, %v3187, -1e+30
      %v3198 = vsel %vm761, %v3188, -1e+30
      %v3199 = vsel %vm762, %v3189, -1e+30
      %v3200 = vsel %vm763, %v3190, -1e+30
      %v3201 = vsel %vm764, %v3191, -1e+30
      %v3202 = vsel %vm765, %v3192, -1e+30
      %v3203 = vsel %vm766, %v3193, -1e+30
      %v3204 = vsel %vm767, %v3194, -1e+30
      %v3205 = vsel %vm768, %v3195, -1e+30
      %v3206 = vsel %vm2509, %v3196, -inf
      %v3207 = vsel %vm2509, %v3197, -inf
      %v3208 = vsel %vm2509, %v3198, -inf
      %v3209 = vsel %vm2509, %v3199, -inf
      %v3210 = vsel %vm2509, %v3200, -inf
      %v3211 = vmax.f32 %v3206, %v3210
      %v3212 = vsel %vm2509, %v3201, -inf
      %v3213 = vmax.f32 %v3207, %v3212
      %v3214 = vsel %vm2509, %v3202, -inf
      %v3215 = vmax.f32 %v3208, %v3214
      %v3216 = vsel %vm2509, %v3203, -inf
      %v3217 = vmax.f32 %v3209, %v3216
      %v3218 = vsel %vm2509, %v3204, -inf
      %v3219 = vmax.f32 %v3211, %v3218
      %v3220 = vsel %vm2509, %v3205, -inf
      %v3221 = vmax.f32 %v3213, %v3220
      %v3222 = vmax.f32 %v3219, %v3221
      %v3223 = vmax.f32 %v3215, %v3217
      %v3224 = vmax.f32 %v3222, %v3223
      %v3225 = vrot.slane %v3224, 4
      %v3226 = vmax.f32 %v3224, %v3225
      %v3227 = vrot.slane %v3226, 2
      %v3228 = vmax.f32 %v3226, %v3227
      %v3229 = vrot.slane %v3228, 1
      %v3230 = vmax.f32 %v3228, %v3229
      %v3231 = vsub.f32 %v3196, %v3230
      %v3232 = vsub.f32 %v3197, %v3230
      %v3233 = vsub.f32 %v3198, %v3230
      %v3234 = vsub.f32 %v3199, %v3230
      %v3235 = vsub.f32 %v3200, %v3230
      %v3236 = vsub.f32 %v3201, %v3230
      %v3237 = vsub.f32 %v3202, %v3230
      %v3238 = vsub.f32 %v3203, %v3230
      %v3239 = vsub.f32 %v3204, %v3230
      %v3240 = vsub.f32 %v3205, %v3230
      %v3241 = vmul.f32 %v3231, 1.442695
      %v3242 = vpow.pop %v3241
      %v3243 = vmul.f32 %v3232, 1.442695
      %v3244 = vpow.pop %v3243
      %v3245 = vmul.f32 %v3233, 1.442695
      %v3246 = vpow.pop %v3245
      %v3247 = vmul.f32 %v3234, 1.442695
      %v3248 = vpow.pop %v3247
      %v3249 = vmul.f32 %v3235, 1.442695
      %v3250 = vpow.pop %v3249
      %v3251 = vmul.f32 %v3236, 1.442695
      %v3252 = vpow.pop %v3251
      %v3253 = vmul.f32 %v3237, 1.442695
      %v3254 = vpow.pop %v3253
      %v3255 = vmul.f32 %v3238, 1.442695
      %v3256 = vpow.pop %v3255
      %v3257 = vmul.f32 %v3239, 1.442695
      %v3258 = vpow.pop %v3257
      %v3259 = vmul.f32 %v3240, 1.442695
      %v3260 = vpow.pop %v3259
      %v3261 = vsel %vm2509, %v3242, 0.0
      %v3262 = vsel %vm2509, %v3244, 0.0
      %v3263 = vadd.f32 %v3261, %v3262
      %v3264 = vsel %vm2509, %v3246, 0.0
      %v3265 = vadd.f32 %v3263, %v3264
      %v3266 = vsel %vm2509, %v3248, 0.0
      %v3267 = vadd.f32 %v3265, %v3266
      %v3268 = vsel %vm2509, %v3250, 0.0
      %v3269 = vadd.f32 %v3267, %v3268
      %v3270 = vsel %vm2509, %v3252, 0.0
      %v3271 = vadd.f32 %v3269, %v3270
      %v3272 = vsel %vm2509, %v3254, 0.0
      %v3273 = vadd.f32 %v3271, %v3272
      %v3274 = vsel %vm2509, %v3256, 0.0
      %v3275 = vadd.f32 %v3273, %v3274
      %v3276 = vsel %vm2509, %v3258, 0.0
      %v3277 = vadd.f32 %v3275, %v3276
      %v3278 = vsel %vm2509, %v3260, 0.0
      %v3279 = vadd.f32 %v3277, %v3278
      %v3280 = vrot.slane %v3279, 4
      %v3281 = vadd.f32 %v3279, %v3280
      %v3282 = vrot.slane %v3281, 2
      %v3283 = vadd.f32 %v3281, %v3282
      %v3284 = vrot.slane %v3283, 1
      %v3285 = vadd.f32 %v3283, %v3284
      %v3286 = vrcp.pop %v3285
      %v3287 = vmul.f32 %v3285, %v3286
      %v3288 = vsub.f32 1.0, %v3287
      %v3289 = vmul.f32 %v3286, %v3288
      %v3290 = vadd.f32 %v3286, %v3289
      %vm3291 = vweird.f32 %v3285
      %vm3292 = vweird.f32 %v3286
      %vm3293 = vmor %vm3291, %vm3292
      %v3294 = vsel %vm3293, %v3286, %v3290
      %v3295 = vand.u32 2147483647, %v3285
      %vm3296 = vcmp.eq.f32.partialorder %v3295, 8.507059e+37
      %v3297 = vand.u32 %v3285, 2147483648
      %v3298 = vor.u32 1.1754944e-38, %v3297
      %v3299 = vsel %vm3296, %v3298, %v3294
      %v3300 = vmul.f32 %v3242, %v3299
      %v3301 = vmul.f32 %v3244, %v3299
      %v3302 = vmul.f32 %v3246, %v3299
      %v3303 = vmul.f32 %v3248, %v3299
      %v3304 = vmul.f32 %v3250, %v3299
      %v3305 = vmul.f32 %v3252, %v3299
      %v3306 = vmul.f32 %v3254, %v3299
      %v3307 = vmul.f32 %v3256, %v3299
      %v3308 = vmul.f32 %v3258, %v3299
      %v3309 = vmul.f32 %v3260, %v3299
      %v3310 = vsel %vm1533, %v2354, 0.0
      %v3311 = vsel %vm1533, %v2357, 0.0
      %v3312 = vsel %vm1533, %v2360, 0.0
      %v3313 = vsel %vm1533, %v2363, 0.0
      %v3314 = vsel %vm1533, %v2366, 0.0
      %v3315 = vsel %vm1533, %v2369, 0.0
      %v3316 = vsel %vm1533, %v2372, 0.0
      %v3317 = vsel %vm1533, %v2375, 0.0
      %v3318 = vsel %vm1533, %v2378, 0.0
      %v3319 = vsel %vm1533, %v2381, 0.0
      %v3321 = vsel %vm2509, %v3300, 0
      %v3324 = vsel %vm2509, %v3301, 0
      %v3327 = vsel %vm2509, %v3302, 0
      %v3330 = vsel %vm2509, %v3303, 0
      %v3333 = vsel %vm2509, %v3304, 0
      %v3336 = vsel %vm2509, %v3305, 0
      %v3339 = vsel %vm2509, %v3306, 0
      %v3342 = vsel %vm2509, %v3307, 0
      %v3345 = vsel %vm2509, %v3308, 0
      %v3348 = vsel %vm2509, %v3309, 0
      %3350 = vmatpush.msra.mxu0 0.0
      %3351 = vmatpush.msra.mxu0 0.0
      %3352 = vmatpush.msra.mxu0 0.0
      %3353 = vmatpush.msra.mxu0 0.0
      %3354 = vmatpush.msra.mxu0 0.0
      %3355 = vmatpush.msra.mxu0 0.0
      %3356 = vmatpush.msra.mxu0 %v3319
      %3357 = vmatpush.msra.mxu0 %v3318
      %3358 = vmatpush.msra.mxu0 %v3317
      %3359 = vmatpush.msra.mxu0 %v3316
      %3360 = vmatpush.msra.mxu0 %v3315
      %3361 = vmatpush.msra.mxu0 %v3314
      %3362 = vmatpush.msra.mxu0 %v3313
      %3363 = vmatpush.msra.mxu0 %v3312
      %3364 = vmatpush.msra.mxu0 %v3311
      %3365 = vmatpush.msra.mxu0 %v3310
      %3366 = vmatmul.f32.gmra.mxu0 %v3321
      %v3367 = vpop.f32.mrf.mxu0
      %v3368 = vadd.f32 0.0, %v3367
      %3369 = vmatmul.f32.gmra.mxu0 %v3324
      %v3370 = vpop.f32.mrf.mxu0
      %v3371 = vadd.f32 0.0, %v3370
      %3372 = vmatmul.f32.gmra.mxu0 %v3327
      %v3373 = vpop.f32.mrf.mxu0
      %v3374 = vadd.f32 0.0, %v3373
      %3375 = vmatmul.f32.gmra.mxu0 %v3330
      %v3376 = vpop.f32.mrf.mxu0
      %v3377 = vadd.f32 0.0, %v3376
      %3378 = vmatmul.f32.gmra.mxu0 %v3333
      %v3379 = vpop.f32.mrf.mxu0
      %v3380 = vadd.f32 0.0, %v3379
      %3381 = vmatmul.f32.gmra.mxu0 %v3336
      %v3382 = vpop.f32.mrf.mxu0
      %v3383 = vadd.f32 0.0, %v3382
      %3384 = vmatmul.f32.gmra.mxu0 %v3339
      %v3385 = vpop.f32.mrf.mxu0
      %v3386 = vadd.f32 0.0, %v3385
      %3387 = vmatmul.f32.gmra.mxu0 %v3342
      %v3388 = vpop.f32.mrf.mxu0
      %v3389 = vadd.f32 0.0, %v3388
      %3390 = vmatmul.f32.gmra.mxu0 %v3345
      %v3391 = vpop.f32.mrf.mxu0
      %v3392 = vadd.f32 0.0, %v3391
      %3393 = vmatmul.f32.gmra.mxu0 %v3348
      %v3394 = vpop.f32.mrf.mxu0
      %v3395 = vadd.f32 0.0, %v3394
      %3396 = vdwg.mxu0
      %v3397 = vadd.f32 %v3049, %v3368
      %v3398 = vadd.f32 %v3050, %v3371
      %v3399 = vadd.f32 %v3051, %v3374
      %v3400 = vadd.f32 %v3052, %v3377
      %v3401 = vadd.f32 %v3053, %v3380
      %v3402 = vadd.f32 %v3054, %v3383
      %v3403 = vadd.f32 %v3055, %v3386
      %v3404 = vadd.f32 %v3056, %v3389
      %v3405 = vadd.f32 %v3057, %v3392
      %v3406 = vadd.f32 %v3058, %v3395
      %3407 = vrot.lane.b32.xlu0 %v2352, 104
      %v3408 = vpop.permute.xlu0 %3407
      %3409 = vrot.lane.b32.xlu0 %v2355, 104
      %v3410 = vpop.permute.xlu0 %3409
      %3411 = vrot.lane.b32.xlu0 %v2358, 104
      %v3412 = vpop.permute.xlu0 %3411
      %3413 = vrot.lane.b32.xlu0 %v2361, 104
      %v3414 = vpop.permute.xlu0 %3413
      %3415 = vrot.lane.b32.xlu0 %v2364, 104
      %v3416 = vpop.permute.xlu0 %3415
      %3417 = vrot.lane.b32.xlu0 %v2367, 104
      %v3418 = vpop.permute.xlu0 %3417
      %3419 = vrot.lane.b32.xlu0 %v2370, 104
      %v3420 = vpop.permute.xlu0 %3419
      %3421 = vrot.lane.b32.xlu0 %v2373, 104
      %v3422 = vpop.permute.xlu0 %3421
      %3423 = vrot.lane.b32.xlu0 %v2376, 104
      %v3424 = vpop.permute.xlu0 %3423
      %3425 = vrot.lane.b32.xlu0 %v2379, 104
      %v3426 = vpop.permute.xlu0 %3425
      %3427 = vrot.lane.b32.xlu0 %v2353, 104
      %v3428 = vpop.permute.xlu0 %3427
      %3429 = vrot.lane.b32.xlu0 %v2356, 104
      %v3430 = vpop.permute.xlu0 %3429
      %3431 = vrot.lane.b32.xlu0 %v2359, 104
      %v3432 = vpop.permute.xlu0 %3431
      %3433 = vrot.lane.b32.xlu0 %v2362, 104
      %v3434 = vpop.permute.xlu0 %3433
      %3435 = vrot.lane.b32.xlu0 %v2365, 104
      %v3436 = vpop.permute.xlu0 %3435
      %3437 = vrot.lane.b32.xlu0 %v2368, 104
      %v3438 = vpop.permute.xlu0 %3437
      %3439 = vrot.lane.b32.xlu0 %v2371, 104
      %v3440 = vpop.permute.xlu0 %3439
      %3441 = vrot.lane.b32.xlu0 %v2374, 104
      %v3442 = vpop.permute.xlu0 %3441
      %3443 = vrot.lane.b32.xlu0 %v2377, 104
      %v3444 = vpop.permute.xlu0 %3443
      %3445 = vrot.lane.b32.xlu0 %v2380, 104
      %v3446 = vpop.permute.xlu0 %3445
      %v3447 = vsel %vm613, %v3408, 0
      %v3449 = vsel %vm613, %v3410, 0
      %v3451 = vsel %vm613, %v3412, 0
      %v3453 = vsel %vm613, %v3414, 0
      %v3455 = vsel %vm613, %v3416, 0
      %v3457 = vsel %vm613, %v3418, 0
      %v3459 = vsel %vm613, %v3420, 0
      %v3461 = vsel %vm613, %v3422, 0
      %v3463 = vsel %vm613, %v3424, 0
      %v3465 = vsel %vm613, %v3426, 0
      %v3467 = vsel %vm613, %v3428, 0
      %v3469 = vsel %vm613, %v3430, 0
      %v3471 = vsel %vm613, %v3432, 0
      %v3473 = vsel %vm613, %v3434, 0
      %v3475 = vsel %vm613, %v3436, 0
      %v3477 = vsel %vm613, %v3438, 0
      %v3479 = vsel %vm613, %v3440, 0
      %v3481 = vsel %vm613, %v3442, 0
      %v3483 = vsel %vm613, %v3444, 0
      %v3485 = vsel %vm613, %v3446, 0
      %3487 = vmatpush.xpose.msra.mxu0 0.0
      %3488 = vmatpush.xpose.msra.mxu0 0.0
      %3489 = vmatpush.xpose.msra.mxu0 0.0
      %3490 = vmatpush.xpose.msra.mxu0 0.0
      %3491 = vmatpush.xpose.msra.mxu0 0.0
      %3492 = vmatpush.xpose.msra.mxu0 0.0
      %3493 = vmatpush.xpose.msra.mxu0 %v3485
      %3494 = vmatpush.xpose.msra.mxu0 %v3483
      %3495 = vmatpush.xpose.msra.mxu0 %v3481
      %3496 = vmatpush.xpose.msra.mxu0 %v3479
      %3497 = vmatpush.xpose.msra.mxu0 %v3477
      %3498 = vmatpush.xpose.msra.mxu0 %v3475
      %3499 = vmatpush.xpose.msra.mxu0 %v3473
      %3500 = vmatpush.xpose.msra.mxu0 %v3471
      %3501 = vmatpush.xpose.msra.mxu0 %v3469
      %3502 = vmatpush.xpose.msra.mxu0 %v3467
      %3503 = vmatmul.f32.gmra.mxu0 %v3447
      %v3504 = vpop.f32.mrf.mxu0
      %v3505 = vadd.f32 0.0, %v3504
      %3506 = vmatmul.f32.gmra.mxu0 %v3449
      %v3507 = vpop.f32.mrf.mxu0
      %v3508 = vadd.f32 0.0, %v3507
      %3509 = vmatmul.f32.gmra.mxu0 %v3451
      %v3510 = vpop.f32.mrf.mxu0
      %v3511 = vadd.f32 0.0, %v3510
      %3512 = vmatmul.f32.gmra.mxu0 %v3453
      %v3513 = vpop.f32.mrf.mxu0
      %v3514 = vadd.f32 0.0, %v3513
      %3515 = vmatmul.f32.gmra.mxu0 %v3455
      %v3516 = vpop.f32.mrf.mxu0
      %v3517 = vadd.f32 0.0, %v3516
      %3518 = vmatmul.f32.gmra.mxu0 %v3457
      %v3519 = vpop.f32.mrf.mxu0
      %v3520 = vadd.f32 0.0, %v3519
      %3521 = vmatmul.f32.gmra.mxu0 %v3459
      %v3522 = vpop.f32.mrf.mxu0
      %v3523 = vadd.f32 0.0, %v3522
      %3524 = vmatmul.f32.gmra.mxu0 %v3461
      %v3525 = vpop.f32.mrf.mxu0
      %v3526 = vadd.f32 0.0, %v3525
      %3527 = vmatmul.f32.gmra.mxu0 %v3463
      %v3528 = vpop.f32.mrf.mxu0
      %v3529 = vadd.f32 0.0, %v3528
      %3530 = vmatmul.f32.gmra.mxu0 %v3465
      %v3531 = vpop.f32.mrf.mxu0
      %v3532 = vadd.f32 0.0, %v3531
      %3533 = vdwg.mxu0
      %v3534 = vmul.f32 %v3505, 0.17677669
      %v3535 = vmul.f32 %v3508, 0.17677669
      %v3536 = vmul.f32 %v3511, 0.17677669
      %v3537 = vmul.f32 %v3514, 0.17677669
      %v3538 = vmul.f32 %v3517, 0.17677669
      %v3539 = vmul.f32 %v3520, 0.17677669
      %v3540 = vmul.f32 %v3523, 0.17677669
      %v3541 = vmul.f32 %v3526, 0.17677669
      %v3542 = vmul.f32 %v3529, 0.17677669
      %v3543 = vmul.f32 %v3532, 0.17677669
      %v3544 = vsel %vm759, %v3534, -1e+30
      %v3545 = vsel %vm760, %v3535, -1e+30
      %v3546 = vsel %vm761, %v3536, -1e+30
      %v3547 = vsel %vm762, %v3537, -1e+30
      %v3548 = vsel %vm763, %v3538, -1e+30
      %v3549 = vsel %vm764, %v3539, -1e+30
      %v3550 = vsel %vm765, %v3540, -1e+30
      %v3551 = vsel %vm766, %v3541, -1e+30
      %v3552 = vsel %vm767, %v3542, -1e+30
      %v3553 = vsel %vm768, %v3543, -1e+30
      %v3554 = vsel %vm2509, %v3544, -inf
      %v3555 = vsel %vm2509, %v3545, -inf
      %v3556 = vsel %vm2509, %v3546, -inf
      %v3557 = vsel %vm2509, %v3547, -inf
      %v3558 = vsel %vm2509, %v3548, -inf
      %v3559 = vmax.f32 %v3554, %v3558
      %v3560 = vsel %vm2509, %v3549, -inf
      %v3561 = vmax.f32 %v3555, %v3560
      %v3562 = vsel %vm2509, %v3550, -inf
      %v3563 = vmax.f32 %v3556, %v3562
      %v3564 = vsel %vm2509, %v3551, -inf
      %v3565 = vmax.f32 %v3557, %v3564
      %v3566 = vsel %vm2509, %v3552, -inf
      %v3567 = vmax.f32 %v3559, %v3566
      %v3568 = vsel %vm2509, %v3553, -inf
      %v3569 = vmax.f32 %v3561, %v3568
      %v3570 = vmax.f32 %v3567, %v3569
      %v3571 = vmax.f32 %v3563, %v3565
      %v3572 = vmax.f32 %v3570, %v3571
      %v3573 = vrot.slane %v3572, 4
      %v3574 = vmax.f32 %v3572, %v3573
      %v3575 = vrot.slane %v3574, 2
      %v3576 = vmax.f32 %v3574, %v3575
      %v3577 = vrot.slane %v3576, 1
      %v3578 = vmax.f32 %v3576, %v3577
      %v3579 = vsub.f32 %v3544, %v3578
      %v3580 = vsub.f32 %v3545, %v3578
      %v3581 = vsub.f32 %v3546, %v3578
      %v3582 = vsub.f32 %v3547, %v3578
      %v3583 = vsub.f32 %v3548, %v3578
      %v3584 = vsub.f32 %v3549, %v3578
      %v3585 = vsub.f32 %v3550, %v3578
      %v3586 = vsub.f32 %v3551, %v3578
      %v3587 = vsub.f32 %v3552, %v3578
      %v3588 = vsub.f32 %v3553, %v3578
      %v3589 = vmul.f32 %v3579, 1.442695
      %v3590 = vpow.pop %v3589
      %v3591 = vmul.f32 %v3580, 1.442695
      %v3592 = vpow.pop %v3591
      %v3593 = vmul.f32 %v3581, 1.442695
      %v3594 = vpow.pop %v3593
      %v3595 = vmul.f32 %v3582, 1.442695
      %v3596 = vpow.pop %v3595
      %v3597 = vmul.f32 %v3583, 1.442695
      %v3598 = vpow.pop %v3597
      %v3599 = vmul.f32 %v3584, 1.442695
      %v3600 = vpow.pop %v3599
      %v3601 = vmul.f32 %v3585, 1.442695
      %v3602 = vpow.pop %v3601
      %v3603 = vmul.f32 %v3586, 1.442695
      %v3604 = vpow.pop %v3603
      %v3605 = vmul.f32 %v3587, 1.442695
      %v3606 = vpow.pop %v3605
      %v3607 = vmul.f32 %v3588, 1.442695
      %v3608 = vpow.pop %v3607
      %v3609 = vsel %vm2509, %v3590, 0.0
      %v3610 = vsel %vm2509, %v3592, 0.0
      %v3611 = vadd.f32 %v3609, %v3610
      %v3612 = vsel %vm2509, %v3594, 0.0
      %v3613 = vadd.f32 %v3611, %v3612
      %v3614 = vsel %vm2509, %v3596, 0.0
      %v3615 = vadd.f32 %v3613, %v3614
      %v3616 = vsel %vm2509, %v3598, 0.0
      %v3617 = vadd.f32 %v3615, %v3616
      %v3618 = vsel %vm2509, %v3600, 0.0
      %v3619 = vadd.f32 %v3617, %v3618
      %v3620 = vsel %vm2509, %v3602, 0.0
      %v3621 = vadd.f32 %v3619, %v3620
      %v3622 = vsel %vm2509, %v3604, 0.0
      %v3623 = vadd.f32 %v3621, %v3622
      %v3624 = vsel %vm2509, %v3606, 0.0
      %v3625 = vadd.f32 %v3623, %v3624
      %v3626 = vsel %vm2509, %v3608, 0.0
      %v3627 = vadd.f32 %v3625, %v3626
      %v3628 = vrot.slane %v3627, 4
      %v3629 = vadd.f32 %v3627, %v3628
      %v3630 = vrot.slane %v3629, 2
      %v3631 = vadd.f32 %v3629, %v3630
      %v3632 = vrot.slane %v3631, 1
      %v3633 = vadd.f32 %v3631, %v3632
      %v3634 = vrcp.pop %v3633
      %v3635 = vmul.f32 %v3633, %v3634
      %v3636 = vsub.f32 1.0, %v3635
      %v3637 = vmul.f32 %v3634, %v3636
      %v3638 = vadd.f32 %v3634, %v3637
      %vm3639 = vweird.f32 %v3633
      %vm3640 = vweird.f32 %v3634
      %vm3641 = vmor %vm3639, %vm3640
      %v3642 = vsel %vm3641, %v3634, %v3638
      %v3643 = vand.u32 2147483647, %v3633
      %vm3644 = vcmp.eq.f32.partialorder %v3643, 8.507059e+37
      %v3645 = vand.u32 %v3633, 2147483648
      %v3646 = vor.u32 1.1754944e-38, %v3645
      %v3647 = vsel %vm3644, %v3646, %v3642
      %v3648 = vmul.f32 %v3590, %v3647
      %v3649 = vmul.f32 %v3592, %v3647
      %v3650 = vmul.f32 %v3594, %v3647
      %v3651 = vmul.f32 %v3596, %v3647
      %v3652 = vmul.f32 %v3598, %v3647
      %v3653 = vmul.f32 %v3600, %v3647
      %v3654 = vmul.f32 %v3602, %v3647
      %v3655 = vmul.f32 %v3604, %v3647
      %v3656 = vmul.f32 %v3606, %v3647
      %v3657 = vmul.f32 %v3608, %v3647
      %v3658 = vsel %vm1866, %v2354, 0.0
      %v3659 = vsel %vm1866, %v2357, 0.0
      %v3660 = vsel %vm1866, %v2360, 0.0
      %v3661 = vsel %vm1866, %v2363, 0.0
      %v3662 = vsel %vm1866, %v2366, 0.0
      %v3663 = vsel %vm1866, %v2369, 0.0
      %v3664 = vsel %vm1866, %v2372, 0.0
      %v3665 = vsel %vm1866, %v2375, 0.0
      %v3666 = vsel %vm1866, %v2378, 0.0
      %v3667 = vsel %vm1866, %v2381, 0.0
      %v3669 = vsel %vm2509, %v3648, 0
      %v3672 = vsel %vm2509, %v3649, 0
      %v3675 = vsel %vm2509, %v3650, 0
      %v3678 = vsel %vm2509, %v3651, 0
      %v3681 = vsel %vm2509, %v3652, 0
      %v3684 = vsel %vm2509, %v3653, 0
      %v3687 = vsel %vm2509, %v3654, 0
      %v3690 = vsel %vm2509, %v3655, 0
      %v3693 = vsel %vm2509, %v3656, 0
      %v3696 = vsel %vm2509, %v3657, 0
      %3698 = vmatpush.msra.mxu0 0.0
      %3699 = vmatpush.msra.mxu0 0.0
      %3700 = vmatpush.msra.mxu0 0.0
      %3701 = vmatpush.msra.mxu0 0.0
      %3702 = vmatpush.msra.mxu0 0.0
      %3703 = vmatpush.msra.mxu0 0.0
      %3704 = vmatpush.msra.mxu0 %v3667
      %3705 = vmatpush.msra.mxu0 %v3666
      %3706 = vmatpush.msra.mxu0 %v3665
      %3707 = vmatpush.msra.mxu0 %v3664
      %3708 = vmatpush.msra.mxu0 %v3663
      %3709 = vmatpush.msra.mxu0 %v3662
      %3710 = vmatpush.msra.mxu0 %v3661
      %3711 = vmatpush.msra.mxu0 %v3660
      %3712 = vmatpush.msra.mxu0 %v3659
      %3713 = vmatpush.msra.mxu0 %v3658
      %3714 = vmatmul.f32.gmra.mxu0 %v3669
      %v3715 = vpop.f32.mrf.mxu0
      %v3716 = vadd.f32 0.0, %v3715
      %3717 = vmatmul.f32.gmra.mxu0 %v3672
      %v3718 = vpop.f32.mrf.mxu0
      %v3719 = vadd.f32 0.0, %v3718
      %3720 = vmatmul.f32.gmra.mxu0 %v3675
      %v3721 = vpop.f32.mrf.mxu0
      %v3722 = vadd.f32 0.0, %v3721
      %3723 = vmatmul.f32.gmra.mxu0 %v3678
      %v3724 = vpop.f32.mrf.mxu0
      %v3725 = vadd.f32 0.0, %v3724
      %3726 = vmatmul.f32.gmra.mxu0 %v3681
      %v3727 = vpop.f32.mrf.mxu0
      %v3728 = vadd.f32 0.0, %v3727
      %3729 = vmatmul.f32.gmra.mxu0 %v3684
      %v3730 = vpop.f32.mrf.mxu0
      %v3731 = vadd.f32 0.0, %v3730
      %3732 = vmatmul.f32.gmra.mxu0 %v3687
      %v3733 = vpop.f32.mrf.mxu0
      %v3734 = vadd.f32 0.0, %v3733
      %3735 = vmatmul.f32.gmra.mxu0 %v3690
      %v3736 = vpop.f32.mrf.mxu0
      %v3737 = vadd.f32 0.0, %v3736
      %3738 = vmatmul.f32.gmra.mxu0 %v3693
      %v3739 = vpop.f32.mrf.mxu0
      %v3740 = vadd.f32 0.0, %v3739
      %3741 = vmatmul.f32.gmra.mxu0 %v3696
      %v3742 = vpop.f32.mrf.mxu0
      %v3743 = vadd.f32 0.0, %v3742
      %3744 = vdwg.mxu0
      %v3745 = vadd.f32 %v3397, %v3716
      %v3746 = vadd.f32 %v3398, %v3719
      %v3747 = vadd.f32 %v3399, %v3722
      %v3748 = vadd.f32 %v3400, %v3725
      %v3749 = vadd.f32 %v3401, %v3728
      %v3750 = vadd.f32 %v3402, %v3731
      %v3751 = vadd.f32 %v3403, %v3734
      %v3752 = vadd.f32 %v3404, %v3737
      %v3753 = vadd.f32 %v3405, %v3740
      %v3754 = vadd.f32 %v3406, %v3743
      %v3755 = vpack.c.bf16 %v3746, %v3745
      %v3756 = vpack.c.bf16 %v3748, %v3747
      %v3757 = vpack.c.bf16 %v3750, %v3749
      %v3758 = vpack.c.bf16 %v3752, %v3751
      %v3759 = vpack.c.bf16 %v3754, %v3753
      %v3760 = vld [vmem:[%s7] sm:$0xf]
      %v3761 = vld [vmem:[%s7 + $0x4] sm:$0xf]
      %v3762 = vld [vmem:[%s7 + $0x8] sm:$0xf]
      %v3763 = vld [vmem:[%s7 + $0xc] sm:$0xf]
      %v3764 = vld [vmem:[%s7 + $0x10] sm:$0xf]
      %v3765 = vld [vmem:[%s7 + $0x14] sm:$0xf]
      %v3766 = vld [vmem:[%s7 + $0x18] sm:$0xf]
      %v3767 = vld [vmem:[%s7 + $0x1c] sm:$0xf]
      %v3768 = vld [vmem:[%s7 + $0x20] sm:$0xf]
      %v3769 = vld [vmem:[%s7 + $0x24] sm:$0xf]
      %v3770 = vld [vmem:[%s7 + $0x28] sm:$0xf]
      %v3771 = vld [vmem:[%s7 + $0x2c] sm:$0xf]
      %v3772 = vld [vmem:[%s7 + $0x30] sm:$0xf]
      %v3773 = vld [vmem:[%s7 + $0x34] sm:$0xf]
      %v3774 = vld [vmem:[%s7 + $0x38] sm:$0xf]
      %v3775 = vld [vmem:[%s7 + $0x3c] sm:$0xf]
      %v3776 = vld [vmem:[%s8] sm:$0x1]
      %v3778 = vperm.slane %v3776, 0
      %v3796 = vunpack.c.l.b16 %v3760
      %v3797 = vunpack.c.l.b16 %v3761
      %v3798 = vunpack.c.l.b16 %v3762
      %v3799 = vunpack.c.l.b16 %v3763
      %v3800 = vunpack.c.l.b16 %v3764
      %v3801 = vunpack.c.l.b16 %v3765
      %v3802 = vunpack.c.l.b16 %v3766
      %v3803 = vunpack.c.l.b16 %v3767
      %v3804 = vunpack.c.l.b16 %v3768
      %v3805 = vunpack.c.l.b16 %v3769
      %v3806 = vunpack.c.l.b16 %v3770
      %v3807 = vunpack.c.l.b16 %v3771
      %v3808 = vunpack.c.l.b16 %v3772
      %v3809 = vunpack.c.l.b16 %v3773
      %v3810 = vunpack.c.l.b16 %v3774
      %v3811 = vunpack.c.l.b16 %v3775
      %v3812 = vpack.c.b16 %v3797, %v3796
      %v3813 = vpack.c.b16 %v3799, %v3798
      %v3814 = vpack.c.b16 %v3801, %v3800
      %v3815 = vpack.c.b16 %v3803, %v3802
      %v3816 = vpack.c.b16 %v3805, %v3804
      %v3817 = vpack.c.b16 %v3807, %v3806
      %v3818 = vpack.c.b16 %v3809, %v3808
      %v3819 = vpack.c.b16 %v3811, %v3810
      %3828 = vmatpush.bf16.msra.mxu0 %v3819
      %3829 = vmatpush.bf16.msra.mxu0 %v3818
      %3830 = vmatpush.bf16.msra.mxu0 %v3817
      %3831 = vmatpush.bf16.msra.mxu0 %v3816
      %3832 = vmatpush.bf16.msra.mxu0 %v3815
      %3833 = vmatpush.bf16.msra.mxu0 %v3814
      %3834 = vmatpush.bf16.msra.mxu0 %v3813
      %3835 = vmatpush.bf16.msra.mxu0 %v3812
      %3836 = vmatmul.bf16.gmra.mxu0 %v3755
      %v3837 = vpop.f32.mrf.mxu0
      %v3838 = vadd.f32 %v3778, %v3837
      %v3839 = vpop.f32.mrf.mxu0
      %v3840 = vadd.f32 %v3778, %v3839
      %3841 = vmatmul.bf16.gmra.mxu0 %v3756
      %v3842 = vpop.f32.mrf.mxu0
      %v3843 = vadd.f32 %v3778, %v3842
      %v3844 = vpop.f32.mrf.mxu0
      %v3845 = vadd.f32 %v3778, %v3844
      %3846 = vmatmul.bf16.gmra.mxu0 %v3757
      %v3847 = vpop.f32.mrf.mxu0
      %v3848 = vadd.f32 %v3778, %v3847
      %v3849 = vpop.f32.mrf.mxu0
      %v3850 = vadd.f32 %v3778, %v3849
      %3851 = vmatmul.bf16.gmra.mxu0 %v3758
      %v3852 = vpop.f32.mrf.mxu0
      %v3853 = vadd.f32 %v3778, %v3852
      %v3854 = vpop.f32.mrf.mxu0
      %v3855 = vadd.f32 %v3778, %v3854
      %3856 = vmatmul.bf16.gmra.mxu0 %v3759
      %v3857 = vpop.f32.mrf.mxu0
      %v3858 = vadd.f32 %v3778, %v3857
      %v3859 = vpop.f32.mrf.mxu0
      %v3860 = vadd.f32 %v3778, %v3859
      %3861 = vdwg.mxu0
      %v3862 = vmax.f32 %v3838, 0.0
      %v3863 = vmax.f32 %v3840, 0.0
      %v3864 = vmax.f32 %v3843, 0.0
      %v3865 = vmax.f32 %v3845, 0.0
      %v3866 = vmax.f32 %v3848, 0.0
      %v3867 = vmax.f32 %v3850, 0.0
      %v3868 = vmax.f32 %v3853, 0.0
      %v3869 = vmax.f32 %v3855, 0.0
      %v3870 = vmax.f32 %v3858, 0.0
      %v3871 = vmax.f32 %v3860, 0.0
      %v3872 = vadd.f32 %v3745, %v3862
      %v3873 = vadd.f32 %v3746, %v3863
      %v3874 = vadd.f32 %v3747, %v3864
      %v3875 = vadd.f32 %v3748, %v3865
      %v3876 = vadd.f32 %v3749, %v3866
      %v3877 = vadd.f32 %v3750, %v3867
      %v3878 = vadd.f32 %v3751, %v3868
      %v3879 = vadd.f32 %v3752, %v3869
      %v3880 = vadd.f32 %v3753, %v3870
      %v3881 = vadd.f32 %v3754, %v3871
      %v3882 = vsel %vm759, %v3872, 0.0
      %v3883 = vsel %vm760, %v3873, 0.0
      %v3884 = vsel %vm761, %v3874, 0.0
      %v3885 = vsel %vm762, %v3875, 0.0
      %v3886 = vsel %vm763, %v3876, 0.0
      %v3887 = vsel %vm764, %v3877, 0.0
      %v3888 = vsel %vm765, %v3878, 0.0
      %v3889 = vsel %vm766, %v3879, 0.0
      %v3890 = vsel %vm767, %v3880, 0.0
      %v3891 = vsel %vm768, %v3881, 0.0
      %v3892 = vpack.c.bf16 %v3883, %v3882
      %v3893 = vpack.c.bf16 %v3885, %v3884
      %v3894 = vpack.c.bf16 %v3887, %v3886
      %v3895 = vpack.c.bf16 %v3889, %v3888
      %v3896 = vpack.c.bf16 %v3891, %v3890
      %v3897 = vld [vmem:[%s9] sm:$0xff]
      %v3898 = vld [vmem:[%s9 + $0x8] sm:$0xff]
      %v3899 = vld [vmem:[%s9 + $0x10] sm:$0xff]
      %v3900 = vld [vmem:[%s9 + $0x18] sm:$0xff]
      %v3901 = vld [vmem:[%s9 + $0x20] sm:$0xff]
      %v3902 = vld [vmem:[%s9 + $0x28] sm:$0xff]
      %v3903 = vld [vmem:[%s9 + $0x30] sm:$0xff]
      %v3904 = vld [vmem:[%s9 + $0x38] sm:$0xff]
      %v3905 = vld [vmem:[%s9 + $0x40] sm:$0xff]
      %v3906 = vld [vmem:[%s9 + $0x48] sm:$0xff]
      %v3907 = vld [vmem:[%s9 + $0x50] sm:$0xff]
      %v3908 = vld [vmem:[%s9 + $0x58] sm:$0xff]
      %v3909 = vld [vmem:[%s9 + $0x60] sm:$0xff]
      %v3910 = vld [vmem:[%s9 + $0x68] sm:$0xff]
      %v3911 = vld [vmem:[%s9 + $0x70] sm:$0xff]
      %v3912 = vld [vmem:[%s9 + $0x78] sm:$0xff]
      %v3913 = vld [vmem:[%s10] sm:$0x3]
      %v3915 = vperm.slane %v3913, 0
      %v3916 = vperm.slane %v3913, 1
      %v3935 = vunpack.c.l.b16 %v3897
      %v3936 = vunpack.c.h.b16 %v3897
      %v3937 = vunpack.c.l.b16 %v3898
      %v3938 = vunpack.c.h.b16 %v3898
      %v3939 = vunpack.c.l.b16 %v3899
      %v3940 = vunpack.c.h.b16 %v3899
      %v3941 = vunpack.c.l.b16 %v3900
      %v3942 = vunpack.c.h.b16 %v3900
      %v3943 = vunpack.c.l.b16 %v3901
      %v3944 = vunpack.c.h.b16 %v3901
      %v3945 = vunpack.c.l.b16 %v3902
      %v3946 = vunpack.c.h.b16 %v3902
      %v3947 = vunpack.c.l.b16 %v3903
      %v3948 = vunpack.c.h.b16 %v3903
      %v3949 = vunpack.c.l.b16 %v3904
      %v3950 = vunpack.c.h.b16 %v3904
      %v3951 = vunpack.c.l.b16 %v3905
      %v3952 = vunpack.c.h.b16 %v3905
      %v3953 = vunpack.c.l.b16 %v3906
      %v3954 = vunpack.c.h.b16 %v3906
      %v3955 = vunpack.c.l.b16 %v3907
      %v3956 = vunpack.c.h.b16 %v3907
      %v3957 = vunpack.c.l.b16 %v3908
      %v3958 = vunpack.c.h.b16 %v3908
      %v3959 = vunpack.c.l.b16 %v3909
      %v3960 = vunpack.c.h.b16 %v3909
      %v3961 = vunpack.c.l.b16 %v3910
      %v3962 = vunpack.c.h.b16 %v3910
      %v3963 = vunpack.c.l.b16 %v3911
      %v3964 = vunpack.c.h.b16 %v3911
      %v3965 = vunpack.c.l.b16 %v3912
      %v3966 = vunpack.c.h.b16 %v3912
      %v3967 = vpack.c.b16 %v3937, %v3935
      %v3968 = vpack.c.b16 %v3938, %v3936
      %v3969 = vpack.c.b16 %v3941, %v3939
      %v3970 = vpack.c.b16 %v3942, %v3940
      %v3971 = vpack.c.b16 %v3945, %v3943
      %v3972 = vpack.c.b16 %v3946, %v3944
      %v3973 = vpack.c.b16 %v3949, %v3947
      %v3974 = vpack.c.b16 %v3950, %v3948
      %v3975 = vpack.c.b16 %v3953, %v3951
      %v3976 = vpack.c.b16 %v3954, %v3952
      %v3977 = vpack.c.b16 %v3957, %v3955
      %v3978 = vpack.c.b16 %v3958, %v3956
      %v3979 = vpack.c.b16 %v3961, %v3959
      %v3980 = vpack.c.b16 %v3962, %v3960
      %v3981 = vpack.c.b16 %v3965, %v3963
      %v3982 = vpack.c.b16 %v3966, %v3964
      %3999 = vmatpush.bf16.msra.mxu0 %v3981
      %4000 = vmatpush.bf16.msra.mxu0 %v3979
      %4001 = vmatpush.bf16.msra.mxu0 %v3977
      %4002 = vmatpush.bf16.msra.mxu0 %v3975
      %4003 = vmatpush.bf16.msra.mxu0 %v3973
      %4004 = vmatpush.bf16.msra.mxu0 %v3971
      %4005 = vmatpush.bf16.msra.mxu0 %v3969
      %4006 = vmatpush.bf16.msra.mxu0 %v3967
      %4007 = vmatmul.bf16.gmra.mxu0 %v3892
      %v4008 = vpop.f32.mrf.mxu0
      %v4009 = vadd.f32 %v3915, %v4008
      %v4010 = vpop.f32.mrf.mxu0
      %v4011 = vadd.f32 %v3915, %v4010
      %4012 = vmatmul.bf16.gmra.mxu0 %v3893
      %v4013 = vpop.f32.mrf.mxu0
      %v4014 = vadd.f32 %v3915, %v4013
      %v4015 = vpop.f32.mrf.mxu0
      %v4016 = vadd.f32 %v3915, %v4015
      %4017 = vmatmul.bf16.gmra.mxu0 %v3894
      %v4018 = vpop.f32.mrf.mxu0
      %v4019 = vadd.f32 %v3915, %v4018
      %v4020 = vpop.f32.mrf.mxu0
      %v4021 = vadd.f32 %v3915, %v4020
      %4022 = vmatmul.bf16.gmra.mxu0 %v3895
      %v4023 = vpop.f32.mrf.mxu0
      %v4024 = vadd.f32 %v3915, %v4023
      %v4025 = vpop.f32.mrf.mxu0
      %v4026 = vadd.f32 %v3915, %v4025
      %4027 = vmatmul.bf16.gmra.mxu0 %v3896
      %v4028 = vpop.f32.mrf.mxu0
      %v4029 = vadd.f32 %v3915, %v4028
      %v4030 = vpop.f32.mrf.mxu0
      %v4031 = vadd.f32 %v3915, %v4030
      %4032 = vdwg.mxu0
      %4033 = vmatpush.bf16.msra.mxu0 %v3982
      %4034 = vmatpush.bf16.msra.mxu0 %v3980
      %4035 = vmatpush.bf16.msra.mxu0 %v3978
      %4036 = vmatpush.bf16.msra.mxu0 %v3976
      %4037 = vmatpush.bf16.msra.mxu0 %v3974
      %4038 = vmatpush.bf16.msra.mxu0 %v3972
      %4039 = vmatpush.bf16.msra.mxu0 %v3970
      %4040 = vmatpush.bf16.msra.mxu0 %v3968
      %4041 = vmatmul.bf16.gmra.mxu0 %v3892
      %v4042 = vpop.f32.mrf.mxu0
      %v4043 = vadd.f32 %v3916, %v4042
      %v4044 = vpop.f32.mrf.mxu0
      %v4045 = vadd.f32 %v3916, %v4044
      %4046 = vmatmul.bf16.gmra.mxu0 %v3893
      %v4047 = vpop.f32.mrf.mxu0
      %v4048 = vadd.f32 %v3916, %v4047
      %v4049 = vpop.f32.mrf.mxu0
      %v4050 = vadd.f32 %v3916, %v4049
      %4051 = vmatmul.bf16.gmra.mxu0 %v3894
      %v4052 = vpop.f32.mrf.mxu0
      %v4053 = vadd.f32 %v3916, %v4052
      %v4054 = vpop.f32.mrf.mxu0
      %v4055 = vadd.f32 %v3916, %v4054
      %4056 = vmatmul.bf16.gmra.mxu0 %v3895
      %v4057 = vpop.f32.mrf.mxu0
      %v4058 = vadd.f32 %v3916, %v4057
      %v4059 = vpop.f32.mrf.mxu0
      %v4060 = vadd.f32 %v3916, %v4059
      %4061 = vmatmul.bf16.gmra.mxu0 %v3896
      %v4062 = vpop.f32.mrf.mxu0
      %v4063 = vadd.f32 %v3916, %v4062
      %v4064 = vpop.f32.mrf.mxu0
      %v4065 = vadd.f32 %v3916, %v4064
      %4066 = vdwg.mxu0
      %v4067 = vsel %vm759, %v4009, 0.0
      %v4068 = vsel %vm759, %v4043, 0.0
      %v4069 = vsel %vm760, %v4011, 0.0
      %v4070 = vsel %vm760, %v4045, 0.0
      %v4071 = vsel %vm761, %v4014, 0.0
      %v4072 = vsel %vm761, %v4048, 0.0
      %v4073 = vsel %vm762, %v4016, 0.0
      %v4074 = vsel %vm762, %v4050, 0.0
      %v4075 = vsel %vm763, %v4019, 0.0
      %v4076 = vsel %vm763, %v4053, 0.0
      %v4077 = vsel %vm764, %v4021, 0.0
      %v4078 = vsel %vm764, %v4055, 0.0
      %v4079 = vsel %vm765, %v4024, 0.0
      %v4080 = vsel %vm765, %v4058, 0.0
      %v4081 = vsel %vm766, %v4026, 0.0
      %v4082 = vsel %vm766, %v4060, 0.0
      %v4083 = vsel %vm767, %v4029, 0.0
      %v4084 = vsel %vm767, %v4063, 0.0
      %v4085 = vsel %vm768, %v4031, 0.0
      %v4086 = vsel %vm768, %v4065, 0.0
      %v4087 = vld [vmem:[%s2] sm:$0xff]
      %v4089 = vsel %vm613, %v4087, 0
      %v4092 = vsel %vm613, %v4067, 0
      %v4095 = vsel %vm613, %v4069, 0
      %v4098 = vsel %vm613, %v4071, 0
      %v4101 = vsel %vm613, %v4073, 0
      %v4104 = vsel %vm613, %v4075, 0
      %v4107 = vsel %vm613, %v4077, 0
      %v4110 = vsel %vm613, %v4079, 0
      %v4113 = vsel %vm613, %v4081, 0
      %v4116 = vsel %vm613, %v4083, 0
      %v4119 = vsel %vm613, %v4085, 0
      %4121 = vmatpush.xpose.msra.mxu0 0.0
      %4122 = vmatpush.xpose.msra.mxu0 0.0
      %4123 = vmatpush.xpose.msra.mxu0 0.0
      %4124 = vmatpush.xpose.msra.mxu0 0.0
      %4125 = vmatpush.xpose.msra.mxu0 0.0
      %4126 = vmatpush.xpose.msra.mxu0 0.0
      %4127 = vmatpush.xpose.msra.mxu0 %v4119
      %4128 = vmatpush.xpose.msra.mxu0 %v4116
      %4129 = vmatpush.xpose.msra.mxu0 %v4113
      %4130 = vmatpush.xpose.msra.mxu0 %v4110
      %4131 = vmatpush.xpose.msra.mxu0 %v4107
      %4132 = vmatpush.xpose.msra.mxu0 %v4104
      %4133 = vmatpush.xpose.msra.mxu0 %v4101
      %4134 = vmatpush.xpose.msra.mxu0 %v4098
      %4135 = vmatpush.xpose.msra.mxu0 %v4095
      %4136 = vmatpush.xpose.msra.mxu0 %v4092
      %4137 = vmatmul.f32.gmra.mxu0 %v4089
      %v4138 = vpop.f32.mrf.mxu0
      %v4139 = vadd.f32 0.0, %v4138
      %4140 = vdwg.mxu0
      %v4141 = vmul.f32 %v4139, 0.17677669
      %v4142 = vsel %vm600, 1, 0
      %vm4143 = vcmp.eq.s32.totalorder %v4142, 1
      %v4144 = vsel %vm4143, %v4141, -1e+30
      %v4145 = vsel %vm2509, %v4144, -inf
      %v4146 = vrot.slane %v4145, 4
      %v4147 = vmax.f32 %v4145, %v4146
      %v4148 = vrot.slane %v4147, 2
      %v4149 = vmax.f32 %v4147, %v4148
      %v4150 = vrot.slane %v4149, 1
      %v4151 = vmax.f32 %v4149, %v4150
      %v4152 = vsub.f32 %v4144, %v4151
      %v4153 = vmul.f32 %v4152, 1.442695
      %v4154 = vpow.pop %v4153
      %v4155 = vsel %vm2509, %v4154, 0.0
      %v4156 = vrot.slane %v4155, 4
      %v4157 = vadd.f32 %v4155, %v4156
      %v4158 = vrot.slane %v4157, 2
      %v4159 = vadd.f32 %v4157, %v4158
      %v4160 = vrot.slane %v4159, 1
      %v4161 = vadd.f32 %v4159, %v4160
      %v4162 = vrcp.pop %v4161
      %v4163 = vmul.f32 %v4161, %v4162
      %v4164 = vsub.f32 1.0, %v4163
      %v4165 = vmul.f32 %v4162, %v4164
      %v4166 = vadd.f32 %v4162, %v4165
      %vm4167 = vweird.f32 %v4161
      %vm4168 = vweird.f32 %v4162
      %vm4169 = vmor %vm4167, %vm4168
      %v4170 = vsel %vm4169, %v4162, %v4166
      %v4171 = vand.u32 2147483647, %v4161
      %vm4172 = vcmp.eq.f32.partialorder %v4171, 8.507059e+37
      %v4173 = vand.u32 %v4161, 2147483648
      %v4174 = vor.u32 1.1754944e-38, %v4173
      %v4175 = vsel %vm4172, %v4174, %v4170
      %v4176 = vmul.f32 %v4154, %v4175
      %v4177 = vsel %vm867, %v4068, 0.0
      %v4178 = vsel %vm867, %v4070, 0.0
      %v4179 = vsel %vm867, %v4072, 0.0
      %v4180 = vsel %vm867, %v4074, 0.0
      %v4181 = vsel %vm867, %v4076, 0.0
      %v4182 = vsel %vm867, %v4078, 0.0
      %v4183 = vsel %vm867, %v4080, 0.0
      %v4184 = vsel %vm867, %v4082, 0.0
      %v4185 = vsel %vm867, %v4084, 0.0
      %v4186 = vsel %vm867, %v4086, 0.0
      %v4188 = vsel %vm2509, %v4176, 0
      %4190 = vmatpush.msra.mxu0 0.0
      %4191 = vmatpush.msra.mxu0 0.0
      %4192 = vmatpush.msra.mxu0 0.0
      %4193 = vmatpush.msra.mxu0 0.0
      %4194 = vmatpush.msra.mxu0 0.0
      %4195 = vmatpush.msra.mxu0 0.0
      %4196 = vmatpush.msra.mxu0 %v4186
      %4197 = vmatpush.msra.mxu0 %v4185
      %4198 = vmatpush.msra.mxu0 %v4184
      %4199 = vmatpush.msra.mxu0 %v4183
      %4200 = vmatpush.msra.mxu0 %v4182
      %4201 = vmatpush.msra.mxu0 %v4181
      %4202 = vmatpush.msra.mxu0 %v4180
      %4203 = vmatpush.msra.mxu0 %v4179
      %4204 = vmatpush.msra.mxu0 %v4178
      %4205 = vmatpush.msra.mxu0 %v4177
      %4206 = vmatmul.f32.gmra.mxu0 %v4188
      %v4207 = vpop.f32.mrf.mxu0
      %v4208 = vadd.f32 0.0, %v4207
      %4209 = vdwg.mxu0
      %v4210 = vadd.f32 %v4087, %v4208
      %4211 = vrot.lane.b32.xlu0 %v4087, 120
      %v4212 = vpop.permute.xlu0 %4211
      %4213 = vrot.lane.b32.xlu0 %v4067, 120
      %v4214 = vpop.permute.xlu0 %4213
      %4215 = vrot.lane.b32.xlu0 %v4069, 120
      %v4216 = vpop.permute.xlu0 %4215
      %4217 = vrot.lane.b32.xlu0 %v4071, 120
      %v4218 = vpop.permute.xlu0 %4217
      %4219 = vrot.lane.b32.xlu0 %v4073, 120
      %v4220 = vpop.permute.xlu0 %4219
      %4221 = vrot.lane.b32.xlu0 %v4075, 120
      %v4222 = vpop.permute.xlu0 %4221
      %4223 = vrot.lane.b32.xlu0 %v4077, 120
      %v4224 = vpop.permute.xlu0 %4223
      %4225 = vrot.lane.b32.xlu0 %v4079, 120
      %v4226 = vpop.permute.xlu0 %4225
      %4227 = vrot.lane.b32.xlu0 %v4081, 120
      %v4228 = vpop.permute.xlu0 %4227
      %4229 = vrot.lane.b32.xlu0 %v4083, 120
      %v4230 = vpop.permute.xlu0 %4229
      %4231 = vrot.lane.b32.xlu0 %v4085, 120
      %v4232 = vpop.permute.xlu0 %4231
      %v4233 = vsel %vm613, %v4212, 0
      %v4235 = vsel %vm613, %v4214, 0
      %v4237 = vsel %vm613, %v4216, 0
      %v4239 = vsel %vm613, %v4218, 0
      %v4241 = vsel %vm613, %v4220, 0
      %v4243 = vsel %vm613, %v4222, 0
      %v4245 = vsel %vm613, %v4224, 0
      %v4247 = vsel %vm613, %v4226, 0
      %v4249 = vsel %vm613, %v4228, 0
      %v4251 = vsel %vm613, %v4230, 0
      %v4253 = vsel %vm613, %v4232, 0
      %4255 = vmatpush.xpose.msra.mxu0 0.0
      %4256 = vmatpush.xpose.msra.mxu0 0.0
      %4257 = vmatpush.xpose.msra.mxu0 0.0
      %4258 = vmatpush.xpose.msra.mxu0 0.0
      %4259 = vmatpush.xpose.msra.mxu0 0.0
      %4260 = vmatpush.xpose.msra.mxu0 0.0
      %4261 = vmatpush.xpose.msra.mxu0 %v4253
      %4262 = vmatpush.xpose.msra.mxu0 %v4251
      %4263 = vmatpush.xpose.msra.mxu0 %v4249
      %4264 = vmatpush.xpose.msra.mxu0 %v4247
      %4265 = vmatpush.xpose.msra.mxu0 %v4245
      %4266 = vmatpush.xpose.msra.mxu0 %v4243
      %4267 = vmatpush.xpose.msra.mxu0 %v4241
      %4268 = vmatpush.xpose.msra.mxu0 %v4239
      %4269 = vmatpush.xpose.msra.mxu0 %v4237
      %4270 = vmatpush.xpose.msra.mxu0 %v4235
      %4271 = vmatmul.f32.gmra.mxu0 %v4233
      %v4272 = vpop.f32.mrf.mxu0
      %v4273 = vadd.f32 0.0, %v4272
      %4274 = vdwg.mxu0
      %v4275 = vmul.f32 %v4273, 0.17677669
      %v4276 = vsel %vm4143, %v4275, -1e+30
      %v4277 = vsel %vm2509, %v4276, -inf
      %v4278 = vrot.slane %v4277, 4
      %v4279 = vmax.f32 %v4277, %v4278
      %v4280 = vrot.slane %v4279, 2
      %v4281 = vmax.f32 %v4279, %v4280
      %v4282 = vrot.slane %v4281, 1
      %v4283 = vmax.f32 %v4281, %v4282
      %v4284 = vsub.f32 %v4276, %v4283
      %v4285 = vmul.f32 %v4284, 1.442695
      %v4286 = vpow.pop %v4285
      %v4287 = vsel %vm2509, %v4286, 0.0
      %v4288 = vrot.slane %v4287, 4
      %v4289 = vadd.f32 %v4287, %v4288
      %v4290 = vrot.slane %v4289, 2
      %v4291 = vadd.f32 %v4289, %v4290
      %v4292 = vrot.slane %v4291, 1
      %v4293 = vadd.f32 %v4291, %v4292
      %v4294 = vrcp.pop %v4293
      %v4295 = vmul.f32 %v4293, %v4294
      %v4296 = vsub.f32 1.0, %v4295
      %v4297 = vmul.f32 %v4294, %v4296
      %v4298 = vadd.f32 %v4294, %v4297
      %vm4299 = vweird.f32 %v4293
      %vm4300 = vweird.f32 %v4294
      %vm4301 = vmor %vm4299, %vm4300
      %v4302 = vsel %vm4301, %v4294, %v4298
      %v4303 = vand.u32 2147483647, %v4293
      %vm4304 = vcmp.eq.f32.partialorder %v4303, 8.507059e+37
      %v4305 = vand.u32 %v4293, 2147483648
      %v4306 = vor.u32 1.1754944e-38, %v4305
      %v4307 = vsel %vm4304, %v4306, %v4302
      %v4308 = vmul.f32 %v4286, %v4307
      %v4309 = vsel %vm1200, %v4068, 0.0
      %v4310 = vsel %vm1200, %v4070, 0.0
      %v4311 = vsel %vm1200, %v4072, 0.0
      %v4312 = vsel %vm1200, %v4074, 0.0
      %v4313 = vsel %vm1200, %v4076, 0.0
      %v4314 = vsel %vm1200, %v4078, 0.0
      %v4315 = vsel %vm1200, %v4080, 0.0
      %v4316 = vsel %vm1200, %v4082, 0.0
      %v4317 = vsel %vm1200, %v4084, 0.0
      %v4318 = vsel %vm1200, %v4086, 0.0
      %v4320 = vsel %vm2509, %v4308, 0
      %4322 = vmatpush.msra.mxu0 0.0
      %4323 = vmatpush.msra.mxu0 0.0
      %4324 = vmatpush.msra.mxu0 0.0
      %4325 = vmatpush.msra.mxu0 0.0
      %4326 = vmatpush.msra.mxu0 0.0
      %4327 = vmatpush.msra.mxu0 0.0
      %4328 = vmatpush.msra.mxu0 %v4318
      %4329 = vmatpush.msra.mxu0 %v4317
      %4330 = vmatpush.msra.mxu0 %v4316
      %4331 = vmatpush.msra.mxu0 %v4315
      %4332 = vmatpush.msra.mxu0 %v4314
      %4333 = vmatpush.msra.mxu0 %v4313
      %4334 = vmatpush.msra.mxu0 %v4312
      %4335 = vmatpush.msra.mxu0 %v4311
      %4336 = vmatpush.msra.mxu0 %v4310
      %4337 = vmatpush.msra.mxu0 %v4309
      %4338 = vmatmul.f32.gmra.mxu0 %v4320
      %v4339 = vpop.f32.mrf.mxu0
      %v4340 = vadd.f32 0.0, %v4339
      %4341 = vdwg.mxu0
      %v4342 = vadd.f32 %v4210, %v4340
      %4343 = vrot.lane.b32.xlu0 %v4087, 112
      %v4344 = vpop.permute.xlu0 %4343
      %4345 = vrot.lane.b32.xlu0 %v4067, 112
      %v4346 = vpop.permute.xlu0 %4345
      %4347 = vrot.lane.b32.xlu0 %v4069, 112
      %v4348 = vpop.permute.xlu0 %4347
      %4349 = vrot.lane.b32.xlu0 %v4071, 112
      %v4350 = vpop.permute.xlu0 %4349
      %4351 = vrot.lane.b32.xlu0 %v4073, 112
      %v4352 = vpop.permute.xlu0 %4351
      %4353 = vrot.lane.b32.xlu0 %v4075, 112
      %v4354 = vpop.permute.xlu0 %4353
      %4355 = vrot.lane.b32.xlu0 %v4077, 112
      %v4356 = vpop.permute.xlu0 %4355
      %4357 = vrot.lane.b32.xlu0 %v4079, 112
      %v4358 = vpop.permute.xlu0 %4357
      %4359 = vrot.lane.b32.xlu0 %v4081, 112
      %v4360 = vpop.permute.xlu0 %4359
      %4361 = vrot.lane.b32.xlu0 %v4083, 112
      %v4362 = vpop.permute.xlu0 %4361
      %4363 = vrot.lane.b32.xlu0 %v4085, 112
      %v4364 = vpop.permute.xlu0 %4363
      %v4365 = vsel %vm613, %v4344, 0
      %v4367 = vsel %vm613, %v4346, 0
      %v4369 = vsel %vm613, %v4348, 0
      %v4371 = vsel %vm613, %v4350, 0
      %v4373 = vsel %vm613, %v4352, 0
      %v4375 = vsel %vm613, %v4354, 0
      %v4377 = vsel %vm613, %v4356, 0
      %v4379 = vsel %vm613, %v4358, 0
      %v4381 = vsel %vm613, %v4360, 0
      %v4383 = vsel %vm613, %v4362, 0
      %v4385 = vsel %vm613, %v4364, 0
      %4387 = vmatpush.xpose.msra.mxu0 0.0
      %4388 = vmatpush.xpose.msra.mxu0 0.0
      %4389 = vmatpush.xpose.msra.mxu0 0.0
      %4390 = vmatpush.xpose.msra.mxu0 0.0
      %4391 = vmatpush.xpose.msra.mxu0 0.0
      %4392 = vmatpush.xpose.msra.mxu0 0.0
      %4393 = vmatpush.xpose.msra.mxu0 %v4385
      %4394 = vmatpush.xpose.msra.mxu0 %v4383
      %4395 = vmatpush.xpose.msra.mxu0 %v4381
      %4396 = vmatpush.xpose.msra.mxu0 %v4379
      %4397 = vmatpush.xpose.msra.mxu0 %v4377
      %4398 = vmatpush.xpose.msra.mxu0 %v4375
      %4399 = vmatpush.xpose.msra.mxu0 %v4373
      %4400 = vmatpush.xpose.msra.mxu0 %v4371
      %4401 = vmatpush.xpose.msra.mxu0 %v4369
      %4402 = vmatpush.xpose.msra.mxu0 %v4367
      %4403 = vmatmul.f32.gmra.mxu0 %v4365
      %v4404 = vpop.f32.mrf.mxu0
      %v4405 = vadd.f32 0.0, %v4404
      %4406 = vdwg.mxu0
      %v4407 = vmul.f32 %v4405, 0.17677669
      %v4408 = vsel %vm4143, %v4407, -1e+30
      %v4409 = vsel %vm2509, %v4408, -inf
      %v4410 = vrot.slane %v4409, 4
      %v4411 = vmax.f32 %v4409, %v4410
      %v4412 = vrot.slane %v4411, 2
      %v4413 = vmax.f32 %v4411, %v4412
      %v4414 = vrot.slane %v4413, 1
      %v4415 = vmax.f32 %v4413, %v4414
      %v4416 = vsub.f32 %v4408, %v4415
      %v4417 = vmul.f32 %v4416, 1.442695
      %v4418 = vpow.pop %v4417
      %v4419 = vsel %vm2509, %v4418, 0.0
      %v4420 = vrot.slane %v4419, 4
      %v4421 = vadd.f32 %v4419, %v4420
      %v4422 = vrot.slane %v4421, 2
      %v4423 = vadd.f32 %v4421, %v4422
      %v4424 = vrot.slane %v4423, 1
      %v4425 = vadd.f32 %v4423, %v4424
      %v4426 = vrcp.pop %v4425
      %v4427 = vmul.f32 %v4425, %v4426
      %v4428 = vsub.f32 1.0, %v4427
      %v4429 = vmul.f32 %v4426, %v4428
      %v4430 = vadd.f32 %v4426, %v4429
      %vm4431 = vweird.f32 %v4425
      %vm4432 = vweird.f32 %v4426
      %vm4433 = vmor %vm4431, %vm4432
      %v4434 = vsel %vm4433, %v4426, %v4430
      %v4435 = vand.u32 2147483647, %v4425
      %vm4436 = vcmp.eq.f32.partialorder %v4435, 8.507059e+37
      %v4437 = vand.u32 %v4425, 2147483648
      %v4438 = vor.u32 1.1754944e-38, %v4437
      %v4439 = vsel %vm4436, %v4438, %v4434
      %v4440 = vmul.f32 %v4418, %v4439
      %v4441 = vsel %vm1533, %v4068, 0.0
      %v4442 = vsel %vm1533, %v4070, 0.0
      %v4443 = vsel %vm1533, %v4072, 0.0
      %v4444 = vsel %vm1533, %v4074, 0.0
      %v4445 = vsel %vm1533, %v4076, 0.0
      %v4446 = vsel %vm1533, %v4078, 0.0
      %v4447 = vsel %vm1533, %v4080, 0.0
      %v4448 = vsel %vm1533, %v4082, 0.0
      %v4449 = vsel %vm1533, %v4084, 0.0
      %v4450 = vsel %vm1533, %v4086, 0.0
      %v4452 = vsel %vm2509, %v4440, 0
      %4454 = vmatpush.msra.mxu0 0.0
      %4455 = vmatpush.msra.mxu0 0.0
      %4456 = vmatpush.msra.mxu0 0.0
      %4457 = vmatpush.msra.mxu0 0.0
      %4458 = vmatpush.msra.mxu0 0.0
      %4459 = vmatpush.msra.mxu0 0.0
      %4460 = vmatpush.msra.mxu0 %v4450
      %4461 = vmatpush.msra.mxu0 %v4449
      %4462 = vmatpush.msra.mxu0 %v4448
      %4463 = vmatpush.msra.mxu0 %v4447
      %4464 = vmatpush.msra.mxu0 %v4446
      %4465 = vmatpush.msra.mxu0 %v4445
      %4466 = vmatpush.msra.mxu0 %v4444
      %4467 = vmatpush.msra.mxu0 %v4443
      %4468 = vmatpush.msra.mxu0 %v4442
      %4469 = vmatpush.msra.mxu0 %v4441
      %4470 = vmatmul.f32.gmra.mxu0 %v4452
      %v4471 = vpop.f32.mrf.mxu0
      %v4472 = vadd.f32 0.0, %v4471
      %4473 = vdwg.mxu0
      %v4474 = vadd.f32 %v4342, %v4472
      %4475 = vrot.lane.b32.xlu0 %v4087, 104
      %v4476 = vpop.permute.xlu0 %4475
      %4477 = vrot.lane.b32.xlu0 %v4067, 104
      %v4478 = vpop.permute.xlu0 %4477
      %4479 = vrot.lane.b32.xlu0 %v4069, 104
      %v4480 = vpop.permute.xlu0 %4479
      %4481 = vrot.lane.b32.xlu0 %v4071, 104
      %v4482 = vpop.permute.xlu0 %4481
      %4483 = vrot.lane.b32.xlu0 %v4073, 104
      %v4484 = vpop.permute.xlu0 %4483
      %4485 = vrot.lane.b32.xlu0 %v4075, 104
      %v4486 = vpop.permute.xlu0 %4485
      %4487 = vrot.lane.b32.xlu0 %v4077, 104
      %v4488 = vpop.permute.xlu0 %4487
      %4489 = vrot.lane.b32.xlu0 %v4079, 104
      %v4490 = vpop.permute.xlu0 %4489
      %4491 = vrot.lane.b32.xlu0 %v4081, 104
      %v4492 = vpop.permute.xlu0 %4491
      %4493 = vrot.lane.b32.xlu0 %v4083, 104
      %v4494 = vpop.permute.xlu0 %4493
      %4495 = vrot.lane.b32.xlu0 %v4085, 104
      %v4496 = vpop.permute.xlu0 %4495
      %v4497 = vsel %vm613, %v4476, 0
      %v4499 = vsel %vm613, %v4478, 0
      %v4501 = vsel %vm613, %v4480, 0
      %v4503 = vsel %vm613, %v4482, 0
      %v4505 = vsel %vm613, %v4484, 0
      %v4507 = vsel %vm613, %v4486, 0
      %v4509 = vsel %vm613, %v4488, 0
      %v4511 = vsel %vm613, %v4490, 0
      %v4513 = vsel %vm613, %v4492, 0
      %v4515 = vsel %vm613, %v4494, 0
      %v4517 = vsel %vm613, %v4496, 0
      %4519 = vmatpush.xpose.msra.mxu0 0.0
      %4520 = vmatpush.xpose.msra.mxu0 0.0
      %4521 = vmatpush.xpose.msra.mxu0 0.0
      %4522 = vmatpush.xpose.msra.mxu0 0.0
      %4523 = vmatpush.xpose.msra.mxu0 0.0
      %4524 = vmatpush.xpose.msra.mxu0 0.0
      %4525 = vmatpush.xpose.msra.mxu0 %v4517
      %4526 = vmatpush.xpose.msra.mxu0 %v4515
      %4527 = vmatpush.xpose.msra.mxu0 %v4513
      %4528 = vmatpush.xpose.msra.mxu0 %v4511
      %4529 = vmatpush.xpose.msra.mxu0 %v4509
      %4530 = vmatpush.xpose.msra.mxu0 %v4507
      %4531 = vmatpush.xpose.msra.mxu0 %v4505
      %4532 = vmatpush.xpose.msra.mxu0 %v4503
      %4533 = vmatpush.xpose.msra.mxu0 %v4501
      %4534 = vmatpush.xpose.msra.mxu0 %v4499
      %4535 = vmatmul.f32.gmra.mxu0 %v4497
      %v4536 = vpop.f32.mrf.mxu0
      %v4537 = vadd.f32 0.0, %v4536
      %4538 = vdwg.mxu0
      %v4539 = vmul.f32 %v4537, 0.17677669
      %v4540 = vsel %vm4143, %v4539, -1e+30
      %v4541 = vsel %vm2509, %v4540, -inf
      %v4542 = vrot.slane %v4541, 4
      %v4543 = vmax.f32 %v4541, %v4542
      %v4544 = vrot.slane %v4543, 2
      %v4545 = vmax.f32 %v4543, %v4544
      %v4546 = vrot.slane %v4545, 1
      %v4547 = vmax.f32 %v4545, %v4546
      %v4548 = vsub.f32 %v4540, %v4547
      %v4549 = vmul.f32 %v4548, 1.442695
      %v4550 = vpow.pop %v4549
      %v4551 = vsel %vm2509, %v4550, 0.0
      %v4552 = vrot.slane %v4551, 4
      %v4553 = vadd.f32 %v4551, %v4552
      %v4554 = vrot.slane %v4553, 2
      %v4555 = vadd.f32 %v4553, %v4554
      %v4556 = vrot.slane %v4555, 1
      %v4557 = vadd.f32 %v4555, %v4556
      %v4558 = vrcp.pop %v4557
      %v4559 = vmul.f32 %v4557, %v4558
      %v4560 = vsub.f32 1.0, %v4559
      %v4561 = vmul.f32 %v4558, %v4560
      %v4562 = vadd.f32 %v4558, %v4561
      %vm4563 = vweird.f32 %v4557
      %vm4564 = vweird.f32 %v4558
      %vm4565 = vmor %vm4563, %vm4564
      %v4566 = vsel %vm4565, %v4558, %v4562
      %v4567 = vand.u32 2147483647, %v4557
      %vm4568 = vcmp.eq.f32.partialorder %v4567, 8.507059e+37
      %v4569 = vand.u32 %v4557, 2147483648
      %v4570 = vor.u32 1.1754944e-38, %v4569
      %v4571 = vsel %vm4568, %v4570, %v4566
      %v4572 = vmul.f32 %v4550, %v4571
      %v4573 = vsel %vm1866, %v4068, 0.0
      %v4574 = vsel %vm1866, %v4070, 0.0
      %v4575 = vsel %vm1866, %v4072, 0.0
      %v4576 = vsel %vm1866, %v4074, 0.0
      %v4577 = vsel %vm1866, %v4076, 0.0
      %v4578 = vsel %vm1866, %v4078, 0.0
      %v4579 = vsel %vm1866, %v4080, 0.0
      %v4580 = vsel %vm1866, %v4082, 0.0
      %v4581 = vsel %vm1866, %v4084, 0.0
      %v4582 = vsel %vm1866, %v4086, 0.0
      %v4584 = vsel %vm2509, %v4572, 0
      %4586 = vmatpush.msra.mxu0 0.0
      %4587 = vmatpush.msra.mxu0 0.0
      %4588 = vmatpush.msra.mxu0 0.0
      %4589 = vmatpush.msra.mxu0 0.0
      %4590 = vmatpush.msra.mxu0 0.0
      %4591 = vmatpush.msra.mxu0 0.0
      %4592 = vmatpush.msra.mxu0 %v4582
      %4593 = vmatpush.msra.mxu0 %v4581
      %4594 = vmatpush.msra.mxu0 %v4580
      %4595 = vmatpush.msra.mxu0 %v4579
      %4596 = vmatpush.msra.mxu0 %v4578
      %4597 = vmatpush.msra.mxu0 %v4577
      %4598 = vmatpush.msra.mxu0 %v4576
      %4599 = vmatpush.msra.mxu0 %v4575
      %4600 = vmatpush.msra.mxu0 %v4574
      %4601 = vmatpush.msra.mxu0 %v4573
      %4602 = vmatmul.f32.gmra.mxu0 %v4584
      %v4603 = vpop.f32.mrf.mxu0
      %v4604 = vadd.f32 0.0, %v4603
      %4605 = vdwg.mxu0
      %v4606 = vadd.f32 %v4474, %v4604
      %v4607 = vpack.c.bf16 %v4606, %v4606
      %v4608 = vld [vmem:[%s11] sm:$0xf]
      %v4609 = vld [vmem:[%s11 + $0x4] sm:$0xf]
      %v4610 = vld [vmem:[%s11 + $0x8] sm:$0xf]
      %v4611 = vld [vmem:[%s11 + $0xc] sm:$0xf]
      %v4612 = vld [vmem:[%s11 + $0x10] sm:$0xf]
      %v4613 = vld [vmem:[%s11 + $0x14] sm:$0xf]
      %v4614 = vld [vmem:[%s11 + $0x18] sm:$0xf]
      %v4615 = vld [vmem:[%s11 + $0x1c] sm:$0xf]
      %v4616 = vld [vmem:[%s11 + $0x20] sm:$0xf]
      %v4617 = vld [vmem:[%s11 + $0x24] sm:$0xf]
      %v4618 = vld [vmem:[%s11 + $0x28] sm:$0xf]
      %v4619 = vld [vmem:[%s11 + $0x2c] sm:$0xf]
      %v4620 = vld [vmem:[%s11 + $0x30] sm:$0xf]
      %v4621 = vld [vmem:[%s11 + $0x34] sm:$0xf]
      %v4622 = vld [vmem:[%s11 + $0x38] sm:$0xf]
      %v4623 = vld [vmem:[%s11 + $0x3c] sm:$0xf]
      %v4624 = vld [vmem:[%s12] sm:$0x1]
      %v4626 = vperm.slane %v4624, 0
      %v4644 = vunpack.c.l.b16 %v4608
      %v4645 = vunpack.c.l.b16 %v4609
      %v4646 = vunpack.c.l.b16 %v4610
      %v4647 = vunpack.c.l.b16 %v4611
      %v4648 = vunpack.c.l.b16 %v4612
      %v4649 = vunpack.c.l.b16 %v4613
      %v4650 = vunpack.c.l.b16 %v4614
      %v4651 = vunpack.c.l.b16 %v4615
      %v4652 = vunpack.c.l.b16 %v4616
      %v4653 = vunpack.c.l.b16 %v4617
      %v4654 = vunpack.c.l.b16 %v4618
      %v4655 = vunpack.c.l.b16 %v4619
      %v4656 = vunpack.c.l.b16 %v4620
      %v4657 = vunpack.c.l.b16 %v4621
      %v4658 = vunpack.c.l.b16 %v4622
      %v4659 = vunpack.c.l.b16 %v4623
      %v4660 = vpack.c.b16 %v4645, %v4644
      %v4661 = vpack.c.b16 %v4647, %v4646
      %v4662 = vpack.c.b16 %v4649, %v4648
      %v4663 = vpack.c.b16 %v4651, %v4650
      %v4664 = vpack.c.b16 %v4653, %v4652
      %v4665 = vpack.c.b16 %v4655, %v4654
      %v4666 = vpack.c.b16 %v4657, %v4656
      %v4667 = vpack.c.b16 %v4659, %v4658
      %4676 = vmatpush.bf16.msra.mxu0 %v4667
      %4677 = vmatpush.bf16.msra.mxu0 %v4666
      %4678 = vmatpush.bf16.msra.mxu0 %v4665
      %4679 = vmatpush.bf16.msra.mxu0 %v4664
      %4680 = vmatpush.bf16.msra.mxu0 %v4663
      %4681 = vmatpush.bf16.msra.mxu0 %v4662
      %4682 = vmatpush.bf16.msra.mxu0 %v4661
      %4683 = vmatpush.bf16.msra.mxu0 %v4660
      %4684 = vmatmul.bf16.gmra.mxu0 %v4607
      %v4685 = vpop.f32.mrf.mxu0
      %v4686 = vadd.f32 %v4626, %v4685
      %v4687 = vpop.f32.mrf.mxu0
      %4688 = vdwg.mxu0
      %v4689 = vmax.f32 %v4686, 0.0
      %v4690 = vadd.f32 %v4606, %v4689
      %v4691 = vsel %vm4143, %v4690, 0.0
      %v4692 = vpack.c.bf16 %v4691, %v4691
      %v4693 = vld [vmem:[%s13] sm:$0xf]
      %v4694 = vld [vmem:[%s13 + $0x4] sm:$0xf]
      %v4695 = vld [vmem:[%s13 + $0x8] sm:$0xf]
      %v4696 = vld [vmem:[%s13 + $0xc] sm:$0xf]
      %v4697 = vld [vmem:[%s13 + $0x10] sm:$0xf]
      %v4698 = vld [vmem:[%s13 + $0x14] sm:$0xf]
      %v4699 = vld [vmem:[%s13 + $0x18] sm:$0xf]
      %v4700 = vld [vmem:[%s13 + $0x1c] sm:$0xf]
      %v4701 = vld [vmem:[%s13 + $0x20] sm:$0xf]
      %v4702 = vld [vmem:[%s13 + $0x24] sm:$0xf]
      %v4703 = vld [vmem:[%s13 + $0x28] sm:$0xf]
      %v4704 = vld [vmem:[%s13 + $0x2c] sm:$0xf]
      %v4705 = vld [vmem:[%s13 + $0x30] sm:$0xf]
      %v4706 = vld [vmem:[%s13 + $0x34] sm:$0xf]
      %v4707 = vld [vmem:[%s13 + $0x38] sm:$0xf]
      %v4708 = vld [vmem:[%s13 + $0x3c] sm:$0xf]
      %v4709 = vld [vmem:[%s14] sm:$0x1]
      %v4711 = vperm.slane %v4709, 0
      %v4729 = vunpack.c.l.b16 %v4693
      %v4730 = vunpack.c.l.b16 %v4694
      %v4731 = vunpack.c.l.b16 %v4695
      %v4732 = vunpack.c.l.b16 %v4696
      %v4733 = vunpack.c.l.b16 %v4697
      %v4734 = vunpack.c.l.b16 %v4698
      %v4735 = vunpack.c.l.b16 %v4699
      %v4736 = vunpack.c.l.b16 %v4700
      %v4737 = vunpack.c.l.b16 %v4701
      %v4738 = vunpack.c.l.b16 %v4702
      %v4739 = vunpack.c.l.b16 %v4703
      %v4740 = vunpack.c.l.b16 %v4704
      %v4741 = vunpack.c.l.b16 %v4705
      %v4742 = vunpack.c.l.b16 %v4706
      %v4743 = vunpack.c.l.b16 %v4707
      %v4744 = vunpack.c.l.b16 %v4708
      %v4745 = vpack.c.b16 %v4730, %v4729
      %v4746 = vpack.c.b16 %v4732, %v4731
      %v4747 = vpack.c.b16 %v4734, %v4733
      %v4748 = vpack.c.b16 %v4736, %v4735
      %v4749 = vpack.c.b16 %v4738, %v4737
      %v4750 = vpack.c.b16 %v4740, %v4739
      %v4751 = vpack.c.b16 %v4742, %v4741
      %v4752 = vpack.c.b16 %v4744, %v4743
      %4761 = vmatpush.bf16.msra.mxu0 %v4752
      %4762 = vmatpush.bf16.msra.mxu0 %v4751
      %4763 = vmatpush.bf16.msra.mxu0 %v4750
      %4764 = vmatpush.bf16.msra.mxu0 %v4749
      %4765 = vmatpush.bf16.msra.mxu0 %v4748
      %4766 = vmatpush.bf16.msra.mxu0 %v4747
      %4767 = vmatpush.bf16.msra.mxu0 %v4746
      %4768 = vmatpush.bf16.msra.mxu0 %v4745
      %4769 = vmatmul.bf16.gmra.mxu0 %v4692
      %v4770 = vpop.f32.mrf.mxu0
      %v4771 = vadd.f32 %v4711, %v4770
      %v4772 = vpop.f32.mrf.mxu0
      %4773 = vdwg.mxu0
      %v4774 = vpack.c.bf16 %v4771, %v4771
      %v4775 = vld [vmem:[%s15] sm:$0xf]
      %v4776 = vld [vmem:[%s15 + $0x4] sm:$0xf]
      %v4777 = vld [vmem:[%s15 + $0x8] sm:$0xf]
      %v4778 = vld [vmem:[%s15 + $0xc] sm:$0xf]
      %v4779 = vld [vmem:[%s15 + $0x10] sm:$0xf]
      %v4780 = vld [vmem:[%s15 + $0x14] sm:$0xf]
      %v4781 = vld [vmem:[%s15 + $0x18] sm:$0xf]
      %v4782 = vld [vmem:[%s15 + $0x1c] sm:$0xf]
      %v4783 = vld [vmem:[%s15 + $0x20] sm:$0xf]
      %v4784 = vld [vmem:[%s15 + $0x24] sm:$0xf]
      %v4785 = vld [vmem:[%s15 + $0x28] sm:$0xf]
      %v4786 = vld [vmem:[%s15 + $0x2c] sm:$0xf]
      %v4787 = vld [vmem:[%s15 + $0x30] sm:$0xf]
      %v4788 = vld [vmem:[%s15 + $0x34] sm:$0xf]
      %v4789 = vld [vmem:[%s15 + $0x38] sm:$0xf]
      %v4790 = vld [vmem:[%s15 + $0x3c] sm:$0xf]
      %v4791 = vld [vmem:[%s16] sm:$0x1]
      %v4793 = vperm.slane %v4791, 0
      %v4811 = vunpack.c.l.b16 %v4775
      %v4812 = vunpack.c.l.b16 %v4776
      %v4813 = vunpack.c.l.b16 %v4777
      %v4814 = vunpack.c.l.b16 %v4778
      %v4815 = vunpack.c.l.b16 %v4779
      %v4816 = vunpack.c.l.b16 %v4780
      %v4817 = vunpack.c.l.b16 %v4781
      %v4818 = vunpack.c.l.b16 %v4782
      %v4819 = vunpack.c.l.b16 %v4783
      %v4820 = vunpack.c.l.b16 %v4784
      %v4821 = vunpack.c.l.b16 %v4785
      %v4822 = vunpack.c.l.b16 %v4786
      %v4823 = vunpack.c.l.b16 %v4787
      %v4824 = vunpack.c.l.b16 %v4788
      %v4825 = vunpack.c.l.b16 %v4789
      %v4826 = vunpack.c.l.b16 %v4790
      %v4827 = vpack.c.b16 %v4812, %v4811
      %v4828 = vpack.c.b16 %v4814, %v4813
      %v4829 = vpack.c.b16 %v4816, %v4815
      %v4830 = vpack.c.b16 %v4818, %v4817
      %v4831 = vpack.c.b16 %v4820, %v4819
      %v4832 = vpack.c.b16 %v4822, %v4821
      %v4833 = vpack.c.b16 %v4824, %v4823
      %v4834 = vpack.c.b16 %v4826, %v4825
      %4843 = vmatpush.bf16.msra.mxu0 %v4834
      %4844 = vmatpush.bf16.msra.mxu0 %v4833
      %4845 = vmatpush.bf16.msra.mxu0 %v4832
      %4846 = vmatpush.bf16.msra.mxu0 %v4831
      %4847 = vmatpush.bf16.msra.mxu0 %v4830
      %4848 = vmatpush.bf16.msra.mxu0 %v4829
      %4849 = vmatpush.bf16.msra.mxu0 %v4828
      %4850 = vmatpush.bf16.msra.mxu0 %v4827
      %4851 = vmatmul.bf16.gmra.mxu0 %v4774
      %v4852 = vpop.f32.mrf.mxu0
      %v4853 = vadd.f32 %v4793, %v4852
      %v4854 = vpop.f32.mrf.mxu0
      %4855 = vdwg.mxu0
      %4856 = vst [vmem:[%s546] sm:$0xff] %v4853
      %p4857 = scmp.lt.s32.totalorder %s28, 1
      %s4858 = scalar_select %p4857, %s28, 1
      %s4859 = smul.addr %s4858, 8
      %s4860 = scalar_lea.vmem %s17, %s4859
      // Predicated region
      $region89: #{gin_enc_forward.3} parent=87 // pred_check
        %p4861 = pneg %p408
      $region90: #{gin_enc_forward.3} parent=87 // pred_check_branch
        %4863 = sbr.rel (%p4861) target = $region92
      $region91: #{gin_enc_forward.3} parent=87 // pred_region
        _
      $region92: #{gin_enc_forward.3} parent=87 // pred_fallthru
        _
    $region88: #{gin_enc_forward.3} parent=5 // pred_fallthru
      _
    %p4864 = scmp.le.s32.totalorder 2, %s23
    // Predicated region
    $region93: #{gin_enc_forward.3} parent=5 // pred_check
      %p4865 = pneg %p4864
    $region94: #{gin_enc_forward.3} parent=5 // pred_check_branch
      %4867 = sbr.rel (%p4865) target = $region96
    $region95: #{gin_enc_forward.3} parent=5 // pred_region
      %s4868 = ssub.s32 %s23, 2
      // Predicated region
      $region97: #{gin_enc_forward.3} parent=95 // pred_check
        %p4869 = pneg %p414
      $region98: #{gin_enc_forward.3} parent=95 // pred_check_branch
        %4871 = sbr.rel (%p4869) target = $region100
      $region99: #{gin_enc_forward.3} parent=95 // pred_region
        %p4872 = scmp.lt.s32.totalorder %s29, 1
        %s4873 = scalar_select %p4872, %s29, 1
        %s4874 = smul.addr %s4873, 8
        %s4875 = scalar_lea.vmem %s17, %s4874
      $region100: #{gin_enc_forward.3} parent=95 // pred_fallthru
        _
    $region96: #{gin_enc_forward.3} parent=5 // pred_fallthru
      _
  $region6: #{gin_enc_forward.3} parent=0 // loop_footer
    %s27 = sadd.s32 1, %s23
  $region7: #{gin_enc_forward.3} parent=0 // loop_footer_branch
    %22 = sbr.rel target = $region3
  $region8: #{gin_enc_forward.3} parent=0 // loop_exit
    _

</llo_original>
